<compile_context>
chip_gen: v7x
topology: tpu7x:2x2x1
jax: 0.10.0
libtpu: 0.0.40
codegen_flags: <defaults>
</compile_context>

<pallas_src>
import functools

import jax
import jax.numpy as jnp
from jax.experimental import pallas as pl
from jax.experimental.pallas import tpu as pltpu


def _mul_conv1x1_kernel(s_ref, x_ref, w_ref, o_ref):
    """grid = (Cin shard ["parallel", one per TensorCore], Cin step ["arbitrary"]).

    s_ref: (tk, 1)    f32  per-channel scale slice
    x_ref: (tk, hw)   f32  activation slice, channel-major (free NCHW reshape)
    w_ref: (tk, cout) bf16 pre-transposed weight slice
    o_ref: (hw, cout) f32  lane-dense resident accumulator for this Cin shard
    """
    k = pl.program_id(1)

    # Per-channel scale in f32 on the VPU (one rounding step; v5e has no bf16 ALUs).
    xs = x_ref[...] * s_ref[...]                        # (tk, hw), lane-broadcast of scale

    # Channel-major -> spatial-major on the XLU (hidden under the weight DMA),
    # then a single cast to bf16 feeding the MXU.
    xs_t = xs.T.astype(jnp.bfloat16)                    # (hw, tk)

    part = jnp.dot(xs_t, w_ref[...],                    # (hw, cout), f32 MXU accumulation
                   preferred_element_type=jnp.float32)

    @pl.when(k == 0)
    def _():
        o_ref[...] = part

    @pl.when(k > 0)
    def _():
        o_ref[...] = o_ref[...] + part


def prepare_conv_weight(weight_oi):
    """One-time parameter relayout: Conv2d weight [Cout, Cin(,1,1)] -> [Cin, Cout] bf16.

    Hoisted out of the per-call hot path (a per-call transpose of the 9.8 MB f32
    weight would roughly double the kernel's HBM traffic).
    """
    w2d = weight_oi.reshape(weight_oi.shape[0], -1)     # drop trailing 1x1 if present
    return jnp.transpose(w2d, (1, 0)).astype(jnp.bfloat16)


def _pick_grid(cin, cout, num_cores=None):
    """Returns (ncores, nk): Cin shards (parallel axis) and reduction steps per shard.

    num_cores may be passed explicitly; otherwise it is detected (v7x -> 2 TCs).
    Tiling is driven by core balance / step-count, NOT by VMEM (footprint is
    only a few MB on all generations, even with v7x's 64 MiB VMEM).
    """
    assert cout % 128 == 0, "kernel keeps a single lane-dense full-Cout tile"
    if num_cores is None:
        try:
            kind = jax.devices()[0].device_kind.lower()
        except Exception:
            kind = ""
        num_cores = 2 if (("v7" in kind) or ("7x" in kind)) else 1
    if cin % num_cores != 0:
        num_cores = 1
    per_core = cin // num_cores
    # Two reduction steps per shard keeps the weight tile in the ~1-2.5 MB sweet
    # spot (v6e: tk=1920 -> 2.4 MB; v7x: tk=960 -> 1.2 MB) while still giving the
    # DMA/compute pipeline something to overlap.
    nk = 2 if per_core % 16 == 0 else 1
    assert (per_core // nk) % 8 == 0
    return num_cores, nk


@functools.partial(jax.jit, static_argnames=("ncores", "nk"))
def _mul_conv1x1_impl(scale_nchw, x_nchw, w_icoc, ncores, nk):
    n, cin, h, w = x_nchw.shape
    hw = h * w
    cout = w_icoc.shape[1]
    tk = cin // (ncores * nk)

    # Free, layout-preserving reshapes (no XLA relayout pass, no extra HBM traffic).
    x2d = x_nchw.reshape(cin, hw)          # channel-major activations, f32
    s2d = scale_nchw.reshape(cin, 1)       # per-channel scale, f32

    bytes_accessed = (cin * cout * 2        # bf16 weight (dominant)
                      + cin * hw * 4        # f32 activations
                      + cin * 4             # f32 scale
                      + ncores * hw * cout * 4)  # f32 partial outputs

    parts = pl.pallas_call(
        _mul_conv1x1_kernel,
        out_shape=jax.ShapeDtypeStruct((ncores, hw, cout), jnp.float32),
        grid=(ncores, nk),
        in_specs=[
            pl.BlockSpec((tk, 1), lambda p, k: (p * nk + k, 0)),     # scale slice
            pl.BlockSpec((tk, hw), lambda p, k: (p * nk + k, 0)),    # activation slice
            pl.BlockSpec((tk, cout), lambda p, k: (p * nk + k, 0)),  # weight slice
        ],
        # Lane-dense per-shard accumulator; block index constant over the
        # reduction axis -> resident in VMEM across k.
        out_specs=pl.BlockSpec((None, hw, cout), lambda p, k: (p, 0, 0)),
        compiler_params=pltpu.CompilerParams(
            dimension_semantics=("parallel", "arbitrary"),
        ),
        cost_estimate=pl.CostEstimate(
            flops=2 * hw * cin * cout,
            transcendentals=0,
            bytes_accessed=bytes_accessed,
        ),
    )(s2d, x2d, w_icoc)

    # Combine the per-core partials (125 KB each; trivial XLA add, ncores<=2).
    out2d = parts[0] if ncores == 1 else jnp.sum(parts, axis=0)

    # Tiny [HW,Cout] -> NCHW transpose kept outside the kernel so the kernel's
    # store path stays lane-dense (do NOT emit [Cout, 49] from the kernel).
    return jnp.transpose(out2d.reshape(1, h, w, cout), (0, 3, 1, 2))


def mul_conv1x1(scale_nchw, x_nchw, w_prepared, num_cores=None):
    """scale [1,Cin,1,1] * x [1,Cin,H,W] followed by 1x1 conv with prepared weight [Cin,Cout]."""
    n, cin, _, _ = x_nchw.shape
    cout = w_prepared.shape[1]
    assert n == 1
    ncores, nk = _pick_grid(cin, cout, num_cores)
    assert cin % (ncores * nk) == 0
    return _mul_conv1x1_impl(scale_nchw, x_nchw, w_prepared, ncores=ncores, nk=nk)


if __name__ == "__main__":
    key = jax.random.PRNGKey(0)
    k1, k2, k3 = jax.random.split(key, 3)

    Cin, Cout, H, W = 3840, 640, 7, 7

    x1000 = jax.random.normal(k1, (1, Cin, 1, 1), dtype=jnp.float32)   # per-channel scale
    x995 = jax.random.normal(k2, (1, Cin, H, W), dtype=jnp.float32)    # feature map
    # Conv2d(3840, 640, 1x1, bias=False) weight, deterministic init (kaiming-ish scaling)
    conv_w = jax.random.normal(k3, (Cout, Cin), dtype=jnp.float32) * (1.0 / jnp.sqrt(Cin))

    # one-time parameter relayout + bf16 cast (outside the hot path)
    w_prepared = prepare_conv_weight(conv_w)

    out = mul_conv1x1(x1000, x995, w_prepared)
    out = jax.block_until_ready(out)

    # correctness check vs pure-JAX f32 reference (bf16 MXU operands -> loose tolerance)
    ref = jnp.einsum("oc,nchw->nohw", conv_w, x1000 * x995)
    assert out.shape == (1, Cout, H, W)
    assert out.dtype == jnp.float32
    max_err = float(jnp.max(jnp.abs(out - ref)))
    assert jnp.allclose(out, ref, atol=5e-2, rtol=5e-2), f"max abs err {max_err}"

    print("KERNEL_OK")
</pallas_src>

<mosaic_0001>
module attributes {stable_mosaic.version = 11 : i64} {
  func.func @_mul_conv1x1_kernel(%arg0: i32, %arg1: i32, %arg2: memref<1920x1xf32, #tpu.memory_space<vmem>>, %arg3: memref<1920x49xf32, #tpu.memory_space<vmem>>, %arg4: memref<1920x640xbf16, #tpu.memory_space<vmem>>, %arg5: memref<1x49x640xf32, #tpu.memory_space<vmem>>) attributes {dimension_semantics = [#tpu.dimension_semantics<parallel>, #tpu.dimension_semantics<arbitrary>], iteration_bounds = array<i64: 1, 2>, scalar_prefetch = 0 : i64, scratch_operands = 0 : i64, tpu.core_type = #tpu.core_type<tc>, window_params = [{transform_indices = @transform_0, window_bounds = array<i64: 1920, 1>}, {transform_indices = @transform_1, window_bounds = array<i64: 1920, 49>}, {transform_indices = @transform_2, window_bounds = array<i64: 1920, 640>}, {transform_indices = @transform_3, window_bounds = array<i64: 1, 49, 640>}]} {
    %c0 = arith.constant 0 : index
    %c0_0 = arith.constant 0 : index
    %0 = vector.load %arg3[%c0, %c0_0] : memref<1920x49xf32, #tpu.memory_space<vmem>>, vector<1920x49xf32>
    %c0_1 = arith.constant 0 : index
    %c0_2 = arith.constant 0 : index
    %1 = vector.load %arg2[%c0_1, %c0_2] : memref<1920x1xf32, #tpu.memory_space<vmem>>, vector<1920x1xf32>
    %2 = vector.broadcast %1 : vector<1920x1xf32> to vector<1920x49xf32>
    %3 = arith.mulf %0, %2 : vector<1920x49xf32>
    %4 = tpu.transpose %3, [1, 0] : vector<1920x49xf32> -> vector<49x1920xf32>
    %5 = arith.truncf %4 : vector<49x1920xf32> to vector<49x1920xbf16>
    %c0_3 = arith.constant 0 : index
    %c0_4 = arith.constant 0 : index
    %6 = vector.load %arg4[%c0_3, %c0_4] : memref<1920x640xbf16, #tpu.memory_space<vmem>>, vector<1920x640xbf16>
    %cst = arith.constant dense<0.000000e+00> : vector<49x640xf32>
    %7 = tpu.matmul %5, %6, %cst {dimension_numbers = #tpu.dot_dimension_numbers<[1], [0], [0], [1], [0, 0, 1, 1], [], []>} : vector<49x1920xbf16>, vector<1920x640xbf16>, vector<49x640xf32> -> vector<49x640xf32>
    %c0_i32 = arith.constant 0 : i32
    %8 = arith.cmpi eq, %arg1, %c0_i32 : i32
    %9 = arith.extui %8 : i1 to i32
    %c0_i32_5 = arith.constant 0 : i32
    %10 = arith.cmpi ne, %9, %c0_i32_5 : i32
    scf.if %10 {
      %c0_8 = arith.constant 0 : index
      %c0_9 = arith.constant 0 : index
      %c0_10 = arith.constant 0 : index
      %14 = vector.load %arg5[%c0_8, %c0_9, %c0_10] : memref<1x49x640xf32, #tpu.memory_space<vmem>>, vector<1x49x640xf32>
      %15 = vector.shape_cast %14 : vector<1x49x640xf32> to vector<49x640xf32>
      %16 = vector.shape_cast %7 : vector<49x640xf32> to vector<1x49x640xf32>
      tpu.vector_store %arg5[%c0_8, %c0_9, %c0_10], %16 {strides = array<i32>} : memref<1x49x640xf32, #tpu.memory_space<vmem>>, vector<1x49x640xf32>,
    } else {
    }
    %c0_i32_6 = arith.constant 0 : i32
    %11 = arith.cmpi sgt, %arg1, %c0_i32_6 : i32
    %12 = arith.extui %11 : i1 to i32
    %c0_i32_7 = arith.constant 0 : i32
    %13 = arith.cmpi ne, %12, %c0_i32_7 : i32
    scf.if %13 {
      %c0_8 = arith.constant 0 : index
      %c0_9 = arith.constant 0 : index
      %c0_10 = arith.constant 0 : index
      %14 = vector.load %arg5[%c0_8, %c0_9, %c0_10] : memref<1x49x640xf32, #tpu.memory_space<vmem>>, vector<1x49x640xf32>
      %15 = vector.shape_cast %14 : vector<1x49x640xf32> to vector<49x640xf32>
      %16 = arith.addf %15, %7 : vector<49x640xf32>
      %c0_11 = arith.constant 0 : index
      %c0_12 = arith.constant 0 : index
      %c0_13 = arith.constant 0 : index
      %17 = vector.load %arg5[%c0_11, %c0_12, %c0_13] : memref<1x49x640xf32, #tpu.memory_space<vmem>>, vector<1x49x640xf32>
      %18 = vector.shape_cast %17 : vector<1x49x640xf32> to vector<49x640xf32>
      %19 = vector.shape_cast %16 : vector<49x640xf32> to vector<1x49x640xf32>
      tpu.vector_store %arg5[%c0_11, %c0_12, %c0_13], %19 {strides = array<i32>} : memref<1x49x640xf32, #tpu.memory_space<vmem>>, vector<1x49x640xf32>,
    } else {
    }
    return
  }
  func.func @transform_0(%arg0: i32, %arg1: i32) -> (i32, i32) {
    %c2_i32 = arith.constant 2 : i32
    %0 = arith.muli %arg0, %c2_i32 : i32
    %1 = arith.addi %0, %arg1 : i32
    %c0_i32 = arith.constant 0 : i32
    %c0_i32_0 = arith.constant 0 : i32
    return %1, %c0_i32 : i32, i32
  }
  func.func @transform_1(%arg0: i32, %arg1: i32) -> (i32, i32) {
    %c2_i32 = arith.constant 2 : i32
    %0 = arith.muli %arg0, %c2_i32 : i32
    %1 = arith.addi %0, %arg1 : i32
    %c0_i32 = arith.constant 0 : i32
    %c0_i32_0 = arith.constant 0 : i32
    return %1, %c0_i32 : i32, i32
  }
  func.func @transform_2(%arg0: i32, %arg1: i32) -> (i32, i32) {
    %c2_i32 = arith.constant 2 : i32
    %0 = arith.muli %arg0, %c2_i32 : i32
    %1 = arith.addi %0, %arg1 : i32
    %c0_i32 = arith.constant 0 : i32
    %c0_i32_0 = arith.constant 0 : i32
    return %1, %c0_i32 : i32, i32
  }
  func.func @transform_3(%arg0: i32, %arg1: i32) -> (i32, i32, i32) {
    %c0_i32 = arith.constant 0 : i32
    %c0_i32_0 = arith.constant 0 : i32
    %c0_i32_1 = arith.constant 0 : i32
    return %arg0, %c0_i32, %c0_i32_0 : i32, i32, i32
  }
}

</mosaic_0001>

<llo_original>
// kernel: squeeze.1
$region0: #{squeeze.1}
  %s0 = inlined_call_operand.vmem [shape: f32[1,49,640], index: 0, kind: input, shape index: {}]
  %s1 = inlined_call_operand.hbm [shape: f32[1,7,7,640], index: 1, kind: output, shape index: {}]
  $region1: #{squeeze.1} parent=0
    #allocation0 [shape = 'u8[125440]{0}', space=vmem, size = 0x1ec00, scoped, tag = 'operand span for operand 1']
    #allocation1 [shape = 's32[1]{0}', space=sflag, size = 0x4, scoped, tag = 'scoped memory for squeeze.1']
    #allocation2 [shape = 'u8[1003520]{0}', space=vmem, size = 0xf5000, scoped, tag = 'scoped mem for output reshape']
    %2 = vsyncpa [#allocation1], 0
    %v3 = vld [vmem:[%s0] sm:$0xff]
    %4 = vst [vmem:[#allocation2] ss:$40 sm:$0xf] %v3
    %5 = vst [vmem:[#allocation2] ss:$40 sm:$0xf0] %v3
    %s6 = scalar_lea.vmem %s0, 8
    %v7 = vld [vmem:[%s6] sm:$0xff]
    %s8 = scalar_lea.vmem [#allocation2], 8
    %9 = vst [vmem:[%s8] ss:$40 sm:$0xf] %v7
    %s10 = scalar_lea.vmem [#allocation2], 8
    %11 = vst [vmem:[%s10] ss:$40 sm:$0xf0] %v7
    %s12 = scalar_lea.vmem %s0, 16
    %v13 = vld [vmem:[%s12] sm:$0xff]
    %s14 = scalar_lea.vmem [#allocation2], 16
    %15 = vst [vmem:[%s14] ss:$40 sm:$0xf] %v13
    %s16 = scalar_lea.vmem [#allocation2], 16
    %17 = vst [vmem:[%s16] ss:$40 sm:$0xf0] %v13
    %s18 = scalar_lea.vmem %s0, 24
    %v19 = vld [vmem:[%s18] sm:$0xff]
    %s20 = scalar_lea.vmem [#allocation2], 24
    %21 = vst [vmem:[%s20] ss:$40 sm:$0xf] %v19
    %s22 = scalar_lea.vmem [#allocation2], 24
    %23 = vst [vmem:[%s22] ss:$40 sm:$0xf0] %v19
    %s24 = scalar_lea.vmem %s0, 32
    %v25 = vld [vmem:[%s24] sm:$0xff]
    %s26 = scalar_lea.vmem [#allocation2], 32
    %27 = vst [vmem:[%s26] ss:$40 sm:$0xf] %v25
    %s28 = scalar_lea.vmem [#allocation2], 32
    %29 = vst [vmem:[%s28] ss:$40 sm:$0xf0] %v25
    %s30 = scalar_lea.vmem %s0, 40
    %v31 = vld [vmem:[%s30] sm:$0xff]
    %s32 = scalar_lea.vmem [#allocation2], 320
    %33 = vst [vmem:[%s32] ss:$40 sm:$0xf] %v31
    %s34 = scalar_lea.vmem [#allocation2], 320
    %35 = vst [vmem:[%s34] ss:$40 sm:$0xf0] %v31
    %s36 = scalar_lea.vmem %s0, 48
    %v37 = vld [vmem:[%s36] sm:$0xff]
    %s38 = scalar_lea.vmem [#allocation2], 328
    %39 = vst [vmem:[%s38] ss:$40 sm:$0xf] %v37
    %s40 = scalar_lea.vmem [#allocation2], 328
    %41 = vst [vmem:[%s40] ss:$40 sm:$0xf0] %v37
    %s42 = scalar_lea.vmem %s0, 56
    %v43 = vld [vmem:[%s42] sm:$0xff]
    %s44 = scalar_lea.vmem [#allocation2], 336
    %45 = vst [vmem:[%s44] ss:$40 sm:$0xf] %v43
    %s46 = scalar_lea.vmem [#allocation2], 336
    %47 = vst [vmem:[%s46] ss:$40 sm:$0xf0] %v43
    %s48 = scalar_lea.vmem %s0, 64
    %v49 = vld [vmem:[%s48] sm:$0xff]
    %s50 = scalar_lea.vmem [#allocation2], 344
    %51 = vst [vmem:[%s50] ss:$40 sm:$0xf] %v49
    %s52 = scalar_lea.vmem [#allocation2], 344
    %53 = vst [vmem:[%s52] ss:$40 sm:$0xf0] %v49
    %s54 = scalar_lea.vmem %s0, 72
    %v55 = vld [vmem:[%s54] sm:$0xff]
    %s56 = scalar_lea.vmem [#allocation2], 352
    %57 = vst [vmem:[%s56] ss:$40 sm:$0xf] %v55
    %s58 = scalar_lea.vmem [#allocation2], 352
    %59 = vst [vmem:[%s58] ss:$40 sm:$0xf0] %v55
    %s60 = scalar_lea.vmem %s0, 80
    %v61 = vld [vmem:[%s60] sm:$0xff]
    %s62 = scalar_lea.vmem [#allocation2], 640
    %63 = vst [vmem:[%s62] ss:$40 sm:$0xf] %v61
    %s64 = scalar_lea.vmem [#allocation2], 640
    %65 = vst [vmem:[%s64] ss:$40 sm:$0xf0] %v61
    %s66 = scalar_lea.vmem %s0, 88
    %v67 = vld [vmem:[%s66] sm:$0xff]
    %s68 = scalar_lea.vmem [#allocation2], 648
    %69 = vst [vmem:[%s68] ss:$40 sm:$0xf] %v67
    %s70 = scalar_lea.vmem [#allocation2], 648
    %71 = vst [vmem:[%s70] ss:$40 sm:$0xf0] %v67
    %s72 = scalar_lea.vmem %s0, 96
    %v73 = vld [vmem:[%s72] sm:$0xff]
    %s74 = scalar_lea.vmem [#allocation2], 656
    %75 = vst [vmem:[%s74] ss:$40 sm:$0xf] %v73
    %s76 = scalar_lea.vmem [#allocation2], 656
    %77 = vst [vmem:[%s76] ss:$40 sm:$0xf0] %v73
    %s78 = scalar_lea.vmem %s0, 104
    %v79 = vld [vmem:[%s78] sm:$0xff]
    %s80 = scalar_lea.vmem [#allocation2], 664
    %81 = vst [vmem:[%s80] ss:$40 sm:$0xf] %v79
    %s82 = scalar_lea.vmem [#allocation2], 664
    %83 = vst [vmem:[%s82] ss:$40 sm:$0xf0] %v79
    %s84 = scalar_lea.vmem %s0, 112
    %v85 = vld [vmem:[%s84] sm:$0xff]
    %s86 = scalar_lea.vmem [#allocation2], 672
    %87 = vst [vmem:[%s86] ss:$40 sm:$0xf] %v85
    %s88 = scalar_lea.vmem [#allocation2], 672
    %89 = vst [vmem:[%s88] ss:$40 sm:$0xf0] %v85
    %s90 = scalar_lea.vmem %s0, 120
    %v91 = vld [vmem:[%s90] sm:$0xff]
    %s92 = scalar_lea.vmem [#allocation2], 960
    %93 = vst [vmem:[%s92] ss:$40 sm:$0xf] %v91
    %s94 = scalar_lea.vmem [#allocation2], 960
    %95 = vst [vmem:[%s94] ss:$40 sm:$0xf0] %v91
    %s96 = scalar_lea.vmem %s0, 128
    %v97 = vld [vmem:[%s96] sm:$0xff]
    %s98 = scalar_lea.vmem [#allocation2], 968
    %99 = vst [vmem:[%s98] ss:$40 sm:$0xf] %v97
    %s100 = scalar_lea.vmem [#allocation2], 968
    %101 = vst [vmem:[%s100] ss:$40 sm:$0xf0] %v97
    %s102 = scalar_lea.vmem %s0, 136
    %v103 = vld [vmem:[%s102] sm:$0xff]
    %s104 = scalar_lea.vmem [#allocation2], 976
    %105 = vst [vmem:[%s104] ss:$40 sm:$0xf] %v103
    %s106 = scalar_lea.vmem [#allocation2], 976
    %107 = vst [vmem:[%s106] ss:$40 sm:$0xf0] %v103
    %s108 = scalar_lea.vmem %s0, 144
    %v109 = vld [vmem:[%s108] sm:$0xff]
    %s110 = scalar_lea.vmem [#allocation2], 984
    %111 = vst [vmem:[%s110] ss:$40 sm:$0xf] %v109
    %s112 = scalar_lea.vmem [#allocation2], 984
    %113 = vst [vmem:[%s112] ss:$40 sm:$0xf0] %v109
    %s114 = scalar_lea.vmem %s0, 152
    %v115 = vld [vmem:[%s114] sm:$0xff]
    %s116 = scalar_lea.vmem [#allocation2], 992
    %117 = vst [vmem:[%s116] ss:$40 sm:$0xf] %v115
    %s118 = scalar_lea.vmem [#allocation2], 992
    %119 = vst [vmem:[%s118] ss:$40 sm:$0xf0] %v115
    %s120 = scalar_lea.vmem %s0, 160
    %v121 = vld [vmem:[%s120] sm:$0xff]
    %s122 = scalar_lea.vmem [#allocation2], 1280
    %123 = vst [vmem:[%s122] ss:$40 sm:$0xf] %v121
    %s124 = scalar_lea.vmem [#allocation2], 1280
    %125 = vst [vmem:[%s124] ss:$40 sm:$0xf0] %v121
    %s126 = scalar_lea.vmem %s0, 168
    %v127 = vld [vmem:[%s126] sm:$0xff]
    %s128 = scalar_lea.vmem [#allocation2], 1288
    %129 = vst [vmem:[%s128] ss:$40 sm:$0xf] %v127
    %s130 = scalar_lea.vmem [#allocation2], 1288
    %131 = vst [vmem:[%s130] ss:$40 sm:$0xf0] %v127
    %s132 = scalar_lea.vmem %s0, 176
    %v133 = vld [vmem:[%s132] sm:$0xff]
    %s134 = scalar_lea.vmem [#allocation2], 1296
    %135 = vst [vmem:[%s134] ss:$40 sm:$0xf] %v133
    %s136 = scalar_lea.vmem [#allocation2], 1296
    %137 = vst [vmem:[%s136] ss:$40 sm:$0xf0] %v133
    %s138 = scalar_lea.vmem %s0, 184
    %v139 = vld [vmem:[%s138] sm:$0xff]
    %s140 = scalar_lea.vmem [#allocation2], 1304
    %141 = vst [vmem:[%s140] ss:$40 sm:$0xf] %v139
    %s142 = scalar_lea.vmem [#allocation2], 1304
    %143 = vst [vmem:[%s142] ss:$40 sm:$0xf0] %v139
    %s144 = scalar_lea.vmem %s0, 192
    %v145 = vld [vmem:[%s144] sm:$0xff]
    %s146 = scalar_lea.vmem [#allocation2], 1312
    %147 = vst [vmem:[%s146] ss:$40 sm:$0xf] %v145
    %s148 = scalar_lea.vmem [#allocation2], 1312
    %149 = vst [vmem:[%s148] ss:$40 sm:$0xf0] %v145
    %s150 = scalar_lea.vmem %s0, 200
    %v151 = vld [vmem:[%s150] sm:$0xff]
    %s152 = scalar_lea.vmem [#allocation2], 1600
    %153 = vst [vmem:[%s152] ss:$40 sm:$0xf] %v151
    %s154 = scalar_lea.vmem [#allocation2], 1600
    %155 = vst [vmem:[%s154] ss:$40 sm:$0xf0] %v151
    %s156 = scalar_lea.vmem %s0, 208
    %v157 = vld [vmem:[%s156] sm:$0xff]
    %s158 = scalar_lea.vmem [#allocation2], 1608
    %159 = vst [vmem:[%s158] ss:$40 sm:$0xf] %v157
    %s160 = scalar_lea.vmem [#allocation2], 1608
    %161 = vst [vmem:[%s160] ss:$40 sm:$0xf0] %v157
    %s162 = scalar_lea.vmem %s0, 216
    %v163 = vld [vmem:[%s162] sm:$0xff]
    %s164 = scalar_lea.vmem [#allocation2], 1616
    %165 = vst [vmem:[%s164] ss:$40 sm:$0xf] %v163
    %s166 = scalar_lea.vmem [#allocation2], 1616
    %167 = vst [vmem:[%s166] ss:$40 sm:$0xf0] %v163
    %s168 = scalar_lea.vmem %s0, 224
    %v169 = vld [vmem:[%s168] sm:$0xff]
    %s170 = scalar_lea.vmem [#allocation2], 1624
    %171 = vst [vmem:[%s170] ss:$40 sm:$0xf] %v169
    %s172 = scalar_lea.vmem [#allocation2], 1624
    %173 = vst [vmem:[%s172] ss:$40 sm:$0xf0] %v169
    %s174 = scalar_lea.vmem %s0, 232
    %v175 = vld [vmem:[%s174] sm:$0xff]
    %s176 = scalar_lea.vmem [#allocation2], 1632
    %177 = vst [vmem:[%s176] ss:$40 sm:$0xf] %v175
    %s178 = scalar_lea.vmem [#allocation2], 1632
    %179 = vst [vmem:[%s178] ss:$40 sm:$0xf0] %v175
    %s180 = scalar_lea.vmem %s0, 240
    %v181 = vld [vmem:[%s180] ss:$8 sm:$0xf]
    %s182 = scalar_lea.vmem %s0, 268
    %v183 = vld [vmem:[%s182] sm:$0x10]
    %vm184 = vcmask 1044484
    %v185 = vsel %vm184, %v183, %v181
    %s186 = scalar_lea.vmem [#allocation2], 1920
    %187 = vst [vmem:[%s186] ss:$8 sm:$0xf] %v185
    %s188 = scalar_lea.vmem [#allocation2], 1948
    %189 = vst [vmem:[%s188] sm:$0x10] %v185
    %s191 = sshllo.u32 0, 1
    %v193 = vld [vmem:[#allocation2] sm:%s191]
    %s194 = sshllo.u32 0, 1
    %195 = vst [vmem:[#allocation0] sm:%s194] %v193
    %s196 = scalar_lea.vmem [#allocation2], 8
    %v197 = vld [vmem:[%s196] sm:%s191]
    %s198 = sshllo.u32 0, 1
    %s199 = scalar_lea.vmem [#allocation0], 1
    %200 = vst [vmem:[%s199] sm:%s198] %v197
    %s201 = scalar_lea.vmem [#allocation2], 16
    %v202 = vld [vmem:[%s201] sm:%s191]
    %s203 = sshllo.u32 0, 1
    %s204 = smul.addr 1, 2
    %s205 = scalar_lea.vmem [#allocation0], %s204
    %206 = vst [vmem:[%s205] sm:%s203] %v202
    %s207 = scalar_lea.vmem [#allocation2], 24
    %v208 = vld [vmem:[%s207] sm:%s191]
    %s209 = sshllo.u32 0, 1
    %s210 = smul.addr 1, 3
    %s211 = scalar_lea.vmem [#allocation0], %s210
    %212 = vst [vmem:[%s211] sm:%s209] %v208
    %s213 = scalar_lea.vmem [#allocation2], 32
    %v214 = vld [vmem:[%s213] sm:%s191]
    %s215 = sshllo.u32 0, 1
    %s216 = smul.addr 1, 4
    %s217 = scalar_lea.vmem [#allocation0], %s216
    %218 = vst [vmem:[%s217] sm:%s215] %v214
    %s219 = scalar_lea.vmem [#allocation2], 40
    %v220 = vld [vmem:[%s219] sm:%s191]
    %s221 = sshllo.u32 0, 1
    %s222 = smul.addr 1, 5
    %s223 = scalar_lea.vmem [#allocation0], %s222
    %224 = vst [vmem:[%s223] sm:%s221] %v220
    %s225 = scalar_lea.vmem [#allocation2], 48
    %v226 = vld [vmem:[%s225] sm:%s191]
    %s227 = sshllo.u32 0, 1
    %s228 = smul.addr 1, 6
    %s229 = scalar_lea.vmem [#allocation0], %s228
    %230 = vst [vmem:[%s229] sm:%s227] %v226
    %s231 = scalar_lea.vmem [#allocation2], 56
    %v232 = vld [vmem:[%s231] sm:%s191]
    %s233 = sshllo.u32 0, 1
    %s234 = smul.addr 1, 7
    %s235 = scalar_lea.vmem [#allocation0], %s234
    %236 = vst [vmem:[%s235] sm:%s233] %v232
    %s237 = scalar_lea.vmem [#allocation2], 64
    %v238 = vld [vmem:[%s237] sm:%s191]
    %s239 = sshllo.u32 0, 1
    %s240 = smul.addr 1, 8
    %s241 = scalar_lea.vmem [#allocation0], %s240
    %242 = vst [vmem:[%s241] sm:%s239] %v238
    %s243 = scalar_lea.vmem [#allocation2], 72
    %v244 = vld [vmem:[%s243] sm:%s191]
    %s245 = sshllo.u32 0, 1
    %s246 = smul.addr 1, 9
    %s247 = scalar_lea.vmem [#allocation0], %s246
    %248 = vst [vmem:[%s247] sm:%s245] %v244
    %s249 = scalar_lea.vmem [#allocation2], 80
    %v250 = vld [vmem:[%s249] sm:%s191]
    %s251 = sshllo.u32 0, 1
    %s252 = smul.addr 1, 10
    %s253 = scalar_lea.vmem [#allocation0], %s252
    %254 = vst [vmem:[%s253] sm:%s251] %v250
    %s255 = scalar_lea.vmem [#allocation2], 88
    %v256 = vld [vmem:[%s255] sm:%s191]
    %s257 = sshllo.u32 0, 1
    %s258 = smul.addr 1, 11
    %s259 = scalar_lea.vmem [#allocation0], %s258
    %260 = vst [vmem:[%s259] sm:%s257] %v256
    %s261 = scalar_lea.vmem [#allocation2], 96
    %v262 = vld [vmem:[%s261] sm:%s191]
    %s263 = sshllo.u32 0, 1
    %s264 = smul.addr 1, 12
    %s265 = scalar_lea.vmem [#allocation0], %s264
    %266 = vst [vmem:[%s265] sm:%s263] %v262
    %s267 = scalar_lea.vmem [#allocation2], 104
    %v268 = vld [vmem:[%s267] sm:%s191]
    %s269 = sshllo.u32 0, 1
    %s270 = smul.addr 1, 13
    %s271 = scalar_lea.vmem [#allocation0], %s270
    %272 = vst [vmem:[%s271] sm:%s269] %v268
    %s273 = scalar_lea.vmem [#allocation2], 112
    %v274 = vld [vmem:[%s273] sm:%s191]
    %s275 = sshllo.u32 0, 1
    %s276 = smul.addr 1, 14
    %s277 = scalar_lea.vmem [#allocation0], %s276
    %278 = vst [vmem:[%s277] sm:%s275] %v274
    %s279 = scalar_lea.vmem [#allocation2], 120
    %v280 = vld [vmem:[%s279] sm:%s191]
    %s281 = sshllo.u32 0, 1
    %s282 = smul.addr 1, 15
    %s283 = scalar_lea.vmem [#allocation0], %s282
    %284 = vst [vmem:[%s283] sm:%s281] %v280
    %s285 = scalar_lea.vmem [#allocation2], 128
    %v286 = vld [vmem:[%s285] sm:%s191]
    %s287 = sshllo.u32 0, 1
    %s288 = smul.addr 1, 16
    %s289 = scalar_lea.vmem [#allocation0], %s288
    %290 = vst [vmem:[%s289] sm:%s287] %v286
    %s291 = scalar_lea.vmem [#allocation2], 136
    %v292 = vld [vmem:[%s291] sm:%s191]
    %s293 = sshllo.u32 0, 1
    %s294 = smul.addr 1, 17
    %s295 = scalar_lea.vmem [#allocation0], %s294
    %296 = vst [vmem:[%s295] sm:%s293] %v292
    %s297 = scalar_lea.vmem [#allocation2], 144
    %v298 = vld [vmem:[%s297] sm:%s191]
    %s299 = sshllo.u32 0, 1
    %s300 = smul.addr 1, 18
    %s301 = scalar_lea.vmem [#allocation0], %s300
    %302 = vst [vmem:[%s301] sm:%s299] %v298
    %s303 = scalar_lea.vmem [#allocation2], 152
    %v304 = vld [vmem:[%s303] sm:%s191]
    %s305 = sshllo.u32 0, 1
    %s306 = smul.addr 1, 19
    %s307 = scalar_lea.vmem [#allocation0], %s306
    %308 = vst [vmem:[%s307] sm:%s305] %v304
    %s309 = scalar_lea.vmem [#allocation2], 160
    %v310 = vld [vmem:[%s309] sm:%s191]
    %s311 = sshllo.u32 0, 1
    %s312 = smul.addr 1, 20
    %s313 = scalar_lea.vmem [#allocation0], %s312
    %314 = vst [vmem:[%s313] sm:%s311] %v310
    %s315 = scalar_lea.vmem [#allocation2], 168
    %v316 = vld [vmem:[%s315] sm:%s191]
    %s317 = sshllo.u32 0, 1
    %s318 = smul.addr 1, 21
    %s319 = scalar_lea.vmem [#allocation0], %s318
    %320 = vst [vmem:[%s319] sm:%s317] %v316
    %s321 = scalar_lea.vmem [#allocation2], 176
    %v322 = vld [vmem:[%s321] sm:%s191]
    %s323 = sshllo.u32 0, 1
    %s324 = smul.addr 1, 22
    %s325 = scalar_lea.vmem [#allocation0], %s324
    %326 = vst [vmem:[%s325] sm:%s323] %v322
    %s327 = scalar_lea.vmem [#allocation2], 184
    %v328 = vld [vmem:[%s327] sm:%s191]
    %s329 = sshllo.u32 0, 1
    %s330 = smul.addr 1, 23
    %s331 = scalar_lea.vmem [#allocation0], %s330
    %332 = vst [vmem:[%s331] sm:%s329] %v328
    %s333 = scalar_lea.vmem [#allocation2], 192
    %v334 = vld [vmem:[%s333] sm:%s191]
    %s335 = sshllo.u32 0, 1
    %s336 = smul.addr 1, 24
    %s337 = scalar_lea.vmem [#allocation0], %s336
    %338 = vst [vmem:[%s337] sm:%s335] %v334
    %s339 = scalar_lea.vmem [#allocation2], 200
    %v340 = vld [vmem:[%s339] sm:%s191]
    %s341 = sshllo.u32 0, 1
    %s342 = smul.addr 1, 25
    %s343 = scalar_lea.vmem [#allocation0], %s342
    %344 = vst [vmem:[%s343] sm:%s341] %v340
    %s345 = scalar_lea.vmem [#allocation2], 208
    %v346 = vld [vmem:[%s345] sm:%s191]
    %s347 = sshllo.u32 0, 1
    %s348 = smul.addr 1, 26
    %s349 = scalar_lea.vmem [#allocation0], %s348
    %350 = vst [vmem:[%s349] sm:%s347] %v346
    %s351 = scalar_lea.vmem [#allocation2], 216
    %v352 = vld [vmem:[%s351] sm:%s191]
    %s353 = sshllo.u32 0, 1
    %s354 = smul.addr 1, 27
    %s355 = scalar_lea.vmem [#allocation0], %s354
    %356 = vst [vmem:[%s355] sm:%s353] %v352
    %s357 = scalar_lea.vmem [#allocation2], 224
    %v358 = vld [vmem:[%s357] sm:%s191]
    %s359 = sshllo.u32 0, 1
    %s360 = smul.addr 1, 28
    %s361 = scalar_lea.vmem [#allocation0], %s360
    %362 = vst [vmem:[%s361] sm:%s359] %v358
    %s363 = scalar_lea.vmem [#allocation2], 232
    %v364 = vld [vmem:[%s363] sm:%s191]
    %s365 = sshllo.u32 0, 1
    %s366 = smul.addr 1, 29
    %s367 = scalar_lea.vmem [#allocation0], %s366
    %368 = vst [vmem:[%s367] sm:%s365] %v364
    %s369 = scalar_lea.vmem [#allocation2], 240
    %v370 = vld [vmem:[%s369] sm:%s191]
    %s371 = sshllo.u32 0, 1
    %s372 = smul.addr 1, 30
    %s373 = scalar_lea.vmem [#allocation0], %s372
    %374 = vst [vmem:[%s373] sm:%s371] %v370
    %s375 = scalar_lea.vmem [#allocation2], 248
    %v376 = vld [vmem:[%s375] sm:%s191]
    %s377 = sshllo.u32 0, 1
    %s378 = smul.addr 1, 31
    %s379 = scalar_lea.vmem [#allocation0], %s378
    %380 = vst [vmem:[%s379] sm:%s377] %v376
    %s381 = scalar_lea.vmem [#allocation2], 256
    %v382 = vld [vmem:[%s381] sm:%s191]
    %s383 = sshllo.u32 0, 1
    %s384 = smul.addr 1, 32
    %s385 = scalar_lea.vmem [#allocation0], %s384
    %386 = vst [vmem:[%s385] sm:%s383] %v382
    %s387 = scalar_lea.vmem [#allocation2], 264
    %v388 = vld [vmem:[%s387] sm:%s191]
    %s389 = sshllo.u32 0, 1
    %s390 = smul.addr 1, 33
    %s391 = scalar_lea.vmem [#allocation0], %s390
    %392 = vst [vmem:[%s391] sm:%s389] %v388
    %s393 = scalar_lea.vmem [#allocation2], 272
    %v394 = vld [vmem:[%s393] sm:%s191]
    %s395 = sshllo.u32 0, 1
    %s396 = smul.addr 1, 34
    %s397 = scalar_lea.vmem [#allocation0], %s396
    %398 = vst [vmem:[%s397] sm:%s395] %v394
    %s399 = scalar_lea.vmem [#allocation2], 280
    %v400 = vld [vmem:[%s399] sm:%s191]
    %s401 = sshllo.u32 0, 1
    %s402 = smul.addr 1, 35
    %s403 = scalar_lea.vmem [#allocation0], %s402
    %404 = vst [vmem:[%s403] sm:%s401] %v400
    %s405 = scalar_lea.vmem [#allocation2], 288
    %v406 = vld [vmem:[%s405] sm:%s191]
    %s407 = sshllo.u32 0, 1
    %s408 = smul.addr 1, 36
    %s409 = scalar_lea.vmem [#allocation0], %s408
    %410 = vst [vmem:[%s409] sm:%s407] %v406
    %s411 = scalar_lea.vmem [#allocation2], 296
    %v412 = vld [vmem:[%s411] sm:%s191]
    %s413 = sshllo.u32 0, 1
    %s414 = smul.addr 1, 37
    %s415 = scalar_lea.vmem [#allocation0], %s414
    %416 = vst [vmem:[%s415] sm:%s413] %v412
    %s417 = scalar_lea.vmem [#allocation2], 304
    %v418 = vld [vmem:[%s417] sm:%s191]
    %s419 = sshllo.u32 0, 1
    %s420 = smul.addr 1, 38
    %s421 = scalar_lea.vmem [#allocation0], %s420
    %422 = vst [vmem:[%s421] sm:%s419] %v418
    %s423 = scalar_lea.vmem [#allocation2], 312
    %v424 = vld [vmem:[%s423] sm:%s191]
    %s425 = sshllo.u32 0, 1
    %s426 = smul.addr 1, 39
    %s427 = scalar_lea.vmem [#allocation0], %s426
    %428 = vst [vmem:[%s427] sm:%s425] %v424
    %s429 = scalar_lea.vmem [#allocation2], 320
    %v430 = vld [vmem:[%s429] sm:%s191]
    %s431 = sshllo.u32 0, 1
    %s432 = smul.addr 1, 40
    %s433 = scalar_lea.vmem [#allocation0], %s432
    %434 = vst [vmem:[%s433] sm:%s431] %v430
    %s435 = scalar_lea.vmem [#allocation2], 328
    %v436 = vld [vmem:[%s435] sm:%s191]
    %s437 = sshllo.u32 0, 1
    %s438 = smul.addr 1, 41
    %s439 = scalar_lea.vmem [#allocation0], %s438
    %440 = vst [vmem:[%s439] sm:%s437] %v436
    %s441 = scalar_lea.vmem [#allocation2], 336
    %v442 = vld [vmem:[%s441] sm:%s191]
    %s443 = sshllo.u32 0, 1
    %s444 = smul.addr 1, 42
    %s445 = scalar_lea.vmem [#allocation0], %s444
    %446 = vst [vmem:[%s445] sm:%s443] %v442
    %s447 = scalar_lea.vmem [#allocation2], 344
    %v448 = vld [vmem:[%s447] sm:%s191]
    %s449 = sshllo.u32 0, 1
    %s450 = smul.addr 1, 43
    %s451 = scalar_lea.vmem [#allocation0], %s450
    %452 = vst [vmem:[%s451] sm:%s449] %v448
    %s453 = scalar_lea.vmem [#allocation2], 352
    %v454 = vld [vmem:[%s453] sm:%s191]
    %s455 = sshllo.u32 0, 1
    %s456 = smul.addr 1, 44
    %s457 = scalar_lea.vmem [#allocation0], %s456
    %458 = vst [vmem:[%s457] sm:%s455] %v454
    %s459 = scalar_lea.vmem [#allocation2], 360
    %v460 = vld [vmem:[%s459] sm:%s191]
    %s461 = sshllo.u32 0, 1
    %s462 = smul.addr 1, 45
    %s463 = scalar_lea.vmem [#allocation0], %s462
    %464 = vst [vmem:[%s463] sm:%s461] %v460
    %s465 = scalar_lea.vmem [#allocation2], 368
    %v466 = vld [vmem:[%s465] sm:%s191]
    %s467 = sshllo.u32 0, 1
    %s468 = smul.addr 1, 46
    %s469 = scalar_lea.vmem [#allocation0], %s468
    %470 = vst [vmem:[%s469] sm:%s467] %v466
    %s471 = scalar_lea.vmem [#allocation2], 376
    %v472 = vld [vmem:[%s471] sm:%s191]
    %s473 = sshllo.u32 0, 1
    %s474 = smul.addr 1, 47
    %s475 = scalar_lea.vmem [#allocation0], %s474
    %476 = vst [vmem:[%s475] sm:%s473] %v472
    %s477 = scalar_lea.vmem [#allocation2], 384
    %v478 = vld [vmem:[%s477] sm:%s191]
    %s479 = sshllo.u32 0, 1
    %s480 = smul.addr 1, 48
    %s481 = scalar_lea.vmem [#allocation0], %s480
    %482 = vst [vmem:[%s481] sm:%s479] %v478
    %s483 = scalar_lea.vmem [#allocation2], 392
    %v484 = vld [vmem:[%s483] sm:%s191]
    %s485 = sshllo.u32 0, 1
    %s486 = smul.addr 1, 49
    %s487 = scalar_lea.vmem [#allocation0], %s486
    %488 = vst [vmem:[%s487] sm:%s485] %v484
    %s489 = scalar_lea.vmem [#allocation2], 400
    %v490 = vld [vmem:[%s489] sm:%s191]
    %s491 = sshllo.u32 0, 1
    %s492 = smul.addr 1, 50
    %s493 = scalar_lea.vmem [#allocation0], %s492
    %494 = vst [vmem:[%s493] sm:%s491] %v490
    %s495 = scalar_lea.vmem [#allocation2], 408
    %v496 = vld [vmem:[%s495] sm:%s191]
    %s497 = sshllo.u32 0, 1
    %s498 = smul.addr 1, 51
    %s499 = scalar_lea.vmem [#allocation0], %s498
    %500 = vst [vmem:[%s499] sm:%s497] %v496
    %s501 = scalar_lea.vmem [#allocation2], 416
    %v502 = vld [vmem:[%s501] sm:%s191]
    %s503 = sshllo.u32 0, 1
    %s504 = smul.addr 1, 52
    %s505 = scalar_lea.vmem [#allocation0], %s504
    %506 = vst [vmem:[%s505] sm:%s503] %v502
    %s507 = scalar_lea.vmem [#allocation2], 424
    %v508 = vld [vmem:[%s507] sm:%s191]
    %s509 = sshllo.u32 0, 1
    %s510 = smul.addr 1, 53
    %s511 = scalar_lea.vmem [#allocation0], %s510
    %512 = vst [vmem:[%s511] sm:%s509] %v508
    %s513 = scalar_lea.vmem [#allocation2], 432
    %v514 = vld [vmem:[%s513] sm:%s191]
    %s515 = sshllo.u32 0, 1
    %s516 = smul.addr 1, 54
    %s517 = scalar_lea.vmem [#allocation0], %s516
    %518 = vst [vmem:[%s517] sm:%s515] %v514
    %s519 = scalar_lea.vmem [#allocation2], 440
    %v520 = vld [vmem:[%s519] sm:%s191]
    %s521 = sshllo.u32 0, 1
    %s522 = smul.addr 1, 55
    %s523 = scalar_lea.vmem [#allocation0], %s522
    %524 = vst [vmem:[%s523] sm:%s521] %v520
    %s525 = scalar_lea.vmem [#allocation2], 448
    %v526 = vld [vmem:[%s525] sm:%s191]
    %s527 = sshllo.u32 0, 1
    %s528 = smul.addr 1, 56
    %s529 = scalar_lea.vmem [#allocation0], %s528
    %530 = vst [vmem:[%s529] sm:%s527] %v526
    %s531 = scalar_lea.vmem [#allocation2], 456
    %v532 = vld [vmem:[%s531] sm:%s191]
    %s533 = sshllo.u32 0, 1
    %s534 = smul.addr 1, 57
    %s535 = scalar_lea.vmem [#allocation0], %s534
    %536 = vst [vmem:[%s535] sm:%s533] %v532
    %s537 = scalar_lea.vmem [#allocation2], 464
    %v538 = vld [vmem:[%s537] sm:%s191]
    %s539 = sshllo.u32 0, 1
    %s540 = smul.addr 1, 58
    %s541 = scalar_lea.vmem [#allocation0], %s540
    %542 = vst [vmem:[%s541] sm:%s539] %v538
    %s543 = scalar_lea.vmem [#allocation2], 472
    %v544 = vld [vmem:[%s543] sm:%s191]
    %s545 = sshllo.u32 0, 1
    %s546 = smul.addr 1, 59
    %s547 = scalar_lea.vmem [#allocation0], %s546
    %548 = vst [vmem:[%s547] sm:%s545] %v544
    %s549 = scalar_lea.vmem [#allocation2], 480
    %v550 = vld [vmem:[%s549] sm:%s191]
    %s551 = sshllo.u32 0, 1
    %s552 = smul.addr 1, 60
    %s553 = scalar_lea.vmem [#allocation0], %s552
    %554 = vst [vmem:[%s553] sm:%s551] %v550
    %s555 = scalar_lea.vmem [#allocation2], 488
    %v556 = vld [vmem:[%s555] sm:%s191]
    %s557 = sshllo.u32 0, 1
    %s558 = smul.addr 1, 61
    %s559 = scalar_lea.vmem [#allocation0], %s558
    %560 = vst [vmem:[%s559] sm:%s557] %v556
    %s561 = scalar_lea.vmem [#allocation2], 496
    %v562 = vld [vmem:[%s561] sm:%s191]
    %s563 = sshllo.u32 0, 1
    %s564 = smul.addr 1, 62
    %s565 = scalar_lea.vmem [#allocation0], %s564
    %566 = vst [vmem:[%s565] sm:%s563] %v562
    %s567 = scalar_lea.vmem [#allocation2], 504
    %v568 = vld [vmem:[%s567] sm:%s191]
    %s569 = sshllo.u32 0, 1
    %s570 = smul.addr 1, 63
    %s571 = scalar_lea.vmem [#allocation0], %s570
    %572 = vst [vmem:[%s571] sm:%s569] %v568
    %s573 = scalar_lea.vmem [#allocation2], 512
    %v574 = vld [vmem:[%s573] sm:%s191]
    %s575 = sshllo.u32 0, 1
    %s576 = smul.addr 1, 64
    %s577 = scalar_lea.vmem [#allocation0], %s576
    %578 = vst [vmem:[%s577] sm:%s575] %v574
    %s579 = scalar_lea.vmem [#allocation2], 520
    %v580 = vld [vmem:[%s579] sm:%s191]
    %s581 = sshllo.u32 0, 1
    %s582 = smul.addr 1, 65
    %s583 = scalar_lea.vmem [#allocation0], %s582
    %584 = vst [vmem:[%s583] sm:%s581] %v580
    %s585 = scalar_lea.vmem [#allocation2], 528
    %v586 = vld [vmem:[%s585] sm:%s191]
    %s587 = sshllo.u32 0, 1
    %s588 = smul.addr 1, 66
    %s589 = scalar_lea.vmem [#allocation0], %s588
    %590 = vst [vmem:[%s589] sm:%s587] %v586
    %s591 = scalar_lea.vmem [#allocation2], 536
    %v592 = vld [vmem:[%s591] sm:%s191]
    %s593 = sshllo.u32 0, 1
    %s594 = smul.addr 1, 67
    %s595 = scalar_lea.vmem [#allocation0], %s594
    %596 = vst [vmem:[%s595] sm:%s593] %v592
    %s597 = scalar_lea.vmem [#allocation2], 544
    %v598 = vld [vmem:[%s597] sm:%s191]
    %s599 = sshllo.u32 0, 1
    %s600 = smul.addr 1, 68
    %s601 = scalar_lea.vmem [#allocation0], %s600
    %602 = vst [vmem:[%s601] sm:%s599] %v598
    %s603 = scalar_lea.vmem [#allocation2], 552
    %v604 = vld [vmem:[%s603] sm:%s191]
    %s605 = sshllo.u32 0, 1
    %s606 = smul.addr 1, 69
    %s607 = scalar_lea.vmem [#allocation0], %s606
    %608 = vst [vmem:[%s607] sm:%s605] %v604
    %s609 = scalar_lea.vmem [#allocation2], 560
    %v610 = vld [vmem:[%s609] sm:%s191]
    %s611 = sshllo.u32 0, 1
    %s612 = smul.addr 1, 70
    %s613 = scalar_lea.vmem [#allocation0], %s612
    %614 = vst [vmem:[%s613] sm:%s611] %v610
    %s615 = scalar_lea.vmem [#allocation2], 568
    %v616 = vld [vmem:[%s615] sm:%s191]
    %s617 = sshllo.u32 0, 1
    %s618 = smul.addr 1, 71
    %s619 = scalar_lea.vmem [#allocation0], %s618
    %620 = vst [vmem:[%s619] sm:%s617] %v616
    %s621 = scalar_lea.vmem [#allocation2], 576
    %v622 = vld [vmem:[%s621] sm:%s191]
    %s623 = sshllo.u32 0, 1
    %s624 = smul.addr 1, 72
    %s625 = scalar_lea.vmem [#allocation0], %s624
    %626 = vst [vmem:[%s625] sm:%s623] %v622
    %s627 = scalar_lea.vmem [#allocation2], 584
    %v628 = vld [vmem:[%s627] sm:%s191]
    %s629 = sshllo.u32 0, 1
    %s630 = smul.addr 1, 73
    %s631 = scalar_lea.vmem [#allocation0], %s630
    %632 = vst [vmem:[%s631] sm:%s629] %v628
    %s633 = scalar_lea.vmem [#allocation2], 592
    %v634 = vld [vmem:[%s633] sm:%s191]
    %s635 = sshllo.u32 0, 1
    %s636 = smul.addr 1, 74
    %s637 = scalar_lea.vmem [#allocation0], %s636
    %638 = vst [vmem:[%s637] sm:%s635] %v634
    %s639 = scalar_lea.vmem [#allocation2], 600
    %v640 = vld [vmem:[%s639] sm:%s191]
    %s641 = sshllo.u32 0, 1
    %s642 = smul.addr 1, 75
    %s643 = scalar_lea.vmem [#allocation0], %s642
    %644 = vst [vmem:[%s643] sm:%s641] %v640
    %s645 = scalar_lea.vmem [#allocation2], 608
    %v646 = vld [vmem:[%s645] sm:%s191]
    %s647 = sshllo.u32 0, 1
    %s648 = smul.addr 1, 76
    %s649 = scalar_lea.vmem [#allocation0], %s648
    %650 = vst [vmem:[%s649] sm:%s647] %v646
    %s651 = scalar_lea.vmem [#allocation2], 616
    %v652 = vld [vmem:[%s651] sm:%s191]
    %s653 = sshllo.u32 0, 1
    %s654 = smul.addr 1, 77
    %s655 = scalar_lea.vmem [#allocation0], %s654
    %656 = vst [vmem:[%s655] sm:%s653] %v652
    %s657 = scalar_lea.vmem [#allocation2], 624
    %v658 = vld [vmem:[%s657] sm:%s191]
    %s659 = sshllo.u32 0, 1
    %s660 = smul.addr 1, 78
    %s661 = scalar_lea.vmem [#allocation0], %s660
    %662 = vst [vmem:[%s661] sm:%s659] %v658
    %s663 = scalar_lea.vmem [#allocation2], 632
    %v664 = vld [vmem:[%s663] sm:%s191]
    %s665 = sshllo.u32 0, 1
    %s666 = smul.addr 1, 79
    %s667 = scalar_lea.vmem [#allocation0], %s666
    %668 = vst [vmem:[%s667] sm:%s665] %v664
    %s669 = scalar_lea.vmem [#allocation2], 640
    %v670 = vld [vmem:[%s669] sm:%s191]
    %s671 = sshllo.u32 0, 1
    %s672 = smul.addr 1, 80
    %s673 = scalar_lea.vmem [#allocation0], %s672
    %674 = vst [vmem:[%s673] sm:%s671] %v670
    %s675 = scalar_lea.vmem [#allocation2], 648
    %v676 = vld [vmem:[%s675] sm:%s191]
    %s677 = sshllo.u32 0, 1
    %s678 = smul.addr 1, 81
    %s679 = scalar_lea.vmem [#allocation0], %s678
    %680 = vst [vmem:[%s679] sm:%s677] %v676
    %s681 = scalar_lea.vmem [#allocation2], 656
    %v682 = vld [vmem:[%s681] sm:%s191]
    %s683 = sshllo.u32 0, 1
    %s684 = smul.addr 1, 82
    %s685 = scalar_lea.vmem [#allocation0], %s684
    %686 = vst [vmem:[%s685] sm:%s683] %v682
    %s687 = scalar_lea.vmem [#allocation2], 664
    %v688 = vld [vmem:[%s687] sm:%s191]
    %s689 = sshllo.u32 0, 1
    %s690 = smul.addr 1, 83
    %s691 = scalar_lea.vmem [#allocation0], %s690
    %692 = vst [vmem:[%s691] sm:%s689] %v688
    %s693 = scalar_lea.vmem [#allocation2], 672
    %v694 = vld [vmem:[%s693] sm:%s191]
    %s695 = sshllo.u32 0, 1
    %s696 = smul.addr 1, 84
    %s697 = scalar_lea.vmem [#allocation0], %s696
    %698 = vst [vmem:[%s697] sm:%s695] %v694
    %s699 = scalar_lea.vmem [#allocation2], 680
    %v700 = vld [vmem:[%s699] sm:%s191]
    %s701 = sshllo.u32 0, 1
    %s702 = smul.addr 1, 85
    %s703 = scalar_lea.vmem [#allocation0], %s702
    %704 = vst [vmem:[%s703] sm:%s701] %v700
    %s705 = scalar_lea.vmem [#allocation2], 688
    %v706 = vld [vmem:[%s705] sm:%s191]
    %s707 = sshllo.u32 0, 1
    %s708 = smul.addr 1, 86
    %s709 = scalar_lea.vmem [#allocation0], %s708
    %710 = vst [vmem:[%s709] sm:%s707] %v706
    %s711 = scalar_lea.vmem [#allocation2], 696
    %v712 = vld [vmem:[%s711] sm:%s191]
    %s713 = sshllo.u32 0, 1
    %s714 = smul.addr 1, 87
    %s715 = scalar_lea.vmem [#allocation0], %s714
    %716 = vst [vmem:[%s715] sm:%s713] %v712
    %s717 = scalar_lea.vmem [#allocation2], 704
    %v718 = vld [vmem:[%s717] sm:%s191]
    %s719 = sshllo.u32 0, 1
    %s720 = smul.addr 1, 88
    %s721 = scalar_lea.vmem [#allocation0], %s720
    %722 = vst [vmem:[%s721] sm:%s719] %v718
    %s723 = scalar_lea.vmem [#allocation2], 712
    %v724 = vld [vmem:[%s723] sm:%s191]
    %s725 = sshllo.u32 0, 1
    %s726 = smul.addr 1, 89
    %s727 = scalar_lea.vmem [#allocation0], %s726
    %728 = vst [vmem:[%s727] sm:%s725] %v724
    %s729 = scalar_lea.vmem [#allocation2], 720
    %v730 = vld [vmem:[%s729] sm:%s191]
    %s731 = sshllo.u32 0, 1
    %s732 = smul.addr 1, 90
    %s733 = scalar_lea.vmem [#allocation0], %s732
    %734 = vst [vmem:[%s733] sm:%s731] %v730
    %s735 = scalar_lea.vmem [#allocation2], 728
    %v736 = vld [vmem:[%s735] sm:%s191]
    %s737 = sshllo.u32 0, 1
    %s738 = smul.addr 1, 91
    %s739 = scalar_lea.vmem [#allocation0], %s738
    %740 = vst [vmem:[%s739] sm:%s737] %v736
    %s741 = scalar_lea.vmem [#allocation2], 736
    %v742 = vld [vmem:[%s741] sm:%s191]
    %s743 = sshllo.u32 0, 1
    %s744 = smul.addr 1, 92
    %s745 = scalar_lea.vmem [#allocation0], %s744
    %746 = vst [vmem:[%s745] sm:%s743] %v742
    %s747 = scalar_lea.vmem [#allocation2], 744
    %v748 = vld [vmem:[%s747] sm:%s191]
    %s749 = sshllo.u32 0, 1
    %s750 = smul.addr 1, 93
    %s751 = scalar_lea.vmem [#allocation0], %s750
    %752 = vst [vmem:[%s751] sm:%s749] %v748
    %s753 = scalar_lea.vmem [#allocation2], 752
    %v754 = vld [vmem:[%s753] sm:%s191]
    %s755 = sshllo.u32 0, 1
    %s756 = smul.addr 1, 94
    %s757 = scalar_lea.vmem [#allocation0], %s756
    %758 = vst [vmem:[%s757] sm:%s755] %v754
    %s759 = scalar_lea.vmem [#allocation2], 760
    %v760 = vld [vmem:[%s759] sm:%s191]
    %s761 = sshllo.u32 0, 1
    %s762 = smul.addr 1, 95
    %s763 = scalar_lea.vmem [#allocation0], %s762
    %764 = vst [vmem:[%s763] sm:%s761] %v760
    %s765 = scalar_lea.vmem [#allocation2], 768
    %v766 = vld [vmem:[%s765] sm:%s191]
    %s767 = sshllo.u32 0, 1
    %s768 = smul.addr 1, 96
    %s769 = scalar_lea.vmem [#allocation0], %s768
    %770 = vst [vmem:[%s769] sm:%s767] %v766
    %s771 = scalar_lea.vmem [#allocation2], 776
    %v772 = vld [vmem:[%s771] sm:%s191]
    %s773 = sshllo.u32 0, 1
    %s774 = smul.addr 1, 97
    %s775 = scalar_lea.vmem [#allocation0], %s774
    %776 = vst [vmem:[%s775] sm:%s773] %v772
    %s777 = scalar_lea.vmem [#allocation2], 784
    %v778 = vld [vmem:[%s777] sm:%s191]
    %s779 = sshllo.u32 0, 1
    %s780 = smul.addr 1, 98
    %s781 = scalar_lea.vmem [#allocation0], %s780
    %782 = vst [vmem:[%s781] sm:%s779] %v778
    %s783 = scalar_lea.vmem [#allocation2], 792
    %v784 = vld [vmem:[%s783] sm:%s191]
    %s785 = sshllo.u32 0, 1
    %s786 = smul.addr 1, 99
    %s787 = scalar_lea.vmem [#allocation0], %s786
    %788 = vst [vmem:[%s787] sm:%s785] %v784
    %s789 = scalar_lea.vmem [#allocation2], 800
    %v790 = vld [vmem:[%s789] sm:%s191]
    %s791 = sshllo.u32 0, 1
    %s792 = smul.addr 1, 100
    %s793 = scalar_lea.vmem [#allocation0], %s792
    %794 = vst [vmem:[%s793] sm:%s791] %v790
    %s795 = scalar_lea.vmem [#allocation2], 808
    %v796 = vld [vmem:[%s795] sm:%s191]
    %s797 = sshllo.u32 0, 1
    %s798 = smul.addr 1, 101
    %s799 = scalar_lea.vmem [#allocation0], %s798
    %800 = vst [vmem:[%s799] sm:%s797] %v796
    %s801 = scalar_lea.vmem [#allocation2], 816
    %v802 = vld [vmem:[%s801] sm:%s191]
    %s803 = sshllo.u32 0, 1
    %s804 = smul.addr 1, 102
    %s805 = scalar_lea.vmem [#allocation0], %s804
    %806 = vst [vmem:[%s805] sm:%s803] %v802
    %s807 = scalar_lea.vmem [#allocation2], 824
    %v808 = vld [vmem:[%s807] sm:%s191]
    %s809 = sshllo.u32 0, 1
    %s810 = smul.addr 1, 103
    %s811 = scalar_lea.vmem [#allocation0], %s810
    %812 = vst [vmem:[%s811] sm:%s809] %v808
    %s813 = scalar_lea.vmem [#allocation2], 832
    %v814 = vld [vmem:[%s813] sm:%s191]
    %s815 = sshllo.u32 0, 1
    %s816 = smul.addr 1, 104
    %s817 = scalar_lea.vmem [#allocation0], %s816
    %818 = vst [vmem:[%s817] sm:%s815] %v814
    %s819 = scalar_lea.vmem [#allocation2], 840
    %v820 = vld [vmem:[%s819] sm:%s191]
    %s821 = sshllo.u32 0, 1
    %s822 = smul.addr 1, 105
    %s823 = scalar_lea.vmem [#allocation0], %s822
    %824 = vst [vmem:[%s823] sm:%s821] %v820
    %s825 = scalar_lea.vmem [#allocation2], 848
    %v826 = vld [vmem:[%s825] sm:%s191]
    %s827 = sshllo.u32 0, 1
    %s828 = smul.addr 1, 106
    %s829 = scalar_lea.vmem [#allocation0], %s828
    %830 = vst [vmem:[%s829] sm:%s827] %v826
    %s831 = scalar_lea.vmem [#allocation2], 856
    %v832 = vld [vmem:[%s831] sm:%s191]
    %s833 = sshllo.u32 0, 1
    %s834 = smul.addr 1, 107
    %s835 = scalar_lea.vmem [#allocation0], %s834
    %836 = vst [vmem:[%s835] sm:%s833] %v832
    %s837 = scalar_lea.vmem [#allocation2], 864
    %v838 = vld [vmem:[%s837] sm:%s191]
    %s839 = sshllo.u32 0, 1
    %s840 = smul.addr 1, 108
    %s841 = scalar_lea.vmem [#allocation0], %s840
    %842 = vst [vmem:[%s841] sm:%s839] %v838
    %s843 = scalar_lea.vmem [#allocation2], 872
    %v844 = vld [vmem:[%s843] sm:%s191]
    %s845 = sshllo.u32 0, 1
    %s846 = smul.addr 1, 109
    %s847 = scalar_lea.vmem [#allocation0], %s846
    %848 = vst [vmem:[%s847] sm:%s845] %v844
    %s849 = scalar_lea.vmem [#allocation2], 880
    %v850 = vld [vmem:[%s849] sm:%s191]
    %s851 = sshllo.u32 0, 1
    %s852 = smul.addr 1, 110
    %s853 = scalar_lea.vmem [#allocation0], %s852
    %854 = vst [vmem:[%s853] sm:%s851] %v850
    %s855 = scalar_lea.vmem [#allocation2], 888
    %v856 = vld [vmem:[%s855] sm:%s191]
    %s857 = sshllo.u32 0, 1
    %s858 = smul.addr 1, 111
    %s859 = scalar_lea.vmem [#allocation0], %s858
    %860 = vst [vmem:[%s859] sm:%s857] %v856
    %s861 = scalar_lea.vmem [#allocation2], 896
    %v862 = vld [vmem:[%s861] sm:%s191]
    %s863 = sshllo.u32 0, 1
    %s864 = smul.addr 1, 112
    %s865 = scalar_lea.vmem [#allocation0], %s864
    %866 = vst [vmem:[%s865] sm:%s863] %v862
    %s867 = scalar_lea.vmem [#allocation2], 904
    %v868 = vld [vmem:[%s867] sm:%s191]
    %s869 = sshllo.u32 0, 1
    %s870 = smul.addr 1, 113
    %s871 = scalar_lea.vmem [#allocation0], %s870
    %872 = vst [vmem:[%s871] sm:%s869] %v868
    %s873 = scalar_lea.vmem [#allocation2], 912
    %v874 = vld [vmem:[%s873] sm:%s191]
    %s875 = sshllo.u32 0, 1
    %s876 = smul.addr 1, 114
    %s877 = scalar_lea.vmem [#allocation0], %s876
    %878 = vst [vmem:[%s877] sm:%s875] %v874
    %s879 = scalar_lea.vmem [#allocation2], 920
    %v880 = vld [vmem:[%s879] sm:%s191]
    %s881 = sshllo.u32 0, 1
    %s882 = smul.addr 1, 115
    %s883 = scalar_lea.vmem [#allocation0], %s882
    %884 = vst [vmem:[%s883] sm:%s881] %v880
    %s885 = scalar_lea.vmem [#allocation2], 928
    %v886 = vld [vmem:[%s885] sm:%s191]
    %s887 = sshllo.u32 0, 1
    %s888 = smul.addr 1, 116
    %s889 = scalar_lea.vmem [#allocation0], %s888
    %890 = vst [vmem:[%s889] sm:%s887] %v886
    %s891 = scalar_lea.vmem [#allocation2], 936
    %v892 = vld [vmem:[%s891] sm:%s191]
    %s893 = sshllo.u32 0, 1
    %s894 = smul.addr 1, 117
    %s895 = scalar_lea.vmem [#allocation0], %s894
    %896 = vst [vmem:[%s895] sm:%s893] %v892
    %s897 = scalar_lea.vmem [#allocation2], 944
    %v898 = vld [vmem:[%s897] sm:%s191]
    %s899 = sshllo.u32 0, 1
    %s900 = smul.addr 1, 118
    %s901 = scalar_lea.vmem [#allocation0], %s900
    %902 = vst [vmem:[%s901] sm:%s899] %v898
    %s903 = scalar_lea.vmem [#allocation2], 952
    %v904 = vld [vmem:[%s903] sm:%s191]
    %s905 = sshllo.u32 0, 1
    %s906 = smul.addr 1, 119
    %s907 = scalar_lea.vmem [#allocation0], %s906
    %908 = vst [vmem:[%s907] sm:%s905] %v904
    %s909 = scalar_lea.vmem [#allocation2], 960
    %v910 = vld [vmem:[%s909] sm:%s191]
    %s911 = sshllo.u32 0, 1
    %s912 = smul.addr 1, 120
    %s913 = scalar_lea.vmem [#allocation0], %s912
    %914 = vst [vmem:[%s913] sm:%s911] %v910
    %s915 = scalar_lea.vmem [#allocation2], 968
    %v916 = vld [vmem:[%s915] sm:%s191]
    %s917 = sshllo.u32 0, 1
    %s918 = smul.addr 1, 121
    %s919 = scalar_lea.vmem [#allocation0], %s918
    %920 = vst [vmem:[%s919] sm:%s917] %v916
    %s921 = scalar_lea.vmem [#allocation2], 976
    %v922 = vld [vmem:[%s921] sm:%s191]
    %s923 = sshllo.u32 0, 1
    %s924 = smul.addr 1, 122
    %s925 = scalar_lea.vmem [#allocation0], %s924
    %926 = vst [vmem:[%s925] sm:%s923] %v922
    %s927 = scalar_lea.vmem [#allocation2], 984
    %v928 = vld [vmem:[%s927] sm:%s191]
    %s929 = sshllo.u32 0, 1
    %s930 = smul.addr 1, 123
    %s931 = scalar_lea.vmem [#allocation0], %s930
    %932 = vst [vmem:[%s931] sm:%s929] %v928
    %s933 = scalar_lea.vmem [#allocation2], 992
    %v934 = vld [vmem:[%s933] sm:%s191]
    %s935 = sshllo.u32 0, 1
    %s936 = smul.addr 1, 124
    %s937 = scalar_lea.vmem [#allocation0], %s936
    %938 = vst [vmem:[%s937] sm:%s935] %v934
    %s939 = scalar_lea.vmem [#allocation2], 1000
    %v940 = vld [vmem:[%s939] sm:%s191]
    %s941 = sshllo.u32 0, 1
    %s942 = smul.addr 1, 125
    %s943 = scalar_lea.vmem [#allocation0], %s942
    %944 = vst [vmem:[%s943] sm:%s941] %v940
    %s945 = scalar_lea.vmem [#allocation2], 1008
    %v946 = vld [vmem:[%s945] sm:%s191]
    %s947 = sshllo.u32 0, 1
    %s948 = smul.addr 1, 126
    %s949 = scalar_lea.vmem [#allocation0], %s948
    %950 = vst [vmem:[%s949] sm:%s947] %v946
    %s951 = scalar_lea.vmem [#allocation2], 1016
    %v952 = vld [vmem:[%s951] sm:%s191]
    %s953 = sshllo.u32 0, 1
    %s954 = smul.addr 1, 127
    %s955 = scalar_lea.vmem [#allocation0], %s954
    %956 = vst [vmem:[%s955] sm:%s953] %v952
    %s957 = scalar_lea.vmem [#allocation2], 1024
    %v958 = vld [vmem:[%s957] sm:%s191]
    %s959 = sshllo.u32 0, 1
    %s960 = smul.addr 1, 128
    %s961 = scalar_lea.vmem [#allocation0], %s960
    %962 = vst [vmem:[%s961] sm:%s959] %v958
    %s963 = scalar_lea.vmem [#allocation2], 1032
    %v964 = vld [vmem:[%s963] sm:%s191]
    %s965 = sshllo.u32 0, 1
    %s966 = smul.addr 1, 129
    %s967 = scalar_lea.vmem [#allocation0], %s966
    %968 = vst [vmem:[%s967] sm:%s965] %v964
    %s969 = scalar_lea.vmem [#allocation2], 1040
    %v970 = vld [vmem:[%s969] sm:%s191]
    %s971 = sshllo.u32 0, 1
    %s972 = smul.addr 1, 130
    %s973 = scalar_lea.vmem [#allocation0], %s972
    %974 = vst [vmem:[%s973] sm:%s971] %v970
    %s975 = scalar_lea.vmem [#allocation2], 1048
    %v976 = vld [vmem:[%s975] sm:%s191]
    %s977 = sshllo.u32 0, 1
    %s978 = smul.addr 1, 131
    %s979 = scalar_lea.vmem [#allocation0], %s978
    %980 = vst [vmem:[%s979] sm:%s977] %v976
    %s981 = scalar_lea.vmem [#allocation2], 1056
    %v982 = vld [vmem:[%s981] sm:%s191]
    %s983 = sshllo.u32 0, 1
    %s984 = smul.addr 1, 132
    %s985 = scalar_lea.vmem [#allocation0], %s984
    %986 = vst [vmem:[%s985] sm:%s983] %v982
    %s987 = scalar_lea.vmem [#allocation2], 1064
    %v988 = vld [vmem:[%s987] sm:%s191]
    %s989 = sshllo.u32 0, 1
    %s990 = smul.addr 1, 133
    %s991 = scalar_lea.vmem [#allocation0], %s990
    %992 = vst [vmem:[%s991] sm:%s989] %v988
    %s993 = scalar_lea.vmem [#allocation2], 1072
    %v994 = vld [vmem:[%s993] sm:%s191]
    %s995 = sshllo.u32 0, 1
    %s996 = smul.addr 1, 134
    %s997 = scalar_lea.vmem [#allocation0], %s996
    %998 = vst [vmem:[%s997] sm:%s995] %v994
    %s999 = scalar_lea.vmem [#allocation2], 1080
    %v1000 = vld [vmem:[%s999] sm:%s191]
    %s1001 = sshllo.u32 0, 1
    %s1002 = smul.addr 1, 135
    %s1003 = scalar_lea.vmem [#allocation0], %s1002
    %1004 = vst [vmem:[%s1003] sm:%s1001] %v1000
    %s1005 = scalar_lea.vmem [#allocation2], 1088
    %v1006 = vld [vmem:[%s1005] sm:%s191]
    %s1007 = sshllo.u32 0, 1
    %s1008 = smul.addr 1, 136
    %s1009 = scalar_lea.vmem [#allocation0], %s1008
    %1010 = vst [vmem:[%s1009] sm:%s1007] %v1006
    %s1011 = scalar_lea.vmem [#allocation2], 1096
    %v1012 = vld [vmem:[%s1011] sm:%s191]
    %s1013 = sshllo.u32 0, 1
    %s1014 = smul.addr 1, 137
    %s1015 = scalar_lea.vmem [#allocation0], %s1014
    %1016 = vst [vmem:[%s1015] sm:%s1013] %v1012
    %s1017 = scalar_lea.vmem [#allocation2], 1104
    %v1018 = vld [vmem:[%s1017] sm:%s191]
    %s1019 = sshllo.u32 0, 1
    %s1020 = smul.addr 1, 138
    %s1021 = scalar_lea.vmem [#allocation0], %s1020
    %1022 = vst [vmem:[%s1021] sm:%s1019] %v1018
    %s1023 = scalar_lea.vmem [#allocation2], 1112
    %v1024 = vld [vmem:[%s1023] sm:%s191]
    %s1025 = sshllo.u32 0, 1
    %s1026 = smul.addr 1, 139
    %s1027 = scalar_lea.vmem [#allocation0], %s1026
    %1028 = vst [vmem:[%s1027] sm:%s1025] %v1024
    %s1029 = scalar_lea.vmem [#allocation2], 1120
    %v1030 = vld [vmem:[%s1029] sm:%s191]
    %s1031 = sshllo.u32 0, 1
    %s1032 = smul.addr 1, 140
    %s1033 = scalar_lea.vmem [#allocation0], %s1032
    %1034 = vst [vmem:[%s1033] sm:%s1031] %v1030
    %s1035 = scalar_lea.vmem [#allocation2], 1128
    %v1036 = vld [vmem:[%s1035] sm:%s191]
    %s1037 = sshllo.u32 0, 1
    %s1038 = smul.addr 1, 141
    %s1039 = scalar_lea.vmem [#allocation0], %s1038
    %1040 = vst [vmem:[%s1039] sm:%s1037] %v1036
    %s1041 = scalar_lea.vmem [#allocation2], 1136
    %v1042 = vld [vmem:[%s1041] sm:%s191]
    %s1043 = sshllo.u32 0, 1
    %s1044 = smul.addr 1, 142
    %s1045 = scalar_lea.vmem [#allocation0], %s1044
    %1046 = vst [vmem:[%s1045] sm:%s1043] %v1042
    %s1047 = scalar_lea.vmem [#allocation2], 1144
    %v1048 = vld [vmem:[%s1047] sm:%s191]
    %s1049 = sshllo.u32 0, 1
    %s1050 = smul.addr 1, 143
    %s1051 = scalar_lea.vmem [#allocation0], %s1050
    %1052 = vst [vmem:[%s1051] sm:%s1049] %v1048
    %s1053 = scalar_lea.vmem [#allocation2], 1152
    %v1054 = vld [vmem:[%s1053] sm:%s191]
    %s1055 = sshllo.u32 0, 1
    %s1056 = smul.addr 1, 144
    %s1057 = scalar_lea.vmem [#allocation0], %s1056
    %1058 = vst [vmem:[%s1057] sm:%s1055] %v1054
    %s1059 = scalar_lea.vmem [#allocation2], 1160
    %v1060 = vld [vmem:[%s1059] sm:%s191]
    %s1061 = sshllo.u32 0, 1
    %s1062 = smul.addr 1, 145
    %s1063 = scalar_lea.vmem [#allocation0], %s1062
    %1064 = vst [vmem:[%s1063] sm:%s1061] %v1060
    %s1065 = scalar_lea.vmem [#allocation2], 1168
    %v1066 = vld [vmem:[%s1065] sm:%s191]
    %s1067 = sshllo.u32 0, 1
    %s1068 = smul.addr 1, 146
    %s1069 = scalar_lea.vmem [#allocation0], %s1068
    %1070 = vst [vmem:[%s1069] sm:%s1067] %v1066
    %s1071 = scalar_lea.vmem [#allocation2], 1176
    %v1072 = vld [vmem:[%s1071] sm:%s191]
    %s1073 = sshllo.u32 0, 1
    %s1074 = smul.addr 1, 147
    %s1075 = scalar_lea.vmem [#allocation0], %s1074
    %1076 = vst [vmem:[%s1075] sm:%s1073] %v1072
    %s1077 = scalar_lea.vmem [#allocation2], 1184
    %v1078 = vld [vmem:[%s1077] sm:%s191]
    %s1079 = sshllo.u32 0, 1
    %s1080 = smul.addr 1, 148
    %s1081 = scalar_lea.vmem [#allocation0], %s1080
    %1082 = vst [vmem:[%s1081] sm:%s1079] %v1078
    %s1083 = scalar_lea.vmem [#allocation2], 1192
    %v1084 = vld [vmem:[%s1083] sm:%s191]
    %s1085 = sshllo.u32 0, 1
    %s1086 = smul.addr 1, 149
    %s1087 = scalar_lea.vmem [#allocation0], %s1086
    %1088 = vst [vmem:[%s1087] sm:%s1085] %v1084
    %s1089 = scalar_lea.vmem [#allocation2], 1200
    %v1090 = vld [vmem:[%s1089] sm:%s191]
    %s1091 = sshllo.u32 0, 1
    %s1092 = smul.addr 1, 150
    %s1093 = scalar_lea.vmem [#allocation0], %s1092
    %1094 = vst [vmem:[%s1093] sm:%s1091] %v1090
    %s1095 = scalar_lea.vmem [#allocation2], 1208
    %v1096 = vld [vmem:[%s1095] sm:%s191]
    %s1097 = sshllo.u32 0, 1
    %s1098 = smul.addr 1, 151
    %s1099 = scalar_lea.vmem [#allocation0], %s1098
    %1100 = vst [vmem:[%s1099] sm:%s1097] %v1096
    %s1101 = scalar_lea.vmem [#allocation2], 1216
    %v1102 = vld [vmem:[%s1101] sm:%s191]
    %s1103 = sshllo.u32 0, 1
    %s1104 = smul.addr 1, 152
    %s1105 = scalar_lea.vmem [#allocation0], %s1104
    %1106 = vst [vmem:[%s1105] sm:%s1103] %v1102
    %s1107 = scalar_lea.vmem [#allocation2], 1224
    %v1108 = vld [vmem:[%s1107] sm:%s191]
    %s1109 = sshllo.u32 0, 1
    %s1110 = smul.addr 1, 153
    %s1111 = scalar_lea.vmem [#allocation0], %s1110
    %1112 = vst [vmem:[%s1111] sm:%s1109] %v1108
    %s1113 = scalar_lea.vmem [#allocation2], 1232
    %v1114 = vld [vmem:[%s1113] sm:%s191]
    %s1115 = sshllo.u32 0, 1
    %s1116 = smul.addr 1, 154
    %s1117 = scalar_lea.vmem [#allocation0], %s1116
    %1118 = vst [vmem:[%s1117] sm:%s1115] %v1114
    %s1119 = scalar_lea.vmem [#allocation2], 1240
    %v1120 = vld [vmem:[%s1119] sm:%s191]
    %s1121 = sshllo.u32 0, 1
    %s1122 = smul.addr 1, 155
    %s1123 = scalar_lea.vmem [#allocation0], %s1122
    %1124 = vst [vmem:[%s1123] sm:%s1121] %v1120
    %s1125 = scalar_lea.vmem [#allocation2], 1248
    %v1126 = vld [vmem:[%s1125] sm:%s191]
    %s1127 = sshllo.u32 0, 1
    %s1128 = smul.addr 1, 156
    %s1129 = scalar_lea.vmem [#allocation0], %s1128
    %1130 = vst [vmem:[%s1129] sm:%s1127] %v1126
    %s1131 = scalar_lea.vmem [#allocation2], 1256
    %v1132 = vld [vmem:[%s1131] sm:%s191]
    %s1133 = sshllo.u32 0, 1
    %s1134 = smul.addr 1, 157
    %s1135 = scalar_lea.vmem [#allocation0], %s1134
    %1136 = vst [vmem:[%s1135] sm:%s1133] %v1132
    %s1137 = scalar_lea.vmem [#allocation2], 1264
    %v1138 = vld [vmem:[%s1137] sm:%s191]
    %s1139 = sshllo.u32 0, 1
    %s1140 = smul.addr 1, 158
    %s1141 = scalar_lea.vmem [#allocation0], %s1140
    %1142 = vst [vmem:[%s1141] sm:%s1139] %v1138
    %s1143 = scalar_lea.vmem [#allocation2], 1272
    %v1144 = vld [vmem:[%s1143] sm:%s191]
    %s1145 = sshllo.u32 0, 1
    %s1146 = smul.addr 1, 159
    %s1147 = scalar_lea.vmem [#allocation0], %s1146
    %1148 = vst [vmem:[%s1147] sm:%s1145] %v1144
    %s1149 = scalar_lea.vmem [#allocation2], 1280
    %v1150 = vld [vmem:[%s1149] sm:%s191]
    %s1151 = sshllo.u32 0, 1
    %s1152 = smul.addr 1, 160
    %s1153 = scalar_lea.vmem [#allocation0], %s1152
    %1154 = vst [vmem:[%s1153] sm:%s1151] %v1150
    %s1155 = scalar_lea.vmem [#allocation2], 1288
    %v1156 = vld [vmem:[%s1155] sm:%s191]
    %s1157 = sshllo.u32 0, 1
    %s1158 = smul.addr 1, 161
    %s1159 = scalar_lea.vmem [#allocation0], %s1158
    %1160 = vst [vmem:[%s1159] sm:%s1157] %v1156
    %s1161 = scalar_lea.vmem [#allocation2], 1296
    %v1162 = vld [vmem:[%s1161] sm:%s191]
    %s1163 = sshllo.u32 0, 1
    %s1164 = smul.addr 1, 162
    %s1165 = scalar_lea.vmem [#allocation0], %s1164
    %1166 = vst [vmem:[%s1165] sm:%s1163] %v1162
    %s1167 = scalar_lea.vmem [#allocation2], 1304
    %v1168 = vld [vmem:[%s1167] sm:%s191]
    %s1169 = sshllo.u32 0, 1
    %s1170 = smul.addr 1, 163
    %s1171 = scalar_lea.vmem [#allocation0], %s1170
    %1172 = vst [vmem:[%s1171] sm:%s1169] %v1168
    %s1173 = scalar_lea.vmem [#allocation2], 1312
    %v1174 = vld [vmem:[%s1173] sm:%s191]
    %s1175 = sshllo.u32 0, 1
    %s1176 = smul.addr 1, 164
    %s1177 = scalar_lea.vmem [#allocation0], %s1176
    %1178 = vst [vmem:[%s1177] sm:%s1175] %v1174
    %s1179 = scalar_lea.vmem [#allocation2], 1320
    %v1180 = vld [vmem:[%s1179] sm:%s191]
    %s1181 = sshllo.u32 0, 1
    %s1182 = smul.addr 1, 165
    %s1183 = scalar_lea.vmem [#allocation0], %s1182
    %1184 = vst [vmem:[%s1183] sm:%s1181] %v1180
    %s1185 = scalar_lea.vmem [#allocation2], 1328
    %v1186 = vld [vmem:[%s1185] sm:%s191]
    %s1187 = sshllo.u32 0, 1
    %s1188 = smul.addr 1, 166
    %s1189 = scalar_lea.vmem [#allocation0], %s1188
    %1190 = vst [vmem:[%s1189] sm:%s1187] %v1186
    %s1191 = scalar_lea.vmem [#allocation2], 1336
    %v1192 = vld [vmem:[%s1191] sm:%s191]
    %s1193 = sshllo.u32 0, 1
    %s1194 = smul.addr 1, 167
    %s1195 = scalar_lea.vmem [#allocation0], %s1194
    %1196 = vst [vmem:[%s1195] sm:%s1193] %v1192
    %s1197 = scalar_lea.vmem [#allocation2], 1344
    %v1198 = vld [vmem:[%s1197] sm:%s191]
    %s1199 = sshllo.u32 0, 1
    %s1200 = smul.addr 1, 168
    %s1201 = scalar_lea.vmem [#allocation0], %s1200
    %1202 = vst [vmem:[%s1201] sm:%s1199] %v1198
    %s1203 = scalar_lea.vmem [#allocation2], 1352
    %v1204 = vld [vmem:[%s1203] sm:%s191]
    %s1205 = sshllo.u32 0, 1
    %s1206 = smul.addr 1, 169
    %s1207 = scalar_lea.vmem [#allocation0], %s1206
    %1208 = vst [vmem:[%s1207] sm:%s1205] %v1204
    %s1209 = scalar_lea.vmem [#allocation2], 1360
    %v1210 = vld [vmem:[%s1209] sm:%s191]
    %s1211 = sshllo.u32 0, 1
    %s1212 = smul.addr 1, 170
    %s1213 = scalar_lea.vmem [#allocation0], %s1212
    %1214 = vst [vmem:[%s1213] sm:%s1211] %v1210
    %s1215 = scalar_lea.vmem [#allocation2], 1368
    %v1216 = vld [vmem:[%s1215] sm:%s191]
    %s1217 = sshllo.u32 0, 1
    %s1218 = smul.addr 1, 171
    %s1219 = scalar_lea.vmem [#allocation0], %s1218
    %1220 = vst [vmem:[%s1219] sm:%s1217] %v1216
    %s1221 = scalar_lea.vmem [#allocation2], 1376
    %v1222 = vld [vmem:[%s1221] sm:%s191]
    %s1223 = sshllo.u32 0, 1
    %s1224 = smul.addr 1, 172
    %s1225 = scalar_lea.vmem [#allocation0], %s1224
    %1226 = vst [vmem:[%s1225] sm:%s1223] %v1222
    %s1227 = scalar_lea.vmem [#allocation2], 1384
    %v1228 = vld [vmem:[%s1227] sm:%s191]
    %s1229 = sshllo.u32 0, 1
    %s1230 = smul.addr 1, 173
    %s1231 = scalar_lea.vmem [#allocation0], %s1230
    %1232 = vst [vmem:[%s1231] sm:%s1229] %v1228
    %s1233 = scalar_lea.vmem [#allocation2], 1392
    %v1234 = vld [vmem:[%s1233] sm:%s191]
    %s1235 = sshllo.u32 0, 1
    %s1236 = smul.addr 1, 174
    %s1237 = scalar_lea.vmem [#allocation0], %s1236
    %1238 = vst [vmem:[%s1237] sm:%s1235] %v1234
    %s1239 = scalar_lea.vmem [#allocation2], 1400
    %v1240 = vld [vmem:[%s1239] sm:%s191]
    %s1241 = sshllo.u32 0, 1
    %s1242 = smul.addr 1, 175
    %s1243 = scalar_lea.vmem [#allocation0], %s1242
    %1244 = vst [vmem:[%s1243] sm:%s1241] %v1240
    %s1245 = scalar_lea.vmem [#allocation2], 1408
    %v1246 = vld [vmem:[%s1245] sm:%s191]
    %s1247 = sshllo.u32 0, 1
    %s1248 = smul.addr 1, 176
    %s1249 = scalar_lea.vmem [#allocation0], %s1248
    %1250 = vst [vmem:[%s1249] sm:%s1247] %v1246
    %s1251 = scalar_lea.vmem [#allocation2], 1416
    %v1252 = vld [vmem:[%s1251] sm:%s191]
    %s1253 = sshllo.u32 0, 1
    %s1254 = smul.addr 1, 177
    %s1255 = scalar_lea.vmem [#allocation0], %s1254
    %1256 = vst [vmem:[%s1255] sm:%s1253] %v1252
    %s1257 = scalar_lea.vmem [#allocation2], 1424
    %v1258 = vld [vmem:[%s1257] sm:%s191]
    %s1259 = sshllo.u32 0, 1
    %s1260 = smul.addr 1, 178
    %s1261 = scalar_lea.vmem [#allocation0], %s1260
    %1262 = vst [vmem:[%s1261] sm:%s1259] %v1258
    %s1263 = scalar_lea.vmem [#allocation2], 1432
    %v1264 = vld [vmem:[%s1263] sm:%s191]
    %s1265 = sshllo.u32 0, 1
    %s1266 = smul.addr 1, 179
    %s1267 = scalar_lea.vmem [#allocation0], %s1266
    %1268 = vst [vmem:[%s1267] sm:%s1265] %v1264
    %s1269 = scalar_lea.vmem [#allocation2], 1440
    %v1270 = vld [vmem:[%s1269] sm:%s191]
    %s1271 = sshllo.u32 0, 1
    %s1272 = smul.addr 1, 180
    %s1273 = scalar_lea.vmem [#allocation0], %s1272
    %1274 = vst [vmem:[%s1273] sm:%s1271] %v1270
    %s1275 = scalar_lea.vmem [#allocation2], 1448
    %v1276 = vld [vmem:[%s1275] sm:%s191]
    %s1277 = sshllo.u32 0, 1
    %s1278 = smul.addr 1, 181
    %s1279 = scalar_lea.vmem [#allocation0], %s1278
    %1280 = vst [vmem:[%s1279] sm:%s1277] %v1276
    %s1281 = scalar_lea.vmem [#allocation2], 1456
    %v1282 = vld [vmem:[%s1281] sm:%s191]
    %s1283 = sshllo.u32 0, 1
    %s1284 = smul.addr 1, 182
    %s1285 = scalar_lea.vmem [#allocation0], %s1284
    %1286 = vst [vmem:[%s1285] sm:%s1283] %v1282
    %s1287 = scalar_lea.vmem [#allocation2], 1464
    %v1288 = vld [vmem:[%s1287] sm:%s191]
    %s1289 = sshllo.u32 0, 1
    %s1290 = smul.addr 1, 183
    %s1291 = scalar_lea.vmem [#allocation0], %s1290
    %1292 = vst [vmem:[%s1291] sm:%s1289] %v1288
    %s1293 = scalar_lea.vmem [#allocation2], 1472
    %v1294 = vld [vmem:[%s1293] sm:%s191]
    %s1295 = sshllo.u32 0, 1
    %s1296 = smul.addr 1, 184
    %s1297 = scalar_lea.vmem [#allocation0], %s1296
    %1298 = vst [vmem:[%s1297] sm:%s1295] %v1294
    %s1299 = scalar_lea.vmem [#allocation2], 1480
    %v1300 = vld [vmem:[%s1299] sm:%s191]
    %s1301 = sshllo.u32 0, 1
    %s1302 = smul.addr 1, 185
    %s1303 = scalar_lea.vmem [#allocation0], %s1302
    %1304 = vst [vmem:[%s1303] sm:%s1301] %v1300
    %s1305 = scalar_lea.vmem [#allocation2], 1488
    %v1306 = vld [vmem:[%s1305] sm:%s191]
    %s1307 = sshllo.u32 0, 1
    %s1308 = smul.addr 1, 186
    %s1309 = scalar_lea.vmem [#allocation0], %s1308
    %1310 = vst [vmem:[%s1309] sm:%s1307] %v1306
    %s1311 = scalar_lea.vmem [#allocation2], 1496
    %v1312 = vld [vmem:[%s1311] sm:%s191]
    %s1313 = sshllo.u32 0, 1
    %s1314 = smul.addr 1, 187
    %s1315 = scalar_lea.vmem [#allocation0], %s1314
    %1316 = vst [vmem:[%s1315] sm:%s1313] %v1312
    %s1317 = scalar_lea.vmem [#allocation2], 1504
    %v1318 = vld [vmem:[%s1317] sm:%s191]
    %s1319 = sshllo.u32 0, 1
    %s1320 = smul.addr 1, 188
    %s1321 = scalar_lea.vmem [#allocation0], %s1320
    %1322 = vst [vmem:[%s1321] sm:%s1319] %v1318
    %s1323 = scalar_lea.vmem [#allocation2], 1512
    %v1324 = vld [vmem:[%s1323] sm:%s191]
    %s1325 = sshllo.u32 0, 1
    %s1326 = smul.addr 1, 189
    %s1327 = scalar_lea.vmem [#allocation0], %s1326
    %1328 = vst [vmem:[%s1327] sm:%s1325] %v1324
    %s1329 = scalar_lea.vmem [#allocation2], 1520
    %v1330 = vld [vmem:[%s1329] sm:%s191]
    %s1331 = sshllo.u32 0, 1
    %s1332 = smul.addr 1, 190
    %s1333 = scalar_lea.vmem [#allocation0], %s1332
    %1334 = vst [vmem:[%s1333] sm:%s1331] %v1330
    %s1335 = scalar_lea.vmem [#allocation2], 1528
    %v1336 = vld [vmem:[%s1335] sm:%s191]
    %s1337 = sshllo.u32 0, 1
    %s1338 = smul.addr 1, 191
    %s1339 = scalar_lea.vmem [#allocation0], %s1338
    %1340 = vst [vmem:[%s1339] sm:%s1337] %v1336
    %s1341 = scalar_lea.vmem [#allocation2], 1536
    %v1342 = vld [vmem:[%s1341] sm:%s191]
    %s1343 = sshllo.u32 0, 1
    %s1344 = smul.addr 1, 192
    %s1345 = scalar_lea.vmem [#allocation0], %s1344
    %1346 = vst [vmem:[%s1345] sm:%s1343] %v1342
    %s1347 = scalar_lea.vmem [#allocation2], 1544
    %v1348 = vld [vmem:[%s1347] sm:%s191]
    %s1349 = sshllo.u32 0, 1
    %s1350 = smul.addr 1, 193
    %s1351 = scalar_lea.vmem [#allocation0], %s1350
    %1352 = vst [vmem:[%s1351] sm:%s1349] %v1348
    %s1353 = scalar_lea.vmem [#allocation2], 1552
    %v1354 = vld [vmem:[%s1353] sm:%s191]
    %s1355 = sshllo.u32 0, 1
    %s1356 = smul.addr 1, 194
    %s1357 = scalar_lea.vmem [#allocation0], %s1356
    %1358 = vst [vmem:[%s1357] sm:%s1355] %v1354
    %s1359 = scalar_lea.vmem [#allocation2], 1560
    %v1360 = vld [vmem:[%s1359] sm:%s191]
    %s1361 = sshllo.u32 0, 1
    %s1362 = smul.addr 1, 195
    %s1363 = scalar_lea.vmem [#allocation0], %s1362
    %1364 = vst [vmem:[%s1363] sm:%s1361] %v1360
    %s1365 = scalar_lea.vmem [#allocation2], 1568
    %v1366 = vld [vmem:[%s1365] sm:%s191]
    %s1367 = sshllo.u32 0, 1
    %s1368 = smul.addr 1, 196
    %s1369 = scalar_lea.vmem [#allocation0], %s1368
    %1370 = vst [vmem:[%s1369] sm:%s1367] %v1366
    %s1371 = scalar_lea.vmem [#allocation2], 1576
    %v1372 = vld [vmem:[%s1371] sm:%s191]
    %s1373 = sshllo.u32 0, 1
    %s1374 = smul.addr 1, 197
    %s1375 = scalar_lea.vmem [#allocation0], %s1374
    %1376 = vst [vmem:[%s1375] sm:%s1373] %v1372
    %s1377 = scalar_lea.vmem [#allocation2], 1584
    %v1378 = vld [vmem:[%s1377] sm:%s191]
    %s1379 = sshllo.u32 0, 1
    %s1380 = smul.addr 1, 198
    %s1381 = scalar_lea.vmem [#allocation0], %s1380
    %1382 = vst [vmem:[%s1381] sm:%s1379] %v1378
    %s1383 = scalar_lea.vmem [#allocation2], 1592
    %v1384 = vld [vmem:[%s1383] sm:%s191]
    %s1385 = sshllo.u32 0, 1
    %s1386 = smul.addr 1, 199
    %s1387 = scalar_lea.vmem [#allocation0], %s1386
    %1388 = vst [vmem:[%s1387] sm:%s1385] %v1384
    %s1389 = scalar_lea.vmem [#allocation2], 1600
    %v1390 = vld [vmem:[%s1389] sm:%s191]
    %s1391 = sshllo.u32 0, 1
    %s1392 = smul.addr 1, 200
    %s1393 = scalar_lea.vmem [#allocation0], %s1392
    %1394 = vst [vmem:[%s1393] sm:%s1391] %v1390
    %s1395 = scalar_lea.vmem [#allocation2], 1608
    %v1396 = vld [vmem:[%s1395] sm:%s191]
    %s1397 = sshllo.u32 0, 1
    %s1398 = smul.addr 1, 201
    %s1399 = scalar_lea.vmem [#allocation0], %s1398
    %1400 = vst [vmem:[%s1399] sm:%s1397] %v1396
    %s1401 = scalar_lea.vmem [#allocation2], 1616
    %v1402 = vld [vmem:[%s1401] sm:%s191]
    %s1403 = sshllo.u32 0, 1
    %s1404 = smul.addr 1, 202
    %s1405 = scalar_lea.vmem [#allocation0], %s1404
    %1406 = vst [vmem:[%s1405] sm:%s1403] %v1402
    %s1407 = scalar_lea.vmem [#allocation2], 1624
    %v1408 = vld [vmem:[%s1407] sm:%s191]
    %s1409 = sshllo.u32 0, 1
    %s1410 = smul.addr 1, 203
    %s1411 = scalar_lea.vmem [#allocation0], %s1410
    %1412 = vst [vmem:[%s1411] sm:%s1409] %v1408
    %s1413 = scalar_lea.vmem [#allocation2], 1632
    %v1414 = vld [vmem:[%s1413] sm:%s191]
    %s1415 = sshllo.u32 0, 1
    %s1416 = smul.addr 1, 204
    %s1417 = scalar_lea.vmem [#allocation0], %s1416
    %1418 = vst [vmem:[%s1417] sm:%s1415] %v1414
    %s1419 = scalar_lea.vmem [#allocation2], 1640
    %v1420 = vld [vmem:[%s1419] sm:%s191]
    %s1421 = sshllo.u32 0, 1
    %s1422 = smul.addr 1, 205
    %s1423 = scalar_lea.vmem [#allocation0], %s1422
    %1424 = vst [vmem:[%s1423] sm:%s1421] %v1420
    %s1425 = scalar_lea.vmem [#allocation2], 1648
    %v1426 = vld [vmem:[%s1425] sm:%s191]
    %s1427 = sshllo.u32 0, 1
    %s1428 = smul.addr 1, 206
    %s1429 = scalar_lea.vmem [#allocation0], %s1428
    %1430 = vst [vmem:[%s1429] sm:%s1427] %v1426
    %s1431 = scalar_lea.vmem [#allocation2], 1656
    %v1432 = vld [vmem:[%s1431] sm:%s191]
    %s1433 = sshllo.u32 0, 1
    %s1434 = smul.addr 1, 207
    %s1435 = scalar_lea.vmem [#allocation0], %s1434
    %1436 = vst [vmem:[%s1435] sm:%s1433] %v1432
    %s1437 = scalar_lea.vmem [#allocation2], 1664
    %v1438 = vld [vmem:[%s1437] sm:%s191]
    %s1439 = sshllo.u32 0, 1
    %s1440 = smul.addr 1, 208
    %s1441 = scalar_lea.vmem [#allocation0], %s1440
    %1442 = vst [vmem:[%s1441] sm:%s1439] %v1438
    %s1443 = scalar_lea.vmem [#allocation2], 1672
    %v1444 = vld [vmem:[%s1443] sm:%s191]
    %s1445 = sshllo.u32 0, 1
    %s1446 = smul.addr 1, 209
    %s1447 = scalar_lea.vmem [#allocation0], %s1446
    %1448 = vst [vmem:[%s1447] sm:%s1445] %v1444
    %s1449 = scalar_lea.vmem [#allocation2], 1680
    %v1450 = vld [vmem:[%s1449] sm:%s191]
    %s1451 = sshllo.u32 0, 1
    %s1452 = smul.addr 1, 210
    %s1453 = scalar_lea.vmem [#allocation0], %s1452
    %1454 = vst [vmem:[%s1453] sm:%s1451] %v1450
    %s1455 = scalar_lea.vmem [#allocation2], 1688
    %v1456 = vld [vmem:[%s1455] sm:%s191]
    %s1457 = sshllo.u32 0, 1
    %s1458 = smul.addr 1, 211
    %s1459 = scalar_lea.vmem [#allocation0], %s1458
    %1460 = vst [vmem:[%s1459] sm:%s1457] %v1456
    %s1461 = scalar_lea.vmem [#allocation2], 1696
    %v1462 = vld [vmem:[%s1461] sm:%s191]
    %s1463 = sshllo.u32 0, 1
    %s1464 = smul.addr 1, 212
    %s1465 = scalar_lea.vmem [#allocation0], %s1464
    %1466 = vst [vmem:[%s1465] sm:%s1463] %v1462
    %s1467 = scalar_lea.vmem [#allocation2], 1704
    %v1468 = vld [vmem:[%s1467] sm:%s191]
    %s1469 = sshllo.u32 0, 1
    %s1470 = smul.addr 1, 213
    %s1471 = scalar_lea.vmem [#allocation0], %s1470
    %1472 = vst [vmem:[%s1471] sm:%s1469] %v1468
    %s1473 = scalar_lea.vmem [#allocation2], 1712
    %v1474 = vld [vmem:[%s1473] sm:%s191]
    %s1475 = sshllo.u32 0, 1
    %s1476 = smul.addr 1, 214
    %s1477 = scalar_lea.vmem [#allocation0], %s1476
    %1478 = vst [vmem:[%s1477] sm:%s1475] %v1474
    %s1479 = scalar_lea.vmem [#allocation2], 1720
    %v1480 = vld [vmem:[%s1479] sm:%s191]
    %s1481 = sshllo.u32 0, 1
    %s1482 = smul.addr 1, 215
    %s1483 = scalar_lea.vmem [#allocation0], %s1482
    %1484 = vst [vmem:[%s1483] sm:%s1481] %v1480
    %s1485 = scalar_lea.vmem [#allocation2], 1728
    %v1486 = vld [vmem:[%s1485] sm:%s191]
    %s1487 = sshllo.u32 0, 1
    %s1488 = smul.addr 1, 216
    %s1489 = scalar_lea.vmem [#allocation0], %s1488
    %1490 = vst [vmem:[%s1489] sm:%s1487] %v1486
    %s1491 = scalar_lea.vmem [#allocation2], 1736
    %v1492 = vld [vmem:[%s1491] sm:%s191]
    %s1493 = sshllo.u32 0, 1
    %s1494 = smul.addr 1, 217
    %s1495 = scalar_lea.vmem [#allocation0], %s1494
    %1496 = vst [vmem:[%s1495] sm:%s1493] %v1492
    %s1497 = scalar_lea.vmem [#allocation2], 1744
    %v1498 = vld [vmem:[%s1497] sm:%s191]
    %s1499 = sshllo.u32 0, 1
    %s1500 = smul.addr 1, 218
    %s1501 = scalar_lea.vmem [#allocation0], %s1500
    %1502 = vst [vmem:[%s1501] sm:%s1499] %v1498
    %s1503 = scalar_lea.vmem [#allocation2], 1752
    %v1504 = vld [vmem:[%s1503] sm:%s191]
    %s1505 = sshllo.u32 0, 1
    %s1506 = smul.addr 1, 219
    %s1507 = scalar_lea.vmem [#allocation0], %s1506
    %1508 = vst [vmem:[%s1507] sm:%s1505] %v1504
    %s1509 = scalar_lea.vmem [#allocation2], 1760
    %v1510 = vld [vmem:[%s1509] sm:%s191]
    %s1511 = sshllo.u32 0, 1
    %s1512 = smul.addr 1, 220
    %s1513 = scalar_lea.vmem [#allocation0], %s1512
    %1514 = vst [vmem:[%s1513] sm:%s1511] %v1510
    %s1515 = scalar_lea.vmem [#allocation2], 1768
    %v1516 = vld [vmem:[%s1515] sm:%s191]
    %s1517 = sshllo.u32 0, 1
    %s1518 = smul.addr 1, 221
    %s1519 = scalar_lea.vmem [#allocation0], %s1518
    %1520 = vst [vmem:[%s1519] sm:%s1517] %v1516
    %s1521 = scalar_lea.vmem [#allocation2], 1776
    %v1522 = vld [vmem:[%s1521] sm:%s191]
    %s1523 = sshllo.u32 0, 1
    %s1524 = smul.addr 1, 222
    %s1525 = scalar_lea.vmem [#allocation0], %s1524
    %1526 = vst [vmem:[%s1525] sm:%s1523] %v1522
    %s1527 = scalar_lea.vmem [#allocation2], 1784
    %v1528 = vld [vmem:[%s1527] sm:%s191]
    %s1529 = sshllo.u32 0, 1
    %s1530 = smul.addr 1, 223
    %s1531 = scalar_lea.vmem [#allocation0], %s1530
    %1532 = vst [vmem:[%s1531] sm:%s1529] %v1528
    %s1533 = scalar_lea.vmem [#allocation2], 1792
    %v1534 = vld [vmem:[%s1533] sm:%s191]
    %s1535 = sshllo.u32 0, 1
    %s1536 = smul.addr 1, 224
    %s1537 = scalar_lea.vmem [#allocation0], %s1536
    %1538 = vst [vmem:[%s1537] sm:%s1535] %v1534
    %s1539 = scalar_lea.vmem [#allocation2], 1800
    %v1540 = vld [vmem:[%s1539] sm:%s191]
    %s1541 = sshllo.u32 0, 1
    %s1542 = smul.addr 1, 225
    %s1543 = scalar_lea.vmem [#allocation0], %s1542
    %1544 = vst [vmem:[%s1543] sm:%s1541] %v1540
    %s1545 = scalar_lea.vmem [#allocation2], 1808
    %v1546 = vld [vmem:[%s1545] sm:%s191]
    %s1547 = sshllo.u32 0, 1
    %s1548 = smul.addr 1, 226
    %s1549 = scalar_lea.vmem [#allocation0], %s1548
    %1550 = vst [vmem:[%s1549] sm:%s1547] %v1546
    %s1551 = scalar_lea.vmem [#allocation2], 1816
    %v1552 = vld [vmem:[%s1551] sm:%s191]
    %s1553 = sshllo.u32 0, 1
    %s1554 = smul.addr 1, 227
    %s1555 = scalar_lea.vmem [#allocation0], %s1554
    %1556 = vst [vmem:[%s1555] sm:%s1553] %v1552
    %s1557 = scalar_lea.vmem [#allocation2], 1824
    %v1558 = vld [vmem:[%s1557] sm:%s191]
    %s1559 = sshllo.u32 0, 1
    %s1560 = smul.addr 1, 228
    %s1561 = scalar_lea.vmem [#allocation0], %s1560
    %1562 = vst [vmem:[%s1561] sm:%s1559] %v1558
    %s1563 = scalar_lea.vmem [#allocation2], 1832
    %v1564 = vld [vmem:[%s1563] sm:%s191]
    %s1565 = sshllo.u32 0, 1
    %s1566 = smul.addr 1, 229
    %s1567 = scalar_lea.vmem [#allocation0], %s1566
    %1568 = vst [vmem:[%s1567] sm:%s1565] %v1564
    %s1569 = scalar_lea.vmem [#allocation2], 1840
    %v1570 = vld [vmem:[%s1569] sm:%s191]
    %s1571 = sshllo.u32 0, 1
    %s1572 = smul.addr 1, 230
    %s1573 = scalar_lea.vmem [#allocation0], %s1572
    %1574 = vst [vmem:[%s1573] sm:%s1571] %v1570
    %s1575 = scalar_lea.vmem [#allocation2], 1848
    %v1576 = vld [vmem:[%s1575] sm:%s191]
    %s1577 = sshllo.u32 0, 1
    %s1578 = smul.addr 1, 231
    %s1579 = scalar_lea.vmem [#allocation0], %s1578
    %1580 = vst [vmem:[%s1579] sm:%s1577] %v1576
    %s1581 = scalar_lea.vmem [#allocation2], 1856
    %v1582 = vld [vmem:[%s1581] sm:%s191]
    %s1583 = sshllo.u32 0, 1
    %s1584 = smul.addr 1, 232
    %s1585 = scalar_lea.vmem [#allocation0], %s1584
    %1586 = vst [vmem:[%s1585] sm:%s1583] %v1582
    %s1587 = scalar_lea.vmem [#allocation2], 1864
    %v1588 = vld [vmem:[%s1587] sm:%s191]
    %s1589 = sshllo.u32 0, 1
    %s1590 = smul.addr 1, 233
    %s1591 = scalar_lea.vmem [#allocation0], %s1590
    %1592 = vst [vmem:[%s1591] sm:%s1589] %v1588
    %s1593 = scalar_lea.vmem [#allocation2], 1872
    %v1594 = vld [vmem:[%s1593] sm:%s191]
    %s1595 = sshllo.u32 0, 1
    %s1596 = smul.addr 1, 234
    %s1597 = scalar_lea.vmem [#allocation0], %s1596
    %1598 = vst [vmem:[%s1597] sm:%s1595] %v1594
    %s1599 = scalar_lea.vmem [#allocation2], 1880
    %v1600 = vld [vmem:[%s1599] sm:%s191]
    %s1601 = sshllo.u32 0, 1
    %s1602 = smul.addr 1, 235
    %s1603 = scalar_lea.vmem [#allocation0], %s1602
    %1604 = vst [vmem:[%s1603] sm:%s1601] %v1600
    %s1605 = scalar_lea.vmem [#allocation2], 1888
    %v1606 = vld [vmem:[%s1605] sm:%s191]
    %s1607 = sshllo.u32 0, 1
    %s1608 = smul.addr 1, 236
    %s1609 = scalar_lea.vmem [#allocation0], %s1608
    %1610 = vst [vmem:[%s1609] sm:%s1607] %v1606
    %s1611 = scalar_lea.vmem [#allocation2], 1896
    %v1612 = vld [vmem:[%s1611] sm:%s191]
    %s1613 = sshllo.u32 0, 1
    %s1614 = smul.addr 1, 237
    %s1615 = scalar_lea.vmem [#allocation0], %s1614
    %1616 = vst [vmem:[%s1615] sm:%s1613] %v1612
    %s1617 = scalar_lea.vmem [#allocation2], 1904
    %v1618 = vld [vmem:[%s1617] sm:%s191]
    %s1619 = sshllo.u32 0, 1
    %s1620 = smul.addr 1, 238
    %s1621 = scalar_lea.vmem [#allocation0], %s1620
    %1622 = vst [vmem:[%s1621] sm:%s1619] %v1618
    %s1623 = scalar_lea.vmem [#allocation2], 1912
    %v1624 = vld [vmem:[%s1623] sm:%s191]
    %s1625 = sshllo.u32 0, 1
    %s1626 = smul.addr 1, 239
    %s1627 = scalar_lea.vmem [#allocation0], %s1626
    %1628 = vst [vmem:[%s1627] sm:%s1625] %v1624
    %s1629 = scalar_lea.vmem [#allocation2], 1920
    %v1630 = vld [vmem:[%s1629] sm:%s191]
    %s1631 = sshllo.u32 0, 1
    %s1632 = smul.addr 1, 240
    %s1633 = scalar_lea.vmem [#allocation0], %s1632
    %1634 = vst [vmem:[%s1633] sm:%s1631] %v1630
    %s1635 = scalar_lea.vmem [#allocation2], 1928
    %v1636 = vld [vmem:[%s1635] sm:%s191]
    %s1637 = sshllo.u32 0, 1
    %s1638 = smul.addr 1, 241
    %s1639 = scalar_lea.vmem [#allocation0], %s1638
    %1640 = vst [vmem:[%s1639] sm:%s1637] %v1636
    %s1641 = scalar_lea.vmem [#allocation2], 1936
    %v1642 = vld [vmem:[%s1641] sm:%s191]
    %s1643 = sshllo.u32 0, 1
    %s1644 = smul.addr 1, 242
    %s1645 = scalar_lea.vmem [#allocation0], %s1644
    %1646 = vst [vmem:[%s1645] sm:%s1643] %v1642
    %s1647 = scalar_lea.vmem [#allocation2], 1944
    %v1648 = vld [vmem:[%s1647] sm:%s191]
    %s1649 = sshllo.u32 0, 1
    %s1650 = smul.addr 1, 243
    %s1651 = scalar_lea.vmem [#allocation0], %s1650
    %1652 = vst [vmem:[%s1651] sm:%s1649] %v1648
    %s1653 = scalar_lea.vmem [#allocation2], 1952
    %v1654 = vld [vmem:[%s1653] sm:%s191]
    %s1655 = sshllo.u32 0, 1
    %s1656 = smul.addr 1, 244
    %s1657 = scalar_lea.vmem [#allocation0], %s1656
    %1658 = vst [vmem:[%s1657] sm:%s1655] %v1654
    %s1660 = ssub.s32 3920, 3920
    %1661 = vsyncadd [#allocation1], %s1660
    %s1663 = sshll.u32 [#allocation0], 4
    %s1664 = int_to_ptr.vmem [resolvable:$true] %s1663
    %1666 = dma.vmem_to_hbm [thread:$0]  %s1664, 3920, %s1, [#allocation1]
    %1667 = dma.done [#allocation1], 3920
    %1668 = vsyncpa [#allocation1], 1

// kernel: _mul_conv1x1_impl.1
$region0: #{_mul_conv1x1_impl.1}
  #allocation0 [shape = 'u32[]', space=smem, size = 0x4, offset = 0x4, fixed_abs, tag = 'smem constant byte address 0x4 - core index']
  #allocation1 [shape = 'u32[144,128]{1,0:T(1,128)}', space=vmem, size = 0x12000, scoped, tag = 'internal scratch']
  %s0 = inlined_call_operand.vmem [shape: f32[3840,1], index: 0, kind: input, shape index: {}]
  %s1 = inlined_call_operand.vmem [shape: f32[3840,49], index: 1, kind: input, shape index: {}]
  %s2 = inlined_call_operand.vmem [shape: bf16[3840,640], index: 2, kind: input, shape index: {}]
  %s3 = inlined_call_operand.vmem [shape: f32[1,49,640], index: 3, kind: output, shape index: {}]
  %s4 = sld [smem:[#allocation0]]
  $region53: #{_mul_conv1x1_impl.1} parent=0
    _
  %s6 = ssub.s32 1, %s4
  %s7 = scalar_select 0, %s6, %s4
  loop: start=0, step=1, limit=4
  $region2: #{_mul_conv1x1_impl.1} parent=0 // loop_pre_header
    _
  $region3: #{_mul_conv1x1_impl.1} parent=0 // loop_header
    %s9 = sphi 0, %s13
    %p10 = scmp.ge.s32.totalorder %s9, 4
    %s16 = sphi 0, %s28
    %s17 = sphi 0, %s24
    %s18 = sphi 0, %s16
    %s19 = sphi 0, %s17
    %s20 = sphi 0, %s18
    %s21 = sphi 0, %s19
    %s35 = sphi 0, %s37
    %s38 = sphi 0, %s35
    %s39 = sphi 0, %s38
    %s55 = sphi 0, %s39
    %s65 = sphi 0, %s67
    %s68 = sphi 0, %s65
    %s69 = sphi 0, %s68
    %s85 = sphi 0, %s69
    %s95 = sphi 0, %s97
    %s98 = sphi 0, %s95
    %s99 = sphi 0, %s98
    %s115 = sphi 0, %s99
    %s121 = sphi 0, %s123
    %s124 = sphi 0, %s121
    %s125 = sphi 0, %s124
    %s141 = sphi 0, %s125
  $region4: #{_mul_conv1x1_impl.1} parent=0 // loop_header_branch
    %12 = sbr.rel (%p10) target = $region8
  $region5: #{_mul_conv1x1_impl.1} parent=0 // loop_body
    %s14 = ssub.s32 %s9, 1
    %s15 = ssub.s32 %s9, 2
    %s22 = sadd.s32 1, %s17
    %p23 = scmp.ge.s32.totalorder %s22, 2
    %s24 = scalar_select %p23, 0, %s22
    %s25 = sadd.s32 1, %s16
    %s26 = scalar_select %p23, %s25, %s16
    %p27 = scmp.ge.s32.totalorder %s26, 1
    %s28 = scalar_select %p27, 0, %s26
    %s29 = smul.u32 %s16, 2
    %s30 = sadd.s32 %s29, %s17
    %s31 = smul.u32 %s28, 2
    %s32 = sadd.s32 %s31, %s24
    %s33 = ssub.s32 %s30, %s32
    %p34 = scmp.eq.s32.totalorder %s33, 0
    %s36 = sadd.s32 %s35, 1
    %s37 = scalar_select %p34, %s35, %s36
    %p40 = pneg %p34
    %p41 = scmp.eq.s32.totalorder %s9, 1
    %p42 = por %p40, %p41
    %p43 = scmp.ne.s32.totalorder %s35, %s38
    %p44 = scmp.eq.s32.totalorder %s9, 0
    %p45 = por %p43, %p44
    %p46 = scmp.ne.s32.totalorder %s35, %s38
    %p47 = scmp.eq.s32.totalorder %s14, 1
    %p48 = por %p46, %p47
    %p49 = scmp.ne.s32.totalorder %s38, %s39
    %p50 = scmp.eq.s32.totalorder %s14, 0
    %p51 = por %p49, %p50
    %p52 = scmp.ne.s32.totalorder %s38, %s39
    %p53 = scmp.eq.s32.totalorder %s15, 1
    %p54 = por %p52, %p53
    %p56 = scmp.ne.s32.totalorder %s39, %s55
    %p57 = scmp.eq.s32.totalorder %s15, 0
    %p58 = por %p56, %p57
    %s59 = smul.u32 %s16, 2
    %s60 = sadd.s32 %s59, %s17
    %s61 = smul.u32 %s28, 2
    %s62 = sadd.s32 %s61, %s24
    %s63 = ssub.s32 %s60, %s62
    %p64 = scmp.eq.s32.totalorder %s63, 0
    %s66 = sadd.s32 %s65, 1
    %s67 = scalar_select %p64, %s65, %s66
    %p70 = pneg %p64
    %p71 = scmp.eq.s32.totalorder %s9, 1
    %p72 = por %p70, %p71
    %p73 = scmp.ne.s32.totalorder %s65, %s68
    %p74 = scmp.eq.s32.totalorder %s9, 0
    %p75 = por %p73, %p74
    %p76 = scmp.ne.s32.totalorder %s65, %s68
    %p77 = scmp.eq.s32.totalorder %s14, 1
    %p78 = por %p76, %p77
    %p79 = scmp.ne.s32.totalorder %s68, %s69
    %p80 = scmp.eq.s32.totalorder %s14, 0
    %p81 = por %p79, %p80
    %p82 = scmp.ne.s32.totalorder %s68, %s69
    %p83 = scmp.eq.s32.totalorder %s15, 1
    %p84 = por %p82, %p83
    %p86 = scmp.ne.s32.totalorder %s69, %s85
    %p87 = scmp.eq.s32.totalorder %s15, 0
    %p88 = por %p86, %p87
    %s89 = smul.u32 %s16, 2
    %s90 = sadd.s32 %s89, %s17
    %s91 = smul.u32 %s28, 2
    %s92 = sadd.s32 %s91, %s24
    %s93 = ssub.s32 %s90, %s92
    %p94 = scmp.eq.s32.totalorder %s93, 0
    %s96 = sadd.s32 %s95, 1
    %s97 = scalar_select %p94, %s95, %s96
    %p100 = pneg %p94
    %p101 = scmp.eq.s32.totalorder %s9, 1
    %p102 = por %p100, %p101
    %p103 = scmp.ne.s32.totalorder %s95, %s98
    %p104 = scmp.eq.s32.totalorder %s9, 0
    %p105 = por %p103, %p104
    %p106 = scmp.ne.s32.totalorder %s95, %s98
    %p107 = scmp.eq.s32.totalorder %s14, 1
    %p108 = por %p106, %p107
    %p109 = scmp.ne.s32.totalorder %s98, %s99
    %p110 = scmp.eq.s32.totalorder %s14, 0
    %p111 = por %p109, %p110
    %p112 = scmp.ne.s32.totalorder %s98, %s99
    %p113 = scmp.eq.s32.totalorder %s15, 1
    %p114 = por %p112, %p113
    %p116 = scmp.ne.s32.totalorder %s99, %s115
    %p117 = scmp.eq.s32.totalorder %s15, 0
    %p118 = por %p116, %p117
    %s119 = ssub.s32 %s16, %s28
    %p120 = scmp.eq.s32.totalorder %s119, 0
    %s122 = sadd.s32 %s121, 1
    %s123 = scalar_select %p120, %s121, %s122
    %p126 = pneg %p120
    %p127 = scmp.eq.s32.totalorder %s9, 1
    %p128 = por %p126, %p127
    %p129 = scmp.ne.s32.totalorder %s121, %s124
    %p130 = scmp.eq.s32.totalorder %s9, 0
    %p131 = por %p129, %p130
    %p132 = scmp.ne.s32.totalorder %s121, %s124
    %p133 = scmp.eq.s32.totalorder %s14, 1
    %p134 = por %p132, %p133
    %p135 = scmp.ne.s32.totalorder %s124, %s125
    %p136 = scmp.eq.s32.totalorder %s14, 0
    %p137 = por %p135, %p136
    %p138 = scmp.ne.s32.totalorder %s124, %s125
    %p139 = scmp.eq.s32.totalorder %s15, 1
    %p140 = por %p138, %p139
    %p142 = scmp.ne.s32.totalorder %s125, %s141
    %p143 = scmp.eq.s32.totalorder %s15, 0
    %p144 = por %p142, %p143
    %p145 = scmp.le.s32.totalorder 1, %s9
    %p146 = scmp.lt.s32.totalorder %s9, 3
    %p147 = pnand %p145, %p146
    %p148 = pneg %p147
    // Predicated region
    $region9: #{_mul_conv1x1_impl.1} parent=5 // pred_check
      _
    $region10: #{_mul_conv1x1_impl.1} parent=5 // pred_check_branch
      %150 = sbr.rel (%p147) target = $region12
    $region11: #{_mul_conv1x1_impl.1} parent=5 // pred_region
      %s151 = ssub.s32 %s9, 1
    $region12: #{_mul_conv1x1_impl.1} parent=5 // pred_fallthru
      _
    %p152 = scmp.lt.s32.totalorder %s9, 2
    // Predicated region
    $region13: #{_mul_conv1x1_impl.1} parent=5 // pred_check
      %p153 = pneg %p152
    $region14: #{_mul_conv1x1_impl.1} parent=5 // pred_check_branch
      %155 = sbr.rel (%p153) target = $region16
    $region15: #{_mul_conv1x1_impl.1} parent=5 // pred_region
      // Predicated region
      $region17: #{_mul_conv1x1_impl.1} parent=15 // pred_check
        %p156 = pneg %p45
      $region18: #{_mul_conv1x1_impl.1} parent=15 // pred_check_branch
        %158 = sbr.rel (%p156) target = $region20
      $region19: #{_mul_conv1x1_impl.1} parent=15 // pred_region
        %s159 = smul.u32 %s16, 2
        %s160 = sadd.s32 %s159, %s17
        %s161 = smul.u32 240, %s160
        %p162 = scmp.lt.s32.totalorder %s161, 479
        %s163 = scalar_select %p162, %s161, 479
        %s164 = smul.addr %s163, 8
        %s165 = scalar_lea.vmem %s0, %s164
        %s166 = smul.u32 %s16, 2
        %s167 = sadd.s32 %s166, %s17
        %s168 = smul.u32 240, %s167
      $region20: #{_mul_conv1x1_impl.1} parent=15 // pred_fallthru
        _
      // Predicated region
      $region21: #{_mul_conv1x1_impl.1} parent=15 // pred_check
        %p169 = pneg %p75
      $region22: #{_mul_conv1x1_impl.1} parent=15 // pred_check_branch
        %171 = sbr.rel (%p169) target = $region24
      $region23: #{_mul_conv1x1_impl.1} parent=15 // pred_region
        %s172 = smul.u32 %s16, 2
        %s173 = sadd.s32 %s172, %s17
        %s174 = smul.u32 240, %s173
        %p175 = scmp.lt.s32.totalorder %s174, 479
        %s176 = scalar_select %p175, %s174, 479
        %s177 = smul.addr %s176, 8
        %s178 = scalar_lea.vmem %s1, %s177
        %s179 = smul.u32 %s16, 2
        %s180 = sadd.s32 %s179, %s17
        %s181 = smul.u32 240, %s180
      $region24: #{_mul_conv1x1_impl.1} parent=15 // pred_fallthru
        _
      // Predicated region
      $region25: #{_mul_conv1x1_impl.1} parent=15 // pred_check
        %p182 = pneg %p105
      $region26: #{_mul_conv1x1_impl.1} parent=15 // pred_check_branch
        %184 = sbr.rel (%p182) target = $region28
      $region27: #{_mul_conv1x1_impl.1} parent=15 // pred_region
        %s185 = smul.u32 %s16, 2
        %s186 = sadd.s32 %s185, %s17
        %s187 = smul.u32 240, %s186
        %p188 = scmp.lt.s32.totalorder %s187, 479
        %s189 = scalar_select %p188, %s187, 479
        %s190 = smul.addr %s189, 5
        %s191 = smul.addr %s190, 4
        %s192 = scalar_lea.vmem %s2, %s191
        %s193 = smul.u32 %s16, 2
        %s194 = sadd.s32 %s193, %s17
        %s195 = smul.u32 240, %s194
      $region28: #{_mul_conv1x1_impl.1} parent=15 // pred_fallthru
        _
    $region16: #{_mul_conv1x1_impl.1} parent=5 // pred_fallthru
      _
    %p196 = scmp.le.s32.totalorder 1, %s9
    %p197 = scmp.lt.s32.totalorder %s9, 3
    %p198 = pnand %p196, %p197
    %p199 = pneg %p198
    // Predicated region
    $region29: #{_mul_conv1x1_impl.1} parent=5 // pred_check
      _
    $region30: #{_mul_conv1x1_impl.1} parent=5 // pred_check_branch
      %201 = sbr.rel (%p198) target = $region32
    $region31: #{_mul_conv1x1_impl.1} parent=5 // pred_region
      %s202 = ssub.s32 %s9, 1
      %s203 = smul.u32 %s18, 2
      %s204 = sadd.s32 %s203, %s19
      %s205 = smul.u32 240, %s204
      %p206 = scmp.lt.s32.totalorder %s205, 479
      %s207 = scalar_select %p206, %s205, 479
      %s208 = smul.addr %s207, 8
      %s209 = scalar_lea.vmem %s0, %s208
      %p210 = pneg %p51
      %p211 = pneg %p48
      %s212 = smul.u32 %s18, 2
      %s213 = sadd.s32 %s212, %s19
      %s214 = smul.u32 240, %s213
      %p215 = scmp.lt.s32.totalorder %s214, 479
      %s216 = scalar_select %p215, %s214, 479
      %s217 = smul.addr %s216, 8
      %s218 = scalar_lea.vmem %s1, %s217
      %p219 = pneg %p81
      %p220 = pneg %p78
      %s221 = smul.u32 %s18, 2
      %s222 = sadd.s32 %s221, %s19
      %s223 = smul.u32 240, %s222
      %p224 = scmp.lt.s32.totalorder %s223, 479
      %s225 = scalar_select %p224, %s223, 479
      %s226 = smul.addr %s225, 5
      %s227 = smul.addr %s226, 4
      %s228 = scalar_lea.vmem %s2, %s227
      %p229 = pneg %p111
      %p230 = pneg %p108
      %p231 = pneg %p137
      %p232 = pneg %p134
      %p233 = scmp.lt.s32.totalorder %s18, 0
      %s234 = scalar_select %p233, %s18, 0
      %s235 = smul.addr %s234, 35
      %s236 = smul.addr %s235, 8
      %s237 = scalar_lea.vmem %s3, %s236
      %s238 = smul.u32 %s18, 2
      %s239 = sadd.s32 %s238, %s19
      %s240 = smul.u32 240, %s239
      %p241 = scmp.lt.s32.totalorder %s240, 479
      %s242 = scalar_select %p241, %s240, 479
      %s243 = smul.addr %s242, 8
      %s244 = scalar_lea.vmem %s0, %s243
      %s245 = smul.u32 %s18, 2
      %s246 = sadd.s32 %s245, %s19
      %s247 = smul.u32 240, %s246
      %s248 = smul.u32 %s18, 2
      %s249 = sadd.s32 %s248, %s19
      %s250 = smul.u32 240, %s249
      %p251 = scmp.lt.s32.totalorder %s250, 479
      %s252 = scalar_select %p251, %s250, 479
      %s253 = smul.addr %s252, 8
      %s254 = scalar_lea.vmem %s1, %s253
      %s255 = smul.u32 %s18, 2
      %s256 = sadd.s32 %s255, %s19
      %s257 = smul.u32 240, %s256
      %s258 = smul.u32 %s18, 2
      %s259 = sadd.s32 %s258, %s19
      %s260 = smul.u32 240, %s259
      %p261 = scmp.lt.s32.totalorder %s260, 479
      %s262 = scalar_select %p261, %s260, 479
      %s263 = smul.addr %s262, 5
      %s264 = smul.addr %s263, 4
      %s265 = scalar_lea.vmem %s2, %s264
      %s266 = smul.u32 %s18, 2
      %s267 = sadd.s32 %s266, %s19
      %s268 = smul.u32 240, %s267
      %p269 = scmp.lt.s32.totalorder %s18, 0
      %s270 = scalar_select %p269, %s18, 0
      %s271 = smul.addr %s270, 35
      %s272 = smul.addr %s271, 8
      %s273 = scalar_lea.vmem %s3, %s272
      %v275 = vld [vmem:[%s254] sm:$0xff]
      %v276 = vld [vmem:[%s254 + $0x8] sm:$0xff]
      %v277 = vld [vmem:[%s254 + $0x10] sm:$0xff]
      %v278 = vld [vmem:[%s254 + $0x18] sm:$0xff]
      %v279 = vld [vmem:[%s254 + $0x20] sm:$0xff]
      %v280 = vld [vmem:[%s254 + $0x28] sm:$0xff]
      %v281 = vld [vmem:[%s254 + $0x30] sm:$0xff]
      %v282 = vld [vmem:[%s254 + $0x38] sm:$0xff]
      %v283 = vld [vmem:[%s254 + $0x40] sm:$0xff]
      %v284 = vld [vmem:[%s254 + $0x48] sm:$0xff]
      %v285 = vld [vmem:[%s254 + $0x50] sm:$0xff]
      %v286 = vld [vmem:[%s254 + $0x58] sm:$0xff]
      %v287 = vld [vmem:[%s254 + $0x60] sm:$0xff]
      %v288 = vld [vmem:[%s254 + $0x68] sm:$0xff]
      %v289 = vld [vmem:[%s254 + $0x70] sm:$0xff]
      %v290 = vld [vmem:[%s254 + $0x78] sm:$0xff]
      %v291 = vld [vmem:[%s254 + $0x80] sm:$0xff]
      %v292 = vld [vmem:[%s254 + $0x88] sm:$0xff]
      %v293 = vld [vmem:[%s254 + $0x90] sm:$0xff]
      %v294 = vld [vmem:[%s254 + $0x98] sm:$0xff]
      %v295 = vld [vmem:[%s254 + $0xa0] sm:$0xff]
      %v296 = vld [vmem:[%s254 + $0xa8] sm:$0xff]
      %v297 = vld [vmem:[%s254 + $0xb0] sm:$0xff]
      %v298 = vld [vmem:[%s254 + $0xb8] sm:$0xff]
      %v299 = vld [vmem:[%s254 + $0xc0] sm:$0xff]
      %v300 = vld [vmem:[%s254 + $0xc8] sm:$0xff]
      %v301 = vld [vmem:[%s254 + $0xd0] sm:$0xff]
      %v302 = vld [vmem:[%s254 + $0xd8] sm:$0xff]
      %v303 = vld [vmem:[%s254 + $0xe0] sm:$0xff]
      %v304 = vld [vmem:[%s254 + $0xe8] sm:$0xff]
      %v305 = vld [vmem:[%s254 + $0xf0] sm:$0xff]
      %v306 = vld [vmem:[%s254 + $0xf8] sm:$0xff]
      %v307 = vld [vmem:[%s254 + $0x100] sm:$0xff]
      %v308 = vld [vmem:[%s254 + $0x108] sm:$0xff]
      %v309 = vld [vmem:[%s254 + $0x110] sm:$0xff]
      %v310 = vld [vmem:[%s254 + $0x118] sm:$0xff]
      %v311 = vld [vmem:[%s254 + $0x120] sm:$0xff]
      %v312 = vld [vmem:[%s254 + $0x128] sm:$0xff]
      %v313 = vld [vmem:[%s254 + $0x130] sm:$0xff]
      %v314 = vld [vmem:[%s254 + $0x138] sm:$0xff]
      %v315 = vld [vmem:[%s254 + $0x140] sm:$0xff]
      %v316 = vld [vmem:[%s254 + $0x148] sm:$0xff]
      %v317 = vld [vmem:[%s254 + $0x150] sm:$0xff]
      %v318 = vld [vmem:[%s254 + $0x158] sm:$0xff]
      %v319 = vld [vmem:[%s254 + $0x160] sm:$0xff]
      %v320 = vld [vmem:[%s254 + $0x168] sm:$0xff]
      %v321 = vld [vmem:[%s254 + $0x170] sm:$0xff]
      %v322 = vld [vmem:[%s254 + $0x178] sm:$0xff]
      %v323 = vld [vmem:[%s254 + $0x180] sm:$0xff]
      %v324 = vld [vmem:[%s254 + $0x188] sm:$0xff]
      %v325 = vld [vmem:[%s254 + $0x190] sm:$0xff]
      %v326 = vld [vmem:[%s254 + $0x198] sm:$0xff]
      %v327 = vld [vmem:[%s254 + $0x1a0] sm:$0xff]
      %v328 = vld [vmem:[%s254 + $0x1a8] sm:$0xff]
      %v329 = vld [vmem:[%s254 + $0x1b0] sm:$0xff]
      %v330 = vld [vmem:[%s254 + $0x1b8] sm:$0xff]
      %v331 = vld [vmem:[%s254 + $0x1c0] sm:$0xff]
      %v332 = vld [vmem:[%s254 + $0x1c8] sm:$0xff]
      %v333 = vld [vmem:[%s254 + $0x1d0] sm:$0xff]
      %v334 = vld [vmem:[%s254 + $0x1d8] sm:$0xff]
      %v335 = vld [vmem:[%s254 + $0x1e0] sm:$0xff]
      %v336 = vld [vmem:[%s254 + $0x1e8] sm:$0xff]
      %v337 = vld [vmem:[%s254 + $0x1f0] sm:$0xff]
      %v338 = vld [vmem:[%s254 + $0x1f8] sm:$0xff]
      %v339 = vld [vmem:[%s254 + $0x200] sm:$0xff]
      %v340 = vld [vmem:[%s254 + $0x208] sm:$0xff]
      %v341 = vld [vmem:[%s254 + $0x210] sm:$0xff]
      %v342 = vld [vmem:[%s254 + $0x218] sm:$0xff]
      %v343 = vld [vmem:[%s254 + $0x220] sm:$0xff]
      %v344 = vld [vmem:[%s254 + $0x228] sm:$0xff]
      %v345 = vld [vmem:[%s254 + $0x230] sm:$0xff]
      %v346 = vld [vmem:[%s254 + $0x238] sm:$0xff]
      %v347 = vld [vmem:[%s254 + $0x240] sm:$0xff]
      %v348 = vld [vmem:[%s254 + $0x248] sm:$0xff]
      %v349 = vld [vmem:[%s254 + $0x250] sm:$0xff]
      %v350 = vld [vmem:[%s254 + $0x258] sm:$0xff]
      %v351 = vld [vmem:[%s254 + $0x260] sm:$0xff]
      %v352 = vld [vmem:[%s254 + $0x268] sm:$0xff]
      %v353 = vld [vmem:[%s254 + $0x270] sm:$0xff]
      %v354 = vld [vmem:[%s254 + $0x278] sm:$0xff]
      %v355 = vld [vmem:[%s254 + $0x280] sm:$0xff]
      %v356 = vld [vmem:[%s254 + $0x288] sm:$0xff]
      %v357 = vld [vmem:[%s254 + $0x290] sm:$0xff]
      %v358 = vld [vmem:[%s254 + $0x298] sm:$0xff]
      %v359 = vld [vmem:[%s254 + $0x2a0] sm:$0xff]
      %v360 = vld [vmem:[%s254 + $0x2a8] sm:$0xff]
      %v361 = vld [vmem:[%s254 + $0x2b0] sm:$0xff]
      %v362 = vld [vmem:[%s254 + $0x2b8] sm:$0xff]
      %v363 = vld [vmem:[%s254 + $0x2c0] sm:$0xff]
      %v364 = vld [vmem:[%s254 + $0x2c8] sm:$0xff]
      %v365 = vld [vmem:[%s254 + $0x2d0] sm:$0xff]
      %v366 = vld [vmem:[%s254 + $0x2d8] sm:$0xff]
      %v367 = vld [vmem:[%s254 + $0x2e0] sm:$0xff]
      %v368 = vld [vmem:[%s254 + $0x2e8] sm:$0xff]
      %v369 = vld [vmem:[%s254 + $0x2f0] sm:$0xff]
      %v370 = vld [vmem:[%s254 + $0x2f8] sm:$0xff]
      %v371 = vld [vmem:[%s254 + $0x300] sm:$0xff]
      %v372 = vld [vmem:[%s254 + $0x308] sm:$0xff]
      %v373 = vld [vmem:[%s254 + $0x310] sm:$0xff]
      %v374 = vld [vmem:[%s254 + $0x318] sm:$0xff]
      %v375 = vld [vmem:[%s254 + $0x320] sm:$0xff]
      %v376 = vld [vmem:[%s254 + $0x328] sm:$0xff]
      %v377 = vld [vmem:[%s254 + $0x330] sm:$0xff]
      %v378 = vld [vmem:[%s254 + $0x338] sm:$0xff]
      %v379 = vld [vmem:[%s254 + $0x340] sm:$0xff]
      %v380 = vld [vmem:[%s254 + $0x348] sm:$0xff]
      %v381 = vld [vmem:[%s254 + $0x350] sm:$0xff]
      %v382 = vld [vmem:[%s254 + $0x358] sm:$0xff]
      %v383 = vld [vmem:[%s254 + $0x360] sm:$0xff]
      %v384 = vld [vmem:[%s254 + $0x368] sm:$0xff]
      %v385 = vld [vmem:[%s254 + $0x370] sm:$0xff]
      %v386 = vld [vmem:[%s254 + $0x378] sm:$0xff]
      %v387 = vld [vmem:[%s254 + $0x380] sm:$0xff]
      %v388 = vld [vmem:[%s254 + $0x388] sm:$0xff]
      %v389 = vld [vmem:[%s254 + $0x390] sm:$0xff]
      %v390 = vld [vmem:[%s254 + $0x398] sm:$0xff]
      %v391 = vld [vmem:[%s254 + $0x3a0] sm:$0xff]
      %v392 = vld [vmem:[%s254 + $0x3a8] sm:$0xff]
      %v393 = vld [vmem:[%s254 + $0x3b0] sm:$0xff]
      %v394 = vld [vmem:[%s254 + $0x3b8] sm:$0xff]
      %v395 = vld [vmem:[%s254 + $0x3c0] sm:$0xff]
      %v396 = vld [vmem:[%s254 + $0x3c8] sm:$0xff]
      %v397 = vld [vmem:[%s254 + $0x3d0] sm:$0xff]
      %v398 = vld [vmem:[%s254 + $0x3d8] sm:$0xff]
      %v399 = vld [vmem:[%s254 + $0x3e0] sm:$0xff]
      %v400 = vld [vmem:[%s254 + $0x3e8] sm:$0xff]
      %v401 = vld [vmem:[%s254 + $0x3f0] sm:$0xff]
      %v402 = vld [vmem:[%s254 + $0x3f8] sm:$0xff]
      %v403 = vld [vmem:[%s254 + $0x400] sm:$0xff]
      %v404 = vld [vmem:[%s254 + $0x408] sm:$0xff]
      %v405 = vld [vmem:[%s254 + $0x410] sm:$0xff]
      %v406 = vld [vmem:[%s254 + $0x418] sm:$0xff]
      %v407 = vld [vmem:[%s254 + $0x420] sm:$0xff]
      %v408 = vld [vmem:[%s254 + $0x428] sm:$0xff]
      %v409 = vld [vmem:[%s254 + $0x430] sm:$0xff]
      %v410 = vld [vmem:[%s254 + $0x438] sm:$0xff]
      %v411 = vld [vmem:[%s254 + $0x440] sm:$0xff]
      %v412 = vld [vmem:[%s254 + $0x448] sm:$0xff]
      %v413 = vld [vmem:[%s254 + $0x450] sm:$0xff]
      %v414 = vld [vmem:[%s254 + $0x458] sm:$0xff]
      %v415 = vld [vmem:[%s254 + $0x460] sm:$0xff]
      %v416 = vld [vmem:[%s254 + $0x468] sm:$0xff]
      %v417 = vld [vmem:[%s254 + $0x470] sm:$0xff]
      %v418 = vld [vmem:[%s254 + $0x478] sm:$0xff]
      %v419 = vld [vmem:[%s254 + $0x480] sm:$0xff]
      %v420 = vld [vmem:[%s254 + $0x488] sm:$0xff]
      %v421 = vld [vmem:[%s254 + $0x490] sm:$0xff]
      %v422 = vld [vmem:[%s254 + $0x498] sm:$0xff]
      %v423 = vld [vmem:[%s254 + $0x4a0] sm:$0xff]
      %v424 = vld [vmem:[%s254 + $0x4a8] sm:$0xff]
      %v425 = vld [vmem:[%s254 + $0x4b0] sm:$0xff]
      %v426 = vld [vmem:[%s254 + $0x4b8] sm:$0xff]
      %v427 = vld [vmem:[%s254 + $0x4c0] sm:$0xff]
      %v428 = vld [vmem:[%s254 + $0x4c8] sm:$0xff]
      %v429 = vld [vmem:[%s254 + $0x4d0] sm:$0xff]
      %v430 = vld [vmem:[%s254 + $0x4d8] sm:$0xff]
      %v431 = vld [vmem:[%s254 + $0x4e0] sm:$0xff]
      %v432 = vld [vmem:[%s254 + $0x4e8] sm:$0xff]
      %v433 = vld [vmem:[%s254 + $0x4f0] sm:$0xff]
      %v434 = vld [vmem:[%s254 + $0x4f8] sm:$0xff]
      %v435 = vld [vmem:[%s254 + $0x500] sm:$0xff]
      %v436 = vld [vmem:[%s254 + $0x508] sm:$0xff]
      %v437 = vld [vmem:[%s254 + $0x510] sm:$0xff]
      %v438 = vld [vmem:[%s254 + $0x518] sm:$0xff]
      %v439 = vld [vmem:[%s254 + $0x520] sm:$0xff]
      %v440 = vld [vmem:[%s254 + $0x528] sm:$0xff]
      %v441 = vld [vmem:[%s254 + $0x530] sm:$0xff]
      %v442 = vld [vmem:[%s254 + $0x538] sm:$0xff]
      %v443 = vld [vmem:[%s254 + $0x540] sm:$0xff]
      %v444 = vld [vmem:[%s254 + $0x548] sm:$0xff]
      %v445 = vld [vmem:[%s254 + $0x550] sm:$0xff]
      %v446 = vld [vmem:[%s254 + $0x558] sm:$0xff]
      %v447 = vld [vmem:[%s254 + $0x560] sm:$0xff]
      %v448 = vld [vmem:[%s254 + $0x568] sm:$0xff]
      %v449 = vld [vmem:[%s254 + $0x570] sm:$0xff]
      %v450 = vld [vmem:[%s254 + $0x578] sm:$0xff]
      %v451 = vld [vmem:[%s254 + $0x580] sm:$0xff]
      %v452 = vld [vmem:[%s254 + $0x588] sm:$0xff]
      %v453 = vld [vmem:[%s254 + $0x590] sm:$0xff]
      %v454 = vld [vmem:[%s254 + $0x598] sm:$0xff]
      %v455 = vld [vmem:[%s254 + $0x5a0] sm:$0xff]
      %v456 = vld [vmem:[%s254 + $0x5a8] sm:$0xff]
      %v457 = vld [vmem:[%s254 + $0x5b0] sm:$0xff]
      %v458 = vld [vmem:[%s254 + $0x5b8] sm:$0xff]
      %v459 = vld [vmem:[%s254 + $0x5c0] sm:$0xff]
      %v460 = vld [vmem:[%s254 + $0x5c8] sm:$0xff]
      %v461 = vld [vmem:[%s254 + $0x5d0] sm:$0xff]
      %v462 = vld [vmem:[%s254 + $0x5d8] sm:$0xff]
      %v463 = vld [vmem:[%s254 + $0x5e0] sm:$0xff]
      %v464 = vld [vmem:[%s254 + $0x5e8] sm:$0xff]
      %v465 = vld [vmem:[%s254 + $0x5f0] sm:$0xff]
      %v466 = vld [vmem:[%s254 + $0x5f8] sm:$0xff]
      %v467 = vld [vmem:[%s254 + $0x600] sm:$0xff]
      %v468 = vld [vmem:[%s254 + $0x608] sm:$0xff]
      %v469 = vld [vmem:[%s254 + $0x610] sm:$0xff]
      %v470 = vld [vmem:[%s254 + $0x618] sm:$0xff]
      %v471 = vld [vmem:[%s254 + $0x620] sm:$0xff]
      %v472 = vld [vmem:[%s254 + $0x628] sm:$0xff]
      %v473 = vld [vmem:[%s254 + $0x630] sm:$0xff]
      %v474 = vld [vmem:[%s254 + $0x638] sm:$0xff]
      %v475 = vld [vmem:[%s254 + $0x640] sm:$0xff]
      %v476 = vld [vmem:[%s254 + $0x648] sm:$0xff]
      %v477 = vld [vmem:[%s254 + $0x650] sm:$0xff]
      %v478 = vld [vmem:[%s254 + $0x658] sm:$0xff]
      %v479 = vld [vmem:[%s254 + $0x660] sm:$0xff]
      %v480 = vld [vmem:[%s254 + $0x668] sm:$0xff]
      %v481 = vld [vmem:[%s254 + $0x670] sm:$0xff]
      %v482 = vld [vmem:[%s254 + $0x678] sm:$0xff]
      %v483 = vld [vmem:[%s254 + $0x680] sm:$0xff]
      %v484 = vld [vmem:[%s254 + $0x688] sm:$0xff]
      %v485 = vld [vmem:[%s254 + $0x690] sm:$0xff]
      %v486 = vld [vmem:[%s254 + $0x698] sm:$0xff]
      %v487 = vld [vmem:[%s254 + $0x6a0] sm:$0xff]
      %v488 = vld [vmem:[%s254 + $0x6a8] sm:$0xff]
      %v489 = vld [vmem:[%s254 + $0x6b0] sm:$0xff]
      %v490 = vld [vmem:[%s254 + $0x6b8] sm:$0xff]
      %v491 = vld [vmem:[%s254 + $0x6c0] sm:$0xff]
      %v492 = vld [vmem:[%s254 + $0x6c8] sm:$0xff]
      %v493 = vld [vmem:[%s254 + $0x6d0] sm:$0xff]
      %v494 = vld [vmem:[%s254 + $0x6d8] sm:$0xff]
      %v495 = vld [vmem:[%s254 + $0x6e0] sm:$0xff]
      %v496 = vld [vmem:[%s254 + $0x6e8] sm:$0xff]
      %v497 = vld [vmem:[%s254 + $0x6f0] sm:$0xff]
      %v498 = vld [vmem:[%s254 + $0x6f8] sm:$0xff]
      %v499 = vld [vmem:[%s254 + $0x700] sm:$0xff]
      %v500 = vld [vmem:[%s254 + $0x708] sm:$0xff]
      %v501 = vld [vmem:[%s254 + $0x710] sm:$0xff]
      %v502 = vld [vmem:[%s254 + $0x718] sm:$0xff]
      %v503 = vld [vmem:[%s254 + $0x720] sm:$0xff]
      %v504 = vld [vmem:[%s254 + $0x728] sm:$0xff]
      %v505 = vld [vmem:[%s254 + $0x730] sm:$0xff]
      %v506 = vld [vmem:[%s254 + $0x738] sm:$0xff]
      %v507 = vld [vmem:[%s254 + $0x740] sm:$0xff]
      %v508 = vld [vmem:[%s254 + $0x748] sm:$0xff]
      %v509 = vld [vmem:[%s254 + $0x750] sm:$0xff]
      %v510 = vld [vmem:[%s254 + $0x758] sm:$0xff]
      %v511 = vld [vmem:[%s254 + $0x760] sm:$0xff]
      %v512 = vld [vmem:[%s254 + $0x768] sm:$0xff]
      %v513 = vld [vmem:[%s254 + $0x770] sm:$0xff]
      %v514 = vld [vmem:[%s254 + $0x778] sm:$0xff]
      %v515 = vld [vmem:[%s244] sm:$0xff]
      %v516 = vld [vmem:[%s244 + $0x8] sm:$0xff]
      %v517 = vld [vmem:[%s244 + $0x10] sm:$0xff]
      %v518 = vld [vmem:[%s244 + $0x18] sm:$0xff]
      %v519 = vld [vmem:[%s244 + $0x20] sm:$0xff]
      %v520 = vld [vmem:[%s244 + $0x28] sm:$0xff]
      %v521 = vld [vmem:[%s244 + $0x30] sm:$0xff]
      %v522 = vld [vmem:[%s244 + $0x38] sm:$0xff]
      %v523 = vld [vmem:[%s244 + $0x40] sm:$0xff]
      %v524 = vld [vmem:[%s244 + $0x48] sm:$0xff]
      %v525 = vld [vmem:[%s244 + $0x50] sm:$0xff]
      %v526 = vld [vmem:[%s244 + $0x58] sm:$0xff]
      %v527 = vld [vmem:[%s244 + $0x60] sm:$0xff]
      %v528 = vld [vmem:[%s244 + $0x68] sm:$0xff]
      %v529 = vld [vmem:[%s244 + $0x70] sm:$0xff]
      %v530 = vld [vmem:[%s244 + $0x78] sm:$0xff]
      %v531 = vld [vmem:[%s244 + $0x80] sm:$0xff]
      %v532 = vld [vmem:[%s244 + $0x88] sm:$0xff]
      %v533 = vld [vmem:[%s244 + $0x90] sm:$0xff]
      %v534 = vld [vmem:[%s244 + $0x98] sm:$0xff]
      %v535 = vld [vmem:[%s244 + $0xa0] sm:$0xff]
      %v536 = vld [vmem:[%s244 + $0xa8] sm:$0xff]
      %v537 = vld [vmem:[%s244 + $0xb0] sm:$0xff]
      %v538 = vld [vmem:[%s244 + $0xb8] sm:$0xff]
      %v539 = vld [vmem:[%s244 + $0xc0] sm:$0xff]
      %v540 = vld [vmem:[%s244 + $0xc8] sm:$0xff]
      %v541 = vld [vmem:[%s244 + $0xd0] sm:$0xff]
      %v542 = vld [vmem:[%s244 + $0xd8] sm:$0xff]
      %v543 = vld [vmem:[%s244 + $0xe0] sm:$0xff]
      %v544 = vld [vmem:[%s244 + $0xe8] sm:$0xff]
      %v545 = vld [vmem:[%s244 + $0xf0] sm:$0xff]
      %v546 = vld [vmem:[%s244 + $0xf8] sm:$0xff]
      %v547 = vld [vmem:[%s244 + $0x100] sm:$0xff]
      %v548 = vld [vmem:[%s244 + $0x108] sm:$0xff]
      %v549 = vld [vmem:[%s244 + $0x110] sm:$0xff]
      %v550 = vld [vmem:[%s244 + $0x118] sm:$0xff]
      %v551 = vld [vmem:[%s244 + $0x120] sm:$0xff]
      %v552 = vld [vmem:[%s244 + $0x128] sm:$0xff]
      %v553 = vld [vmem:[%s244 + $0x130] sm:$0xff]
      %v554 = vld [vmem:[%s244 + $0x138] sm:$0xff]
      %v555 = vld [vmem:[%s244 + $0x140] sm:$0xff]
      %v556 = vld [vmem:[%s244 + $0x148] sm:$0xff]
      %v557 = vld [vmem:[%s244 + $0x150] sm:$0xff]
      %v558 = vld [vmem:[%s244 + $0x158] sm:$0xff]
      %v559 = vld [vmem:[%s244 + $0x160] sm:$0xff]
      %v560 = vld [vmem:[%s244 + $0x168] sm:$0xff]
      %v561 = vld [vmem:[%s244 + $0x170] sm:$0xff]
      %v562 = vld [vmem:[%s244 + $0x178] sm:$0xff]
      %v563 = vld [vmem:[%s244 + $0x180] sm:$0xff]
      %v564 = vld [vmem:[%s244 + $0x188] sm:$0xff]
      %v565 = vld [vmem:[%s244 + $0x190] sm:$0xff]
      %v566 = vld [vmem:[%s244 + $0x198] sm:$0xff]
      %v567 = vld [vmem:[%s244 + $0x1a0] sm:$0xff]
      %v568 = vld [vmem:[%s244 + $0x1a8] sm:$0xff]
      %v569 = vld [vmem:[%s244 + $0x1b0] sm:$0xff]
      %v570 = vld [vmem:[%s244 + $0x1b8] sm:$0xff]
      %v571 = vld [vmem:[%s244 + $0x1c0] sm:$0xff]
      %v572 = vld [vmem:[%s244 + $0x1c8] sm:$0xff]
      %v573 = vld [vmem:[%s244 + $0x1d0] sm:$0xff]
      %v574 = vld [vmem:[%s244 + $0x1d8] sm:$0xff]
      %v575 = vld [vmem:[%s244 + $0x1e0] sm:$0xff]
      %v576 = vld [vmem:[%s244 + $0x1e8] sm:$0xff]
      %v577 = vld [vmem:[%s244 + $0x1f0] sm:$0xff]
      %v578 = vld [vmem:[%s244 + $0x1f8] sm:$0xff]
      %v579 = vld [vmem:[%s244 + $0x200] sm:$0xff]
      %v580 = vld [vmem:[%s244 + $0x208] sm:$0xff]
      %v581 = vld [vmem:[%s244 + $0x210] sm:$0xff]
      %v582 = vld [vmem:[%s244 + $0x218] sm:$0xff]
      %v583 = vld [vmem:[%s244 + $0x220] sm:$0xff]
      %v584 = vld [vmem:[%s244 + $0x228] sm:$0xff]
      %v585 = vld [vmem:[%s244 + $0x230] sm:$0xff]
      %v586 = vld [vmem:[%s244 + $0x238] sm:$0xff]
      %v587 = vld [vmem:[%s244 + $0x240] sm:$0xff]
      %v588 = vld [vmem:[%s244 + $0x248] sm:$0xff]
      %v589 = vld [vmem:[%s244 + $0x250] sm:$0xff]
      %v590 = vld [vmem:[%s244 + $0x258] sm:$0xff]
      %v591 = vld [vmem:[%s244 + $0x260] sm:$0xff]
      %v592 = vld [vmem:[%s244 + $0x268] sm:$0xff]
      %v593 = vld [vmem:[%s244 + $0x270] sm:$0xff]
      %v594 = vld [vmem:[%s244 + $0x278] sm:$0xff]
      %v595 = vld [vmem:[%s244 + $0x280] sm:$0xff]
      %v596 = vld [vmem:[%s244 + $0x288] sm:$0xff]
      %v597 = vld [vmem:[%s244 + $0x290] sm:$0xff]
      %v598 = vld [vmem:[%s244 + $0x298] sm:$0xff]
      %v599 = vld [vmem:[%s244 + $0x2a0] sm:$0xff]
      %v600 = vld [vmem:[%s244 + $0x2a8] sm:$0xff]
      %v601 = vld [vmem:[%s244 + $0x2b0] sm:$0xff]
      %v602 = vld [vmem:[%s244 + $0x2b8] sm:$0xff]
      %v603 = vld [vmem:[%s244 + $0x2c0] sm:$0xff]
      %v604 = vld [vmem:[%s244 + $0x2c8] sm:$0xff]
      %v605 = vld [vmem:[%s244 + $0x2d0] sm:$0xff]
      %v606 = vld [vmem:[%s244 + $0x2d8] sm:$0xff]
      %v607 = vld [vmem:[%s244 + $0x2e0] sm:$0xff]
      %v608 = vld [vmem:[%s244 + $0x2e8] sm:$0xff]
      %v609 = vld [vmem:[%s244 + $0x2f0] sm:$0xff]
      %v610 = vld [vmem:[%s244 + $0x2f8] sm:$0xff]
      %v611 = vld [vmem:[%s244 + $0x300] sm:$0xff]
      %v612 = vld [vmem:[%s244 + $0x308] sm:$0xff]
      %v613 = vld [vmem:[%s244 + $0x310] sm:$0xff]
      %v614 = vld [vmem:[%s244 + $0x318] sm:$0xff]
      %v615 = vld [vmem:[%s244 + $0x320] sm:$0xff]
      %v616 = vld [vmem:[%s244 + $0x328] sm:$0xff]
      %v617 = vld [vmem:[%s244 + $0x330] sm:$0xff]
      %v618 = vld [vmem:[%s244 + $0x338] sm:$0xff]
      %v619 = vld [vmem:[%s244 + $0x340] sm:$0xff]
      %v620 = vld [vmem:[%s244 + $0x348] sm:$0xff]
      %v621 = vld [vmem:[%s244 + $0x350] sm:$0xff]
      %v622 = vld [vmem:[%s244 + $0x358] sm:$0xff]
      %v623 = vld [vmem:[%s244 + $0x360] sm:$0xff]
      %v624 = vld [vmem:[%s244 + $0x368] sm:$0xff]
      %v625 = vld [vmem:[%s244 + $0x370] sm:$0xff]
      %v626 = vld [vmem:[%s244 + $0x378] sm:$0xff]
      %v627 = vld [vmem:[%s244 + $0x380] sm:$0xff]
      %v628 = vld [vmem:[%s244 + $0x388] sm:$0xff]
      %v629 = vld [vmem:[%s244 + $0x390] sm:$0xff]
      %v630 = vld [vmem:[%s244 + $0x398] sm:$0xff]
      %v631 = vld [vmem:[%s244 + $0x3a0] sm:$0xff]
      %v632 = vld [vmem:[%s244 + $0x3a8] sm:$0xff]
      %v633 = vld [vmem:[%s244 + $0x3b0] sm:$0xff]
      %v634 = vld [vmem:[%s244 + $0x3b8] sm:$0xff]
      %v635 = vld [vmem:[%s244 + $0x3c0] sm:$0xff]
      %v636 = vld [vmem:[%s244 + $0x3c8] sm:$0xff]
      %v637 = vld [vmem:[%s244 + $0x3d0] sm:$0xff]
      %v638 = vld [vmem:[%s244 + $0x3d8] sm:$0xff]
      %v639 = vld [vmem:[%s244 + $0x3e0] sm:$0xff]
      %v640 = vld [vmem:[%s244 + $0x3e8] sm:$0xff]
      %v641 = vld [vmem:[%s244 + $0x3f0] sm:$0xff]
      %v642 = vld [vmem:[%s244 + $0x3f8] sm:$0xff]
      %v643 = vld [vmem:[%s244 + $0x400] sm:$0xff]
      %v644 = vld [vmem:[%s244 + $0x408] sm:$0xff]
      %v645 = vld [vmem:[%s244 + $0x410] sm:$0xff]
      %v646 = vld [vmem:[%s244 + $0x418] sm:$0xff]
      %v647 = vld [vmem:[%s244 + $0x420] sm:$0xff]
      %v648 = vld [vmem:[%s244 + $0x428] sm:$0xff]
      %v649 = vld [vmem:[%s244 + $0x430] sm:$0xff]
      %v650 = vld [vmem:[%s244 + $0x438] sm:$0xff]
      %v651 = vld [vmem:[%s244 + $0x440] sm:$0xff]
      %v652 = vld [vmem:[%s244 + $0x448] sm:$0xff]
      %v653 = vld [vmem:[%s244 + $0x450] sm:$0xff]
      %v654 = vld [vmem:[%s244 + $0x458] sm:$0xff]
      %v655 = vld [vmem:[%s244 + $0x460] sm:$0xff]
      %v656 = vld [vmem:[%s244 + $0x468] sm:$0xff]
      %v657 = vld [vmem:[%s244 + $0x470] sm:$0xff]
      %v658 = vld [vmem:[%s244 + $0x478] sm:$0xff]
      %v659 = vld [vmem:[%s244 + $0x480] sm:$0xff]
      %v660 = vld [vmem:[%s244 + $0x488] sm:$0xff]
      %v661 = vld [vmem:[%s244 + $0x490] sm:$0xff]
      %v662 = vld [vmem:[%s244 + $0x498] sm:$0xff]
      %v663 = vld [vmem:[%s244 + $0x4a0] sm:$0xff]
      %v664 = vld [vmem:[%s244 + $0x4a8] sm:$0xff]
      %v665 = vld [vmem:[%s244 + $0x4b0] sm:$0xff]
      %v666 = vld [vmem:[%s244 + $0x4b8] sm:$0xff]
      %v667 = vld [vmem:[%s244 + $0x4c0] sm:$0xff]
      %v668 = vld [vmem:[%s244 + $0x4c8] sm:$0xff]
      %v669 = vld [vmem:[%s244 + $0x4d0] sm:$0xff]
      %v670 = vld [vmem:[%s244 + $0x4d8] sm:$0xff]
      %v671 = vld [vmem:[%s244 + $0x4e0] sm:$0xff]
      %v672 = vld [vmem:[%s244 + $0x4e8] sm:$0xff]
      %v673 = vld [vmem:[%s244 + $0x4f0] sm:$0xff]
      %v674 = vld [vmem:[%s244 + $0x4f8] sm:$0xff]
      %v675 = vld [vmem:[%s244 + $0x500] sm:$0xff]
      %v676 = vld [vmem:[%s244 + $0x508] sm:$0xff]
      %v677 = vld [vmem:[%s244 + $0x510] sm:$0xff]
      %v678 = vld [vmem:[%s244 + $0x518] sm:$0xff]
      %v679 = vld [vmem:[%s244 + $0x520] sm:$0xff]
      %v680 = vld [vmem:[%s244 + $0x528] sm:$0xff]
      %v681 = vld [vmem:[%s244 + $0x530] sm:$0xff]
      %v682 = vld [vmem:[%s244 + $0x538] sm:$0xff]
      %v683 = vld [vmem:[%s244 + $0x540] sm:$0xff]
      %v684 = vld [vmem:[%s244 + $0x548] sm:$0xff]
      %v685 = vld [vmem:[%s244 + $0x550] sm:$0xff]
      %v686 = vld [vmem:[%s244 + $0x558] sm:$0xff]
      %v687 = vld [vmem:[%s244 + $0x560] sm:$0xff]
      %v688 = vld [vmem:[%s244 + $0x568] sm:$0xff]
      %v689 = vld [vmem:[%s244 + $0x570] sm:$0xff]
      %v690 = vld [vmem:[%s244 + $0x578] sm:$0xff]
      %v691 = vld [vmem:[%s244 + $0x580] sm:$0xff]
      %v692 = vld [vmem:[%s244 + $0x588] sm:$0xff]
      %v693 = vld [vmem:[%s244 + $0x590] sm:$0xff]
      %v694 = vld [vmem:[%s244 + $0x598] sm:$0xff]
      %v695 = vld [vmem:[%s244 + $0x5a0] sm:$0xff]
      %v696 = vld [vmem:[%s244 + $0x5a8] sm:$0xff]
      %v697 = vld [vmem:[%s244 + $0x5b0] sm:$0xff]
      %v698 = vld [vmem:[%s244 + $0x5b8] sm:$0xff]
      %v699 = vld [vmem:[%s244 + $0x5c0] sm:$0xff]
      %v700 = vld [vmem:[%s244 + $0x5c8] sm:$0xff]
      %v701 = vld [vmem:[%s244 + $0x5d0] sm:$0xff]
      %v702 = vld [vmem:[%s244 + $0x5d8] sm:$0xff]
      %v703 = vld [vmem:[%s244 + $0x5e0] sm:$0xff]
      %v704 = vld [vmem:[%s244 + $0x5e8] sm:$0xff]
      %v705 = vld [vmem:[%s244 + $0x5f0] sm:$0xff]
      %v706 = vld [vmem:[%s244 + $0x5f8] sm:$0xff]
      %v707 = vld [vmem:[%s244 + $0x600] sm:$0xff]
      %v708 = vld [vmem:[%s244 + $0x608] sm:$0xff]
      %v709 = vld [vmem:[%s244 + $0x610] sm:$0xff]
      %v710 = vld [vmem:[%s244 + $0x618] sm:$0xff]
      %v711 = vld [vmem:[%s244 + $0x620] sm:$0xff]
      %v712 = vld [vmem:[%s244 + $0x628] sm:$0xff]
      %v713 = vld [vmem:[%s244 + $0x630] sm:$0xff]
      %v714 = vld [vmem:[%s244 + $0x638] sm:$0xff]
      %v715 = vld [vmem:[%s244 + $0x640] sm:$0xff]
      %v716 = vld [vmem:[%s244 + $0x648] sm:$0xff]
      %v717 = vld [vmem:[%s244 + $0x650] sm:$0xff]
      %v718 = vld [vmem:[%s244 + $0x658] sm:$0xff]
      %v719 = vld [vmem:[%s244 + $0x660] sm:$0xff]
      %v720 = vld [vmem:[%s244 + $0x668] sm:$0xff]
      %v721 = vld [vmem:[%s244 + $0x670] sm:$0xff]
      %v722 = vld [vmem:[%s244 + $0x678] sm:$0xff]
      %v723 = vld [vmem:[%s244 + $0x680] sm:$0xff]
      %v724 = vld [vmem:[%s244 + $0x688] sm:$0xff]
      %v725 = vld [vmem:[%s244 + $0x690] sm:$0xff]
      %v726 = vld [vmem:[%s244 + $0x698] sm:$0xff]
      %v727 = vld [vmem:[%s244 + $0x6a0] sm:$0xff]
      %v728 = vld [vmem:[%s244 + $0x6a8] sm:$0xff]
      %v729 = vld [vmem:[%s244 + $0x6b0] sm:$0xff]
      %v730 = vld [vmem:[%s244 + $0x6b8] sm:$0xff]
      %v731 = vld [vmem:[%s244 + $0x6c0] sm:$0xff]
      %v732 = vld [vmem:[%s244 + $0x6c8] sm:$0xff]
      %v733 = vld [vmem:[%s244 + $0x6d0] sm:$0xff]
      %v734 = vld [vmem:[%s244 + $0x6d8] sm:$0xff]
      %v735 = vld [vmem:[%s244 + $0x6e0] sm:$0xff]
      %v736 = vld [vmem:[%s244 + $0x6e8] sm:$0xff]
      %v737 = vld [vmem:[%s244 + $0x6f0] sm:$0xff]
      %v738 = vld [vmem:[%s244 + $0x6f8] sm:$0xff]
      %v739 = vld [vmem:[%s244 + $0x700] sm:$0xff]
      %v740 = vld [vmem:[%s244 + $0x708] sm:$0xff]
      %v741 = vld [vmem:[%s244 + $0x710] sm:$0xff]
      %v742 = vld [vmem:[%s244 + $0x718] sm:$0xff]
      %v743 = vld [vmem:[%s244 + $0x720] sm:$0xff]
      %v744 = vld [vmem:[%s244 + $0x728] sm:$0xff]
      %v745 = vld [vmem:[%s244 + $0x730] sm:$0xff]
      %v746 = vld [vmem:[%s244 + $0x738] sm:$0xff]
      %v747 = vld [vmem:[%s244 + $0x740] sm:$0xff]
      %v748 = vld [vmem:[%s244 + $0x748] sm:$0xff]
      %v749 = vld [vmem:[%s244 + $0x750] sm:$0xff]
      %v750 = vld [vmem:[%s244 + $0x758] sm:$0xff]
      %v751 = vld [vmem:[%s244 + $0x760] sm:$0xff]
      %v752 = vld [vmem:[%s244 + $0x768] sm:$0xff]
      %v753 = vld [vmem:[%s244 + $0x770] sm:$0xff]
      %v754 = vld [vmem:[%s244 + $0x778] sm:$0xff]
      %756 = vset.pattern.permute.xlu0 0
      %757 = vperm.xlu0 %756, %v515
      %v758 = vpop.permute.xlu0 %757
      %761 = vset.pattern.permute.xlu0 0
      %762 = vperm.xlu0 %761, %v516
      %v763 = vpop.permute.xlu0 %762
      %766 = vset.pattern.permute.xlu0 0
      %767 = vperm.xlu0 %766, %v517
      %v768 = vpop.permute.xlu0 %767
      %771 = vset.pattern.permute.xlu0 0
      %772 = vperm.xlu0 %771, %v518
      %v773 = vpop.permute.xlu0 %772
      %776 = vset.pattern.permute.xlu0 0
      %777 = vperm.xlu0 %776, %v519
      %v778 = vpop.permute.xlu0 %777
      %781 = vset.pattern.permute.xlu0 0
      %782 = vperm.xlu0 %781, %v520
      %v783 = vpop.permute.xlu0 %782
      %786 = vset.pattern.permute.xlu0 0
      %787 = vperm.xlu0 %786, %v521
      %v788 = vpop.permute.xlu0 %787
      %791 = vset.pattern.permute.xlu0 0
      %792 = vperm.xlu0 %791, %v522
      %v793 = vpop.permute.xlu0 %792
      %796 = vset.pattern.permute.xlu0 0
      %797 = vperm.xlu0 %796, %v523
      %v798 = vpop.permute.xlu0 %797
      %801 = vset.pattern.permute.xlu0 0
      %802 = vperm.xlu0 %801, %v524
      %v803 = vpop.permute.xlu0 %802
      %806 = vset.pattern.permute.xlu0 0
      %807 = vperm.xlu0 %806, %v525
      %v808 = vpop.permute.xlu0 %807
      %811 = vset.pattern.permute.xlu0 0
      %812 = vperm.xlu0 %811, %v526
      %v813 = vpop.permute.xlu0 %812
      %816 = vset.pattern.permute.xlu0 0
      %817 = vperm.xlu0 %816, %v527
      %v818 = vpop.permute.xlu0 %817
      %821 = vset.pattern.permute.xlu0 0
      %822 = vperm.xlu0 %821, %v528
      %v823 = vpop.permute.xlu0 %822
      %826 = vset.pattern.permute.xlu0 0
      %827 = vperm.xlu0 %826, %v529
      %v828 = vpop.permute.xlu0 %827
      %831 = vset.pattern.permute.xlu0 0
      %832 = vperm.xlu0 %831, %v530
      %v833 = vpop.permute.xlu0 %832
      %836 = vset.pattern.permute.xlu0 0
      %837 = vperm.xlu0 %836, %v531
      %v838 = vpop.permute.xlu0 %837
      %841 = vset.pattern.permute.xlu0 0
      %842 = vperm.xlu0 %841, %v532
      %v843 = vpop.permute.xlu0 %842
      %846 = vset.pattern.permute.xlu0 0
      %847 = vperm.xlu0 %846, %v533
      %v848 = vpop.permute.xlu0 %847
      %851 = vset.pattern.permute.xlu0 0
      %852 = vperm.xlu0 %851, %v534
      %v853 = vpop.permute.xlu0 %852
      %856 = vset.pattern.permute.xlu0 0
      %857 = vperm.xlu0 %856, %v535
      %v858 = vpop.permute.xlu0 %857
      %861 = vset.pattern.permute.xlu0 0
      %862 = vperm.xlu0 %861, %v536
      %v863 = vpop.permute.xlu0 %862
      %866 = vset.pattern.permute.xlu0 0
      %867 = vperm.xlu0 %866, %v537
      %v868 = vpop.permute.xlu0 %867
      %871 = vset.pattern.permute.xlu0 0
      %872 = vperm.xlu0 %871, %v538
      %v873 = vpop.permute.xlu0 %872
      %876 = vset.pattern.permute.xlu0 0
      %877 = vperm.xlu0 %876, %v539
      %v878 = vpop.permute.xlu0 %877
      %881 = vset.pattern.permute.xlu0 0
      %882 = vperm.xlu0 %881, %v540
      %v883 = vpop.permute.xlu0 %882
      %886 = vset.pattern.permute.xlu0 0
      %887 = vperm.xlu0 %886, %v541
      %v888 = vpop.permute.xlu0 %887
      %891 = vset.pattern.permute.xlu0 0
      %892 = vperm.xlu0 %891, %v542
      %v893 = vpop.permute.xlu0 %892
      %896 = vset.pattern.permute.xlu0 0
      %897 = vperm.xlu0 %896, %v543
      %v898 = vpop.permute.xlu0 %897
      %901 = vset.pattern.permute.xlu0 0
      %902 = vperm.xlu0 %901, %v544
      %v903 = vpop.permute.xlu0 %902
      %906 = vset.pattern.permute.xlu0 0
      %907 = vperm.xlu0 %906, %v545
      %v908 = vpop.permute.xlu0 %907
      %911 = vset.pattern.permute.xlu0 0
      %912 = vperm.xlu0 %911, %v546
      %v913 = vpop.permute.xlu0 %912
      %916 = vset.pattern.permute.xlu0 0
      %917 = vperm.xlu0 %916, %v547
      %v918 = vpop.permute.xlu0 %917
      %921 = vset.pattern.permute.xlu0 0
      %922 = vperm.xlu0 %921, %v548
      %v923 = vpop.permute.xlu0 %922
      %926 = vset.pattern.permute.xlu0 0
      %927 = vperm.xlu0 %926, %v549
      %v928 = vpop.permute.xlu0 %927
      %931 = vset.pattern.permute.xlu0 0
      %932 = vperm.xlu0 %931, %v550
      %v933 = vpop.permute.xlu0 %932
      %936 = vset.pattern.permute.xlu0 0
      %937 = vperm.xlu0 %936, %v551
      %v938 = vpop.permute.xlu0 %937
      %941 = vset.pattern.permute.xlu0 0
      %942 = vperm.xlu0 %941, %v552
      %v943 = vpop.permute.xlu0 %942
      %946 = vset.pattern.permute.xlu0 0
      %947 = vperm.xlu0 %946, %v553
      %v948 = vpop.permute.xlu0 %947
      %951 = vset.pattern.permute.xlu0 0
      %952 = vperm.xlu0 %951, %v554
      %v953 = vpop.permute.xlu0 %952
      %956 = vset.pattern.permute.xlu0 0
      %957 = vperm.xlu0 %956, %v555
      %v958 = vpop.permute.xlu0 %957
      %961 = vset.pattern.permute.xlu0 0
      %962 = vperm.xlu0 %961, %v556
      %v963 = vpop.permute.xlu0 %962
      %966 = vset.pattern.permute.xlu0 0
      %967 = vperm.xlu0 %966, %v557
      %v968 = vpop.permute.xlu0 %967
      %971 = vset.pattern.permute.xlu0 0
      %972 = vperm.xlu0 %971, %v558
      %v973 = vpop.permute.xlu0 %972
      %976 = vset.pattern.permute.xlu0 0
      %977 = vperm.xlu0 %976, %v559
      %v978 = vpop.permute.xlu0 %977
      %981 = vset.pattern.permute.xlu0 0
      %982 = vperm.xlu0 %981, %v560
      %v983 = vpop.permute.xlu0 %982
      %986 = vset.pattern.permute.xlu0 0
      %987 = vperm.xlu0 %986, %v561
      %v988 = vpop.permute.xlu0 %987
      %991 = vset.pattern.permute.xlu0 0
      %992 = vperm.xlu0 %991, %v562
      %v993 = vpop.permute.xlu0 %992
      %996 = vset.pattern.permute.xlu0 0
      %997 = vperm.xlu0 %996, %v563
      %v998 = vpop.permute.xlu0 %997
      %1001 = vset.pattern.permute.xlu0 0
      %1002 = vperm.xlu0 %1001, %v564
      %v1003 = vpop.permute.xlu0 %1002
      %1006 = vset.pattern.permute.xlu0 0
      %1007 = vperm.xlu0 %1006, %v565
      %v1008 = vpop.permute.xlu0 %1007
      %1011 = vset.pattern.permute.xlu0 0
      %1012 = vperm.xlu0 %1011, %v566
      %v1013 = vpop.permute.xlu0 %1012
      %1016 = vset.pattern.permute.xlu0 0
      %1017 = vperm.xlu0 %1016, %v567
      %v1018 = vpop.permute.xlu0 %1017
      %1021 = vset.pattern.permute.xlu0 0
      %1022 = vperm.xlu0 %1021, %v568
      %v1023 = vpop.permute.xlu0 %1022
      %1026 = vset.pattern.permute.xlu0 0
      %1027 = vperm.xlu0 %1026, %v569
      %v1028 = vpop.permute.xlu0 %1027
      %1031 = vset.pattern.permute.xlu0 0
      %1032 = vperm.xlu0 %1031, %v570
      %v1033 = vpop.permute.xlu0 %1032
      %1036 = vset.pattern.permute.xlu0 0
      %1037 = vperm.xlu0 %1036, %v571
      %v1038 = vpop.permute.xlu0 %1037
      %1041 = vset.pattern.permute.xlu0 0
      %1042 = vperm.xlu0 %1041, %v572
      %v1043 = vpop.permute.xlu0 %1042
      %1046 = vset.pattern.permute.xlu0 0
      %1047 = vperm.xlu0 %1046, %v573
      %v1048 = vpop.permute.xlu0 %1047
      %1051 = vset.pattern.permute.xlu0 0
      %1052 = vperm.xlu0 %1051, %v574
      %v1053 = vpop.permute.xlu0 %1052
      %1056 = vset.pattern.permute.xlu0 0
      %1057 = vperm.xlu0 %1056, %v575
      %v1058 = vpop.permute.xlu0 %1057
      %1061 = vset.pattern.permute.xlu0 0
      %1062 = vperm.xlu0 %1061, %v576
      %v1063 = vpop.permute.xlu0 %1062
      %1066 = vset.pattern.permute.xlu0 0
      %1067 = vperm.xlu0 %1066, %v577
      %v1068 = vpop.permute.xlu0 %1067
      %1071 = vset.pattern.permute.xlu0 0
      %1072 = vperm.xlu0 %1071, %v578
      %v1073 = vpop.permute.xlu0 %1072
      %1076 = vset.pattern.permute.xlu0 0
      %1077 = vperm.xlu0 %1076, %v579
      %v1078 = vpop.permute.xlu0 %1077
      %1081 = vset.pattern.permute.xlu0 0
      %1082 = vperm.xlu0 %1081, %v580
      %v1083 = vpop.permute.xlu0 %1082
      %1086 = vset.pattern.permute.xlu0 0
      %1087 = vperm.xlu0 %1086, %v581
      %v1088 = vpop.permute.xlu0 %1087
      %1091 = vset.pattern.permute.xlu0 0
      %1092 = vperm.xlu0 %1091, %v582
      %v1093 = vpop.permute.xlu0 %1092
      %1096 = vset.pattern.permute.xlu0 0
      %1097 = vperm.xlu0 %1096, %v583
      %v1098 = vpop.permute.xlu0 %1097
      %1101 = vset.pattern.permute.xlu0 0
      %1102 = vperm.xlu0 %1101, %v584
      %v1103 = vpop.permute.xlu0 %1102
      %1106 = vset.pattern.permute.xlu0 0
      %1107 = vperm.xlu0 %1106, %v585
      %v1108 = vpop.permute.xlu0 %1107
      %1111 = vset.pattern.permute.xlu0 0
      %1112 = vperm.xlu0 %1111, %v586
      %v1113 = vpop.permute.xlu0 %1112
      %1116 = vset.pattern.permute.xlu0 0
      %1117 = vperm.xlu0 %1116, %v587
      %v1118 = vpop.permute.xlu0 %1117
      %1121 = vset.pattern.permute.xlu0 0
      %1122 = vperm.xlu0 %1121, %v588
      %v1123 = vpop.permute.xlu0 %1122
      %1126 = vset.pattern.permute.xlu0 0
      %1127 = vperm.xlu0 %1126, %v589
      %v1128 = vpop.permute.xlu0 %1127
      %1131 = vset.pattern.permute.xlu0 0
      %1132 = vperm.xlu0 %1131, %v590
      %v1133 = vpop.permute.xlu0 %1132
      %1136 = vset.pattern.permute.xlu0 0
      %1137 = vperm.xlu0 %1136, %v591
      %v1138 = vpop.permute.xlu0 %1137
      %1141 = vset.pattern.permute.xlu0 0
      %1142 = vperm.xlu0 %1141, %v592
      %v1143 = vpop.permute.xlu0 %1142
      %1146 = vset.pattern.permute.xlu0 0
      %1147 = vperm.xlu0 %1146, %v593
      %v1148 = vpop.permute.xlu0 %1147
      %1151 = vset.pattern.permute.xlu0 0
      %1152 = vperm.xlu0 %1151, %v594
      %v1153 = vpop.permute.xlu0 %1152
      %1156 = vset.pattern.permute.xlu0 0
      %1157 = vperm.xlu0 %1156, %v595
      %v1158 = vpop.permute.xlu0 %1157
      %1161 = vset.pattern.permute.xlu0 0
      %1162 = vperm.xlu0 %1161, %v596
      %v1163 = vpop.permute.xlu0 %1162
      %1166 = vset.pattern.permute.xlu0 0
      %1167 = vperm.xlu0 %1166, %v597
      %v1168 = vpop.permute.xlu0 %1167
      %1171 = vset.pattern.permute.xlu0 0
      %1172 = vperm.xlu0 %1171, %v598
      %v1173 = vpop.permute.xlu0 %1172
      %1176 = vset.pattern.permute.xlu0 0
      %1177 = vperm.xlu0 %1176, %v599
      %v1178 = vpop.permute.xlu0 %1177
      %1181 = vset.pattern.permute.xlu0 0
      %1182 = vperm.xlu0 %1181, %v600
      %v1183 = vpop.permute.xlu0 %1182
      %1186 = vset.pattern.permute.xlu0 0
      %1187 = vperm.xlu0 %1186, %v601
      %v1188 = vpop.permute.xlu0 %1187
      %1191 = vset.pattern.permute.xlu0 0
      %1192 = vperm.xlu0 %1191, %v602
      %v1193 = vpop.permute.xlu0 %1192
      %1196 = vset.pattern.permute.xlu0 0
      %1197 = vperm.xlu0 %1196, %v603
      %v1198 = vpop.permute.xlu0 %1197
      %1201 = vset.pattern.permute.xlu0 0
      %1202 = vperm.xlu0 %1201, %v604
      %v1203 = vpop.permute.xlu0 %1202
      %1206 = vset.pattern.permute.xlu0 0
      %1207 = vperm.xlu0 %1206, %v605
      %v1208 = vpop.permute.xlu0 %1207
      %1211 = vset.pattern.permute.xlu0 0
      %1212 = vperm.xlu0 %1211, %v606
      %v1213 = vpop.permute.xlu0 %1212
      %1216 = vset.pattern.permute.xlu0 0
      %1217 = vperm.xlu0 %1216, %v607
      %v1218 = vpop.permute.xlu0 %1217
      %1221 = vset.pattern.permute.xlu0 0
      %1222 = vperm.xlu0 %1221, %v608
      %v1223 = vpop.permute.xlu0 %1222
      %1226 = vset.pattern.permute.xlu0 0
      %1227 = vperm.xlu0 %1226, %v609
      %v1228 = vpop.permute.xlu0 %1227
      %1231 = vset.pattern.permute.xlu0 0
      %1232 = vperm.xlu0 %1231, %v610
      %v1233 = vpop.permute.xlu0 %1232
      %1236 = vset.pattern.permute.xlu0 0
      %1237 = vperm.xlu0 %1236, %v611
      %v1238 = vpop.permute.xlu0 %1237
      %1241 = vset.pattern.permute.xlu0 0
      %1242 = vperm.xlu0 %1241, %v612
      %v1243 = vpop.permute.xlu0 %1242
      %1246 = vset.pattern.permute.xlu0 0
      %1247 = vperm.xlu0 %1246, %v613
      %v1248 = vpop.permute.xlu0 %1247
      %1251 = vset.pattern.permute.xlu0 0
      %1252 = vperm.xlu0 %1251, %v614
      %v1253 = vpop.permute.xlu0 %1252
      %1256 = vset.pattern.permute.xlu0 0
      %1257 = vperm.xlu0 %1256, %v615
      %v1258 = vpop.permute.xlu0 %1257
      %1261 = vset.pattern.permute.xlu0 0
      %1262 = vperm.xlu0 %1261, %v616
      %v1263 = vpop.permute.xlu0 %1262
      %1266 = vset.pattern.permute.xlu0 0
      %1267 = vperm.xlu0 %1266, %v617
      %v1268 = vpop.permute.xlu0 %1267
      %1271 = vset.pattern.permute.xlu0 0
      %1272 = vperm.xlu0 %1271, %v618
      %v1273 = vpop.permute.xlu0 %1272
      %1276 = vset.pattern.permute.xlu0 0
      %1277 = vperm.xlu0 %1276, %v619
      %v1278 = vpop.permute.xlu0 %1277
      %1281 = vset.pattern.permute.xlu0 0
      %1282 = vperm.xlu0 %1281, %v620
      %v1283 = vpop.permute.xlu0 %1282
      %1286 = vset.pattern.permute.xlu0 0
      %1287 = vperm.xlu0 %1286, %v621
      %v1288 = vpop.permute.xlu0 %1287
      %1291 = vset.pattern.permute.xlu0 0
      %1292 = vperm.xlu0 %1291, %v622
      %v1293 = vpop.permute.xlu0 %1292
      %1296 = vset.pattern.permute.xlu0 0
      %1297 = vperm.xlu0 %1296, %v623
      %v1298 = vpop.permute.xlu0 %1297
      %1301 = vset.pattern.permute.xlu0 0
      %1302 = vperm.xlu0 %1301, %v624
      %v1303 = vpop.permute.xlu0 %1302
      %1306 = vset.pattern.permute.xlu0 0
      %1307 = vperm.xlu0 %1306, %v625
      %v1308 = vpop.permute.xlu0 %1307
      %1311 = vset.pattern.permute.xlu0 0
      %1312 = vperm.xlu0 %1311, %v626
      %v1313 = vpop.permute.xlu0 %1312
      %1316 = vset.pattern.permute.xlu0 0
      %1317 = vperm.xlu0 %1316, %v627
      %v1318 = vpop.permute.xlu0 %1317
      %1321 = vset.pattern.permute.xlu0 0
      %1322 = vperm.xlu0 %1321, %v628
      %v1323 = vpop.permute.xlu0 %1322
      %1326 = vset.pattern.permute.xlu0 0
      %1327 = vperm.xlu0 %1326, %v629
      %v1328 = vpop.permute.xlu0 %1327
      %1331 = vset.pattern.permute.xlu0 0
      %1332 = vperm.xlu0 %1331, %v630
      %v1333 = vpop.permute.xlu0 %1332
      %1336 = vset.pattern.permute.xlu0 0
      %1337 = vperm.xlu0 %1336, %v631
      %v1338 = vpop.permute.xlu0 %1337
      %1341 = vset.pattern.permute.xlu0 0
      %1342 = vperm.xlu0 %1341, %v632
      %v1343 = vpop.permute.xlu0 %1342
      %1346 = vset.pattern.permute.xlu0 0
      %1347 = vperm.xlu0 %1346, %v633
      %v1348 = vpop.permute.xlu0 %1347
      %1351 = vset.pattern.permute.xlu0 0
      %1352 = vperm.xlu0 %1351, %v634
      %v1353 = vpop.permute.xlu0 %1352
      %1356 = vset.pattern.permute.xlu0 0
      %1357 = vperm.xlu0 %1356, %v635
      %v1358 = vpop.permute.xlu0 %1357
      %1361 = vset.pattern.permute.xlu0 0
      %1362 = vperm.xlu0 %1361, %v636
      %v1363 = vpop.permute.xlu0 %1362
      %1366 = vset.pattern.permute.xlu0 0
      %1367 = vperm.xlu0 %1366, %v637
      %v1368 = vpop.permute.xlu0 %1367
      %1371 = vset.pattern.permute.xlu0 0
      %1372 = vperm.xlu0 %1371, %v638
      %v1373 = vpop.permute.xlu0 %1372
      %1376 = vset.pattern.permute.xlu0 0
      %1377 = vperm.xlu0 %1376, %v639
      %v1378 = vpop.permute.xlu0 %1377
      %1381 = vset.pattern.permute.xlu0 0
      %1382 = vperm.xlu0 %1381, %v640
      %v1383 = vpop.permute.xlu0 %1382
      %1386 = vset.pattern.permute.xlu0 0
      %1387 = vperm.xlu0 %1386, %v641
      %v1388 = vpop.permute.xlu0 %1387
      %1391 = vset.pattern.permute.xlu0 0
      %1392 = vperm.xlu0 %1391, %v642
      %v1393 = vpop.permute.xlu0 %1392
      %1396 = vset.pattern.permute.xlu0 0
      %1397 = vperm.xlu0 %1396, %v643
      %v1398 = vpop.permute.xlu0 %1397
      %1401 = vset.pattern.permute.xlu0 0
      %1402 = vperm.xlu0 %1401, %v644
      %v1403 = vpop.permute.xlu0 %1402
      %1406 = vset.pattern.permute.xlu0 0
      %1407 = vperm.xlu0 %1406, %v645
      %v1408 = vpop.permute.xlu0 %1407
      %1411 = vset.pattern.permute.xlu0 0
      %1412 = vperm.xlu0 %1411, %v646
      %v1413 = vpop.permute.xlu0 %1412
      %1416 = vset.pattern.permute.xlu0 0
      %1417 = vperm.xlu0 %1416, %v647
      %v1418 = vpop.permute.xlu0 %1417
      %1421 = vset.pattern.permute.xlu0 0
      %1422 = vperm.xlu0 %1421, %v648
      %v1423 = vpop.permute.xlu0 %1422
      %1426 = vset.pattern.permute.xlu0 0
      %1427 = vperm.xlu0 %1426, %v649
      %v1428 = vpop.permute.xlu0 %1427
      %1431 = vset.pattern.permute.xlu0 0
      %1432 = vperm.xlu0 %1431, %v650
      %v1433 = vpop.permute.xlu0 %1432
      %1436 = vset.pattern.permute.xlu0 0
      %1437 = vperm.xlu0 %1436, %v651
      %v1438 = vpop.permute.xlu0 %1437
      %1441 = vset.pattern.permute.xlu0 0
      %1442 = vperm.xlu0 %1441, %v652
      %v1443 = vpop.permute.xlu0 %1442
      %1446 = vset.pattern.permute.xlu0 0
      %1447 = vperm.xlu0 %1446, %v653
      %v1448 = vpop.permute.xlu0 %1447
      %1451 = vset.pattern.permute.xlu0 0
      %1452 = vperm.xlu0 %1451, %v654
      %v1453 = vpop.permute.xlu0 %1452
      %1456 = vset.pattern.permute.xlu0 0
      %1457 = vperm.xlu0 %1456, %v655
      %v1458 = vpop.permute.xlu0 %1457
      %1461 = vset.pattern.permute.xlu0 0
      %1462 = vperm.xlu0 %1461, %v656
      %v1463 = vpop.permute.xlu0 %1462
      %1466 = vset.pattern.permute.xlu0 0
      %1467 = vperm.xlu0 %1466, %v657
      %v1468 = vpop.permute.xlu0 %1467
      %1471 = vset.pattern.permute.xlu0 0
      %1472 = vperm.xlu0 %1471, %v658
      %v1473 = vpop.permute.xlu0 %1472
      %1476 = vset.pattern.permute.xlu0 0
      %1477 = vperm.xlu0 %1476, %v659
      %v1478 = vpop.permute.xlu0 %1477
      %1481 = vset.pattern.permute.xlu0 0
      %1482 = vperm.xlu0 %1481, %v660
      %v1483 = vpop.permute.xlu0 %1482
      %1486 = vset.pattern.permute.xlu0 0
      %1487 = vperm.xlu0 %1486, %v661
      %v1488 = vpop.permute.xlu0 %1487
      %1491 = vset.pattern.permute.xlu0 0
      %1492 = vperm.xlu0 %1491, %v662
      %v1493 = vpop.permute.xlu0 %1492
      %1496 = vset.pattern.permute.xlu0 0
      %1497 = vperm.xlu0 %1496, %v663
      %v1498 = vpop.permute.xlu0 %1497
      %1501 = vset.pattern.permute.xlu0 0
      %1502 = vperm.xlu0 %1501, %v664
      %v1503 = vpop.permute.xlu0 %1502
      %1506 = vset.pattern.permute.xlu0 0
      %1507 = vperm.xlu0 %1506, %v665
      %v1508 = vpop.permute.xlu0 %1507
      %1511 = vset.pattern.permute.xlu0 0
      %1512 = vperm.xlu0 %1511, %v666
      %v1513 = vpop.permute.xlu0 %1512
      %1516 = vset.pattern.permute.xlu0 0
      %1517 = vperm.xlu0 %1516, %v667
      %v1518 = vpop.permute.xlu0 %1517
      %1521 = vset.pattern.permute.xlu0 0
      %1522 = vperm.xlu0 %1521, %v668
      %v1523 = vpop.permute.xlu0 %1522
      %1526 = vset.pattern.permute.xlu0 0
      %1527 = vperm.xlu0 %1526, %v669
      %v1528 = vpop.permute.xlu0 %1527
      %1531 = vset.pattern.permute.xlu0 0
      %1532 = vperm.xlu0 %1531, %v670
      %v1533 = vpop.permute.xlu0 %1532
      %1536 = vset.pattern.permute.xlu0 0
      %1537 = vperm.xlu0 %1536, %v671
      %v1538 = vpop.permute.xlu0 %1537
      %1541 = vset.pattern.permute.xlu0 0
      %1542 = vperm.xlu0 %1541, %v672
      %v1543 = vpop.permute.xlu0 %1542
      %1546 = vset.pattern.permute.xlu0 0
      %1547 = vperm.xlu0 %1546, %v673
      %v1548 = vpop.permute.xlu0 %1547
      %1551 = vset.pattern.permute.xlu0 0
      %1552 = vperm.xlu0 %1551, %v674
      %v1553 = vpop.permute.xlu0 %1552
      %1556 = vset.pattern.permute.xlu0 0
      %1557 = vperm.xlu0 %1556, %v675
      %v1558 = vpop.permute.xlu0 %1557
      %1561 = vset.pattern.permute.xlu0 0
      %1562 = vperm.xlu0 %1561, %v676
      %v1563 = vpop.permute.xlu0 %1562
      %1566 = vset.pattern.permute.xlu0 0
      %1567 = vperm.xlu0 %1566, %v677
      %v1568 = vpop.permute.xlu0 %1567
      %1571 = vset.pattern.permute.xlu0 0
      %1572 = vperm.xlu0 %1571, %v678
      %v1573 = vpop.permute.xlu0 %1572
      %1576 = vset.pattern.permute.xlu0 0
      %1577 = vperm.xlu0 %1576, %v679
      %v1578 = vpop.permute.xlu0 %1577
      %1581 = vset.pattern.permute.xlu0 0
      %1582 = vperm.xlu0 %1581, %v680
      %v1583 = vpop.permute.xlu0 %1582
      %1586 = vset.pattern.permute.xlu0 0
      %1587 = vperm.xlu0 %1586, %v681
      %v1588 = vpop.permute.xlu0 %1587
      %1591 = vset.pattern.permute.xlu0 0
      %1592 = vperm.xlu0 %1591, %v682
      %v1593 = vpop.permute.xlu0 %1592
      %1596 = vset.pattern.permute.xlu0 0
      %1597 = vperm.xlu0 %1596, %v683
      %v1598 = vpop.permute.xlu0 %1597
      %1601 = vset.pattern.permute.xlu0 0
      %1602 = vperm.xlu0 %1601, %v684
      %v1603 = vpop.permute.xlu0 %1602
      %1606 = vset.pattern.permute.xlu0 0
      %1607 = vperm.xlu0 %1606, %v685
      %v1608 = vpop.permute.xlu0 %1607
      %1611 = vset.pattern.permute.xlu0 0
      %1612 = vperm.xlu0 %1611, %v686
      %v1613 = vpop.permute.xlu0 %1612
      %1616 = vset.pattern.permute.xlu0 0
      %1617 = vperm.xlu0 %1616, %v687
      %v1618 = vpop.permute.xlu0 %1617
      %1621 = vset.pattern.permute.xlu0 0
      %1622 = vperm.xlu0 %1621, %v688
      %v1623 = vpop.permute.xlu0 %1622
      %1626 = vset.pattern.permute.xlu0 0
      %1627 = vperm.xlu0 %1626, %v689
      %v1628 = vpop.permute.xlu0 %1627
      %1631 = vset.pattern.permute.xlu0 0
      %1632 = vperm.xlu0 %1631, %v690
      %v1633 = vpop.permute.xlu0 %1632
      %1636 = vset.pattern.permute.xlu0 0
      %1637 = vperm.xlu0 %1636, %v691
      %v1638 = vpop.permute.xlu0 %1637
      %1641 = vset.pattern.permute.xlu0 0
      %1642 = vperm.xlu0 %1641, %v692
      %v1643 = vpop.permute.xlu0 %1642
      %1646 = vset.pattern.permute.xlu0 0
      %1647 = vperm.xlu0 %1646, %v693
      %v1648 = vpop.permute.xlu0 %1647
      %1651 = vset.pattern.permute.xlu0 0
      %1652 = vperm.xlu0 %1651, %v694
      %v1653 = vpop.permute.xlu0 %1652
      %1656 = vset.pattern.permute.xlu0 0
      %1657 = vperm.xlu0 %1656, %v695
      %v1658 = vpop.permute.xlu0 %1657
      %1661 = vset.pattern.permute.xlu0 0
      %1662 = vperm.xlu0 %1661, %v696
      %v1663 = vpop.permute.xlu0 %1662
      %1666 = vset.pattern.permute.xlu0 0
      %1667 = vperm.xlu0 %1666, %v697
      %v1668 = vpop.permute.xlu0 %1667
      %1671 = vset.pattern.permute.xlu0 0
      %1672 = vperm.xlu0 %1671, %v698
      %v1673 = vpop.permute.xlu0 %1672
      %1676 = vset.pattern.permute.xlu0 0
      %1677 = vperm.xlu0 %1676, %v699
      %v1678 = vpop.permute.xlu0 %1677
      %1681 = vset.pattern.permute.xlu0 0
      %1682 = vperm.xlu0 %1681, %v700
      %v1683 = vpop.permute.xlu0 %1682
      %1686 = vset.pattern.permute.xlu0 0
      %1687 = vperm.xlu0 %1686, %v701
      %v1688 = vpop.permute.xlu0 %1687
      %1691 = vset.pattern.permute.xlu0 0
      %1692 = vperm.xlu0 %1691, %v702
      %v1693 = vpop.permute.xlu0 %1692
      %1696 = vset.pattern.permute.xlu0 0
      %1697 = vperm.xlu0 %1696, %v703
      %v1698 = vpop.permute.xlu0 %1697
      %1701 = vset.pattern.permute.xlu0 0
      %1702 = vperm.xlu0 %1701, %v704
      %v1703 = vpop.permute.xlu0 %1702
      %1706 = vset.pattern.permute.xlu0 0
      %1707 = vperm.xlu0 %1706, %v705
      %v1708 = vpop.permute.xlu0 %1707
      %1711 = vset.pattern.permute.xlu0 0
      %1712 = vperm.xlu0 %1711, %v706
      %v1713 = vpop.permute.xlu0 %1712
      %1716 = vset.pattern.permute.xlu0 0
      %1717 = vperm.xlu0 %1716, %v707
      %v1718 = vpop.permute.xlu0 %1717
      %1721 = vset.pattern.permute.xlu0 0
      %1722 = vperm.xlu0 %1721, %v708
      %v1723 = vpop.permute.xlu0 %1722
      %1726 = vset.pattern.permute.xlu0 0
      %1727 = vperm.xlu0 %1726, %v709
      %v1728 = vpop.permute.xlu0 %1727
      %1731 = vset.pattern.permute.xlu0 0
      %1732 = vperm.xlu0 %1731, %v710
      %v1733 = vpop.permute.xlu0 %1732
      %1736 = vset.pattern.permute.xlu0 0
      %1737 = vperm.xlu0 %1736, %v711
      %v1738 = vpop.permute.xlu0 %1737
      %1741 = vset.pattern.permute.xlu0 0
      %1742 = vperm.xlu0 %1741, %v712
      %v1743 = vpop.permute.xlu0 %1742
      %1746 = vset.pattern.permute.xlu0 0
      %1747 = vperm.xlu0 %1746, %v713
      %v1748 = vpop.permute.xlu0 %1747
      %1751 = vset.pattern.permute.xlu0 0
      %1752 = vperm.xlu0 %1751, %v714
      %v1753 = vpop.permute.xlu0 %1752
      %1756 = vset.pattern.permute.xlu0 0
      %1757 = vperm.xlu0 %1756, %v715
      %v1758 = vpop.permute.xlu0 %1757
      %1761 = vset.pattern.permute.xlu0 0
      %1762 = vperm.xlu0 %1761, %v716
      %v1763 = vpop.permute.xlu0 %1762
      %1766 = vset.pattern.permute.xlu0 0
      %1767 = vperm.xlu0 %1766, %v717
      %v1768 = vpop.permute.xlu0 %1767
      %1771 = vset.pattern.permute.xlu0 0
      %1772 = vperm.xlu0 %1771, %v718
      %v1773 = vpop.permute.xlu0 %1772
      %1776 = vset.pattern.permute.xlu0 0
      %1777 = vperm.xlu0 %1776, %v719
      %v1778 = vpop.permute.xlu0 %1777
      %1781 = vset.pattern.permute.xlu0 0
      %1782 = vperm.xlu0 %1781, %v720
      %v1783 = vpop.permute.xlu0 %1782
      %1786 = vset.pattern.permute.xlu0 0
      %1787 = vperm.xlu0 %1786, %v721
      %v1788 = vpop.permute.xlu0 %1787
      %1791 = vset.pattern.permute.xlu0 0
      %1792 = vperm.xlu0 %1791, %v722
      %v1793 = vpop.permute.xlu0 %1792
      %1796 = vset.pattern.permute.xlu0 0
      %1797 = vperm.xlu0 %1796, %v723
      %v1798 = vpop.permute.xlu0 %1797
      %1801 = vset.pattern.permute.xlu0 0
      %1802 = vperm.xlu0 %1801, %v724
      %v1803 = vpop.permute.xlu0 %1802
      %1806 = vset.pattern.permute.xlu0 0
      %1807 = vperm.xlu0 %1806, %v725
      %v1808 = vpop.permute.xlu0 %1807
      %1811 = vset.pattern.permute.xlu0 0
      %1812 = vperm.xlu0 %1811, %v726
      %v1813 = vpop.permute.xlu0 %1812
      %1816 = vset.pattern.permute.xlu0 0
      %1817 = vperm.xlu0 %1816, %v727
      %v1818 = vpop.permute.xlu0 %1817
      %1821 = vset.pattern.permute.xlu0 0
      %1822 = vperm.xlu0 %1821, %v728
      %v1823 = vpop.permute.xlu0 %1822
      %1826 = vset.pattern.permute.xlu0 0
      %1827 = vperm.xlu0 %1826, %v729
      %v1828 = vpop.permute.xlu0 %1827
      %1831 = vset.pattern.permute.xlu0 0
      %1832 = vperm.xlu0 %1831, %v730
      %v1833 = vpop.permute.xlu0 %1832
      %1836 = vset.pattern.permute.xlu0 0
      %1837 = vperm.xlu0 %1836, %v731
      %v1838 = vpop.permute.xlu0 %1837
      %1841 = vset.pattern.permute.xlu0 0
      %1842 = vperm.xlu0 %1841, %v732
      %v1843 = vpop.permute.xlu0 %1842
      %1846 = vset.pattern.permute.xlu0 0
      %1847 = vperm.xlu0 %1846, %v733
      %v1848 = vpop.permute.xlu0 %1847
      %1851 = vset.pattern.permute.xlu0 0
      %1852 = vperm.xlu0 %1851, %v734
      %v1853 = vpop.permute.xlu0 %1852
      %1856 = vset.pattern.permute.xlu0 0
      %1857 = vperm.xlu0 %1856, %v735
      %v1858 = vpop.permute.xlu0 %1857
      %1861 = vset.pattern.permute.xlu0 0
      %1862 = vperm.xlu0 %1861, %v736
      %v1863 = vpop.permute.xlu0 %1862
      %1866 = vset.pattern.permute.xlu0 0
      %1867 = vperm.xlu0 %1866, %v737
      %v1868 = vpop.permute.xlu0 %1867
      %1871 = vset.pattern.permute.xlu0 0
      %1872 = vperm.xlu0 %1871, %v738
      %v1873 = vpop.permute.xlu0 %1872
      %1876 = vset.pattern.permute.xlu0 0
      %1877 = vperm.xlu0 %1876, %v739
      %v1878 = vpop.permute.xlu0 %1877
      %1881 = vset.pattern.permute.xlu0 0
      %1882 = vperm.xlu0 %1881, %v740
      %v1883 = vpop.permute.xlu0 %1882
      %1886 = vset.pattern.permute.xlu0 0
      %1887 = vperm.xlu0 %1886, %v741
      %v1888 = vpop.permute.xlu0 %1887
      %1891 = vset.pattern.permute.xlu0 0
      %1892 = vperm.xlu0 %1891, %v742
      %v1893 = vpop.permute.xlu0 %1892
      %1896 = vset.pattern.permute.xlu0 0
      %1897 = vperm.xlu0 %1896, %v743
      %v1898 = vpop.permute.xlu0 %1897
      %1901 = vset.pattern.permute.xlu0 0
      %1902 = vperm.xlu0 %1901, %v744
      %v1903 = vpop.permute.xlu0 %1902
      %1906 = vset.pattern.permute.xlu0 0
      %1907 = vperm.xlu0 %1906, %v745
      %v1908 = vpop.permute.xlu0 %1907
      %1911 = vset.pattern.permute.xlu0 0
      %1912 = vperm.xlu0 %1911, %v746
      %v1913 = vpop.permute.xlu0 %1912
      %1916 = vset.pattern.permute.xlu0 0
      %1917 = vperm.xlu0 %1916, %v747
      %v1918 = vpop.permute.xlu0 %1917
      %1921 = vset.pattern.permute.xlu0 0
      %1922 = vperm.xlu0 %1921, %v748
      %v1923 = vpop.permute.xlu0 %1922
      %1926 = vset.pattern.permute.xlu0 0
      %1927 = vperm.xlu0 %1926, %v749
      %v1928 = vpop.permute.xlu0 %1927
      %1931 = vset.pattern.permute.xlu0 0
      %1932 = vperm.xlu0 %1931, %v750
      %v1933 = vpop.permute.xlu0 %1932
      %1936 = vset.pattern.permute.xlu0 0
      %1937 = vperm.xlu0 %1936, %v751
      %v1938 = vpop.permute.xlu0 %1937
      %1941 = vset.pattern.permute.xlu0 0
      %1942 = vperm.xlu0 %1941, %v752
      %v1943 = vpop.permute.xlu0 %1942
      %1946 = vset.pattern.permute.xlu0 0
      %1947 = vperm.xlu0 %1946, %v753
      %v1948 = vpop.permute.xlu0 %1947
      %1951 = vset.pattern.permute.xlu0 0
      %1952 = vperm.xlu0 %1951, %v754
      %v1953 = vpop.permute.xlu0 %1952
      %v1955 = vmul.f32 %v275, %v758
      %v1956 = vmul.f32 %v276, %v763
      %v1957 = vmul.f32 %v277, %v768
      %v1958 = vmul.f32 %v278, %v773
      %v1959 = vmul.f32 %v279, %v778
      %v1960 = vmul.f32 %v280, %v783
      %v1961 = vmul.f32 %v281, %v788
      %v1962 = vmul.f32 %v282, %v793
      %v1963 = vmul.f32 %v283, %v798
      %v1964 = vmul.f32 %v284, %v803
      %v1965 = vmul.f32 %v285, %v808
      %v1966 = vmul.f32 %v286, %v813
      %v1967 = vmul.f32 %v287, %v818
      %v1968 = vmul.f32 %v288, %v823
      %v1969 = vmul.f32 %v289, %v828
      %v1970 = vmul.f32 %v290, %v833
      %v1971 = vmul.f32 %v291, %v838
      %v1972 = vmul.f32 %v292, %v843
      %v1973 = vmul.f32 %v293, %v848
      %v1974 = vmul.f32 %v294, %v853
      %v1975 = vmul.f32 %v295, %v858
      %v1976 = vmul.f32 %v296, %v863
      %v1977 = vmul.f32 %v297, %v868
      %v1978 = vmul.f32 %v298, %v873
      %v1979 = vmul.f32 %v299, %v878
      %v1980 = vmul.f32 %v300, %v883
      %v1981 = vmul.f32 %v301, %v888
      %v1982 = vmul.f32 %v302, %v893
      %v1983 = vmul.f32 %v303, %v898
      %v1984 = vmul.f32 %v304, %v903
      %v1985 = vmul.f32 %v305, %v908
      %v1986 = vmul.f32 %v306, %v913
      %v1987 = vmul.f32 %v307, %v918
      %v1988 = vmul.f32 %v308, %v923
      %v1989 = vmul.f32 %v309, %v928
      %v1990 = vmul.f32 %v310, %v933
      %v1991 = vmul.f32 %v311, %v938
      %v1992 = vmul.f32 %v312, %v943
      %v1993 = vmul.f32 %v313, %v948
      %v1994 = vmul.f32 %v314, %v953
      %v1995 = vmul.f32 %v315, %v958
      %v1996 = vmul.f32 %v316, %v963
      %v1997 = vmul.f32 %v317, %v968
      %v1998 = vmul.f32 %v318, %v973
      %v1999 = vmul.f32 %v319, %v978
      %v2000 = vmul.f32 %v320, %v983
      %v2001 = vmul.f32 %v321, %v988
      %v2002 = vmul.f32 %v322, %v993
      %v2003 = vmul.f32 %v323, %v998
      %v2004 = vmul.f32 %v324, %v1003
      %v2005 = vmul.f32 %v325, %v1008
      %v2006 = vmul.f32 %v326, %v1013
      %v2007 = vmul.f32 %v327, %v1018
      %v2008 = vmul.f32 %v328, %v1023
      %v2009 = vmul.f32 %v329, %v1028
      %v2010 = vmul.f32 %v330, %v1033
      %v2011 = vmul.f32 %v331, %v1038
      %v2012 = vmul.f32 %v332, %v1043
      %v2013 = vmul.f32 %v333, %v1048
      %v2014 = vmul.f32 %v334, %v1053
      %v2015 = vmul.f32 %v335, %v1058
      %v2016 = vmul.f32 %v336, %v1063
      %v2017 = vmul.f32 %v337, %v1068
      %v2018 = vmul.f32 %v338, %v1073
      %v2019 = vmul.f32 %v339, %v1078
      %v2020 = vmul.f32 %v340, %v1083
      %v2021 = vmul.f32 %v341, %v1088
      %v2022 = vmul.f32 %v342, %v1093
      %v2023 = vmul.f32 %v343, %v1098
      %v2024 = vmul.f32 %v344, %v1103
      %v2025 = vmul.f32 %v345, %v1108
      %v2026 = vmul.f32 %v346, %v1113
      %v2027 = vmul.f32 %v347, %v1118
      %v2028 = vmul.f32 %v348, %v1123
      %v2029 = vmul.f32 %v349, %v1128
      %v2030 = vmul.f32 %v350, %v1133
      %v2031 = vmul.f32 %v351, %v1138
      %v2032 = vmul.f32 %v352, %v1143
      %v2033 = vmul.f32 %v353, %v1148
      %v2034 = vmul.f32 %v354, %v1153
      %v2035 = vmul.f32 %v355, %v1158
      %v2036 = vmul.f32 %v356, %v1163
      %v2037 = vmul.f32 %v357, %v1168
      %v2038 = vmul.f32 %v358, %v1173
      %v2039 = vmul.f32 %v359, %v1178
      %v2040 = vmul.f32 %v360, %v1183
      %v2041 = vmul.f32 %v361, %v1188
      %v2042 = vmul.f32 %v362, %v1193
      %v2043 = vmul.f32 %v363, %v1198
      %v2044 = vmul.f32 %v364, %v1203
      %v2045 = vmul.f32 %v365, %v1208
      %v2046 = vmul.f32 %v366, %v1213
      %v2047 = vmul.f32 %v367, %v1218
      %v2048 = vmul.f32 %v368, %v1223
      %v2049 = vmul.f32 %v369, %v1228
      %v2050 = vmul.f32 %v370, %v1233
      %v2051 = vmul.f32 %v371, %v1238
      %v2052 = vmul.f32 %v372, %v1243
      %v2053 = vmul.f32 %v373, %v1248
      %v2054 = vmul.f32 %v374, %v1253
      %v2055 = vmul.f32 %v375, %v1258
      %v2056 = vmul.f32 %v376, %v1263
      %v2057 = vmul.f32 %v377, %v1268
      %v2058 = vmul.f32 %v378, %v1273
      %v2059 = vmul.f32 %v379, %v1278
      %v2060 = vmul.f32 %v380, %v1283
      %v2061 = vmul.f32 %v381, %v1288
      %v2062 = vmul.f32 %v382, %v1293
      %v2063 = vmul.f32 %v383, %v1298
      %v2064 = vmul.f32 %v384, %v1303
      %v2065 = vmul.f32 %v385, %v1308
      %v2066 = vmul.f32 %v386, %v1313
      %v2067 = vmul.f32 %v387, %v1318
      %v2068 = vmul.f32 %v388, %v1323
      %v2069 = vmul.f32 %v389, %v1328
      %v2070 = vmul.f32 %v390, %v1333
      %v2071 = vmul.f32 %v391, %v1338
      %v2072 = vmul.f32 %v392, %v1343
      %v2073 = vmul.f32 %v393, %v1348
      %v2074 = vmul.f32 %v394, %v1353
      %v2075 = vmul.f32 %v395, %v1358
      %v2076 = vmul.f32 %v396, %v1363
      %v2077 = vmul.f32 %v397, %v1368
      %v2078 = vmul.f32 %v398, %v1373
      %v2079 = vmul.f32 %v399, %v1378
      %v2080 = vmul.f32 %v400, %v1383
      %v2081 = vmul.f32 %v401, %v1388
      %v2082 = vmul.f32 %v402, %v1393
      %v2083 = vmul.f32 %v403, %v1398
      %v2084 = vmul.f32 %v404, %v1403
      %v2085 = vmul.f32 %v405, %v1408
      %v2086 = vmul.f32 %v406, %v1413
      %v2087 = vmul.f32 %v407, %v1418
      %v2088 = vmul.f32 %v408, %v1423
      %v2089 = vmul.f32 %v409, %v1428
      %v2090 = vmul.f32 %v410, %v1433
      %v2091 = vmul.f32 %v411, %v1438
      %v2092 = vmul.f32 %v412, %v1443
      %v2093 = vmul.f32 %v413, %v1448
      %v2094 = vmul.f32 %v414, %v1453
      %v2095 = vmul.f32 %v415, %v1458
      %v2096 = vmul.f32 %v416, %v1463
      %v2097 = vmul.f32 %v417, %v1468
      %v2098 = vmul.f32 %v418, %v1473
      %v2099 = vmul.f32 %v419, %v1478
      %v2100 = vmul.f32 %v420, %v1483
      %v2101 = vmul.f32 %v421, %v1488
      %v2102 = vmul.f32 %v422, %v1493
      %v2103 = vmul.f32 %v423, %v1498
      %v2104 = vmul.f32 %v424, %v1503
      %v2105 = vmul.f32 %v425, %v1508
      %v2106 = vmul.f32 %v426, %v1513
      %v2107 = vmul.f32 %v427, %v1518
      %v2108 = vmul.f32 %v428, %v1523
      %v2109 = vmul.f32 %v429, %v1528
      %v2110 = vmul.f32 %v430, %v1533
      %v2111 = vmul.f32 %v431, %v1538
      %v2112 = vmul.f32 %v432, %v1543
      %v2113 = vmul.f32 %v433, %v1548
      %v2114 = vmul.f32 %v434, %v1553
      %v2115 = vmul.f32 %v435, %v1558
      %v2116 = vmul.f32 %v436, %v1563
      %v2117 = vmul.f32 %v437, %v1568
      %v2118 = vmul.f32 %v438, %v1573
      %v2119 = vmul.f32 %v439, %v1578
      %v2120 = vmul.f32 %v440, %v1583
      %v2121 = vmul.f32 %v441, %v1588
      %v2122 = vmul.f32 %v442, %v1593
      %v2123 = vmul.f32 %v443, %v1598
      %v2124 = vmul.f32 %v444, %v1603
      %v2125 = vmul.f32 %v445, %v1608
      %v2126 = vmul.f32 %v446, %v1613
      %v2127 = vmul.f32 %v447, %v1618
      %v2128 = vmul.f32 %v448, %v1623
      %v2129 = vmul.f32 %v449, %v1628
      %v2130 = vmul.f32 %v450, %v1633
      %v2131 = vmul.f32 %v451, %v1638
      %v2132 = vmul.f32 %v452, %v1643
      %v2133 = vmul.f32 %v453, %v1648
      %v2134 = vmul.f32 %v454, %v1653
      %v2135 = vmul.f32 %v455, %v1658
      %v2136 = vmul.f32 %v456, %v1663
      %v2137 = vmul.f32 %v457, %v1668
      %v2138 = vmul.f32 %v458, %v1673
      %v2139 = vmul.f32 %v459, %v1678
      %v2140 = vmul.f32 %v460, %v1683
      %v2141 = vmul.f32 %v461, %v1688
      %v2142 = vmul.f32 %v462, %v1693
      %v2143 = vmul.f32 %v463, %v1698
      %v2144 = vmul.f32 %v464, %v1703
      %v2145 = vmul.f32 %v465, %v1708
      %v2146 = vmul.f32 %v466, %v1713
      %v2147 = vmul.f32 %v467, %v1718
      %v2148 = vmul.f32 %v468, %v1723
      %v2149 = vmul.f32 %v469, %v1728
      %v2150 = vmul.f32 %v470, %v1733
      %v2151 = vmul.f32 %v471, %v1738
      %v2152 = vmul.f32 %v472, %v1743
      %v2153 = vmul.f32 %v473, %v1748
      %v2154 = vmul.f32 %v474, %v1753
      %v2155 = vmul.f32 %v475, %v1758
      %v2156 = vmul.f32 %v476, %v1763
      %v2157 = vmul.f32 %v477, %v1768
      %v2158 = vmul.f32 %v478, %v1773
      %v2159 = vmul.f32 %v479, %v1778
      %v2160 = vmul.f32 %v480, %v1783
      %v2161 = vmul.f32 %v481, %v1788
      %v2162 = vmul.f32 %v482, %v1793
      %v2163 = vmul.f32 %v483, %v1798
      %v2164 = vmul.f32 %v484, %v1803
      %v2165 = vmul.f32 %v485, %v1808
      %v2166 = vmul.f32 %v486, %v1813
      %v2167 = vmul.f32 %v487, %v1818
      %v2168 = vmul.f32 %v488, %v1823
      %v2169 = vmul.f32 %v489, %v1828
      %v2170 = vmul.f32 %v490, %v1833
      %v2171 = vmul.f32 %v491, %v1838
      %v2172 = vmul.f32 %v492, %v1843
      %v2173 = vmul.f32 %v493, %v1848
      %v2174 = vmul.f32 %v494, %v1853
      %v2175 = vmul.f32 %v495, %v1858
      %v2176 = vmul.f32 %v496, %v1863
      %v2177 = vmul.f32 %v497, %v1868
      %v2178 = vmul.f32 %v498, %v1873
      %v2179 = vmul.f32 %v499, %v1878
      %v2180 = vmul.f32 %v500, %v1883
      %v2181 = vmul.f32 %v501, %v1888
      %v2182 = vmul.f32 %v502, %v1893
      %v2183 = vmul.f32 %v503, %v1898
      %v2184 = vmul.f32 %v504, %v1903
      %v2185 = vmul.f32 %v505, %v1908
      %v2186 = vmul.f32 %v506, %v1913
      %v2187 = vmul.f32 %v507, %v1918
      %v2188 = vmul.f32 %v508, %v1923
      %v2189 = vmul.f32 %v509, %v1928
      %v2190 = vmul.f32 %v510, %v1933
      %v2191 = vmul.f32 %v511, %v1938
      %v2192 = vmul.f32 %v512, %v1943
      %v2193 = vmul.f32 %v513, %v1948
      %v2194 = vmul.f32 %v514, %v1953
      %2195 = vxpose.xlu0.b32.start [1/16] %v1955, 128
      %2196 = vxpose.xlu0.b32.cont [2/16] %v1956, 128
      %2197 = vxpose.xlu0.b32.cont [3/16] %v1957, 128
      %2198 = vxpose.xlu0.b32.cont [4/16] %v1958, 128
      %2199 = vxpose.xlu0.b32.cont [5/16] %v1959, 128
      %2200 = vxpose.xlu0.b32.cont [6/16] %v1960, 128
      %2201 = vxpose.xlu0.b32.cont [7/16] %v1961, 128
      %2202 = vxpose.xlu0.b32.cont [8/16] %v1962, 128
      %2203 = vxpose.xlu0.b32.cont [9/16] %v1963, 128
      %2204 = vxpose.xlu0.b32.cont [10/16] %v1964, 128
      %2205 = vxpose.xlu0.b32.cont [11/16] %v1965, 128
      %2206 = vxpose.xlu0.b32.cont [12/16] %v1966, 128
      %2207 = vxpose.xlu0.b32.cont [13/16] %v1967, 128
      %2208 = vxpose.xlu0.b32.cont [14/16] %v1968, 128
      %2209 = vxpose.xlu0.b32.cont [15/16] %v1969, 128
      %2210 = vxpose.xlu0.b32.end [16/16] %v1970, 128
      %v2211 = vpop.trf.xlu0
      %v2212 = vpop.trf.xlu0
      %v2213 = vpop.trf.xlu0
      %v2214 = vpop.trf.xlu0
      %v2215 = vpop.trf.xlu0
      %v2216 = vpop.trf.xlu0
      %v2217 = vpop.trf.xlu0
      %v2218 = vpop.trf.xlu0
      %v2219 = vpop.trf.xlu0
      %v2220 = vpop.trf.xlu0
      %v2221 = vpop.trf.xlu0
      %v2222 = vpop.trf.xlu0
      %v2223 = vpop.trf.xlu0
      %v2224 = vpop.trf.xlu0
      %v2225 = vpop.trf.xlu0
      %v2226 = vpop.trf.xlu0
      %2227 = vxpose.xlu0.b32.start [1/16] %v1971, 128
      %2228 = vxpose.xlu0.b32.cont [2/16] %v1972, 128
      %2229 = vxpose.xlu0.b32.cont [3/16] %v1973, 128
      %2230 = vxpose.xlu0.b32.cont [4/16] %v1974, 128
      %2231 = vxpose.xlu0.b32.cont [5/16] %v1975, 128
      %2232 = vxpose.xlu0.b32.cont [6/16] %v1976, 128
      %2233 = vxpose.xlu0.b32.cont [7/16] %v1977, 128
      %2234 = vxpose.xlu0.b32.cont [8/16] %v1978, 128
      %2235 = vxpose.xlu0.b32.cont [9/16] %v1979, 128
      %2236 = vxpose.xlu0.b32.cont [10/16] %v1980, 128
      %2237 = vxpose.xlu0.b32.cont [11/16] %v1981, 128
      %2238 = vxpose.xlu0.b32.cont [12/16] %v1982, 128
      %2239 = vxpose.xlu0.b32.cont [13/16] %v1983, 128
      %2240 = vxpose.xlu0.b32.cont [14/16] %v1984, 128
      %2241 = vxpose.xlu0.b32.cont [15/16] %v1985, 128
      %2242 = vxpose.xlu0.b32.end [16/16] %v1986, 128
      %v2243 = vpop.trf.xlu0
      %v2244 = vpop.trf.xlu0
      %v2245 = vpop.trf.xlu0
      %v2246 = vpop.trf.xlu0
      %v2247 = vpop.trf.xlu0
      %v2248 = vpop.trf.xlu0
      %v2249 = vpop.trf.xlu0
      %v2250 = vpop.trf.xlu0
      %v2251 = vpop.trf.xlu0
      %v2252 = vpop.trf.xlu0
      %v2253 = vpop.trf.xlu0
      %v2254 = vpop.trf.xlu0
      %v2255 = vpop.trf.xlu0
      %v2256 = vpop.trf.xlu0
      %v2257 = vpop.trf.xlu0
      %v2258 = vpop.trf.xlu0
      %2259 = vxpose.xlu0.b32.start [1/16] %v1987, 128
      %2260 = vxpose.xlu0.b32.cont [2/16] %v1988, 128
      %2261 = vxpose.xlu0.b32.cont [3/16] %v1989, 128
      %2262 = vxpose.xlu0.b32.cont [4/16] %v1990, 128
      %2263 = vxpose.xlu0.b32.cont [5/16] %v1991, 128
      %2264 = vxpose.xlu0.b32.cont [6/16] %v1992, 128
      %2265 = vxpose.xlu0.b32.cont [7/16] %v1993, 128
      %2266 = vxpose.xlu0.b32.cont [8/16] %v1994, 128
      %2267 = vxpose.xlu0.b32.cont [9/16] %v1995, 128
      %2268 = vxpose.xlu0.b32.cont [10/16] %v1996, 128
      %2269 = vxpose.xlu0.b32.cont [11/16] %v1997, 128
      %2270 = vxpose.xlu0.b32.cont [12/16] %v1998, 128
      %2271 = vxpose.xlu0.b32.cont [13/16] %v1999, 128
      %2272 = vxpose.xlu0.b32.cont [14/16] %v2000, 128
      %2273 = vxpose.xlu0.b32.cont [15/16] %v2001, 128
      %2274 = vxpose.xlu0.b32.end [16/16] %v2002, 128
      %v2275 = vpop.trf.xlu0
      %v2276 = vpop.trf.xlu0
      %v2277 = vpop.trf.xlu0
      %v2278 = vpop.trf.xlu0
      %v2279 = vpop.trf.xlu0
      %v2280 = vpop.trf.xlu0
      %v2281 = vpop.trf.xlu0
      %v2282 = vpop.trf.xlu0
      %v2283 = vpop.trf.xlu0
      %v2284 = vpop.trf.xlu0
      %v2285 = vpop.trf.xlu0
      %v2286 = vpop.trf.xlu0
      %v2287 = vpop.trf.xlu0
      %v2288 = vpop.trf.xlu0
      %v2289 = vpop.trf.xlu0
      %v2290 = vpop.trf.xlu0
      %2291 = vxpose.xlu0.b32.start [1/16] %v2003, 128
      %2292 = vxpose.xlu0.b32.cont [2/16] %v2004, 128
      %2293 = vxpose.xlu0.b32.cont [3/16] %v2005, 128
      %2294 = vxpose.xlu0.b32.cont [4/16] %v2006, 128
      %2295 = vxpose.xlu0.b32.cont [5/16] %v2007, 128
      %2296 = vxpose.xlu0.b32.cont [6/16] %v2008, 128
      %2297 = vxpose.xlu0.b32.cont [7/16] %v2009, 128
      %2298 = vxpose.xlu0.b32.cont [8/16] %v2010, 128
      %2299 = vxpose.xlu0.b32.cont [9/16] %v2011, 128
      %2300 = vxpose.xlu0.b32.cont [10/16] %v2012, 128
      %2301 = vxpose.xlu0.b32.cont [11/16] %v2013, 128
      %2302 = vxpose.xlu0.b32.cont [12/16] %v2014, 128
      %2303 = vxpose.xlu0.b32.cont [13/16] %v2015, 128
      %2304 = vxpose.xlu0.b32.cont [14/16] %v2016, 128
      %2305 = vxpose.xlu0.b32.cont [15/16] %v2017, 128
      %2306 = vxpose.xlu0.b32.end [16/16] %v2018, 128
      %v2307 = vpop.trf.xlu0
      %v2308 = vpop.trf.xlu0
      %v2309 = vpop.trf.xlu0
      %v2310 = vpop.trf.xlu0
      %v2311 = vpop.trf.xlu0
      %v2312 = vpop.trf.xlu0
      %v2313 = vpop.trf.xlu0
      %v2314 = vpop.trf.xlu0
      %v2315 = vpop.trf.xlu0
      %v2316 = vpop.trf.xlu0
      %v2317 = vpop.trf.xlu0
      %v2318 = vpop.trf.xlu0
      %v2319 = vpop.trf.xlu0
      %v2320 = vpop.trf.xlu0
      %v2321 = vpop.trf.xlu0
      %v2322 = vpop.trf.xlu0
      %2323 = vxpose.xlu0.b32.start [1/16] %v2019, 128
      %2324 = vxpose.xlu0.b32.cont [2/16] %v2020, 128
      %2325 = vxpose.xlu0.b32.cont [3/16] %v2021, 128
      %2326 = vxpose.xlu0.b32.cont [4/16] %v2022, 128
      %2327 = vxpose.xlu0.b32.cont [5/16] %v2023, 128
      %2328 = vxpose.xlu0.b32.cont [6/16] %v2024, 128
      %2329 = vxpose.xlu0.b32.cont [7/16] %v2025, 128
      %2330 = vxpose.xlu0.b32.cont [8/16] %v2026, 128
      %2331 = vxpose.xlu0.b32.cont [9/16] %v2027, 128
      %2332 = vxpose.xlu0.b32.cont [10/16] %v2028, 128
      %2333 = vxpose.xlu0.b32.cont [11/16] %v2029, 128
      %2334 = vxpose.xlu0.b32.cont [12/16] %v2030, 128
      %2335 = vxpose.xlu0.b32.cont [13/16] %v2031, 128
      %2336 = vxpose.xlu0.b32.cont [14/16] %v2032, 128
      %2337 = vxpose.xlu0.b32.cont [15/16] %v2033, 128
      %2338 = vxpose.xlu0.b32.end [16/16] %v2034, 128
      %v2339 = vpop.trf.xlu0
      %v2340 = vpop.trf.xlu0
      %v2341 = vpop.trf.xlu0
      %v2342 = vpop.trf.xlu0
      %v2343 = vpop.trf.xlu0
      %v2344 = vpop.trf.xlu0
      %v2345 = vpop.trf.xlu0
      %v2346 = vpop.trf.xlu0
      %v2347 = vpop.trf.xlu0
      %v2348 = vpop.trf.xlu0
      %v2349 = vpop.trf.xlu0
      %v2350 = vpop.trf.xlu0
      %v2351 = vpop.trf.xlu0
      %v2352 = vpop.trf.xlu0
      %v2353 = vpop.trf.xlu0
      %v2354 = vpop.trf.xlu0
      %2355 = vxpose.xlu0.b32.start [1/16] %v2035, 128
      %2356 = vxpose.xlu0.b32.cont [2/16] %v2036, 128
      %2357 = vxpose.xlu0.b32.cont [3/16] %v2037, 128
      %2358 = vxpose.xlu0.b32.cont [4/16] %v2038, 128
      %2359 = vxpose.xlu0.b32.cont [5/16] %v2039, 128
      %2360 = vxpose.xlu0.b32.cont [6/16] %v2040, 128
      %2361 = vxpose.xlu0.b32.cont [7/16] %v2041, 128
      %2362 = vxpose.xlu0.b32.cont [8/16] %v2042, 128
      %2363 = vxpose.xlu0.b32.cont [9/16] %v2043, 128
      %2364 = vxpose.xlu0.b32.cont [10/16] %v2044, 128
      %2365 = vxpose.xlu0.b32.cont [11/16] %v2045, 128
      %2366 = vxpose.xlu0.b32.cont [12/16] %v2046, 128
      %2367 = vxpose.xlu0.b32.cont [13/16] %v2047, 128
      %2368 = vxpose.xlu0.b32.cont [14/16] %v2048, 128
      %2369 = vxpose.xlu0.b32.cont [15/16] %v2049, 128
      %2370 = vxpose.xlu0.b32.end [16/16] %v2050, 128
      %v2371 = vpop.trf.xlu0
      %v2372 = vpop.trf.xlu0
      %v2373 = vpop.trf.xlu0
      %v2374 = vpop.trf.xlu0
      %v2375 = vpop.trf.xlu0
      %v2376 = vpop.trf.xlu0
      %v2377 = vpop.trf.xlu0
      %v2378 = vpop.trf.xlu0
      %v2379 = vpop.trf.xlu0
      %v2380 = vpop.trf.xlu0
      %v2381 = vpop.trf.xlu0
      %v2382 = vpop.trf.xlu0
      %v2383 = vpop.trf.xlu0
      %v2384 = vpop.trf.xlu0
      %v2385 = vpop.trf.xlu0
      %v2386 = vpop.trf.xlu0
      %2387 = vxpose.xlu0.b32.start [1/16] %v2051, 128
      %2388 = vxpose.xlu0.b32.cont [2/16] %v2052, 128
      %2389 = vxpose.xlu0.b32.cont [3/16] %v2053, 128
      %2390 = vxpose.xlu0.b32.cont [4/16] %v2054, 128
      %2391 = vxpose.xlu0.b32.cont [5/16] %v2055, 128
      %2392 = vxpose.xlu0.b32.cont [6/16] %v2056, 128
      %2393 = vxpose.xlu0.b32.cont [7/16] %v2057, 128
      %2394 = vxpose.xlu0.b32.cont [8/16] %v2058, 128
      %2395 = vxpose.xlu0.b32.cont [9/16] %v2059, 128
      %2396 = vxpose.xlu0.b32.cont [10/16] %v2060, 128
      %2397 = vxpose.xlu0.b32.cont [11/16] %v2061, 128
      %2398 = vxpose.xlu0.b32.cont [12/16] %v2062, 128
      %2399 = vxpose.xlu0.b32.cont [13/16] %v2063, 128
      %2400 = vxpose.xlu0.b32.cont [14/16] %v2064, 128
      %2401 = vxpose.xlu0.b32.cont [15/16] %v2065, 128
      %2402 = vxpose.xlu0.b32.end [16/16] %v2066, 128
      %v2403 = vpop.trf.xlu0
      %v2404 = vpop.trf.xlu0
      %v2405 = vpop.trf.xlu0
      %v2406 = vpop.trf.xlu0
      %v2407 = vpop.trf.xlu0
      %v2408 = vpop.trf.xlu0
      %v2409 = vpop.trf.xlu0
      %v2410 = vpop.trf.xlu0
      %v2411 = vpop.trf.xlu0
      %v2412 = vpop.trf.xlu0
      %v2413 = vpop.trf.xlu0
      %v2414 = vpop.trf.xlu0
      %v2415 = vpop.trf.xlu0
      %v2416 = vpop.trf.xlu0
      %v2417 = vpop.trf.xlu0
      %v2418 = vpop.trf.xlu0
      %2419 = vxpose.xlu0.b32.start [1/16] %v2067, 128
      %2420 = vxpose.xlu0.b32.cont [2/16] %v2068, 128
      %2421 = vxpose.xlu0.b32.cont [3/16] %v2069, 128
      %2422 = vxpose.xlu0.b32.cont [4/16] %v2070, 128
      %2423 = vxpose.xlu0.b32.cont [5/16] %v2071, 128
      %2424 = vxpose.xlu0.b32.cont [6/16] %v2072, 128
      %2425 = vxpose.xlu0.b32.cont [7/16] %v2073, 128
      %2426 = vxpose.xlu0.b32.cont [8/16] %v2074, 128
      %2427 = vxpose.xlu0.b32.cont [9/16] %v2075, 128
      %2428 = vxpose.xlu0.b32.cont [10/16] %v2076, 128
      %2429 = vxpose.xlu0.b32.cont [11/16] %v2077, 128
      %2430 = vxpose.xlu0.b32.cont [12/16] %v2078, 128
      %2431 = vxpose.xlu0.b32.cont [13/16] %v2079, 128
      %2432 = vxpose.xlu0.b32.cont [14/16] %v2080, 128
      %2433 = vxpose.xlu0.b32.cont [15/16] %v2081, 128
      %2434 = vxpose.xlu0.b32.end [16/16] %v2082, 128
      %v2435 = vpop.trf.xlu0
      %v2436 = vpop.trf.xlu0
      %v2437 = vpop.trf.xlu0
      %v2438 = vpop.trf.xlu0
      %v2439 = vpop.trf.xlu0
      %v2440 = vpop.trf.xlu0
      %v2441 = vpop.trf.xlu0
      %v2442 = vpop.trf.xlu0
      %v2443 = vpop.trf.xlu0
      %v2444 = vpop.trf.xlu0
      %v2445 = vpop.trf.xlu0
      %v2446 = vpop.trf.xlu0
      %v2447 = vpop.trf.xlu0
      %v2448 = vpop.trf.xlu0
      %v2449 = vpop.trf.xlu0
      %v2450 = vpop.trf.xlu0
      %2451 = vxpose.xlu0.b32.start [1/16] %v2083, 128
      %2452 = vxpose.xlu0.b32.cont [2/16] %v2084, 128
      %2453 = vxpose.xlu0.b32.cont [3/16] %v2085, 128
      %2454 = vxpose.xlu0.b32.cont [4/16] %v2086, 128
      %2455 = vxpose.xlu0.b32.cont [5/16] %v2087, 128
      %2456 = vxpose.xlu0.b32.cont [6/16] %v2088, 128
      %2457 = vxpose.xlu0.b32.cont [7/16] %v2089, 128
      %2458 = vxpose.xlu0.b32.cont [8/16] %v2090, 128
      %2459 = vxpose.xlu0.b32.cont [9/16] %v2091, 128
      %2460 = vxpose.xlu0.b32.cont [10/16] %v2092, 128
      %2461 = vxpose.xlu0.b32.cont [11/16] %v2093, 128
      %2462 = vxpose.xlu0.b32.cont [12/16] %v2094, 128
      %2463 = vxpose.xlu0.b32.cont [13/16] %v2095, 128
      %2464 = vxpose.xlu0.b32.cont [14/16] %v2096, 128
      %2465 = vxpose.xlu0.b32.cont [15/16] %v2097, 128
      %2466 = vxpose.xlu0.b32.end [16/16] %v2098, 128
      %v2467 = vpop.trf.xlu0
      %v2468 = vpop.trf.xlu0
      %v2469 = vpop.trf.xlu0
      %v2470 = vpop.trf.xlu0
      %v2471 = vpop.trf.xlu0
      %v2472 = vpop.trf.xlu0
      %v2473 = vpop.trf.xlu0
      %v2474 = vpop.trf.xlu0
      %v2475 = vpop.trf.xlu0
      %v2476 = vpop.trf.xlu0
      %v2477 = vpop.trf.xlu0
      %v2478 = vpop.trf.xlu0
      %v2479 = vpop.trf.xlu0
      %v2480 = vpop.trf.xlu0
      %v2481 = vpop.trf.xlu0
      %v2482 = vpop.trf.xlu0
      %2483 = vxpose.xlu0.b32.start [1/16] %v2099, 128
      %2484 = vxpose.xlu0.b32.cont [2/16] %v2100, 128
      %2485 = vxpose.xlu0.b32.cont [3/16] %v2101, 128
      %2486 = vxpose.xlu0.b32.cont [4/16] %v2102, 128
      %2487 = vxpose.xlu0.b32.cont [5/16] %v2103, 128
      %2488 = vxpose.xlu0.b32.cont [6/16] %v2104, 128
      %2489 = vxpose.xlu0.b32.cont [7/16] %v2105, 128
      %2490 = vxpose.xlu0.b32.cont [8/16] %v2106, 128
      %2491 = vxpose.xlu0.b32.cont [9/16] %v2107, 128
      %2492 = vxpose.xlu0.b32.cont [10/16] %v2108, 128
      %2493 = vxpose.xlu0.b32.cont [11/16] %v2109, 128
      %2494 = vxpose.xlu0.b32.cont [12/16] %v2110, 128
      %2495 = vxpose.xlu0.b32.cont [13/16] %v2111, 128
      %2496 = vxpose.xlu0.b32.cont [14/16] %v2112, 128
      %2497 = vxpose.xlu0.b32.cont [15/16] %v2113, 128
      %2498 = vxpose.xlu0.b32.end [16/16] %v2114, 128
      %v2499 = vpop.trf.xlu0
      %v2500 = vpop.trf.xlu0
      %v2501 = vpop.trf.xlu0
      %v2502 = vpop.trf.xlu0
      %v2503 = vpop.trf.xlu0
      %v2504 = vpop.trf.xlu0
      %v2505 = vpop.trf.xlu0
      %v2506 = vpop.trf.xlu0
      %v2507 = vpop.trf.xlu0
      %v2508 = vpop.trf.xlu0
      %v2509 = vpop.trf.xlu0
      %v2510 = vpop.trf.xlu0
      %v2511 = vpop.trf.xlu0
      %v2512 = vpop.trf.xlu0
      %v2513 = vpop.trf.xlu0
      %v2514 = vpop.trf.xlu0
      %2515 = vxpose.xlu0.b32.start [1/16] %v2115, 128
      %2516 = vxpose.xlu0.b32.cont [2/16] %v2116, 128
      %2517 = vxpose.xlu0.b32.cont [3/16] %v2117, 128
      %2518 = vxpose.xlu0.b32.cont [4/16] %v2118, 128
      %2519 = vxpose.xlu0.b32.cont [5/16] %v2119, 128
      %2520 = vxpose.xlu0.b32.cont [6/16] %v2120, 128
      %2521 = vxpose.xlu0.b32.cont [7/16] %v2121, 128
      %2522 = vxpose.xlu0.b32.cont [8/16] %v2122, 128
      %2523 = vxpose.xlu0.b32.cont [9/16] %v2123, 128
      %2524 = vxpose.xlu0.b32.cont [10/16] %v2124, 128
      %2525 = vxpose.xlu0.b32.cont [11/16] %v2125, 128
      %2526 = vxpose.xlu0.b32.cont [12/16] %v2126, 128
      %2527 = vxpose.xlu0.b32.cont [13/16] %v2127, 128
      %2528 = vxpose.xlu0.b32.cont [14/16] %v2128, 128
      %2529 = vxpose.xlu0.b32.cont [15/16] %v2129, 128
      %2530 = vxpose.xlu0.b32.end [16/16] %v2130, 128
      %v2531 = vpop.trf.xlu0
      %v2532 = vpop.trf.xlu0
      %v2533 = vpop.trf.xlu0
      %v2534 = vpop.trf.xlu0
      %v2535 = vpop.trf.xlu0
      %v2536 = vpop.trf.xlu0
      %v2537 = vpop.trf.xlu0
      %v2538 = vpop.trf.xlu0
      %v2539 = vpop.trf.xlu0
      %v2540 = vpop.trf.xlu0
      %v2541 = vpop.trf.xlu0
      %v2542 = vpop.trf.xlu0
      %v2543 = vpop.trf.xlu0
      %v2544 = vpop.trf.xlu0
      %v2545 = vpop.trf.xlu0
      %v2546 = vpop.trf.xlu0
      %2547 = vxpose.xlu0.b32.start [1/16] %v2131, 128
      %2548 = vxpose.xlu0.b32.cont [2/16] %v2132, 128
      %2549 = vxpose.xlu0.b32.cont [3/16] %v2133, 128
      %2550 = vxpose.xlu0.b32.cont [4/16] %v2134, 128
      %2551 = vxpose.xlu0.b32.cont [5/16] %v2135, 128
      %2552 = vxpose.xlu0.b32.cont [6/16] %v2136, 128
      %2553 = vxpose.xlu0.b32.cont [7/16] %v2137, 128
      %2554 = vxpose.xlu0.b32.cont [8/16] %v2138, 128
      %2555 = vxpose.xlu0.b32.cont [9/16] %v2139, 128
      %2556 = vxpose.xlu0.b32.cont [10/16] %v2140, 128
      %2557 = vxpose.xlu0.b32.cont [11/16] %v2141, 128
      %2558 = vxpose.xlu0.b32.cont [12/16] %v2142, 128
      %2559 = vxpose.xlu0.b32.cont [13/16] %v2143, 128
      %2560 = vxpose.xlu0.b32.cont [14/16] %v2144, 128
      %2561 = vxpose.xlu0.b32.cont [15/16] %v2145, 128
      %2562 = vxpose.xlu0.b32.end [16/16] %v2146, 128
      %v2563 = vpop.trf.xlu0
      %v2564 = vpop.trf.xlu0
      %v2565 = vpop.trf.xlu0
      %v2566 = vpop.trf.xlu0
      %v2567 = vpop.trf.xlu0
      %v2568 = vpop.trf.xlu0
      %v2569 = vpop.trf.xlu0
      %v2570 = vpop.trf.xlu0
      %v2571 = vpop.trf.xlu0
      %v2572 = vpop.trf.xlu0
      %v2573 = vpop.trf.xlu0
      %v2574 = vpop.trf.xlu0
      %v2575 = vpop.trf.xlu0
      %v2576 = vpop.trf.xlu0
      %v2577 = vpop.trf.xlu0
      %v2578 = vpop.trf.xlu0
      %2579 = vxpose.xlu0.b32.start [1/16] %v2147, 128
      %2580 = vxpose.xlu0.b32.cont [2/16] %v2148, 128
      %2581 = vxpose.xlu0.b32.cont [3/16] %v2149, 128
      %2582 = vxpose.xlu0.b32.cont [4/16] %v2150, 128
      %2583 = vxpose.xlu0.b32.cont [5/16] %v2151, 128
      %2584 = vxpose.xlu0.b32.cont [6/16] %v2152, 128
      %2585 = vxpose.xlu0.b32.cont [7/16] %v2153, 128
      %2586 = vxpose.xlu0.b32.cont [8/16] %v2154, 128
      %2587 = vxpose.xlu0.b32.cont [9/16] %v2155, 128
      %2588 = vxpose.xlu0.b32.cont [10/16] %v2156, 128
      %2589 = vxpose.xlu0.b32.cont [11/16] %v2157, 128
      %2590 = vxpose.xlu0.b32.cont [12/16] %v2158, 128
      %2591 = vxpose.xlu0.b32.cont [13/16] %v2159, 128
      %2592 = vxpose.xlu0.b32.cont [14/16] %v2160, 128
      %2593 = vxpose.xlu0.b32.cont [15/16] %v2161, 128
      %2594 = vxpose.xlu0.b32.end [16/16] %v2162, 128
      %v2595 = vpop.trf.xlu0
      %v2596 = vpop.trf.xlu0
      %v2597 = vpop.trf.xlu0
      %v2598 = vpop.trf.xlu0
      %v2599 = vpop.trf.xlu0
      %v2600 = vpop.trf.xlu0
      %v2601 = vpop.trf.xlu0
      %v2602 = vpop.trf.xlu0
      %v2603 = vpop.trf.xlu0
      %v2604 = vpop.trf.xlu0
      %v2605 = vpop.trf.xlu0
      %v2606 = vpop.trf.xlu0
      %v2607 = vpop.trf.xlu0
      %v2608 = vpop.trf.xlu0
      %v2609 = vpop.trf.xlu0
      %v2610 = vpop.trf.xlu0
      %2611 = vxpose.xlu0.b32.start [1/16] %v2163, 128
      %2612 = vxpose.xlu0.b32.cont [2/16] %v2164, 128
      %2613 = vxpose.xlu0.b32.cont [3/16] %v2165, 128
      %2614 = vxpose.xlu0.b32.cont [4/16] %v2166, 128
      %2615 = vxpose.xlu0.b32.cont [5/16] %v2167, 128
      %2616 = vxpose.xlu0.b32.cont [6/16] %v2168, 128
      %2617 = vxpose.xlu0.b32.cont [7/16] %v2169, 128
      %2618 = vxpose.xlu0.b32.cont [8/16] %v2170, 128
      %2619 = vxpose.xlu0.b32.cont [9/16] %v2171, 128
      %2620 = vxpose.xlu0.b32.cont [10/16] %v2172, 128
      %2621 = vxpose.xlu0.b32.cont [11/16] %v2173, 128
      %2622 = vxpose.xlu0.b32.cont [12/16] %v2174, 128
      %2623 = vxpose.xlu0.b32.cont [13/16] %v2175, 128
      %2624 = vxpose.xlu0.b32.cont [14/16] %v2176, 128
      %2625 = vxpose.xlu0.b32.cont [15/16] %v2177, 128
      %2626 = vxpose.xlu0.b32.end [16/16] %v2178, 128
      %v2627 = vpop.trf.xlu0
      %v2628 = vpop.trf.xlu0
      %v2629 = vpop.trf.xlu0
      %v2630 = vpop.trf.xlu0
      %v2631 = vpop.trf.xlu0
      %v2632 = vpop.trf.xlu0
      %v2633 = vpop.trf.xlu0
      %v2634 = vpop.trf.xlu0
      %v2635 = vpop.trf.xlu0
      %v2636 = vpop.trf.xlu0
      %v2637 = vpop.trf.xlu0
      %v2638 = vpop.trf.xlu0
      %v2639 = vpop.trf.xlu0
      %v2640 = vpop.trf.xlu0
      %v2641 = vpop.trf.xlu0
      %v2642 = vpop.trf.xlu0
      %2643 = vxpose.xlu0.b32.start [1/16] %v2179, 128
      %2644 = vxpose.xlu0.b32.cont [2/16] %v2180, 128
      %2645 = vxpose.xlu0.b32.cont [3/16] %v2181, 128
      %2646 = vxpose.xlu0.b32.cont [4/16] %v2182, 128
      %2647 = vxpose.xlu0.b32.cont [5/16] %v2183, 128
      %2648 = vxpose.xlu0.b32.cont [6/16] %v2184, 128
      %2649 = vxpose.xlu0.b32.cont [7/16] %v2185, 128
      %2650 = vxpose.xlu0.b32.cont [8/16] %v2186, 128
      %2651 = vxpose.xlu0.b32.cont [9/16] %v2187, 128
      %2652 = vxpose.xlu0.b32.cont [10/16] %v2188, 128
      %2653 = vxpose.xlu0.b32.cont [11/16] %v2189, 128
      %2654 = vxpose.xlu0.b32.cont [12/16] %v2190, 128
      %2655 = vxpose.xlu0.b32.cont [13/16] %v2191, 128
      %2656 = vxpose.xlu0.b32.cont [14/16] %v2192, 128
      %2657 = vxpose.xlu0.b32.cont [15/16] %v2193, 128
      %2658 = vxpose.xlu0.b32.end [16/16] %v2194, 128
      %v2659 = vpop.trf.xlu0
      %v2660 = vpop.trf.xlu0
      %v2661 = vpop.trf.xlu0
      %v2662 = vpop.trf.xlu0
      %v2663 = vpop.trf.xlu0
      %v2664 = vpop.trf.xlu0
      %v2665 = vpop.trf.xlu0
      %v2666 = vpop.trf.xlu0
      %v2667 = vpop.trf.xlu0
      %v2668 = vpop.trf.xlu0
      %v2669 = vpop.trf.xlu0
      %v2670 = vpop.trf.xlu0
      %v2671 = vpop.trf.xlu0
      %v2672 = vpop.trf.xlu0
      %v2673 = vpop.trf.xlu0
      %v2674 = vpop.trf.xlu0
      %v2675 = vpack.c.bf16 %v2212, %v2211
      %v2676 = vpack.c.bf16 %v2244, %v2243
      %v2677 = vpack.c.bf16 %v2276, %v2275
      %v2678 = vpack.c.bf16 %v2308, %v2307
      %v2679 = vpack.c.bf16 %v2340, %v2339
      %v2680 = vpack.c.bf16 %v2372, %v2371
      %v2681 = vpack.c.bf16 %v2404, %v2403
      %v2682 = vpack.c.bf16 %v2436, %v2435
      %v2683 = vpack.c.bf16 %v2468, %v2467
      %v2684 = vpack.c.bf16 %v2500, %v2499
      %v2685 = vpack.c.bf16 %v2532, %v2531
      %v2686 = vpack.c.bf16 %v2564, %v2563
      %v2687 = vpack.c.bf16 %v2596, %v2595
      %v2688 = vpack.c.bf16 %v2628, %v2627
      %v2689 = vpack.c.bf16 %v2660, %v2659
      %v2690 = vpack.c.bf16 %v2214, %v2213
      %v2691 = vpack.c.bf16 %v2246, %v2245
      %v2692 = vpack.c.bf16 %v2278, %v2277
      %v2693 = vpack.c.bf16 %v2310, %v2309
      %v2694 = vpack.c.bf16 %v2342, %v2341
      %v2695 = vpack.c.bf16 %v2374, %v2373
      %v2696 = vpack.c.bf16 %v2406, %v2405
      %v2697 = vpack.c.bf16 %v2438, %v2437
      %v2698 = vpack.c.bf16 %v2470, %v2469
      %v2699 = vpack.c.bf16 %v2502, %v2501
      %v2700 = vpack.c.bf16 %v2534, %v2533
      %v2701 = vpack.c.bf16 %v2566, %v2565
      %v2702 = vpack.c.bf16 %v2598, %v2597
      %v2703 = vpack.c.bf16 %v2630, %v2629
      %v2704 = vpack.c.bf16 %v2662, %v2661
      %v2705 = vpack.c.bf16 %v2216, %v2215
      %v2706 = vpack.c.bf16 %v2248, %v2247
      %v2707 = vpack.c.bf16 %v2280, %v2279
      %v2708 = vpack.c.bf16 %v2312, %v2311
      %v2709 = vpack.c.bf16 %v2344, %v2343
      %v2710 = vpack.c.bf16 %v2376, %v2375
      %v2711 = vpack.c.bf16 %v2408, %v2407
      %v2712 = vpack.c.bf16 %v2440, %v2439
      %v2713 = vpack.c.bf16 %v2472, %v2471
      %v2714 = vpack.c.bf16 %v2504, %v2503
      %v2715 = vpack.c.bf16 %v2536, %v2535
      %v2716 = vpack.c.bf16 %v2568, %v2567
      %v2717 = vpack.c.bf16 %v2600, %v2599
      %v2718 = vpack.c.bf16 %v2632, %v2631
      %v2719 = vpack.c.bf16 %v2664, %v2663
      %v2720 = vpack.c.bf16 %v2217, %v2217
      %v2721 = vpack.c.bf16 %v2249, %v2249
      %v2722 = vpack.c.bf16 %v2281, %v2281
      %v2723 = vpack.c.bf16 %v2313, %v2313
      %v2724 = vpack.c.bf16 %v2345, %v2345
      %v2725 = vpack.c.bf16 %v2377, %v2377
      %v2726 = vpack.c.bf16 %v2409, %v2409
      %v2727 = vpack.c.bf16 %v2441, %v2441
      %v2728 = vpack.c.bf16 %v2473, %v2473
      %v2729 = vpack.c.bf16 %v2505, %v2505
      %v2730 = vpack.c.bf16 %v2537, %v2537
      %v2731 = vpack.c.bf16 %v2569, %v2569
      %v2732 = vpack.c.bf16 %v2601, %v2601
      %v2733 = vpack.c.bf16 %v2633, %v2633
      %v2734 = vpack.c.bf16 %v2665, %v2665
      %v2735 = vld [vmem:[%s265] sm:$0xff]
      %v2736 = vld [vmem:[%s265 + $0x8] sm:$0xff]
      %v2737 = vld [vmem:[%s265 + $0x10] sm:$0xf]
      %v2738 = vld [vmem:[%s265 + $0x14] sm:$0xff]
      %v2739 = vld [vmem:[%s265 + $0x1c] sm:$0xff]
      %v2740 = vld [vmem:[%s265 + $0x24] sm:$0xf]
      %v2741 = vld [vmem:[%s265 + $0x28] sm:$0xff]
      %v2742 = vld [vmem:[%s265 + $0x30] sm:$0xff]
      %v2743 = vld [vmem:[%s265 + $0x38] sm:$0xf]
      %v2744 = vld [vmem:[%s265 + $0x3c] sm:$0xff]
      %v2745 = vld [vmem:[%s265 + $0x44] sm:$0xff]
      %v2746 = vld [vmem:[%s265 + $0x4c] sm:$0xf]
      %v2747 = vld [vmem:[%s265 + $0x50] sm:$0xff]
      %v2748 = vld [vmem:[%s265 + $0x58] sm:$0xff]
      %v2749 = vld [vmem:[%s265 + $0x60] sm:$0xf]
      %v2750 = vld [vmem:[%s265 + $0x64] sm:$0xff]
      %v2751 = vld [vmem:[%s265 + $0x6c] sm:$0xff]
      %v2752 = vld [vmem:[%s265 + $0x74] sm:$0xf]
      %v2753 = vld [vmem:[%s265 + $0x78] sm:$0xff]
      %v2754 = vld [vmem:[%s265 + $0x80] sm:$0xff]
      %v2755 = vld [vmem:[%s265 + $0x88] sm:$0xf]
      %v2756 = vld [vmem:[%s265 + $0x8c] sm:$0xff]
      %v2757 = vld [vmem:[%s265 + $0x94] sm:$0xff]
      %v2758 = vld [vmem:[%s265 + $0x9c] sm:$0xf]
      %v2759 = vld [vmem:[%s265 + $0xa0] sm:$0xff]
      %v2760 = vld [vmem:[%s265 + $0xa8] sm:$0xff]
      %v2761 = vld [vmem:[%s265 + $0xb0] sm:$0xf]
      %v2762 = vld [vmem:[%s265 + $0xb4] sm:$0xff]
      %v2763 = vld [vmem:[%s265 + $0xbc] sm:$0xff]
      %v2764 = vld [vmem:[%s265 + $0xc4] sm:$0xf]
      %v2765 = vld [vmem:[%s265 + $0xc8] sm:$0xff]
      %v2766 = vld [vmem:[%s265 + $0xd0] sm:$0xff]
      %v2767 = vld [vmem:[%s265 + $0xd8] sm:$0xf]
      %v2768 = vld [vmem:[%s265 + $0xdc] sm:$0xff]
      %v2769 = vld [vmem:[%s265 + $0xe4] sm:$0xff]
      %v2770 = vld [vmem:[%s265 + $0xec] sm:$0xf]
      %v2771 = vld [vmem:[%s265 + $0xf0] sm:$0xff]
      %v2772 = vld [vmem:[%s265 + $0xf8] sm:$0xff]
      %v2773 = vld [vmem:[%s265 + $0x100] sm:$0xf]
      %v2774 = vld [vmem:[%s265 + $0x104] sm:$0xff]
      %v2775 = vld [vmem:[%s265 + $0x10c] sm:$0xff]
      %v2776 = vld [vmem:[%s265 + $0x114] sm:$0xf]
      %v2777 = vld [vmem:[%s265 + $0x118] sm:$0xff]
      %v2778 = vld [vmem:[%s265 + $0x120] sm:$0xff]
      %v2779 = vld [vmem:[%s265 + $0x128] sm:$0xf]
      %v2780 = vld [vmem:[%s265 + $0x12c] sm:$0xff]
      %v2781 = vld [vmem:[%s265 + $0x134] sm:$0xff]
      %v2782 = vld [vmem:[%s265 + $0x13c] sm:$0xf]
      %v2783 = vld [vmem:[%s265 + $0x140] sm:$0xff]
      %v2784 = vld [vmem:[%s265 + $0x148] sm:$0xff]
      %v2785 = vld [vmem:[%s265 + $0x150] sm:$0xf]
      %v2786 = vld [vmem:[%s265 + $0x154] sm:$0xff]
      %v2787 = vld [vmem:[%s265 + $0x15c] sm:$0xff]
      %v2788 = vld [vmem:[%s265 + $0x164] sm:$0xf]
      %v2789 = vld [vmem:[%s265 + $0x168] sm:$0xff]
      %v2790 = vld [vmem:[%s265 + $0x170] sm:$0xff]
      %v2791 = vld [vmem:[%s265 + $0x178] sm:$0xf]
      %v2792 = vld [vmem:[%s265 + $0x17c] sm:$0xff]
      %v2793 = vld [vmem:[%s265 + $0x184] sm:$0xff]
      %v2794 = vld [vmem:[%s265 + $0x18c] sm:$0xf]
      %v2795 = vld [vmem:[%s265 + $0x190] sm:$0xff]
      %v2796 = vld [vmem:[%s265 + $0x198] sm:$0xff]
      %v2797 = vld [vmem:[%s265 + $0x1a0] sm:$0xf]
      %v2798 = vld [vmem:[%s265 + $0x1a4] sm:$0xff]
      %v2799 = vld [vmem:[%s265 + $0x1ac] sm:$0xff]
      %v2800 = vld [vmem:[%s265 + $0x1b4] sm:$0xf]
      %v2801 = vld [vmem:[%s265 + $0x1b8] sm:$0xff]
      %v2802 = vld [vmem:[%s265 + $0x1c0] sm:$0xff]
      %v2803 = vld [vmem:[%s265 + $0x1c8] sm:$0xf]
      %v2804 = vld [vmem:[%s265 + $0x1cc] sm:$0xff]
      %v2805 = vld [vmem:[%s265 + $0x1d4] sm:$0xff]
      %v2806 = vld [vmem:[%s265 + $0x1dc] sm:$0xf]
      %v2807 = vld [vmem:[%s265 + $0x1e0] sm:$0xff]
      %v2808 = vld [vmem:[%s265 + $0x1e8] sm:$0xff]
      %v2809 = vld [vmem:[%s265 + $0x1f0] sm:$0xf]
      %v2810 = vld [vmem:[%s265 + $0x1f4] sm:$0xff]
      %v2811 = vld [vmem:[%s265 + $0x1fc] sm:$0xff]
      %v2812 = vld [vmem:[%s265 + $0x204] sm:$0xf]
      %v2813 = vld [vmem:[%s265 + $0x208] sm:$0xff]
      %v2814 = vld [vmem:[%s265 + $0x210] sm:$0xff]
      %v2815 = vld [vmem:[%s265 + $0x218] sm:$0xf]
      %v2816 = vld [vmem:[%s265 + $0x21c] sm:$0xff]
      %v2817 = vld [vmem:[%s265 + $0x224] sm:$0xff]
      %v2818 = vld [vmem:[%s265 + $0x22c] sm:$0xf]
      %v2819 = vld [vmem:[%s265 + $0x230] sm:$0xff]
      %v2820 = vld [vmem:[%s265 + $0x238] sm:$0xff]
      %v2821 = vld [vmem:[%s265 + $0x240] sm:$0xf]
      %v2822 = vld [vmem:[%s265 + $0x244] sm:$0xff]
      %v2823 = vld [vmem:[%s265 + $0x24c] sm:$0xff]
      %v2824 = vld [vmem:[%s265 + $0x254] sm:$0xf]
      %v2825 = vld [vmem:[%s265 + $0x258] sm:$0xff]
      %v2826 = vld [vmem:[%s265 + $0x260] sm:$0xff]
      %v2827 = vld [vmem:[%s265 + $0x268] sm:$0xf]
      %v2828 = vld [vmem:[%s265 + $0x26c] sm:$0xff]
      %v2829 = vld [vmem:[%s265 + $0x274] sm:$0xff]
      %v2830 = vld [vmem:[%s265 + $0x27c] sm:$0xf]
      %v2831 = vld [vmem:[%s265 + $0x280] sm:$0xff]
      %v2832 = vld [vmem:[%s265 + $0x288] sm:$0xff]
      %v2833 = vld [vmem:[%s265 + $0x290] sm:$0xf]
      %v2834 = vld [vmem:[%s265 + $0x294] sm:$0xff]
      %v2835 = vld [vmem:[%s265 + $0x29c] sm:$0xff]
      %v2836 = vld [vmem:[%s265 + $0x2a4] sm:$0xf]
      %v2837 = vld [vmem:[%s265 + $0x2a8] sm:$0xff]
      %v2838 = vld [vmem:[%s265 + $0x2b0] sm:$0xff]
      %v2839 = vld [vmem:[%s265 + $0x2b8] sm:$0xf]
      %v2840 = vld [vmem:[%s265 + $0x2bc] sm:$0xff]
      %v2841 = vld [vmem:[%s265 + $0x2c4] sm:$0xff]
      %v2842 = vld [vmem:[%s265 + $0x2cc] sm:$0xf]
      %v2843 = vld [vmem:[%s265 + $0x2d0] sm:$0xff]
      %v2844 = vld [vmem:[%s265 + $0x2d8] sm:$0xff]
      %v2845 = vld [vmem:[%s265 + $0x2e0] sm:$0xf]
      %v2846 = vld [vmem:[%s265 + $0x2e4] sm:$0xff]
      %v2847 = vld [vmem:[%s265 + $0x2ec] sm:$0xff]
      %v2848 = vld [vmem:[%s265 + $0x2f4] sm:$0xf]
      %v2849 = vld [vmem:[%s265 + $0x2f8] sm:$0xff]
      %v2850 = vld [vmem:[%s265 + $0x300] sm:$0xff]
      %v2851 = vld [vmem:[%s265 + $0x308] sm:$0xf]
      %v2852 = vld [vmem:[%s265 + $0x30c] sm:$0xff]
      %v2853 = vld [vmem:[%s265 + $0x314] sm:$0xff]
      %v2854 = vld [vmem:[%s265 + $0x31c] sm:$0xf]
      %v2855 = vld [vmem:[%s265 + $0x320] sm:$0xff]
      %v2856 = vld [vmem:[%s265 + $0x328] sm:$0xff]
      %v2857 = vld [vmem:[%s265 + $0x330] sm:$0xf]
      %v2858 = vld [vmem:[%s265 + $0x334] sm:$0xff]
      %v2859 = vld [vmem:[%s265 + $0x33c] sm:$0xff]
      %v2860 = vld [vmem:[%s265 + $0x344] sm:$0xf]
      %v2861 = vld [vmem:[%s265 + $0x348] sm:$0xff]
      %v2862 = vld [vmem:[%s265 + $0x350] sm:$0xff]
      %v2863 = vld [vmem:[%s265 + $0x358] sm:$0xf]
      %v2864 = vld [vmem:[%s265 + $0x35c] sm:$0xff]
      %v2865 = vld [vmem:[%s265 + $0x364] sm:$0xff]
      %v2866 = vld [vmem:[%s265 + $0x36c] sm:$0xf]
      %v2867 = vld [vmem:[%s265 + $0x370] sm:$0xff]
      %v2868 = vld [vmem:[%s265 + $0x378] sm:$0xff]
      %v2869 = vld [vmem:[%s265 + $0x380] sm:$0xf]
      %v2870 = vld [vmem:[%s265 + $0x384] sm:$0xff]
      %v2871 = vld [vmem:[%s265 + $0x38c] sm:$0xff]
      %v2872 = vld [vmem:[%s265 + $0x394] sm:$0xf]
      %v2873 = vld [vmem:[%s265 + $0x398] sm:$0xff]
      %v2874 = vld [vmem:[%s265 + $0x3a0] sm:$0xff]
      %v2875 = vld [vmem:[%s265 + $0x3a8] sm:$0xf]
      %v2876 = vld [vmem:[%s265 + $0x3ac] sm:$0xff]
      %v2877 = vld [vmem:[%s265 + $0x3b4] sm:$0xff]
      %v2878 = vld [vmem:[%s265 + $0x3bc] sm:$0xf]
      %v2879 = vld [vmem:[%s265 + $0x3c0] sm:$0xff]
      %v2880 = vld [vmem:[%s265 + $0x3c8] sm:$0xff]
      %v2881 = vld [vmem:[%s265 + $0x3d0] sm:$0xf]
      %v2882 = vld [vmem:[%s265 + $0x3d4] sm:$0xff]
      %v2883 = vld [vmem:[%s265 + $0x3dc] sm:$0xff]
      %v2884 = vld [vmem:[%s265 + $0x3e4] sm:$0xf]
      %v2885 = vld [vmem:[%s265 + $0x3e8] sm:$0xff]
      %v2886 = vld [vmem:[%s265 + $0x3f0] sm:$0xff]
      %v2887 = vld [vmem:[%s265 + $0x3f8] sm:$0xf]
      %v2888 = vld [vmem:[%s265 + $0x3fc] sm:$0xff]
      %v2889 = vld [vmem:[%s265 + $0x404] sm:$0xff]
      %v2890 = vld [vmem:[%s265 + $0x40c] sm:$0xf]
      %v2891 = vld [vmem:[%s265 + $0x410] sm:$0xff]
      %v2892 = vld [vmem:[%s265 + $0x418] sm:$0xff]
      %v2893 = vld [vmem:[%s265 + $0x420] sm:$0xf]
      %v2894 = vld [vmem:[%s265 + $0x424] sm:$0xff]
      %v2895 = vld [vmem:[%s265 + $0x42c] sm:$0xff]
      %v2896 = vld [vmem:[%s265 + $0x434] sm:$0xf]
      %v2897 = vld [vmem:[%s265 + $0x438] sm:$0xff]
      %v2898 = vld [vmem:[%s265 + $0x440] sm:$0xff]
      %v2899 = vld [vmem:[%s265 + $0x448] sm:$0xf]
      %v2900 = vld [vmem:[%s265 + $0x44c] sm:$0xff]
      %v2901 = vld [vmem:[%s265 + $0x454] sm:$0xff]
      %v2902 = vld [vmem:[%s265 + $0x45c] sm:$0xf]
      %v2903 = vld [vmem:[%s265 + $0x460] sm:$0xff]
      %v2904 = vld [vmem:[%s265 + $0x468] sm:$0xff]
      %v2905 = vld [vmem:[%s265 + $0x470] sm:$0xf]
      %v2906 = vld [vmem:[%s265 + $0x474] sm:$0xff]
      %v2907 = vld [vmem:[%s265 + $0x47c] sm:$0xff]
      %v2908 = vld [vmem:[%s265 + $0x484] sm:$0xf]
      %v2909 = vld [vmem:[%s265 + $0x488] sm:$0xff]
      %v2910 = vld [vmem:[%s265 + $0x490] sm:$0xff]
      %v2911 = vld [vmem:[%s265 + $0x498] sm:$0xf]
      %v2912 = vld [vmem:[%s265 + $0x49c] sm:$0xff]
      %v2913 = vld [vmem:[%s265 + $0x4a4] sm:$0xff]
      %v2914 = vld [vmem:[%s265 + $0x4ac] sm:$0xf]
      %v2915 = vld [vmem:[%s265 + $0x4b0] sm:$0xff]
      %v2916 = vld [vmem:[%s265 + $0x4b8] sm:$0xff]
      %v2917 = vld [vmem:[%s265 + $0x4c0] sm:$0xf]
      %v2918 = vld [vmem:[%s265 + $0x4c4] sm:$0xff]
      %v2919 = vld [vmem:[%s265 + $0x4cc] sm:$0xff]
      %v2920 = vld [vmem:[%s265 + $0x4d4] sm:$0xf]
      %v2921 = vld [vmem:[%s265 + $0x4d8] sm:$0xff]
      %v2922 = vld [vmem:[%s265 + $0x4e0] sm:$0xff]
      %v2923 = vld [vmem:[%s265 + $0x4e8] sm:$0xf]
      %v2924 = vld [vmem:[%s265 + $0x4ec] sm:$0xff]
      %v2925 = vld [vmem:[%s265 + $0x4f4] sm:$0xff]
      %v2926 = vld [vmem:[%s265 + $0x4fc] sm:$0xf]
      %v2927 = vld [vmem:[%s265 + $0x500] sm:$0xff]
      %v2928 = vld [vmem:[%s265 + $0x508] sm:$0xff]
      %v2929 = vld [vmem:[%s265 + $0x510] sm:$0xf]
      %v2930 = vld [vmem:[%s265 + $0x514] sm:$0xff]
      %v2931 = vld [vmem:[%s265 + $0x51c] sm:$0xff]
      %v2932 = vld [vmem:[%s265 + $0x524] sm:$0xf]
      %v2933 = vld [vmem:[%s265 + $0x528] sm:$0xff]
      %v2934 = vld [vmem:[%s265 + $0x530] sm:$0xff]
      %v2935 = vld [vmem:[%s265 + $0x538] sm:$0xf]
      %v2936 = vld [vmem:[%s265 + $0x53c] sm:$0xff]
      %v2937 = vld [vmem:[%s265 + $0x544] sm:$0xff]
      %v2938 = vld [vmem:[%s265 + $0x54c] sm:$0xf]
      %v2939 = vld [vmem:[%s265 + $0x550] sm:$0xff]
      %v2940 = vld [vmem:[%s265 + $0x558] sm:$0xff]
      %v2941 = vld [vmem:[%s265 + $0x560] sm:$0xf]
      %v2942 = vld [vmem:[%s265 + $0x564] sm:$0xff]
      %v2943 = vld [vmem:[%s265 + $0x56c] sm:$0xff]
      %v2944 = vld [vmem:[%s265 + $0x574] sm:$0xf]
      %v2945 = vld [vmem:[%s265 + $0x578] sm:$0xff]
      %v2946 = vld [vmem:[%s265 + $0x580] sm:$0xff]
      %v2947 = vld [vmem:[%s265 + $0x588] sm:$0xf]
      %v2948 = vld [vmem:[%s265 + $0x58c] sm:$0xff]
      %v2949 = vld [vmem:[%s265 + $0x594] sm:$0xff]
      %v2950 = vld [vmem:[%s265 + $0x59c] sm:$0xf]
      %v2951 = vld [vmem:[%s265 + $0x5a0] sm:$0xff]
      %v2952 = vld [vmem:[%s265 + $0x5a8] sm:$0xff]
      %v2953 = vld [vmem:[%s265 + $0x5b0] sm:$0xf]
      %v2954 = vld [vmem:[%s265 + $0x5b4] sm:$0xff]
      %v2955 = vld [vmem:[%s265 + $0x5bc] sm:$0xff]
      %v2956 = vld [vmem:[%s265 + $0x5c4] sm:$0xf]
      %v2957 = vld [vmem:[%s265 + $0x5c8] sm:$0xff]
      %v2958 = vld [vmem:[%s265 + $0x5d0] sm:$0xff]
      %v2959 = vld [vmem:[%s265 + $0x5d8] sm:$0xf]
      %v2960 = vld [vmem:[%s265 + $0x5dc] sm:$0xff]
      %v2961 = vld [vmem:[%s265 + $0x5e4] sm:$0xff]
      %v2962 = vld [vmem:[%s265 + $0x5ec] sm:$0xf]
      %v2963 = vld [vmem:[%s265 + $0x5f0] sm:$0xff]
      %v2964 = vld [vmem:[%s265 + $0x5f8] sm:$0xff]
      %v2965 = vld [vmem:[%s265 + $0x600] sm:$0xf]
      %v2966 = vld [vmem:[%s265 + $0x604] sm:$0xff]
      %v2967 = vld [vmem:[%s265 + $0x60c] sm:$0xff]
      %v2968 = vld [vmem:[%s265 + $0x614] sm:$0xf]
      %v2969 = vld [vmem:[%s265 + $0x618] sm:$0xff]
      %v2970 = vld [vmem:[%s265 + $0x620] sm:$0xff]
      %v2971 = vld [vmem:[%s265 + $0x628] sm:$0xf]
      %v2972 = vld [vmem:[%s265 + $0x62c] sm:$0xff]
      %v2973 = vld [vmem:[%s265 + $0x634] sm:$0xff]
      %v2974 = vld [vmem:[%s265 + $0x63c] sm:$0xf]
      %v2975 = vld [vmem:[%s265 + $0x640] sm:$0xff]
      %v2976 = vld [vmem:[%s265 + $0x648] sm:$0xff]
      %v2977 = vld [vmem:[%s265 + $0x650] sm:$0xf]
      %v2978 = vld [vmem:[%s265 + $0x654] sm:$0xff]
      %v2979 = vld [vmem:[%s265 + $0x65c] sm:$0xff]
      %v2980 = vld [vmem:[%s265 + $0x664] sm:$0xf]
      %v2981 = vld [vmem:[%s265 + $0x668] sm:$0xff]
      %v2982 = vld [vmem:[%s265 + $0x670] sm:$0xff]
      %v2983 = vld [vmem:[%s265 + $0x678] sm:$0xf]
      %v2984 = vld [vmem:[%s265 + $0x67c] sm:$0xff]
      %v2985 = vld [vmem:[%s265 + $0x684] sm:$0xff]
      %v2986 = vld [vmem:[%s265 + $0x68c] sm:$0xf]
      %v2987 = vld [vmem:[%s265 + $0x690] sm:$0xff]
      %v2988 = vld [vmem:[%s265 + $0x698] sm:$0xff]
      %v2989 = vld [vmem:[%s265 + $0x6a0] sm:$0xf]
      %v2990 = vld [vmem:[%s265 + $0x6a4] sm:$0xff]
      %v2991 = vld [vmem:[%s265 + $0x6ac] sm:$0xff]
      %v2992 = vld [vmem:[%s265 + $0x6b4] sm:$0xf]
      %v2993 = vld [vmem:[%s265 + $0x6b8] sm:$0xff]
      %v2994 = vld [vmem:[%s265 + $0x6c0] sm:$0xff]
      %v2995 = vld [vmem:[%s265 + $0x6c8] sm:$0xf]
      %v2996 = vld [vmem:[%s265 + $0x6cc] sm:$0xff]
      %v2997 = vld [vmem:[%s265 + $0x6d4] sm:$0xff]
      %v2998 = vld [vmem:[%s265 + $0x6dc] sm:$0xf]
      %v2999 = vld [vmem:[%s265 + $0x6e0] sm:$0xff]
      %v3000 = vld [vmem:[%s265 + $0x6e8] sm:$0xff]
      %v3001 = vld [vmem:[%s265 + $0x6f0] sm:$0xf]
      %v3002 = vld [vmem:[%s265 + $0x6f4] sm:$0xff]
      %v3003 = vld [vmem:[%s265 + $0x6fc] sm:$0xff]
      %v3004 = vld [vmem:[%s265 + $0x704] sm:$0xf]
      %v3005 = vld [vmem:[%s265 + $0x708] sm:$0xff]
      %v3006 = vld [vmem:[%s265 + $0x710] sm:$0xff]
      %v3007 = vld [vmem:[%s265 + $0x718] sm:$0xf]
      %v3008 = vld [vmem:[%s265 + $0x71c] sm:$0xff]
      %v3009 = vld [vmem:[%s265 + $0x724] sm:$0xff]
      %v3010 = vld [vmem:[%s265 + $0x72c] sm:$0xf]
      %v3011 = vld [vmem:[%s265 + $0x730] sm:$0xff]
      %v3012 = vld [vmem:[%s265 + $0x738] sm:$0xff]
      %v3013 = vld [vmem:[%s265 + $0x740] sm:$0xf]
      %v3014 = vld [vmem:[%s265 + $0x744] sm:$0xff]
      %v3015 = vld [vmem:[%s265 + $0x74c] sm:$0xff]
      %v3016 = vld [vmem:[%s265 + $0x754] sm:$0xf]
      %v3017 = vld [vmem:[%s265 + $0x758] sm:$0xff]
      %v3018 = vld [vmem:[%s265 + $0x760] sm:$0xff]
      %v3019 = vld [vmem:[%s265 + $0x768] sm:$0xf]
      %v3020 = vld [vmem:[%s265 + $0x76c] sm:$0xff]
      %v3021 = vld [vmem:[%s265 + $0x774] sm:$0xff]
      %v3022 = vld [vmem:[%s265 + $0x77c] sm:$0xf]
      %v3023 = vld [vmem:[%s265 + $0x780] sm:$0xff]
      %v3024 = vld [vmem:[%s265 + $0x788] sm:$0xff]
      %v3025 = vld [vmem:[%s265 + $0x790] sm:$0xf]
      %v3026 = vld [vmem:[%s265 + $0x794] sm:$0xff]
      %v3027 = vld [vmem:[%s265 + $0x79c] sm:$0xff]
      %v3028 = vld [vmem:[%s265 + $0x7a4] sm:$0xf]
      %v3029 = vld [vmem:[%s265 + $0x7a8] sm:$0xff]
      %v3030 = vld [vmem:[%s265 + $0x7b0] sm:$0xff]
      %v3031 = vld [vmem:[%s265 + $0x7b8] sm:$0xf]
      %v3032 = vld [vmem:[%s265 + $0x7bc] sm:$0xff]
      %v3033 = vld [vmem:[%s265 + $0x7c4] sm:$0xff]
      %v3034 = vld [vmem:[%s265 + $0x7cc] sm:$0xf]
      %v3035 = vld [vmem:[%s265 + $0x7d0] sm:$0xff]
      %v3036 = vld [vmem:[%s265 + $0x7d8] sm:$0xff]
      %v3037 = vld [vmem:[%s265 + $0x7e0] sm:$0xf]
      %v3038 = vld [vmem:[%s265 + $0x7e4] sm:$0xff]
      %v3039 = vld [vmem:[%s265 + $0x7ec] sm:$0xff]
      %v3040 = vld [vmem:[%s265 + $0x7f4] sm:$0xf]
      %v3041 = vld [vmem:[%s265 + $0x7f8] sm:$0xff]
      %v3042 = vld [vmem:[%s265 + $0x800] sm:$0xff]
      %v3043 = vld [vmem:[%s265 + $0x808] sm:$0xf]
      %v3044 = vld [vmem:[%s265 + $0x80c] sm:$0xff]
      %v3045 = vld [vmem:[%s265 + $0x814] sm:$0xff]
      %v3046 = vld [vmem:[%s265 + $0x81c] sm:$0xf]
      %v3047 = vld [vmem:[%s265 + $0x820] sm:$0xff]
      %v3048 = vld [vmem:[%s265 + $0x828] sm:$0xff]
      %v3049 = vld [vmem:[%s265 + $0x830] sm:$0xf]
      %v3050 = vld [vmem:[%s265 + $0x834] sm:$0xff]
      %v3051 = vld [vmem:[%s265 + $0x83c] sm:$0xff]
      %v3052 = vld [vmem:[%s265 + $0x844] sm:$0xf]
      %v3053 = vld [vmem:[%s265 + $0x848] sm:$0xff]
      %v3054 = vld [vmem:[%s265 + $0x850] sm:$0xff]
      %v3055 = vld [vmem:[%s265 + $0x858] sm:$0xf]
      %v3056 = vld [vmem:[%s265 + $0x85c] sm:$0xff]
      %v3057 = vld [vmem:[%s265 + $0x864] sm:$0xff]
      %v3058 = vld [vmem:[%s265 + $0x86c] sm:$0xf]
      %v3059 = vld [vmem:[%s265 + $0x870] sm:$0xff]
      %v3060 = vld [vmem:[%s265 + $0x878] sm:$0xff]
      %v3061 = vld [vmem:[%s265 + $0x880] sm:$0xf]
      %v3062 = vld [vmem:[%s265 + $0x884] sm:$0xff]
      %v3063 = vld [vmem:[%s265 + $0x88c] sm:$0xff]
      %v3064 = vld [vmem:[%s265 + $0x894] sm:$0xf]
      %v3065 = vld [vmem:[%s265 + $0x898] sm:$0xff]
      %v3066 = vld [vmem:[%s265 + $0x8a0] sm:$0xff]
      %v3067 = vld [vmem:[%s265 + $0x8a8] sm:$0xf]
      %v3068 = vld [vmem:[%s265 + $0x8ac] sm:$0xff]
      %v3069 = vld [vmem:[%s265 + $0x8b4] sm:$0xff]
      %v3070 = vld [vmem:[%s265 + $0x8bc] sm:$0xf]
      %v3071 = vld [vmem:[%s265 + $0x8c0] sm:$0xff]
      %v3072 = vld [vmem:[%s265 + $0x8c8] sm:$0xff]
      %v3073 = vld [vmem:[%s265 + $0x8d0] sm:$0xf]
      %v3074 = vld [vmem:[%s265 + $0x8d4] sm:$0xff]
      %v3075 = vld [vmem:[%s265 + $0x8dc] sm:$0xff]
      %v3076 = vld [vmem:[%s265 + $0x8e4] sm:$0xf]
      %v3077 = vld [vmem:[%s265 + $0x8e8] sm:$0xff]
      %v3078 = vld [vmem:[%s265 + $0x8f0] sm:$0xff]
      %v3079 = vld [vmem:[%s265 + $0x8f8] sm:$0xf]
      %v3080 = vld [vmem:[%s265 + $0x8fc] sm:$0xff]
      %v3081 = vld [vmem:[%s265 + $0x904] sm:$0xff]
      %v3082 = vld [vmem:[%s265 + $0x90c] sm:$0xf]
      %v3083 = vld [vmem:[%s265 + $0x910] sm:$0xff]
      %v3084 = vld [vmem:[%s265 + $0x918] sm:$0xff]
      %v3085 = vld [vmem:[%s265 + $0x920] sm:$0xf]
      %v3086 = vld [vmem:[%s265 + $0x924] sm:$0xff]
      %v3087 = vld [vmem:[%s265 + $0x92c] sm:$0xff]
      %v3088 = vld [vmem:[%s265 + $0x934] sm:$0xf]
      %v3089 = vld [vmem:[%s265 + $0x938] sm:$0xff]
      %v3090 = vld [vmem:[%s265 + $0x940] sm:$0xff]
      %v3091 = vld [vmem:[%s265 + $0x948] sm:$0xf]
      %v3092 = vld [vmem:[%s265 + $0x94c] sm:$0xff]
      %v3093 = vld [vmem:[%s265 + $0x954] sm:$0xff]
      %v3094 = vld [vmem:[%s265 + $0x95c] sm:$0xf]
      %v3095 = vld [vmem:[%s265 + $0x960] sm:$0xff]
      %v3096 = vld [vmem:[%s265 + $0x968] sm:$0xff]
      %v3097 = vld [vmem:[%s265 + $0x970] sm:$0xf]
      %v3098 = vld [vmem:[%s265 + $0x974] sm:$0xff]
      %v3099 = vld [vmem:[%s265 + $0x97c] sm:$0xff]
      %v3100 = vld [vmem:[%s265 + $0x984] sm:$0xf]
      %v3101 = vld [vmem:[%s265 + $0x988] sm:$0xff]
      %v3102 = vld [vmem:[%s265 + $0x990] sm:$0xff]
      %v3103 = vld [vmem:[%s265 + $0x998] sm:$0xf]
      %v3104 = vld [vmem:[%s265 + $0x99c] sm:$0xff]
      %v3105 = vld [vmem:[%s265 + $0x9a4] sm:$0xff]
      %v3106 = vld [vmem:[%s265 + $0x9ac] sm:$0xf]
      %v3107 = vld [vmem:[%s265 + $0x9b0] sm:$0xff]
      %v3108 = vld [vmem:[%s265 + $0x9b8] sm:$0xff]
      %v3109 = vld [vmem:[%s265 + $0x9c0] sm:$0xf]
      %v3110 = vld [vmem:[%s265 + $0x9c4] sm:$0xff]
      %v3111 = vld [vmem:[%s265 + $0x9cc] sm:$0xff]
      %v3112 = vld [vmem:[%s265 + $0x9d4] sm:$0xf]
      %v3113 = vld [vmem:[%s265 + $0x9d8] sm:$0xff]
      %v3114 = vld [vmem:[%s265 + $0x9e0] sm:$0xff]
      %v3115 = vld [vmem:[%s265 + $0x9e8] sm:$0xf]
      %v3116 = vld [vmem:[%s265 + $0x9ec] sm:$0xff]
      %v3117 = vld [vmem:[%s265 + $0x9f4] sm:$0xff]
      %v3118 = vld [vmem:[%s265 + $0x9fc] sm:$0xf]
      %v3119 = vld [vmem:[%s265 + $0xa00] sm:$0xff]
      %v3120 = vld [vmem:[%s265 + $0xa08] sm:$0xff]
      %v3121 = vld [vmem:[%s265 + $0xa10] sm:$0xf]
      %v3122 = vld [vmem:[%s265 + $0xa14] sm:$0xff]
      %v3123 = vld [vmem:[%s265 + $0xa1c] sm:$0xff]
      %v3124 = vld [vmem:[%s265 + $0xa24] sm:$0xf]
      %v3125 = vld [vmem:[%s265 + $0xa28] sm:$0xff]
      %v3126 = vld [vmem:[%s265 + $0xa30] sm:$0xff]
      %v3127 = vld [vmem:[%s265 + $0xa38] sm:$0xf]
      %v3128 = vld [vmem:[%s265 + $0xa3c] sm:$0xff]
      %v3129 = vld [vmem:[%s265 + $0xa44] sm:$0xff]
      %v3130 = vld [vmem:[%s265 + $0xa4c] sm:$0xf]
      %v3131 = vld [vmem:[%s265 + $0xa50] sm:$0xff]
      %v3132 = vld [vmem:[%s265 + $0xa58] sm:$0xff]
      %v3133 = vld [vmem:[%s265 + $0xa60] sm:$0xf]
      %v3134 = vld [vmem:[%s265 + $0xa64] sm:$0xff]
      %v3135 = vld [vmem:[%s265 + $0xa6c] sm:$0xff]
      %v3136 = vld [vmem:[%s265 + $0xa74] sm:$0xf]
      %v3137 = vld [vmem:[%s265 + $0xa78] sm:$0xff]
      %v3138 = vld [vmem:[%s265 + $0xa80] sm:$0xff]
      %v3139 = vld [vmem:[%s265 + $0xa88] sm:$0xf]
      %v3140 = vld [vmem:[%s265 + $0xa8c] sm:$0xff]
      %v3141 = vld [vmem:[%s265 + $0xa94] sm:$0xff]
      %v3142 = vld [vmem:[%s265 + $0xa9c] sm:$0xf]
      %v3143 = vld [vmem:[%s265 + $0xaa0] sm:$0xff]
      %v3144 = vld [vmem:[%s265 + $0xaa8] sm:$0xff]
      %v3145 = vld [vmem:[%s265 + $0xab0] sm:$0xf]
      %v3146 = vld [vmem:[%s265 + $0xab4] sm:$0xff]
      %v3147 = vld [vmem:[%s265 + $0xabc] sm:$0xff]
      %v3148 = vld [vmem:[%s265 + $0xac4] sm:$0xf]
      %v3149 = vld [vmem:[%s265 + $0xac8] sm:$0xff]
      %v3150 = vld [vmem:[%s265 + $0xad0] sm:$0xff]
      %v3151 = vld [vmem:[%s265 + $0xad8] sm:$0xf]
      %v3152 = vld [vmem:[%s265 + $0xadc] sm:$0xff]
      %v3153 = vld [vmem:[%s265 + $0xae4] sm:$0xff]
      %v3154 = vld [vmem:[%s265 + $0xaec] sm:$0xf]
      %v3155 = vld [vmem:[%s265 + $0xaf0] sm:$0xff]
      %v3156 = vld [vmem:[%s265 + $0xaf8] sm:$0xff]
      %v3157 = vld [vmem:[%s265 + $0xb00] sm:$0xf]
      %v3158 = vld [vmem:[%s265 + $0xb04] sm:$0xff]
      %v3159 = vld [vmem:[%s265 + $0xb0c] sm:$0xff]
      %v3160 = vld [vmem:[%s265 + $0xb14] sm:$0xf]
      %v3161 = vld [vmem:[%s265 + $0xb18] sm:$0xff]
      %v3162 = vld [vmem:[%s265 + $0xb20] sm:$0xff]
      %v3163 = vld [vmem:[%s265 + $0xb28] sm:$0xf]
      %v3164 = vld [vmem:[%s265 + $0xb2c] sm:$0xff]
      %v3165 = vld [vmem:[%s265 + $0xb34] sm:$0xff]
      %v3166 = vld [vmem:[%s265 + $0xb3c] sm:$0xf]
      %v3167 = vld [vmem:[%s265 + $0xb40] sm:$0xff]
      %v3168 = vld [vmem:[%s265 + $0xb48] sm:$0xff]
      %v3169 = vld [vmem:[%s265 + $0xb50] sm:$0xf]
      %v3170 = vld [vmem:[%s265 + $0xb54] sm:$0xff]
      %v3171 = vld [vmem:[%s265 + $0xb5c] sm:$0xff]
      %v3172 = vld [vmem:[%s265 + $0xb64] sm:$0xf]
      %v3173 = vld [vmem:[%s265 + $0xb68] sm:$0xff]
      %v3174 = vld [vmem:[%s265 + $0xb70] sm:$0xff]
      %v3175 = vld [vmem:[%s265 + $0xb78] sm:$0xf]
      %v3176 = vld [vmem:[%s265 + $0xb7c] sm:$0xff]
      %v3177 = vld [vmem:[%s265 + $0xb84] sm:$0xff]
      %v3178 = vld [vmem:[%s265 + $0xb8c] sm:$0xf]
      %v3179 = vld [vmem:[%s265 + $0xb90] sm:$0xff]
      %v3180 = vld [vmem:[%s265 + $0xb98] sm:$0xff]
      %v3181 = vld [vmem:[%s265 + $0xba0] sm:$0xf]
      %v3182 = vld [vmem:[%s265 + $0xba4] sm:$0xff]
      %v3183 = vld [vmem:[%s265 + $0xbac] sm:$0xff]
      %v3184 = vld [vmem:[%s265 + $0xbb4] sm:$0xf]
      %v3185 = vld [vmem:[%s265 + $0xbb8] sm:$0xff]
      %v3186 = vld [vmem:[%s265 + $0xbc0] sm:$0xff]
      %v3187 = vld [vmem:[%s265 + $0xbc8] sm:$0xf]
      %v3188 = vld [vmem:[%s265 + $0xbcc] sm:$0xff]
      %v3189 = vld [vmem:[%s265 + $0xbd4] sm:$0xff]
      %v3190 = vld [vmem:[%s265 + $0xbdc] sm:$0xf]
      %v3191 = vld [vmem:[%s265 + $0xbe0] sm:$0xff]
      %v3192 = vld [vmem:[%s265 + $0xbe8] sm:$0xff]
      %v3193 = vld [vmem:[%s265 + $0xbf0] sm:$0xf]
      %v3194 = vld [vmem:[%s265 + $0xbf4] sm:$0xff]
      %v3195 = vld [vmem:[%s265 + $0xbfc] sm:$0xff]
      %v3196 = vld [vmem:[%s265 + $0xc04] sm:$0xf]
      %v3197 = vld [vmem:[%s265 + $0xc08] sm:$0xff]
      %v3198 = vld [vmem:[%s265 + $0xc10] sm:$0xff]
      %v3199 = vld [vmem:[%s265 + $0xc18] sm:$0xf]
      %v3200 = vld [vmem:[%s265 + $0xc1c] sm:$0xff]
      %v3201 = vld [vmem:[%s265 + $0xc24] sm:$0xff]
      %v3202 = vld [vmem:[%s265 + $0xc2c] sm:$0xf]
      %v3203 = vld [vmem:[%s265 + $0xc30] sm:$0xff]
      %v3204 = vld [vmem:[%s265 + $0xc38] sm:$0xff]
      %v3205 = vld [vmem:[%s265 + $0xc40] sm:$0xf]
      %v3206 = vld [vmem:[%s265 + $0xc44] sm:$0xff]
      %v3207 = vld [vmem:[%s265 + $0xc4c] sm:$0xff]
      %v3208 = vld [vmem:[%s265 + $0xc54] sm:$0xf]
      %v3209 = vld [vmem:[%s265 + $0xc58] sm:$0xff]
      %v3210 = vld [vmem:[%s265 + $0xc60] sm:$0xff]
      %v3211 = vld [vmem:[%s265 + $0xc68] sm:$0xf]
      %v3212 = vld [vmem:[%s265 + $0xc6c] sm:$0xff]
      %v3213 = vld [vmem:[%s265 + $0xc74] sm:$0xff]
      %v3214 = vld [vmem:[%s265 + $0xc7c] sm:$0xf]
      %v3215 = vld [vmem:[%s265 + $0xc80] sm:$0xff]
      %v3216 = vld [vmem:[%s265 + $0xc88] sm:$0xff]
      %v3217 = vld [vmem:[%s265 + $0xc90] sm:$0xf]
      %v3218 = vld [vmem:[%s265 + $0xc94] sm:$0xff]
      %v3219 = vld [vmem:[%s265 + $0xc9c] sm:$0xff]
      %v3220 = vld [vmem:[%s265 + $0xca4] sm:$0xf]
      %v3221 = vld [vmem:[%s265 + $0xca8] sm:$0xff]
      %v3222 = vld [vmem:[%s265 + $0xcb0] sm:$0xff]
      %v3223 = vld [vmem:[%s265 + $0xcb8] sm:$0xf]
      %v3224 = vld [vmem:[%s265 + $0xcbc] sm:$0xff]
      %v3225 = vld [vmem:[%s265 + $0xcc4] sm:$0xff]
      %v3226 = vld [vmem:[%s265 + $0xccc] sm:$0xf]
      %v3227 = vld [vmem:[%s265 + $0xcd0] sm:$0xff]
      %v3228 = vld [vmem:[%s265 + $0xcd8] sm:$0xff]
      %v3229 = vld [vmem:[%s265 + $0xce0] sm:$0xf]
      %v3230 = vld [vmem:[%s265 + $0xce4] sm:$0xff]
      %v3231 = vld [vmem:[%s265 + $0xcec] sm:$0xff]
      %v3232 = vld [vmem:[%s265 + $0xcf4] sm:$0xf]
      %v3233 = vld [vmem:[%s265 + $0xcf8] sm:$0xff]
      %v3234 = vld [vmem:[%s265 + $0xd00] sm:$0xff]
      %v3235 = vld [vmem:[%s265 + $0xd08] sm:$0xf]
      %v3236 = vld [vmem:[%s265 + $0xd0c] sm:$0xff]
      %v3237 = vld [vmem:[%s265 + $0xd14] sm:$0xff]
      %v3238 = vld [vmem:[%s265 + $0xd1c] sm:$0xf]
      %v3239 = vld [vmem:[%s265 + $0xd20] sm:$0xff]
      %v3240 = vld [vmem:[%s265 + $0xd28] sm:$0xff]
      %v3241 = vld [vmem:[%s265 + $0xd30] sm:$0xf]
      %v3242 = vld [vmem:[%s265 + $0xd34] sm:$0xff]
      %v3243 = vld [vmem:[%s265 + $0xd3c] sm:$0xff]
      %v3244 = vld [vmem:[%s265 + $0xd44] sm:$0xf]
      %v3245 = vld [vmem:[%s265 + $0xd48] sm:$0xff]
      %v3246 = vld [vmem:[%s265 + $0xd50] sm:$0xff]
      %v3247 = vld [vmem:[%s265 + $0xd58] sm:$0xf]
      %v3248 = vld [vmem:[%s265 + $0xd5c] sm:$0xff]
      %v3249 = vld [vmem:[%s265 + $0xd64] sm:$0xff]
      %v3250 = vld [vmem:[%s265 + $0xd6c] sm:$0xf]
      %v3251 = vld [vmem:[%s265 + $0xd70] sm:$0xff]
      %v3252 = vld [vmem:[%s265 + $0xd78] sm:$0xff]
      %v3253 = vld [vmem:[%s265 + $0xd80] sm:$0xf]
      %v3254 = vld [vmem:[%s265 + $0xd84] sm:$0xff]
      %v3255 = vld [vmem:[%s265 + $0xd8c] sm:$0xff]
      %v3256 = vld [vmem:[%s265 + $0xd94] sm:$0xf]
      %v3257 = vld [vmem:[%s265 + $0xd98] sm:$0xff]
      %v3258 = vld [vmem:[%s265 + $0xda0] sm:$0xff]
      %v3259 = vld [vmem:[%s265 + $0xda8] sm:$0xf]
      %v3260 = vld [vmem:[%s265 + $0xdac] sm:$0xff]
      %v3261 = vld [vmem:[%s265 + $0xdb4] sm:$0xff]
      %v3262 = vld [vmem:[%s265 + $0xdbc] sm:$0xf]
      %v3263 = vld [vmem:[%s265 + $0xdc0] sm:$0xff]
      %v3264 = vld [vmem:[%s265 + $0xdc8] sm:$0xff]
      %v3265 = vld [vmem:[%s265 + $0xdd0] sm:$0xf]
      %v3266 = vld [vmem:[%s265 + $0xdd4] sm:$0xff]
      %v3267 = vld [vmem:[%s265 + $0xddc] sm:$0xff]
      %v3268 = vld [vmem:[%s265 + $0xde4] sm:$0xf]
      %v3269 = vld [vmem:[%s265 + $0xde8] sm:$0xff]
      %v3270 = vld [vmem:[%s265 + $0xdf0] sm:$0xff]
      %v3271 = vld [vmem:[%s265 + $0xdf8] sm:$0xf]
      %v3272 = vld [vmem:[%s265 + $0xdfc] sm:$0xff]
      %v3273 = vld [vmem:[%s265 + $0xe04] sm:$0xff]
      %v3274 = vld [vmem:[%s265 + $0xe0c] sm:$0xf]
      %v3275 = vld [vmem:[%s265 + $0xe10] sm:$0xff]
      %v3276 = vld [vmem:[%s265 + $0xe18] sm:$0xff]
      %v3277 = vld [vmem:[%s265 + $0xe20] sm:$0xf]
      %v3278 = vld [vmem:[%s265 + $0xe24] sm:$0xff]
      %v3279 = vld [vmem:[%s265 + $0xe2c] sm:$0xff]
      %v3280 = vld [vmem:[%s265 + $0xe34] sm:$0xf]
      %v3281 = vld [vmem:[%s265 + $0xe38] sm:$0xff]
      %v3282 = vld [vmem:[%s265 + $0xe40] sm:$0xff]
      %v3283 = vld [vmem:[%s265 + $0xe48] sm:$0xf]
      %v3284 = vld [vmem:[%s265 + $0xe4c] sm:$0xff]
      %v3285 = vld [vmem:[%s265 + $0xe54] sm:$0xff]
      %v3286 = vld [vmem:[%s265 + $0xe5c] sm:$0xf]
      %v3287 = vld [vmem:[%s265 + $0xe60] sm:$0xff]
      %v3288 = vld [vmem:[%s265 + $0xe68] sm:$0xff]
      %v3289 = vld [vmem:[%s265 + $0xe70] sm:$0xf]
      %v3290 = vld [vmem:[%s265 + $0xe74] sm:$0xff]
      %v3291 = vld [vmem:[%s265 + $0xe7c] sm:$0xff]
      %v3292 = vld [vmem:[%s265 + $0xe84] sm:$0xf]
      %v3293 = vld [vmem:[%s265 + $0xe88] sm:$0xff]
      %v3294 = vld [vmem:[%s265 + $0xe90] sm:$0xff]
      %v3295 = vld [vmem:[%s265 + $0xe98] sm:$0xf]
      %v3296 = vld [vmem:[%s265 + $0xe9c] sm:$0xff]
      %v3297 = vld [vmem:[%s265 + $0xea4] sm:$0xff]
      %v3298 = vld [vmem:[%s265 + $0xeac] sm:$0xf]
      %v3299 = vld [vmem:[%s265 + $0xeb0] sm:$0xff]
      %v3300 = vld [vmem:[%s265 + $0xeb8] sm:$0xff]
      %v3301 = vld [vmem:[%s265 + $0xec0] sm:$0xf]
      %v3302 = vld [vmem:[%s265 + $0xec4] sm:$0xff]
      %v3303 = vld [vmem:[%s265 + $0xecc] sm:$0xff]
      %v3304 = vld [vmem:[%s265 + $0xed4] sm:$0xf]
      %v3305 = vld [vmem:[%s265 + $0xed8] sm:$0xff]
      %v3306 = vld [vmem:[%s265 + $0xee0] sm:$0xff]
      %v3307 = vld [vmem:[%s265 + $0xee8] sm:$0xf]
      %v3308 = vld [vmem:[%s265 + $0xeec] sm:$0xff]
      %v3309 = vld [vmem:[%s265 + $0xef4] sm:$0xff]
      %v3310 = vld [vmem:[%s265 + $0xefc] sm:$0xf]
      %v3311 = vld [vmem:[%s265 + $0xf00] sm:$0xff]
      %v3312 = vld [vmem:[%s265 + $0xf08] sm:$0xff]
      %v3313 = vld [vmem:[%s265 + $0xf10] sm:$0xf]
      %v3314 = vld [vmem:[%s265 + $0xf14] sm:$0xff]
      %v3315 = vld [vmem:[%s265 + $0xf1c] sm:$0xff]
      %v3316 = vld [vmem:[%s265 + $0xf24] sm:$0xf]
      %v3317 = vld [vmem:[%s265 + $0xf28] sm:$0xff]
      %v3318 = vld [vmem:[%s265 + $0xf30] sm:$0xff]
      %v3319 = vld [vmem:[%s265 + $0xf38] sm:$0xf]
      %v3320 = vld [vmem:[%s265 + $0xf3c] sm:$0xff]
      %v3321 = vld [vmem:[%s265 + $0xf44] sm:$0xff]
      %v3322 = vld [vmem:[%s265 + $0xf4c] sm:$0xf]
      %v3323 = vld [vmem:[%s265 + $0xf50] sm:$0xff]
      %v3324 = vld [vmem:[%s265 + $0xf58] sm:$0xff]
      %v3325 = vld [vmem:[%s265 + $0xf60] sm:$0xf]
      %v3326 = vld [vmem:[%s265 + $0xf64] sm:$0xff]
      %v3327 = vld [vmem:[%s265 + $0xf6c] sm:$0xff]
      %v3328 = vld [vmem:[%s265 + $0xf74] sm:$0xf]
      %v3329 = vld [vmem:[%s265 + $0xf78] sm:$0xff]
      %v3330 = vld [vmem:[%s265 + $0xf80] sm:$0xff]
      %v3331 = vld [vmem:[%s265 + $0xf88] sm:$0xf]
      %v3332 = vld [vmem:[%s265 + $0xf8c] sm:$0xff]
      %v3333 = vld [vmem:[%s265 + $0xf94] sm:$0xff]
      %v3334 = vld [vmem:[%s265 + $0xf9c] sm:$0xf]
      %v3335 = vld [vmem:[%s265 + $0xfa0] sm:$0xff]
      %v3336 = vld [vmem:[%s265 + $0xfa8] sm:$0xff]
      %v3337 = vld [vmem:[%s265 + $0xfb0] sm:$0xf]
      %v3338 = vld [vmem:[%s265 + $0xfb4] sm:$0xff]
      %v3339 = vld [vmem:[%s265 + $0xfbc] sm:$0xff]
      %v3340 = vld [vmem:[%s265 + $0xfc4] sm:$0xf]
      %v3341 = vld [vmem:[%s265 + $0xfc8] sm:$0xff]
      %v3342 = vld [vmem:[%s265 + $0xfd0] sm:$0xff]
      %v3343 = vld [vmem:[%s265 + $0xfd8] sm:$0xf]
      %v3344 = vld [vmem:[%s265 + $0xfdc] sm:$0xff]
      %v3345 = vld [vmem:[%s265 + $0xfe4] sm:$0xff]
      %v3346 = vld [vmem:[%s265 + $0xfec] sm:$0xf]
      %v3347 = vld [vmem:[%s265 + $0xff0] sm:$0xff]
      %v3348 = vld [vmem:[%s265 + $0xff8] sm:$0xff]
      %v3349 = vld [vmem:[%s265 + $0x1000] sm:$0xf]
      %v3350 = vld [vmem:[%s265 + $0x1004] sm:$0xff]
      %v3351 = vld [vmem:[%s265 + $0x100c] sm:$0xff]
      %v3352 = vld [vmem:[%s265 + $0x1014] sm:$0xf]
      %v3353 = vld [vmem:[%s265 + $0x1018] sm:$0xff]
      %v3354 = vld [vmem:[%s265 + $0x1020] sm:$0xff]
      %v3355 = vld [vmem:[%s265 + $0x1028] sm:$0xf]
      %v3356 = vld [vmem:[%s265 + $0x102c] sm:$0xff]
      %v3357 = vld [vmem:[%s265 + $0x1034] sm:$0xff]
      %v3358 = vld [vmem:[%s265 + $0x103c] sm:$0xf]
      %v3359 = vld [vmem:[%s265 + $0x1040] sm:$0xff]
      %v3360 = vld [vmem:[%s265 + $0x1048] sm:$0xff]
      %v3361 = vld [vmem:[%s265 + $0x1050] sm:$0xf]
      %v3362 = vld [vmem:[%s265 + $0x1054] sm:$0xff]
      %v3363 = vld [vmem:[%s265 + $0x105c] sm:$0xff]
      %v3364 = vld [vmem:[%s265 + $0x1064] sm:$0xf]
      %v3365 = vld [vmem:[%s265 + $0x1068] sm:$0xff]
      %v3366 = vld [vmem:[%s265 + $0x1070] sm:$0xff]
      %v3367 = vld [vmem:[%s265 + $0x1078] sm:$0xf]
      %v3368 = vld [vmem:[%s265 + $0x107c] sm:$0xff]
      %v3369 = vld [vmem:[%s265 + $0x1084] sm:$0xff]
      %v3370 = vld [vmem:[%s265 + $0x108c] sm:$0xf]
      %v3371 = vld [vmem:[%s265 + $0x1090] sm:$0xff]
      %v3372 = vld [vmem:[%s265 + $0x1098] sm:$0xff]
      %v3373 = vld [vmem:[%s265 + $0x10a0] sm:$0xf]
      %v3374 = vld [vmem:[%s265 + $0x10a4] sm:$0xff]
      %v3375 = vld [vmem:[%s265 + $0x10ac] sm:$0xff]
      %v3376 = vld [vmem:[%s265 + $0x10b4] sm:$0xf]
      %v3377 = vld [vmem:[%s265 + $0x10b8] sm:$0xff]
      %v3378 = vld [vmem:[%s265 + $0x10c0] sm:$0xff]
      %v3379 = vld [vmem:[%s265 + $0x10c8] sm:$0xf]
      %v3380 = vld [vmem:[%s265 + $0x10cc] sm:$0xff]
      %v3381 = vld [vmem:[%s265 + $0x10d4] sm:$0xff]
      %v3382 = vld [vmem:[%s265 + $0x10dc] sm:$0xf]
      %v3383 = vld [vmem:[%s265 + $0x10e0] sm:$0xff]
      %v3384 = vld [vmem:[%s265 + $0x10e8] sm:$0xff]
      %v3385 = vld [vmem:[%s265 + $0x10f0] sm:$0xf]
      %v3386 = vld [vmem:[%s265 + $0x10f4] sm:$0xff]
      %v3387 = vld [vmem:[%s265 + $0x10fc] sm:$0xff]
      %v3388 = vld [vmem:[%s265 + $0x1104] sm:$0xf]
      %v3389 = vld [vmem:[%s265 + $0x1108] sm:$0xff]
      %v3390 = vld [vmem:[%s265 + $0x1110] sm:$0xff]
      %v3391 = vld [vmem:[%s265 + $0x1118] sm:$0xf]
      %v3392 = vld [vmem:[%s265 + $0x111c] sm:$0xff]
      %v3393 = vld [vmem:[%s265 + $0x1124] sm:$0xff]
      %v3394 = vld [vmem:[%s265 + $0x112c] sm:$0xf]
      %v3395 = vld [vmem:[%s265 + $0x1130] sm:$0xff]
      %v3396 = vld [vmem:[%s265 + $0x1138] sm:$0xff]
      %v3397 = vld [vmem:[%s265 + $0x1140] sm:$0xf]
      %v3398 = vld [vmem:[%s265 + $0x1144] sm:$0xff]
      %v3399 = vld [vmem:[%s265 + $0x114c] sm:$0xff]
      %v3400 = vld [vmem:[%s265 + $0x1154] sm:$0xf]
      %v3401 = vld [vmem:[%s265 + $0x1158] sm:$0xff]
      %v3402 = vld [vmem:[%s265 + $0x1160] sm:$0xff]
      %v3403 = vld [vmem:[%s265 + $0x1168] sm:$0xf]
      %v3404 = vld [vmem:[%s265 + $0x116c] sm:$0xff]
      %v3405 = vld [vmem:[%s265 + $0x1174] sm:$0xff]
      %v3406 = vld [vmem:[%s265 + $0x117c] sm:$0xf]
      %v3407 = vld [vmem:[%s265 + $0x1180] sm:$0xff]
      %v3408 = vld [vmem:[%s265 + $0x1188] sm:$0xff]
      %v3409 = vld [vmem:[%s265 + $0x1190] sm:$0xf]
      %v3410 = vld [vmem:[%s265 + $0x1194] sm:$0xff]
      %v3411 = vld [vmem:[%s265 + $0x119c] sm:$0xff]
      %v3412 = vld [vmem:[%s265 + $0x11a4] sm:$0xf]
      %v3413 = vld [vmem:[%s265 + $0x11a8] sm:$0xff]
      %v3414 = vld [vmem:[%s265 + $0x11b0] sm:$0xff]
      %v3415 = vld [vmem:[%s265 + $0x11b8] sm:$0xf]
      %v3416 = vld [vmem:[%s265 + $0x11bc] sm:$0xff]
      %v3417 = vld [vmem:[%s265 + $0x11c4] sm:$0xff]
      %v3418 = vld [vmem:[%s265 + $0x11cc] sm:$0xf]
      %v3419 = vld [vmem:[%s265 + $0x11d0] sm:$0xff]
      %v3420 = vld [vmem:[%s265 + $0x11d8] sm:$0xff]
      %v3421 = vld [vmem:[%s265 + $0x11e0] sm:$0xf]
      %v3422 = vld [vmem:[%s265 + $0x11e4] sm:$0xff]
      %v3423 = vld [vmem:[%s265 + $0x11ec] sm:$0xff]
      %v3424 = vld [vmem:[%s265 + $0x11f4] sm:$0xf]
      %v3425 = vld [vmem:[%s265 + $0x11f8] sm:$0xff]
      %v3426 = vld [vmem:[%s265 + $0x1200] sm:$0xff]
      %v3427 = vld [vmem:[%s265 + $0x1208] sm:$0xf]
      %v3428 = vld [vmem:[%s265 + $0x120c] sm:$0xff]
      %v3429 = vld [vmem:[%s265 + $0x1214] sm:$0xff]
      %v3430 = vld [vmem:[%s265 + $0x121c] sm:$0xf]
      %v3431 = vld [vmem:[%s265 + $0x1220] sm:$0xff]
      %v3432 = vld [vmem:[%s265 + $0x1228] sm:$0xff]
      %v3433 = vld [vmem:[%s265 + $0x1230] sm:$0xf]
      %v3434 = vld [vmem:[%s265 + $0x1234] sm:$0xff]
      %v3435 = vld [vmem:[%s265 + $0x123c] sm:$0xff]
      %v3436 = vld [vmem:[%s265 + $0x1244] sm:$0xf]
      %v3437 = vld [vmem:[%s265 + $0x1248] sm:$0xff]
      %v3438 = vld [vmem:[%s265 + $0x1250] sm:$0xff]
      %v3439 = vld [vmem:[%s265 + $0x1258] sm:$0xf]
      %v3440 = vld [vmem:[%s265 + $0x125c] sm:$0xff]
      %v3441 = vld [vmem:[%s265 + $0x1264] sm:$0xff]
      %v3442 = vld [vmem:[%s265 + $0x126c] sm:$0xf]
      %v3443 = vld [vmem:[%s265 + $0x1270] sm:$0xff]
      %v3444 = vld [vmem:[%s265 + $0x1278] sm:$0xff]
      %v3445 = vld [vmem:[%s265 + $0x1280] sm:$0xf]
      %v3446 = vld [vmem:[%s265 + $0x1284] sm:$0xff]
      %v3447 = vld [vmem:[%s265 + $0x128c] sm:$0xff]
      %v3448 = vld [vmem:[%s265 + $0x1294] sm:$0xf]
      %v3449 = vld [vmem:[%s265 + $0x1298] sm:$0xff]
      %v3450 = vld [vmem:[%s265 + $0x12a0] sm:$0xff]
      %v3451 = vld [vmem:[%s265 + $0x12a8] sm:$0xf]
      %v3452 = vld [vmem:[%s265 + $0x12ac] sm:$0xff]
      %v3453 = vld [vmem:[%s265 + $0x12b4] sm:$0xff]
      %v3454 = vld [vmem:[%s265 + $0x12bc] sm:$0xf]
      %v4175 = vunpack.c.l.b16 %v2735
      %v4176 = vunpack.c.h.b16 %v2735
      %v4177 = vunpack.c.l.b16 %v2736
      %v4178 = vunpack.c.h.b16 %v2736
      %v4179 = vunpack.c.l.b16 %v2737
      %v4180 = vunpack.c.l.b16 %v2738
      %v4181 = vunpack.c.h.b16 %v2738
      %v4182 = vunpack.c.l.b16 %v2739
      %v4183 = vunpack.c.h.b16 %v2739
      %v4184 = vunpack.c.l.b16 %v2740
      %v4185 = vunpack.c.l.b16 %v2741
      %v4186 = vunpack.c.h.b16 %v2741
      %v4187 = vunpack.c.l.b16 %v2742
      %v4188 = vunpack.c.h.b16 %v2742
      %v4189 = vunpack.c.l.b16 %v2743
      %v4190 = vunpack.c.l.b16 %v2744
      %v4191 = vunpack.c.h.b16 %v2744
      %v4192 = vunpack.c.l.b16 %v2745
      %v4193 = vunpack.c.h.b16 %v2745
      %v4194 = vunpack.c.l.b16 %v2746
      %v4195 = vunpack.c.l.b16 %v2747
      %v4196 = vunpack.c.h.b16 %v2747
      %v4197 = vunpack.c.l.b16 %v2748
      %v4198 = vunpack.c.h.b16 %v2748
      %v4199 = vunpack.c.l.b16 %v2749
      %v4200 = vunpack.c.l.b16 %v2750
      %v4201 = vunpack.c.h.b16 %v2750
      %v4202 = vunpack.c.l.b16 %v2751
      %v4203 = vunpack.c.h.b16 %v2751
      %v4204 = vunpack.c.l.b16 %v2752
      %v4205 = vunpack.c.l.b16 %v2753
      %v4206 = vunpack.c.h.b16 %v2753
      %v4207 = vunpack.c.l.b16 %v2754
      %v4208 = vunpack.c.h.b16 %v2754
      %v4209 = vunpack.c.l.b16 %v2755
      %v4210 = vunpack.c.l.b16 %v2756
      %v4211 = vunpack.c.h.b16 %v2756
      %v4212 = vunpack.c.l.b16 %v2757
      %v4213 = vunpack.c.h.b16 %v2757
      %v4214 = vunpack.c.l.b16 %v2758
      %v4215 = vunpack.c.l.b16 %v2759
      %v4216 = vunpack.c.h.b16 %v2759
      %v4217 = vunpack.c.l.b16 %v2760
      %v4218 = vunpack.c.h.b16 %v2760
      %v4219 = vunpack.c.l.b16 %v2761
      %v4220 = vunpack.c.l.b16 %v2762
      %v4221 = vunpack.c.h.b16 %v2762
      %v4222 = vunpack.c.l.b16 %v2763
      %v4223 = vunpack.c.h.b16 %v2763
      %v4224 = vunpack.c.l.b16 %v2764
      %v4225 = vunpack.c.l.b16 %v2765
      %v4226 = vunpack.c.h.b16 %v2765
      %v4227 = vunpack.c.l.b16 %v2766
      %v4228 = vunpack.c.h.b16 %v2766
      %v4229 = vunpack.c.l.b16 %v2767
      %v4230 = vunpack.c.l.b16 %v2768
      %v4231 = vunpack.c.h.b16 %v2768
      %v4232 = vunpack.c.l.b16 %v2769
      %v4233 = vunpack.c.h.b16 %v2769
      %v4234 = vunpack.c.l.b16 %v2770
      %v4235 = vunpack.c.l.b16 %v2771
      %v4236 = vunpack.c.h.b16 %v2771
      %v4237 = vunpack.c.l.b16 %v2772
      %v4238 = vunpack.c.h.b16 %v2772
      %v4239 = vunpack.c.l.b16 %v2773
      %v4240 = vunpack.c.l.b16 %v2774
      %v4241 = vunpack.c.h.b16 %v2774
      %v4242 = vunpack.c.l.b16 %v2775
      %v4243 = vunpack.c.h.b16 %v2775
      %v4244 = vunpack.c.l.b16 %v2776
      %v4245 = vunpack.c.l.b16 %v2777
      %v4246 = vunpack.c.h.b16 %v2777
      %v4247 = vunpack.c.l.b16 %v2778
      %v4248 = vunpack.c.h.b16 %v2778
      %v4249 = vunpack.c.l.b16 %v2779
      %v4250 = vunpack.c.l.b16 %v2780
      %v4251 = vunpack.c.h.b16 %v2780
      %v4252 = vunpack.c.l.b16 %v2781
      %v4253 = vunpack.c.h.b16 %v2781
      %v4254 = vunpack.c.l.b16 %v2782
      %v4255 = vunpack.c.l.b16 %v2783
      %v4256 = vunpack.c.h.b16 %v2783
      %v4257 = vunpack.c.l.b16 %v2784
      %v4258 = vunpack.c.h.b16 %v2784
      %v4259 = vunpack.c.l.b16 %v2785
      %v4260 = vunpack.c.l.b16 %v2786
      %v4261 = vunpack.c.h.b16 %v2786
      %v4262 = vunpack.c.l.b16 %v2787
      %v4263 = vunpack.c.h.b16 %v2787
      %v4264 = vunpack.c.l.b16 %v2788
      %v4265 = vunpack.c.l.b16 %v2789
      %v4266 = vunpack.c.h.b16 %v2789
      %v4267 = vunpack.c.l.b16 %v2790
      %v4268 = vunpack.c.h.b16 %v2790
      %v4269 = vunpack.c.l.b16 %v2791
      %v4270 = vunpack.c.l.b16 %v2792
      %v4271 = vunpack.c.h.b16 %v2792
      %v4272 = vunpack.c.l.b16 %v2793
      %v4273 = vunpack.c.h.b16 %v2793
      %v4274 = vunpack.c.l.b16 %v2794
      %v4275 = vunpack.c.l.b16 %v2795
      %v4276 = vunpack.c.h.b16 %v2795
      %v4277 = vunpack.c.l.b16 %v2796
      %v4278 = vunpack.c.h.b16 %v2796
      %v4279 = vunpack.c.l.b16 %v2797
      %v4280 = vunpack.c.l.b16 %v2798
      %v4281 = vunpack.c.h.b16 %v2798
      %v4282 = vunpack.c.l.b16 %v2799
      %v4283 = vunpack.c.h.b16 %v2799
      %v4284 = vunpack.c.l.b16 %v2800
      %v4285 = vunpack.c.l.b16 %v2801
      %v4286 = vunpack.c.h.b16 %v2801
      %v4287 = vunpack.c.l.b16 %v2802
      %v4288 = vunpack.c.h.b16 %v2802
      %v4289 = vunpack.c.l.b16 %v2803
      %v4290 = vunpack.c.l.b16 %v2804
      %v4291 = vunpack.c.h.b16 %v2804
      %v4292 = vunpack.c.l.b16 %v2805
      %v4293 = vunpack.c.h.b16 %v2805
      %v4294 = vunpack.c.l.b16 %v2806
      %v4295 = vunpack.c.l.b16 %v2807
      %v4296 = vunpack.c.h.b16 %v2807
      %v4297 = vunpack.c.l.b16 %v2808
      %v4298 = vunpack.c.h.b16 %v2808
      %v4299 = vunpack.c.l.b16 %v2809
      %v4300 = vunpack.c.l.b16 %v2810
      %v4301 = vunpack.c.h.b16 %v2810
      %v4302 = vunpack.c.l.b16 %v2811
      %v4303 = vunpack.c.h.b16 %v2811
      %v4304 = vunpack.c.l.b16 %v2812
      %v4305 = vunpack.c.l.b16 %v2813
      %v4306 = vunpack.c.h.b16 %v2813
      %v4307 = vunpack.c.l.b16 %v2814
      %v4308 = vunpack.c.h.b16 %v2814
      %v4309 = vunpack.c.l.b16 %v2815
      %v4310 = vunpack.c.l.b16 %v2816
      %v4311 = vunpack.c.h.b16 %v2816
      %v4312 = vunpack.c.l.b16 %v2817
      %v4313 = vunpack.c.h.b16 %v2817
      %v4314 = vunpack.c.l.b16 %v2818
      %v4315 = vunpack.c.l.b16 %v2819
      %v4316 = vunpack.c.h.b16 %v2819
      %v4317 = vunpack.c.l.b16 %v2820
      %v4318 = vunpack.c.h.b16 %v2820
      %v4319 = vunpack.c.l.b16 %v2821
      %v4320 = vunpack.c.l.b16 %v2822
      %v4321 = vunpack.c.h.b16 %v2822
      %v4322 = vunpack.c.l.b16 %v2823
      %v4323 = vunpack.c.h.b16 %v2823
      %v4324 = vunpack.c.l.b16 %v2824
      %v4325 = vunpack.c.l.b16 %v2825
      %v4326 = vunpack.c.h.b16 %v2825
      %v4327 = vunpack.c.l.b16 %v2826
      %v4328 = vunpack.c.h.b16 %v2826
      %v4329 = vunpack.c.l.b16 %v2827
      %v4330 = vunpack.c.l.b16 %v2828
      %v4331 = vunpack.c.h.b16 %v2828
      %v4332 = vunpack.c.l.b16 %v2829
      %v4333 = vunpack.c.h.b16 %v2829
      %v4334 = vunpack.c.l.b16 %v2830
      %v4335 = vunpack.c.l.b16 %v2831
      %v4336 = vunpack.c.h.b16 %v2831
      %v4337 = vunpack.c.l.b16 %v2832
      %v4338 = vunpack.c.h.b16 %v2832
      %v4339 = vunpack.c.l.b16 %v2833
      %v4340 = vunpack.c.l.b16 %v2834
      %v4341 = vunpack.c.h.b16 %v2834
      %v4342 = vunpack.c.l.b16 %v2835
      %v4343 = vunpack.c.h.b16 %v2835
      %v4344 = vunpack.c.l.b16 %v2836
      %v4345 = vunpack.c.l.b16 %v2837
      %v4346 = vunpack.c.h.b16 %v2837
      %v4347 = vunpack.c.l.b16 %v2838
      %v4348 = vunpack.c.h.b16 %v2838
      %v4349 = vunpack.c.l.b16 %v2839
      %v4350 = vunpack.c.l.b16 %v2840
      %v4351 = vunpack.c.h.b16 %v2840
      %v4352 = vunpack.c.l.b16 %v2841
      %v4353 = vunpack.c.h.b16 %v2841
      %v4354 = vunpack.c.l.b16 %v2842
      %v4355 = vunpack.c.l.b16 %v2843
      %v4356 = vunpack.c.h.b16 %v2843
      %v4357 = vunpack.c.l.b16 %v2844
      %v4358 = vunpack.c.h.b16 %v2844
      %v4359 = vunpack.c.l.b16 %v2845
      %v4360 = vunpack.c.l.b16 %v2846
      %v4361 = vunpack.c.h.b16 %v2846
      %v4362 = vunpack.c.l.b16 %v2847
      %v4363 = vunpack.c.h.b16 %v2847
      %v4364 = vunpack.c.l.b16 %v2848
      %v4365 = vunpack.c.l.b16 %v2849
      %v4366 = vunpack.c.h.b16 %v2849
      %v4367 = vunpack.c.l.b16 %v2850
      %v4368 = vunpack.c.h.b16 %v2850
      %v4369 = vunpack.c.l.b16 %v2851
      %v4370 = vunpack.c.l.b16 %v2852
      %v4371 = vunpack.c.h.b16 %v2852
      %v4372 = vunpack.c.l.b16 %v2853
      %v4373 = vunpack.c.h.b16 %v2853
      %v4374 = vunpack.c.l.b16 %v2854
      %v4375 = vunpack.c.l.b16 %v2855
      %v4376 = vunpack.c.h.b16 %v2855
      %v4377 = vunpack.c.l.b16 %v2856
      %v4378 = vunpack.c.h.b16 %v2856
      %v4379 = vunpack.c.l.b16 %v2857
      %v4380 = vunpack.c.l.b16 %v2858
      %v4381 = vunpack.c.h.b16 %v2858
      %v4382 = vunpack.c.l.b16 %v2859
      %v4383 = vunpack.c.h.b16 %v2859
      %v4384 = vunpack.c.l.b16 %v2860
      %v4385 = vunpack.c.l.b16 %v2861
      %v4386 = vunpack.c.h.b16 %v2861
      %v4387 = vunpack.c.l.b16 %v2862
      %v4388 = vunpack.c.h.b16 %v2862
      %v4389 = vunpack.c.l.b16 %v2863
      %v4390 = vunpack.c.l.b16 %v2864
      %v4391 = vunpack.c.h.b16 %v2864
      %v4392 = vunpack.c.l.b16 %v2865
      %v4393 = vunpack.c.h.b16 %v2865
      %v4394 = vunpack.c.l.b16 %v2866
      %v4395 = vunpack.c.l.b16 %v2867
      %v4396 = vunpack.c.h.b16 %v2867
      %v4397 = vunpack.c.l.b16 %v2868
      %v4398 = vunpack.c.h.b16 %v2868
      %v4399 = vunpack.c.l.b16 %v2869
      %v4400 = vunpack.c.l.b16 %v2870
      %v4401 = vunpack.c.h.b16 %v2870
      %v4402 = vunpack.c.l.b16 %v2871
      %v4403 = vunpack.c.h.b16 %v2871
      %v4404 = vunpack.c.l.b16 %v2872
      %v4405 = vunpack.c.l.b16 %v2873
      %v4406 = vunpack.c.h.b16 %v2873
      %v4407 = vunpack.c.l.b16 %v2874
      %v4408 = vunpack.c.h.b16 %v2874
      %v4409 = vunpack.c.l.b16 %v2875
      %v4410 = vunpack.c.l.b16 %v2876
      %v4411 = vunpack.c.h.b16 %v2876
      %v4412 = vunpack.c.l.b16 %v2877
      %v4413 = vunpack.c.h.b16 %v2877
      %v4414 = vunpack.c.l.b16 %v2878
      %v4415 = vunpack.c.l.b16 %v2879
      %v4416 = vunpack.c.h.b16 %v2879
      %v4417 = vunpack.c.l.b16 %v2880
      %v4418 = vunpack.c.h.b16 %v2880
      %v4419 = vunpack.c.l.b16 %v2881
      %v4420 = vunpack.c.l.b16 %v2882
      %v4421 = vunpack.c.h.b16 %v2882
      %v4422 = vunpack.c.l.b16 %v2883
      %v4423 = vunpack.c.h.b16 %v2883
      %v4424 = vunpack.c.l.b16 %v2884
      %v4425 = vunpack.c.l.b16 %v2885
      %v4426 = vunpack.c.h.b16 %v2885
      %v4427 = vunpack.c.l.b16 %v2886
      %v4428 = vunpack.c.h.b16 %v2886
      %v4429 = vunpack.c.l.b16 %v2887
      %v4430 = vunpack.c.l.b16 %v2888
      %v4431 = vunpack.c.h.b16 %v2888
      %v4432 = vunpack.c.l.b16 %v2889
      %v4433 = vunpack.c.h.b16 %v2889
      %v4434 = vunpack.c.l.b16 %v2890
      %v4435 = vunpack.c.l.b16 %v2891
      %v4436 = vunpack.c.h.b16 %v2891
      %v4437 = vunpack.c.l.b16 %v2892
      %v4438 = vunpack.c.h.b16 %v2892
      %v4439 = vunpack.c.l.b16 %v2893
      %v4440 = vunpack.c.l.b16 %v2894
      %v4441 = vunpack.c.h.b16 %v2894
      %v4442 = vunpack.c.l.b16 %v2895
      %v4443 = vunpack.c.h.b16 %v2895
      %v4444 = vunpack.c.l.b16 %v2896
      %v4445 = vunpack.c.l.b16 %v2897
      %v4446 = vunpack.c.h.b16 %v2897
      %v4447 = vunpack.c.l.b16 %v2898
      %v4448 = vunpack.c.h.b16 %v2898
      %v4449 = vunpack.c.l.b16 %v2899
      %v4450 = vunpack.c.l.b16 %v2900
      %v4451 = vunpack.c.h.b16 %v2900
      %v4452 = vunpack.c.l.b16 %v2901
      %v4453 = vunpack.c.h.b16 %v2901
      %v4454 = vunpack.c.l.b16 %v2902
      %v4455 = vunpack.c.l.b16 %v2903
      %v4456 = vunpack.c.h.b16 %v2903
      %v4457 = vunpack.c.l.b16 %v2904
      %v4458 = vunpack.c.h.b16 %v2904
      %v4459 = vunpack.c.l.b16 %v2905
      %v4460 = vunpack.c.l.b16 %v2906
      %v4461 = vunpack.c.h.b16 %v2906
      %v4462 = vunpack.c.l.b16 %v2907
      %v4463 = vunpack.c.h.b16 %v2907
      %v4464 = vunpack.c.l.b16 %v2908
      %v4465 = vunpack.c.l.b16 %v2909
      %v4466 = vunpack.c.h.b16 %v2909
      %v4467 = vunpack.c.l.b16 %v2910
      %v4468 = vunpack.c.h.b16 %v2910
      %v4469 = vunpack.c.l.b16 %v2911
      %v4470 = vunpack.c.l.b16 %v2912
      %v4471 = vunpack.c.h.b16 %v2912
      %v4472 = vunpack.c.l.b16 %v2913
      %v4473 = vunpack.c.h.b16 %v2913
      %v4474 = vunpack.c.l.b16 %v2914
      %v4475 = vunpack.c.l.b16 %v2915
      %v4476 = vunpack.c.h.b16 %v2915
      %v4477 = vunpack.c.l.b16 %v2916
      %v4478 = vunpack.c.h.b16 %v2916
      %v4479 = vunpack.c.l.b16 %v2917
      %v4480 = vunpack.c.l.b16 %v2918
      %v4481 = vunpack.c.h.b16 %v2918
      %v4482 = vunpack.c.l.b16 %v2919
      %v4483 = vunpack.c.h.b16 %v2919
      %v4484 = vunpack.c.l.b16 %v2920
      %v4485 = vunpack.c.l.b16 %v2921
      %v4486 = vunpack.c.h.b16 %v2921
      %v4487 = vunpack.c.l.b16 %v2922
      %v4488 = vunpack.c.h.b16 %v2922
      %v4489 = vunpack.c.l.b16 %v2923
      %v4490 = vunpack.c.l.b16 %v2924
      %v4491 = vunpack.c.h.b16 %v2924
      %v4492 = vunpack.c.l.b16 %v2925
      %v4493 = vunpack.c.h.b16 %v2925
      %v4494 = vunpack.c.l.b16 %v2926
      %v4495 = vunpack.c.l.b16 %v2927
      %v4496 = vunpack.c.h.b16 %v2927
      %v4497 = vunpack.c.l.b16 %v2928
      %v4498 = vunpack.c.h.b16 %v2928
      %v4499 = vunpack.c.l.b16 %v2929
      %v4500 = vunpack.c.l.b16 %v2930
      %v4501 = vunpack.c.h.b16 %v2930
      %v4502 = vunpack.c.l.b16 %v2931
      %v4503 = vunpack.c.h.b16 %v2931
      %v4504 = vunpack.c.l.b16 %v2932
      %v4505 = vunpack.c.l.b16 %v2933
      %v4506 = vunpack.c.h.b16 %v2933
      %v4507 = vunpack.c.l.b16 %v2934
      %v4508 = vunpack.c.h.b16 %v2934
      %v4509 = vunpack.c.l.b16 %v2935
      %v4510 = vunpack.c.l.b16 %v2936
      %v4511 = vunpack.c.h.b16 %v2936
      %v4512 = vunpack.c.l.b16 %v2937
      %v4513 = vunpack.c.h.b16 %v2937
      %v4514 = vunpack.c.l.b16 %v2938
      %v4515 = vunpack.c.l.b16 %v2939
      %v4516 = vunpack.c.h.b16 %v2939
      %v4517 = vunpack.c.l.b16 %v2940
      %v4518 = vunpack.c.h.b16 %v2940
      %v4519 = vunpack.c.l.b16 %v2941
      %v4520 = vunpack.c.l.b16 %v2942
      %v4521 = vunpack.c.h.b16 %v2942
      %v4522 = vunpack.c.l.b16 %v2943
      %v4523 = vunpack.c.h.b16 %v2943
      %v4524 = vunpack.c.l.b16 %v2944
      %v4525 = vunpack.c.l.b16 %v2945
      %v4526 = vunpack.c.h.b16 %v2945
      %v4527 = vunpack.c.l.b16 %v2946
      %v4528 = vunpack.c.h.b16 %v2946
      %v4529 = vunpack.c.l.b16 %v2947
      %v4530 = vunpack.c.l.b16 %v2948
      %v4531 = vunpack.c.h.b16 %v2948
      %v4532 = vunpack.c.l.b16 %v2949
      %v4533 = vunpack.c.h.b16 %v2949
      %v4534 = vunpack.c.l.b16 %v2950
      %v4535 = vunpack.c.l.b16 %v2951
      %v4536 = vunpack.c.h.b16 %v2951
      %v4537 = vunpack.c.l.b16 %v2952
      %v4538 = vunpack.c.h.b16 %v2952
      %v4539 = vunpack.c.l.b16 %v2953
      %v4540 = vunpack.c.l.b16 %v2954
      %v4541 = vunpack.c.h.b16 %v2954
      %v4542 = vunpack.c.l.b16 %v2955
      %v4543 = vunpack.c.h.b16 %v2955
      %v4544 = vunpack.c.l.b16 %v2956
      %v4545 = vunpack.c.l.b16 %v2957
      %v4546 = vunpack.c.h.b16 %v2957
      %v4547 = vunpack.c.l.b16 %v2958
      %v4548 = vunpack.c.h.b16 %v2958
      %v4549 = vunpack.c.l.b16 %v2959
      %v4550 = vunpack.c.l.b16 %v2960
      %v4551 = vunpack.c.h.b16 %v2960
      %v4552 = vunpack.c.l.b16 %v2961
      %v4553 = vunpack.c.h.b16 %v2961
      %v4554 = vunpack.c.l.b16 %v2962
      %v4555 = vunpack.c.l.b16 %v2963
      %v4556 = vunpack.c.h.b16 %v2963
      %v4557 = vunpack.c.l.b16 %v2964
      %v4558 = vunpack.c.h.b16 %v2964
      %v4559 = vunpack.c.l.b16 %v2965
      %v4560 = vunpack.c.l.b16 %v2966
      %v4561 = vunpack.c.h.b16 %v2966
      %v4562 = vunpack.c.l.b16 %v2967
      %v4563 = vunpack.c.h.b16 %v2967
      %v4564 = vunpack.c.l.b16 %v2968
      %v4565 = vunpack.c.l.b16 %v2969
      %v4566 = vunpack.c.h.b16 %v2969
      %v4567 = vunpack.c.l.b16 %v2970
      %v4568 = vunpack.c.h.b16 %v2970
      %v4569 = vunpack.c.l.b16 %v2971
      %v4570 = vunpack.c.l.b16 %v2972
      %v4571 = vunpack.c.h.b16 %v2972
      %v4572 = vunpack.c.l.b16 %v2973
      %v4573 = vunpack.c.h.b16 %v2973
      %v4574 = vunpack.c.l.b16 %v2974
      %v4575 = vunpack.c.l.b16 %v2975
      %v4576 = vunpack.c.h.b16 %v2975
      %v4577 = vunpack.c.l.b16 %v2976
      %v4578 = vunpack.c.h.b16 %v2976
      %v4579 = vunpack.c.l.b16 %v2977
      %v4580 = vunpack.c.l.b16 %v2978
      %v4581 = vunpack.c.h.b16 %v2978
      %v4582 = vunpack.c.l.b16 %v2979
      %v4583 = vunpack.c.h.b16 %v2979
      %v4584 = vunpack.c.l.b16 %v2980
      %v4585 = vunpack.c.l.b16 %v2981
      %v4586 = vunpack.c.h.b16 %v2981
      %v4587 = vunpack.c.l.b16 %v2982
      %v4588 = vunpack.c.h.b16 %v2982
      %v4589 = vunpack.c.l.b16 %v2983
      %v4590 = vunpack.c.l.b16 %v2984
      %v4591 = vunpack.c.h.b16 %v2984
      %v4592 = vunpack.c.l.b16 %v2985
      %v4593 = vunpack.c.h.b16 %v2985
      %v4594 = vunpack.c.l.b16 %v2986
      %v4595 = vunpack.c.l.b16 %v2987
      %v4596 = vunpack.c.h.b16 %v2987
      %v4597 = vunpack.c.l.b16 %v2988
      %v4598 = vunpack.c.h.b16 %v2988
      %v4599 = vunpack.c.l.b16 %v2989
      %v4600 = vunpack.c.l.b16 %v2990
      %v4601 = vunpack.c.h.b16 %v2990
      %v4602 = vunpack.c.l.b16 %v2991
      %v4603 = vunpack.c.h.b16 %v2991
      %v4604 = vunpack.c.l.b16 %v2992
      %v4605 = vunpack.c.l.b16 %v2993
      %v4606 = vunpack.c.h.b16 %v2993
      %v4607 = vunpack.c.l.b16 %v2994
      %v4608 = vunpack.c.h.b16 %v2994
      %v4609 = vunpack.c.l.b16 %v2995
      %v4610 = vunpack.c.l.b16 %v2996
      %v4611 = vunpack.c.h.b16 %v2996
      %v4612 = vunpack.c.l.b16 %v2997
      %v4613 = vunpack.c.h.b16 %v2997
      %v4614 = vunpack.c.l.b16 %v2998
      %v4615 = vunpack.c.l.b16 %v2999
      %v4616 = vunpack.c.h.b16 %v2999
      %v4617 = vunpack.c.l.b16 %v3000
      %v4618 = vunpack.c.h.b16 %v3000
      %v4619 = vunpack.c.l.b16 %v3001
      %v4620 = vunpack.c.l.b16 %v3002
      %v4621 = vunpack.c.h.b16 %v3002
      %v4622 = vunpack.c.l.b16 %v3003
      %v4623 = vunpack.c.h.b16 %v3003
      %v4624 = vunpack.c.l.b16 %v3004
      %v4625 = vunpack.c.l.b16 %v3005
      %v4626 = vunpack.c.h.b16 %v3005
      %v4627 = vunpack.c.l.b16 %v3006
      %v4628 = vunpack.c.h.b16 %v3006
      %v4629 = vunpack.c.l.b16 %v3007
      %v4630 = vunpack.c.l.b16 %v3008
      %v4631 = vunpack.c.h.b16 %v3008
      %v4632 = vunpack.c.l.b16 %v3009
      %v4633 = vunpack.c.h.b16 %v3009
      %v4634 = vunpack.c.l.b16 %v3010
      %v4635 = vunpack.c.l.b16 %v3011
      %v4636 = vunpack.c.h.b16 %v3011
      %v4637 = vunpack.c.l.b16 %v3012
      %v4638 = vunpack.c.h.b16 %v3012
      %v4639 = vunpack.c.l.b16 %v3013
      %v4640 = vunpack.c.l.b16 %v3014
      %v4641 = vunpack.c.h.b16 %v3014
      %v4642 = vunpack.c.l.b16 %v3015
      %v4643 = vunpack.c.h.b16 %v3015
      %v4644 = vunpack.c.l.b16 %v3016
      %v4645 = vunpack.c.l.b16 %v3017
      %v4646 = vunpack.c.h.b16 %v3017
      %v4647 = vunpack.c.l.b16 %v3018
      %v4648 = vunpack.c.h.b16 %v3018
      %v4649 = vunpack.c.l.b16 %v3019
      %v4650 = vunpack.c.l.b16 %v3020
      %v4651 = vunpack.c.h.b16 %v3020
      %v4652 = vunpack.c.l.b16 %v3021
      %v4653 = vunpack.c.h.b16 %v3021
      %v4654 = vunpack.c.l.b16 %v3022
      %v4655 = vunpack.c.l.b16 %v3023
      %v4656 = vunpack.c.h.b16 %v3023
      %v4657 = vunpack.c.l.b16 %v3024
      %v4658 = vunpack.c.h.b16 %v3024
      %v4659 = vunpack.c.l.b16 %v3025
      %v4660 = vunpack.c.l.b16 %v3026
      %v4661 = vunpack.c.h.b16 %v3026
      %v4662 = vunpack.c.l.b16 %v3027
      %v4663 = vunpack.c.h.b16 %v3027
      %v4664 = vunpack.c.l.b16 %v3028
      %v4665 = vunpack.c.l.b16 %v3029
      %v4666 = vunpack.c.h.b16 %v3029
      %v4667 = vunpack.c.l.b16 %v3030
      %v4668 = vunpack.c.h.b16 %v3030
      %v4669 = vunpack.c.l.b16 %v3031
      %v4670 = vunpack.c.l.b16 %v3032
      %v4671 = vunpack.c.h.b16 %v3032
      %v4672 = vunpack.c.l.b16 %v3033
      %v4673 = vunpack.c.h.b16 %v3033
      %v4674 = vunpack.c.l.b16 %v3034
      %v4675 = vunpack.c.l.b16 %v3035
      %v4676 = vunpack.c.h.b16 %v3035
      %v4677 = vunpack.c.l.b16 %v3036
      %v4678 = vunpack.c.h.b16 %v3036
      %v4679 = vunpack.c.l.b16 %v3037
      %v4680 = vunpack.c.l.b16 %v3038
      %v4681 = vunpack.c.h.b16 %v3038
      %v4682 = vunpack.c.l.b16 %v3039
      %v4683 = vunpack.c.h.b16 %v3039
      %v4684 = vunpack.c.l.b16 %v3040
      %v4685 = vunpack.c.l.b16 %v3041
      %v4686 = vunpack.c.h.b16 %v3041
      %v4687 = vunpack.c.l.b16 %v3042
      %v4688 = vunpack.c.h.b16 %v3042
      %v4689 = vunpack.c.l.b16 %v3043
      %v4690 = vunpack.c.l.b16 %v3044
      %v4691 = vunpack.c.h.b16 %v3044
      %v4692 = vunpack.c.l.b16 %v3045
      %v4693 = vunpack.c.h.b16 %v3045
      %v4694 = vunpack.c.l.b16 %v3046
      %v4695 = vunpack.c.l.b16 %v3047
      %v4696 = vunpack.c.h.b16 %v3047
      %v4697 = vunpack.c.l.b16 %v3048
      %v4698 = vunpack.c.h.b16 %v3048
      %v4699 = vunpack.c.l.b16 %v3049
      %v4700 = vunpack.c.l.b16 %v3050
      %v4701 = vunpack.c.h.b16 %v3050
      %v4702 = vunpack.c.l.b16 %v3051
      %v4703 = vunpack.c.h.b16 %v3051
      %v4704 = vunpack.c.l.b16 %v3052
      %v4705 = vunpack.c.l.b16 %v3053
      %v4706 = vunpack.c.h.b16 %v3053
      %v4707 = vunpack.c.l.b16 %v3054
      %v4708 = vunpack.c.h.b16 %v3054
      %v4709 = vunpack.c.l.b16 %v3055
      %v4710 = vunpack.c.l.b16 %v3056
      %v4711 = vunpack.c.h.b16 %v3056
      %v4712 = vunpack.c.l.b16 %v3057
      %v4713 = vunpack.c.h.b16 %v3057
      %v4714 = vunpack.c.l.b16 %v3058
      %v4715 = vunpack.c.l.b16 %v3059
      %v4716 = vunpack.c.h.b16 %v3059
      %v4717 = vunpack.c.l.b16 %v3060
      %v4718 = vunpack.c.h.b16 %v3060
      %v4719 = vunpack.c.l.b16 %v3061
      %v4720 = vunpack.c.l.b16 %v3062
      %v4721 = vunpack.c.h.b16 %v3062
      %v4722 = vunpack.c.l.b16 %v3063
      %v4723 = vunpack.c.h.b16 %v3063
      %v4724 = vunpack.c.l.b16 %v3064
      %v4725 = vunpack.c.l.b16 %v3065
      %v4726 = vunpack.c.h.b16 %v3065
      %v4727 = vunpack.c.l.b16 %v3066
      %v4728 = vunpack.c.h.b16 %v3066
      %v4729 = vunpack.c.l.b16 %v3067
      %v4730 = vunpack.c.l.b16 %v3068
      %v4731 = vunpack.c.h.b16 %v3068
      %v4732 = vunpack.c.l.b16 %v3069
      %v4733 = vunpack.c.h.b16 %v3069
      %v4734 = vunpack.c.l.b16 %v3070
      %v4735 = vunpack.c.l.b16 %v3071
      %v4736 = vunpack.c.h.b16 %v3071
      %v4737 = vunpack.c.l.b16 %v3072
      %v4738 = vunpack.c.h.b16 %v3072
      %v4739 = vunpack.c.l.b16 %v3073
      %v4740 = vunpack.c.l.b16 %v3074
      %v4741 = vunpack.c.h.b16 %v3074
      %v4742 = vunpack.c.l.b16 %v3075
      %v4743 = vunpack.c.h.b16 %v3075
      %v4744 = vunpack.c.l.b16 %v3076
      %v4745 = vunpack.c.l.b16 %v3077
      %v4746 = vunpack.c.h.b16 %v3077
      %v4747 = vunpack.c.l.b16 %v3078
      %v4748 = vunpack.c.h.b16 %v3078
      %v4749 = vunpack.c.l.b16 %v3079
      %v4750 = vunpack.c.l.b16 %v3080
      %v4751 = vunpack.c.h.b16 %v3080
      %v4752 = vunpack.c.l.b16 %v3081
      %v4753 = vunpack.c.h.b16 %v3081
      %v4754 = vunpack.c.l.b16 %v3082
      %v4755 = vunpack.c.l.b16 %v3083
      %v4756 = vunpack.c.h.b16 %v3083
      %v4757 = vunpack.c.l.b16 %v3084
      %v4758 = vunpack.c.h.b16 %v3084
      %v4759 = vunpack.c.l.b16 %v3085
      %v4760 = vunpack.c.l.b16 %v3086
      %v4761 = vunpack.c.h.b16 %v3086
      %v4762 = vunpack.c.l.b16 %v3087
      %v4763 = vunpack.c.h.b16 %v3087
      %v4764 = vunpack.c.l.b16 %v3088
      %v4765 = vunpack.c.l.b16 %v3089
      %v4766 = vunpack.c.h.b16 %v3089
      %v4767 = vunpack.c.l.b16 %v3090
      %v4768 = vunpack.c.h.b16 %v3090
      %v4769 = vunpack.c.l.b16 %v3091
      %v4770 = vunpack.c.l.b16 %v3092
      %v4771 = vunpack.c.h.b16 %v3092
      %v4772 = vunpack.c.l.b16 %v3093
      %v4773 = vunpack.c.h.b16 %v3093
      %v4774 = vunpack.c.l.b16 %v3094
      %v4775 = vunpack.c.l.b16 %v3095
      %v4776 = vunpack.c.h.b16 %v3095
      %v4777 = vunpack.c.l.b16 %v3096
      %v4778 = vunpack.c.h.b16 %v3096
      %v4779 = vunpack.c.l.b16 %v3097
      %v4780 = vunpack.c.l.b16 %v3098
      %v4781 = vunpack.c.h.b16 %v3098
      %v4782 = vunpack.c.l.b16 %v3099
      %v4783 = vunpack.c.h.b16 %v3099
      %v4784 = vunpack.c.l.b16 %v3100
      %v4785 = vunpack.c.l.b16 %v3101
      %v4786 = vunpack.c.h.b16 %v3101
      %v4787 = vunpack.c.l.b16 %v3102
      %v4788 = vunpack.c.h.b16 %v3102
      %v4789 = vunpack.c.l.b16 %v3103
      %v4790 = vunpack.c.l.b16 %v3104
      %v4791 = vunpack.c.h.b16 %v3104
      %v4792 = vunpack.c.l.b16 %v3105
      %v4793 = vunpack.c.h.b16 %v3105
      %v4794 = vunpack.c.l.b16 %v3106
      %v4795 = vunpack.c.l.b16 %v3107
      %v4796 = vunpack.c.h.b16 %v3107
      %v4797 = vunpack.c.l.b16 %v3108
      %v4798 = vunpack.c.h.b16 %v3108
      %v4799 = vunpack.c.l.b16 %v3109
      %v4800 = vunpack.c.l.b16 %v3110
      %v4801 = vunpack.c.h.b16 %v3110
      %v4802 = vunpack.c.l.b16 %v3111
      %v4803 = vunpack.c.h.b16 %v3111
      %v4804 = vunpack.c.l.b16 %v3112
      %v4805 = vunpack.c.l.b16 %v3113
      %v4806 = vunpack.c.h.b16 %v3113
      %v4807 = vunpack.c.l.b16 %v3114
      %v4808 = vunpack.c.h.b16 %v3114
      %v4809 = vunpack.c.l.b16 %v3115
      %v4810 = vunpack.c.l.b16 %v3116
      %v4811 = vunpack.c.h.b16 %v3116
      %v4812 = vunpack.c.l.b16 %v3117
      %v4813 = vunpack.c.h.b16 %v3117
      %v4814 = vunpack.c.l.b16 %v3118
      %v4815 = vunpack.c.l.b16 %v3119
      %v4816 = vunpack.c.h.b16 %v3119
      %v4817 = vunpack.c.l.b16 %v3120
      %v4818 = vunpack.c.h.b16 %v3120
      %v4819 = vunpack.c.l.b16 %v3121
      %v4820 = vunpack.c.l.b16 %v3122
      %v4821 = vunpack.c.h.b16 %v3122
      %v4822 = vunpack.c.l.b16 %v3123
      %v4823 = vunpack.c.h.b16 %v3123
      %v4824 = vunpack.c.l.b16 %v3124
      %v4825 = vunpack.c.l.b16 %v3125
      %v4826 = vunpack.c.h.b16 %v3125
      %v4827 = vunpack.c.l.b16 %v3126
      %v4828 = vunpack.c.h.b16 %v3126
      %v4829 = vunpack.c.l.b16 %v3127
      %v4830 = vunpack.c.l.b16 %v3128
      %v4831 = vunpack.c.h.b16 %v3128
      %v4832 = vunpack.c.l.b16 %v3129
      %v4833 = vunpack.c.h.b16 %v3129
      %v4834 = vunpack.c.l.b16 %v3130
      %v4835 = vunpack.c.l.b16 %v3131
      %v4836 = vunpack.c.h.b16 %v3131
      %v4837 = vunpack.c.l.b16 %v3132
      %v4838 = vunpack.c.h.b16 %v3132
      %v4839 = vunpack.c.l.b16 %v3133
      %v4840 = vunpack.c.l.b16 %v3134
      %v4841 = vunpack.c.h.b16 %v3134
      %v4842 = vunpack.c.l.b16 %v3135
      %v4843 = vunpack.c.h.b16 %v3135
      %v4844 = vunpack.c.l.b16 %v3136
      %v4845 = vunpack.c.l.b16 %v3137
      %v4846 = vunpack.c.h.b16 %v3137
      %v4847 = vunpack.c.l.b16 %v3138
      %v4848 = vunpack.c.h.b16 %v3138
      %v4849 = vunpack.c.l.b16 %v3139
      %v4850 = vunpack.c.l.b16 %v3140
      %v4851 = vunpack.c.h.b16 %v3140
      %v4852 = vunpack.c.l.b16 %v3141
      %v4853 = vunpack.c.h.b16 %v3141
      %v4854 = vunpack.c.l.b16 %v3142
      %v4855 = vunpack.c.l.b16 %v3143
      %v4856 = vunpack.c.h.b16 %v3143
      %v4857 = vunpack.c.l.b16 %v3144
      %v4858 = vunpack.c.h.b16 %v3144
      %v4859 = vunpack.c.l.b16 %v3145
      %v4860 = vunpack.c.l.b16 %v3146
      %v4861 = vunpack.c.h.b16 %v3146
      %v4862 = vunpack.c.l.b16 %v3147
      %v4863 = vunpack.c.h.b16 %v3147
      %v4864 = vunpack.c.l.b16 %v3148
      %v4865 = vunpack.c.l.b16 %v3149
      %v4866 = vunpack.c.h.b16 %v3149
      %v4867 = vunpack.c.l.b16 %v3150
      %v4868 = vunpack.c.h.b16 %v3150
      %v4869 = vunpack.c.l.b16 %v3151
      %v4870 = vunpack.c.l.b16 %v3152
      %v4871 = vunpack.c.h.b16 %v3152
      %v4872 = vunpack.c.l.b16 %v3153
      %v4873 = vunpack.c.h.b16 %v3153
      %v4874 = vunpack.c.l.b16 %v3154
      %v4875 = vunpack.c.l.b16 %v3155
      %v4876 = vunpack.c.h.b16 %v3155
      %v4877 = vunpack.c.l.b16 %v3156
      %v4878 = vunpack.c.h.b16 %v3156
      %v4879 = vunpack.c.l.b16 %v3157
      %v4880 = vunpack.c.l.b16 %v3158
      %v4881 = vunpack.c.h.b16 %v3158
      %v4882 = vunpack.c.l.b16 %v3159
      %v4883 = vunpack.c.h.b16 %v3159
      %v4884 = vunpack.c.l.b16 %v3160
      %v4885 = vunpack.c.l.b16 %v3161
      %v4886 = vunpack.c.h.b16 %v3161
      %v4887 = vunpack.c.l.b16 %v3162
      %v4888 = vunpack.c.h.b16 %v3162
      %v4889 = vunpack.c.l.b16 %v3163
      %v4890 = vunpack.c.l.b16 %v3164
      %v4891 = vunpack.c.h.b16 %v3164
      %v4892 = vunpack.c.l.b16 %v3165
      %v4893 = vunpack.c.h.b16 %v3165
      %v4894 = vunpack.c.l.b16 %v3166
      %v4895 = vunpack.c.l.b16 %v3167
      %v4896 = vunpack.c.h.b16 %v3167
      %v4897 = vunpack.c.l.b16 %v3168
      %v4898 = vunpack.c.h.b16 %v3168
      %v4899 = vunpack.c.l.b16 %v3169
      %v4900 = vunpack.c.l.b16 %v3170
      %v4901 = vunpack.c.h.b16 %v3170
      %v4902 = vunpack.c.l.b16 %v3171
      %v4903 = vunpack.c.h.b16 %v3171
      %v4904 = vunpack.c.l.b16 %v3172
      %v4905 = vunpack.c.l.b16 %v3173
      %v4906 = vunpack.c.h.b16 %v3173
      %v4907 = vunpack.c.l.b16 %v3174
      %v4908 = vunpack.c.h.b16 %v3174
      %v4909 = vunpack.c.l.b16 %v3175
      %v4910 = vunpack.c.l.b16 %v3176
      %v4911 = vunpack.c.h.b16 %v3176
      %v4912 = vunpack.c.l.b16 %v3177
      %v4913 = vunpack.c.h.b16 %v3177
      %v4914 = vunpack.c.l.b16 %v3178
      %v4915 = vunpack.c.l.b16 %v3179
      %v4916 = vunpack.c.h.b16 %v3179
      %v4917 = vunpack.c.l.b16 %v3180
      %v4918 = vunpack.c.h.b16 %v3180
      %v4919 = vunpack.c.l.b16 %v3181
      %v4920 = vunpack.c.l.b16 %v3182
      %v4921 = vunpack.c.h.b16 %v3182
      %v4922 = vunpack.c.l.b16 %v3183
      %v4923 = vunpack.c.h.b16 %v3183
      %v4924 = vunpack.c.l.b16 %v3184
      %v4925 = vunpack.c.l.b16 %v3185
      %v4926 = vunpack.c.h.b16 %v3185
      %v4927 = vunpack.c.l.b16 %v3186
      %v4928 = vunpack.c.h.b16 %v3186
      %v4929 = vunpack.c.l.b16 %v3187
      %v4930 = vunpack.c.l.b16 %v3188
      %v4931 = vunpack.c.h.b16 %v3188
      %v4932 = vunpack.c.l.b16 %v3189
      %v4933 = vunpack.c.h.b16 %v3189
      %v4934 = vunpack.c.l.b16 %v3190
      %v4935 = vunpack.c.l.b16 %v3191
      %v4936 = vunpack.c.h.b16 %v3191
      %v4937 = vunpack.c.l.b16 %v3192
      %v4938 = vunpack.c.h.b16 %v3192
      %v4939 = vunpack.c.l.b16 %v3193
      %v4940 = vunpack.c.l.b16 %v3194
      %v4941 = vunpack.c.h.b16 %v3194
      %v4942 = vunpack.c.l.b16 %v3195
      %v4943 = vunpack.c.h.b16 %v3195
      %v4944 = vunpack.c.l.b16 %v3196
      %v4945 = vunpack.c.l.b16 %v3197
      %v4946 = vunpack.c.h.b16 %v3197
      %v4947 = vunpack.c.l.b16 %v3198
      %v4948 = vunpack.c.h.b16 %v3198
      %v4949 = vunpack.c.l.b16 %v3199
      %v4950 = vunpack.c.l.b16 %v3200
      %v4951 = vunpack.c.h.b16 %v3200
      %v4952 = vunpack.c.l.b16 %v3201
      %v4953 = vunpack.c.h.b16 %v3201
      %v4954 = vunpack.c.l.b16 %v3202
      %v4955 = vunpack.c.l.b16 %v3203
      %v4956 = vunpack.c.h.b16 %v3203
      %v4957 = vunpack.c.l.b16 %v3204
      %v4958 = vunpack.c.h.b16 %v3204
      %v4959 = vunpack.c.l.b16 %v3205
      %v4960 = vunpack.c.l.b16 %v3206
      %v4961 = vunpack.c.h.b16 %v3206
      %v4962 = vunpack.c.l.b16 %v3207
      %v4963 = vunpack.c.h.b16 %v3207
      %v4964 = vunpack.c.l.b16 %v3208
      %v4965 = vunpack.c.l.b16 %v3209
      %v4966 = vunpack.c.h.b16 %v3209
      %v4967 = vunpack.c.l.b16 %v3210
      %v4968 = vunpack.c.h.b16 %v3210
      %v4969 = vunpack.c.l.b16 %v3211
      %v4970 = vunpack.c.l.b16 %v3212
      %v4971 = vunpack.c.h.b16 %v3212
      %v4972 = vunpack.c.l.b16 %v3213
      %v4973 = vunpack.c.h.b16 %v3213
      %v4974 = vunpack.c.l.b16 %v3214
      %v4975 = vunpack.c.l.b16 %v3215
      %v4976 = vunpack.c.h.b16 %v3215
      %v4977 = vunpack.c.l.b16 %v3216
      %v4978 = vunpack.c.h.b16 %v3216
      %v4979 = vunpack.c.l.b16 %v3217
      %v4980 = vunpack.c.l.b16 %v3218
      %v4981 = vunpack.c.h.b16 %v3218
      %v4982 = vunpack.c.l.b16 %v3219
      %v4983 = vunpack.c.h.b16 %v3219
      %v4984 = vunpack.c.l.b16 %v3220
      %v4985 = vunpack.c.l.b16 %v3221
      %v4986 = vunpack.c.h.b16 %v3221
      %v4987 = vunpack.c.l.b16 %v3222
      %v4988 = vunpack.c.h.b16 %v3222
      %v4989 = vunpack.c.l.b16 %v3223
      %v4990 = vunpack.c.l.b16 %v3224
      %v4991 = vunpack.c.h.b16 %v3224
      %v4992 = vunpack.c.l.b16 %v3225
      %v4993 = vunpack.c.h.b16 %v3225
      %v4994 = vunpack.c.l.b16 %v3226
      %v4995 = vunpack.c.l.b16 %v3227
      %v4996 = vunpack.c.h.b16 %v3227
      %v4997 = vunpack.c.l.b16 %v3228
      %v4998 = vunpack.c.h.b16 %v3228
      %v4999 = vunpack.c.l.b16 %v3229
      %v5000 = vunpack.c.l.b16 %v3230
      %v5001 = vunpack.c.h.b16 %v3230
      %v5002 = vunpack.c.l.b16 %v3231
      %v5003 = vunpack.c.h.b16 %v3231
      %v5004 = vunpack.c.l.b16 %v3232
      %v5005 = vunpack.c.l.b16 %v3233
      %v5006 = vunpack.c.h.b16 %v3233
      %v5007 = vunpack.c.l.b16 %v3234
      %v5008 = vunpack.c.h.b16 %v3234
      %v5009 = vunpack.c.l.b16 %v3235
      %v5010 = vunpack.c.l.b16 %v3236
      %v5011 = vunpack.c.h.b16 %v3236
      %v5012 = vunpack.c.l.b16 %v3237
      %v5013 = vunpack.c.h.b16 %v3237
      %v5014 = vunpack.c.l.b16 %v3238
      %v5015 = vunpack.c.l.b16 %v3239
      %v5016 = vunpack.c.h.b16 %v3239
      %v5017 = vunpack.c.l.b16 %v3240
      %v5018 = vunpack.c.h.b16 %v3240
      %v5019 = vunpack.c.l.b16 %v3241
      %v5020 = vunpack.c.l.b16 %v3242
      %v5021 = vunpack.c.h.b16 %v3242
      %v5022 = vunpack.c.l.b16 %v3243
      %v5023 = vunpack.c.h.b16 %v3243
      %v5024 = vunpack.c.l.b16 %v3244
      %v5025 = vunpack.c.l.b16 %v3245
      %v5026 = vunpack.c.h.b16 %v3245
      %v5027 = vunpack.c.l.b16 %v3246
      %v5028 = vunpack.c.h.b16 %v3246
      %v5029 = vunpack.c.l.b16 %v3247
      %v5030 = vunpack.c.l.b16 %v3248
      %v5031 = vunpack.c.h.b16 %v3248
      %v5032 = vunpack.c.l.b16 %v3249
      %v5033 = vunpack.c.h.b16 %v3249
      %v5034 = vunpack.c.l.b16 %v3250
      %v5035 = vunpack.c.l.b16 %v3251
      %v5036 = vunpack.c.h.b16 %v3251
      %v5037 = vunpack.c.l.b16 %v3252
      %v5038 = vunpack.c.h.b16 %v3252
      %v5039 = vunpack.c.l.b16 %v3253
      %v5040 = vunpack.c.l.b16 %v3254
      %v5041 = vunpack.c.h.b16 %v3254
      %v5042 = vunpack.c.l.b16 %v3255
      %v5043 = vunpack.c.h.b16 %v3255
      %v5044 = vunpack.c.l.b16 %v3256
      %v5045 = vunpack.c.l.b16 %v3257
      %v5046 = vunpack.c.h.b16 %v3257
      %v5047 = vunpack.c.l.b16 %v3258
      %v5048 = vunpack.c.h.b16 %v3258
      %v5049 = vunpack.c.l.b16 %v3259
      %v5050 = vunpack.c.l.b16 %v3260
      %v5051 = vunpack.c.h.b16 %v3260
      %v5052 = vunpack.c.l.b16 %v3261
      %v5053 = vunpack.c.h.b16 %v3261
      %v5054 = vunpack.c.l.b16 %v3262
      %v5055 = vunpack.c.l.b16 %v3263
      %v5056 = vunpack.c.h.b16 %v3263
      %v5057 = vunpack.c.l.b16 %v3264
      %v5058 = vunpack.c.h.b16 %v3264
      %v5059 = vunpack.c.l.b16 %v3265
      %v5060 = vunpack.c.l.b16 %v3266
      %v5061 = vunpack.c.h.b16 %v3266
      %v5062 = vunpack.c.l.b16 %v3267
      %v5063 = vunpack.c.h.b16 %v3267
      %v5064 = vunpack.c.l.b16 %v3268
      %v5065 = vunpack.c.l.b16 %v3269
      %v5066 = vunpack.c.h.b16 %v3269
      %v5067 = vunpack.c.l.b16 %v3270
      %v5068 = vunpack.c.h.b16 %v3270
      %v5069 = vunpack.c.l.b16 %v3271
      %v5070 = vunpack.c.l.b16 %v3272
      %v5071 = vunpack.c.h.b16 %v3272
      %v5072 = vunpack.c.l.b16 %v3273
      %v5073 = vunpack.c.h.b16 %v3273
      %v5074 = vunpack.c.l.b16 %v3274
      %v5075 = vunpack.c.l.b16 %v3275
      %v5076 = vunpack.c.h.b16 %v3275
      %v5077 = vunpack.c.l.b16 %v3276
      %v5078 = vunpack.c.h.b16 %v3276
      %v5079 = vunpack.c.l.b16 %v3277
      %v5080 = vunpack.c.l.b16 %v3278
      %v5081 = vunpack.c.h.b16 %v3278
      %v5082 = vunpack.c.l.b16 %v3279
      %v5083 = vunpack.c.h.b16 %v3279
      %v5084 = vunpack.c.l.b16 %v3280
      %v5085 = vunpack.c.l.b16 %v3281
      %v5086 = vunpack.c.h.b16 %v3281
      %v5087 = vunpack.c.l.b16 %v3282
      %v5088 = vunpack.c.h.b16 %v3282
      %v5089 = vunpack.c.l.b16 %v3283
      %v5090 = vunpack.c.l.b16 %v3284
      %v5091 = vunpack.c.h.b16 %v3284
      %v5092 = vunpack.c.l.b16 %v3285
      %v5093 = vunpack.c.h.b16 %v3285
      %v5094 = vunpack.c.l.b16 %v3286
      %v5095 = vunpack.c.l.b16 %v3287
      %v5096 = vunpack.c.h.b16 %v3287
      %v5097 = vunpack.c.l.b16 %v3288
      %v5098 = vunpack.c.h.b16 %v3288
      %v5099 = vunpack.c.l.b16 %v3289
      %v5100 = vunpack.c.l.b16 %v3290
      %v5101 = vunpack.c.h.b16 %v3290
      %v5102 = vunpack.c.l.b16 %v3291
      %v5103 = vunpack.c.h.b16 %v3291
      %v5104 = vunpack.c.l.b16 %v3292
      %v5105 = vunpack.c.l.b16 %v3293
      %v5106 = vunpack.c.h.b16 %v3293
      %v5107 = vunpack.c.l.b16 %v3294
      %v5108 = vunpack.c.h.b16 %v3294
      %v5109 = vunpack.c.l.b16 %v3295
      %v5110 = vunpack.c.l.b16 %v3296
      %v5111 = vunpack.c.h.b16 %v3296
      %v5112 = vunpack.c.l.b16 %v3297
      %v5113 = vunpack.c.h.b16 %v3297
      %v5114 = vunpack.c.l.b16 %v3298
      %v5115 = vunpack.c.l.b16 %v3299
      %v5116 = vunpack.c.h.b16 %v3299
      %v5117 = vunpack.c.l.b16 %v3300
      %v5118 = vunpack.c.h.b16 %v3300
      %v5119 = vunpack.c.l.b16 %v3301
      %v5120 = vunpack.c.l.b16 %v3302
      %v5121 = vunpack.c.h.b16 %v3302
      %v5122 = vunpack.c.l.b16 %v3303
      %v5123 = vunpack.c.h.b16 %v3303
      %v5124 = vunpack.c.l.b16 %v3304
      %v5125 = vunpack.c.l.b16 %v3305
      %v5126 = vunpack.c.h.b16 %v3305
      %v5127 = vunpack.c.l.b16 %v3306
      %v5128 = vunpack.c.h.b16 %v3306
      %v5129 = vunpack.c.l.b16 %v3307
      %v5130 = vunpack.c.l.b16 %v3308
      %v5131 = vunpack.c.h.b16 %v3308
      %v5132 = vunpack.c.l.b16 %v3309
      %v5133 = vunpack.c.h.b16 %v3309
      %v5134 = vunpack.c.l.b16 %v3310
      %v5135 = vunpack.c.l.b16 %v3311
      %v5136 = vunpack.c.h.b16 %v3311
      %v5137 = vunpack.c.l.b16 %v3312
      %v5138 = vunpack.c.h.b16 %v3312
      %v5139 = vunpack.c.l.b16 %v3313
      %v5140 = vunpack.c.l.b16 %v3314
      %v5141 = vunpack.c.h.b16 %v3314
      %v5142 = vunpack.c.l.b16 %v3315
      %v5143 = vunpack.c.h.b16 %v3315
      %v5144 = vunpack.c.l.b16 %v3316
      %v5145 = vunpack.c.l.b16 %v3317
      %v5146 = vunpack.c.h.b16 %v3317
      %v5147 = vunpack.c.l.b16 %v3318
      %v5148 = vunpack.c.h.b16 %v3318
      %v5149 = vunpack.c.l.b16 %v3319
      %v5150 = vunpack.c.l.b16 %v3320
      %v5151 = vunpack.c.h.b16 %v3320
      %v5152 = vunpack.c.l.b16 %v3321
      %v5153 = vunpack.c.h.b16 %v3321
      %v5154 = vunpack.c.l.b16 %v3322
      %v5155 = vunpack.c.l.b16 %v3323
      %v5156 = vunpack.c.h.b16 %v3323
      %v5157 = vunpack.c.l.b16 %v3324
      %v5158 = vunpack.c.h.b16 %v3324
      %v5159 = vunpack.c.l.b16 %v3325
      %v5160 = vunpack.c.l.b16 %v3326
      %v5161 = vunpack.c.h.b16 %v3326
      %v5162 = vunpack.c.l.b16 %v3327
      %v5163 = vunpack.c.h.b16 %v3327
      %v5164 = vunpack.c.l.b16 %v3328
      %v5165 = vunpack.c.l.b16 %v3329
      %v5166 = vunpack.c.h.b16 %v3329
      %v5167 = vunpack.c.l.b16 %v3330
      %v5168 = vunpack.c.h.b16 %v3330
      %v5169 = vunpack.c.l.b16 %v3331
      %v5170 = vunpack.c.l.b16 %v3332
      %v5171 = vunpack.c.h.b16 %v3332
      %v5172 = vunpack.c.l.b16 %v3333
      %v5173 = vunpack.c.h.b16 %v3333
      %v5174 = vunpack.c.l.b16 %v3334
      %v5175 = vunpack.c.l.b16 %v3335
      %v5176 = vunpack.c.h.b16 %v3335
      %v5177 = vunpack.c.l.b16 %v3336
      %v5178 = vunpack.c.h.b16 %v3336
      %v5179 = vunpack.c.l.b16 %v3337
      %v5180 = vunpack.c.l.b16 %v3338
      %v5181 = vunpack.c.h.b16 %v3338
      %v5182 = vunpack.c.l.b16 %v3339
      %v5183 = vunpack.c.h.b16 %v3339
      %v5184 = vunpack.c.l.b16 %v3340
      %v5185 = vunpack.c.l.b16 %v3341
      %v5186 = vunpack.c.h.b16 %v3341
      %v5187 = vunpack.c.l.b16 %v3342
      %v5188 = vunpack.c.h.b16 %v3342
      %v5189 = vunpack.c.l.b16 %v3343
      %v5190 = vunpack.c.l.b16 %v3344
      %v5191 = vunpack.c.h.b16 %v3344
      %v5192 = vunpack.c.l.b16 %v3345
      %v5193 = vunpack.c.h.b16 %v3345
      %v5194 = vunpack.c.l.b16 %v3346
      %v5195 = vunpack.c.l.b16 %v3347
      %v5196 = vunpack.c.h.b16 %v3347
      %v5197 = vunpack.c.l.b16 %v3348
      %v5198 = vunpack.c.h.b16 %v3348
      %v5199 = vunpack.c.l.b16 %v3349
      %v5200 = vunpack.c.l.b16 %v3350
      %v5201 = vunpack.c.h.b16 %v3350
      %v5202 = vunpack.c.l.b16 %v3351
      %v5203 = vunpack.c.h.b16 %v3351
      %v5204 = vunpack.c.l.b16 %v3352
      %v5205 = vunpack.c.l.b16 %v3353
      %v5206 = vunpack.c.h.b16 %v3353
      %v5207 = vunpack.c.l.b16 %v3354
      %v5208 = vunpack.c.h.b16 %v3354
      %v5209 = vunpack.c.l.b16 %v3355
      %v5210 = vunpack.c.l.b16 %v3356
      %v5211 = vunpack.c.h.b16 %v3356
      %v5212 = vunpack.c.l.b16 %v3357
      %v5213 = vunpack.c.h.b16 %v3357
      %v5214 = vunpack.c.l.b16 %v3358
      %v5215 = vunpack.c.l.b16 %v3359
      %v5216 = vunpack.c.h.b16 %v3359
      %v5217 = vunpack.c.l.b16 %v3360
      %v5218 = vunpack.c.h.b16 %v3360
      %v5219 = vunpack.c.l.b16 %v3361
      %v5220 = vunpack.c.l.b16 %v3362
      %v5221 = vunpack.c.h.b16 %v3362
      %v5222 = vunpack.c.l.b16 %v3363
      %v5223 = vunpack.c.h.b16 %v3363
      %v5224 = vunpack.c.l.b16 %v3364
      %v5225 = vunpack.c.l.b16 %v3365
      %v5226 = vunpack.c.h.b16 %v3365
      %v5227 = vunpack.c.l.b16 %v3366
      %v5228 = vunpack.c.h.b16 %v3366
      %v5229 = vunpack.c.l.b16 %v3367
      %v5230 = vunpack.c.l.b16 %v3368
      %v5231 = vunpack.c.h.b16 %v3368
      %v5232 = vunpack.c.l.b16 %v3369
      %v5233 = vunpack.c.h.b16 %v3369
      %v5234 = vunpack.c.l.b16 %v3370
      %v5235 = vunpack.c.l.b16 %v3371
      %v5236 = vunpack.c.h.b16 %v3371
      %v5237 = vunpack.c.l.b16 %v3372
      %v5238 = vunpack.c.h.b16 %v3372
      %v5239 = vunpack.c.l.b16 %v3373
      %v5240 = vunpack.c.l.b16 %v3374
      %v5241 = vunpack.c.h.b16 %v3374
      %v5242 = vunpack.c.l.b16 %v3375
      %v5243 = vunpack.c.h.b16 %v3375
      %v5244 = vunpack.c.l.b16 %v3376
      %v5245 = vunpack.c.l.b16 %v3377
      %v5246 = vunpack.c.h.b16 %v3377
      %v5247 = vunpack.c.l.b16 %v3378
      %v5248 = vunpack.c.h.b16 %v3378
      %v5249 = vunpack.c.l.b16 %v3379
      %v5250 = vunpack.c.l.b16 %v3380
      %v5251 = vunpack.c.h.b16 %v3380
      %v5252 = vunpack.c.l.b16 %v3381
      %v5253 = vunpack.c.h.b16 %v3381
      %v5254 = vunpack.c.l.b16 %v3382
      %v5255 = vunpack.c.l.b16 %v3383
      %v5256 = vunpack.c.h.b16 %v3383
      %v5257 = vunpack.c.l.b16 %v3384
      %v5258 = vunpack.c.h.b16 %v3384
      %v5259 = vunpack.c.l.b16 %v3385
      %v5260 = vunpack.c.l.b16 %v3386
      %v5261 = vunpack.c.h.b16 %v3386
      %v5262 = vunpack.c.l.b16 %v3387
      %v5263 = vunpack.c.h.b16 %v3387
      %v5264 = vunpack.c.l.b16 %v3388
      %v5265 = vunpack.c.l.b16 %v3389
      %v5266 = vunpack.c.h.b16 %v3389
      %v5267 = vunpack.c.l.b16 %v3390
      %v5268 = vunpack.c.h.b16 %v3390
      %v5269 = vunpack.c.l.b16 %v3391
      %v5270 = vunpack.c.l.b16 %v3392
      %v5271 = vunpack.c.h.b16 %v3392
      %v5272 = vunpack.c.l.b16 %v3393
      %v5273 = vunpack.c.h.b16 %v3393
      %v5274 = vunpack.c.l.b16 %v3394
      %v5275 = vunpack.c.l.b16 %v3395
      %v5276 = vunpack.c.h.b16 %v3395
      %v5277 = vunpack.c.l.b16 %v3396
      %v5278 = vunpack.c.h.b16 %v3396
      %v5279 = vunpack.c.l.b16 %v3397
      %v5280 = vunpack.c.l.b16 %v3398
      %v5281 = vunpack.c.h.b16 %v3398
      %v5282 = vunpack.c.l.b16 %v3399
      %v5283 = vunpack.c.h.b16 %v3399
      %v5284 = vunpack.c.l.b16 %v3400
      %v5285 = vunpack.c.l.b16 %v3401
      %v5286 = vunpack.c.h.b16 %v3401
      %v5287 = vunpack.c.l.b16 %v3402
      %v5288 = vunpack.c.h.b16 %v3402
      %v5289 = vunpack.c.l.b16 %v3403
      %v5290 = vunpack.c.l.b16 %v3404
      %v5291 = vunpack.c.h.b16 %v3404
      %v5292 = vunpack.c.l.b16 %v3405
      %v5293 = vunpack.c.h.b16 %v3405
      %v5294 = vunpack.c.l.b16 %v3406
      %v5295 = vunpack.c.l.b16 %v3407
      %v5296 = vunpack.c.h.b16 %v3407
      %v5297 = vunpack.c.l.b16 %v3408
      %v5298 = vunpack.c.h.b16 %v3408
      %v5299 = vunpack.c.l.b16 %v3409
      %v5300 = vunpack.c.l.b16 %v3410
      %v5301 = vunpack.c.h.b16 %v3410
      %v5302 = vunpack.c.l.b16 %v3411
      %v5303 = vunpack.c.h.b16 %v3411
      %v5304 = vunpack.c.l.b16 %v3412
      %v5305 = vunpack.c.l.b16 %v3413
      %v5306 = vunpack.c.h.b16 %v3413
      %v5307 = vunpack.c.l.b16 %v3414
      %v5308 = vunpack.c.h.b16 %v3414
      %v5309 = vunpack.c.l.b16 %v3415
      %v5310 = vunpack.c.l.b16 %v3416
      %v5311 = vunpack.c.h.b16 %v3416
      %v5312 = vunpack.c.l.b16 %v3417
      %v5313 = vunpack.c.h.b16 %v3417
      %v5314 = vunpack.c.l.b16 %v3418
      %v5315 = vunpack.c.l.b16 %v3419
      %v5316 = vunpack.c.h.b16 %v3419
      %v5317 = vunpack.c.l.b16 %v3420
      %v5318 = vunpack.c.h.b16 %v3420
      %v5319 = vunpack.c.l.b16 %v3421
      %v5320 = vunpack.c.l.b16 %v3422
      %v5321 = vunpack.c.h.b16 %v3422
      %v5322 = vunpack.c.l.b16 %v3423
      %v5323 = vunpack.c.h.b16 %v3423
      %v5324 = vunpack.c.l.b16 %v3424
      %v5325 = vunpack.c.l.b16 %v3425
      %v5326 = vunpack.c.h.b16 %v3425
      %v5327 = vunpack.c.l.b16 %v3426
      %v5328 = vunpack.c.h.b16 %v3426
      %v5329 = vunpack.c.l.b16 %v3427
      %v5330 = vunpack.c.l.b16 %v3428
      %v5331 = vunpack.c.h.b16 %v3428
      %v5332 = vunpack.c.l.b16 %v3429
      %v5333 = vunpack.c.h.b16 %v3429
      %v5334 = vunpack.c.l.b16 %v3430
      %v5335 = vunpack.c.l.b16 %v3431
      %v5336 = vunpack.c.h.b16 %v3431
      %v5337 = vunpack.c.l.b16 %v3432
      %v5338 = vunpack.c.h.b16 %v3432
      %v5339 = vunpack.c.l.b16 %v3433
      %v5340 = vunpack.c.l.b16 %v3434
      %v5341 = vunpack.c.h.b16 %v3434
      %v5342 = vunpack.c.l.b16 %v3435
      %v5343 = vunpack.c.h.b16 %v3435
      %v5344 = vunpack.c.l.b16 %v3436
      %v5345 = vunpack.c.l.b16 %v3437
      %v5346 = vunpack.c.h.b16 %v3437
      %v5347 = vunpack.c.l.b16 %v3438
      %v5348 = vunpack.c.h.b16 %v3438
      %v5349 = vunpack.c.l.b16 %v3439
      %v5350 = vunpack.c.l.b16 %v3440
      %v5351 = vunpack.c.h.b16 %v3440
      %v5352 = vunpack.c.l.b16 %v3441
      %v5353 = vunpack.c.h.b16 %v3441
      %v5354 = vunpack.c.l.b16 %v3442
      %v5355 = vunpack.c.l.b16 %v3443
      %v5356 = vunpack.c.h.b16 %v3443
      %v5357 = vunpack.c.l.b16 %v3444
      %v5358 = vunpack.c.h.b16 %v3444
      %v5359 = vunpack.c.l.b16 %v3445
      %v5360 = vunpack.c.l.b16 %v3446
      %v5361 = vunpack.c.h.b16 %v3446
      %v5362 = vunpack.c.l.b16 %v3447
      %v5363 = vunpack.c.h.b16 %v3447
      %v5364 = vunpack.c.l.b16 %v3448
      %v5365 = vunpack.c.l.b16 %v3449
      %v5366 = vunpack.c.h.b16 %v3449
      %v5367 = vunpack.c.l.b16 %v3450
      %v5368 = vunpack.c.h.b16 %v3450
      %v5369 = vunpack.c.l.b16 %v3451
      %v5370 = vunpack.c.l.b16 %v3452
      %v5371 = vunpack.c.h.b16 %v3452
      %v5372 = vunpack.c.l.b16 %v3453
      %v5373 = vunpack.c.h.b16 %v3453
      %v5374 = vunpack.c.l.b16 %v3454
      %v5375 = vpack.c.b16 %v4180, %v4175
      %v5376 = vpack.c.b16 %v4181, %v4176
      %v5377 = vpack.c.b16 %v4182, %v4177
      %v5378 = vpack.c.b16 %v4183, %v4178
      %v5379 = vpack.c.b16 %v4184, %v4179
      %v5380 = vpack.c.b16 %v4190, %v4185
      %v5381 = vpack.c.b16 %v4191, %v4186
      %v5382 = vpack.c.b16 %v4192, %v4187
      %v5383 = vpack.c.b16 %v4193, %v4188
      %v5384 = vpack.c.b16 %v4194, %v4189
      %v5385 = vpack.c.b16 %v4200, %v4195
      %v5386 = vpack.c.b16 %v4201, %v4196
      %v5387 = vpack.c.b16 %v4202, %v4197
      %v5388 = vpack.c.b16 %v4203, %v4198
      %v5389 = vpack.c.b16 %v4204, %v4199
      %v5390 = vpack.c.b16 %v4210, %v4205
      %v5391 = vpack.c.b16 %v4211, %v4206
      %v5392 = vpack.c.b16 %v4212, %v4207
      %v5393 = vpack.c.b16 %v4213, %v4208
      %v5394 = vpack.c.b16 %v4214, %v4209
      %v5395 = vpack.c.b16 %v4220, %v4215
      %v5396 = vpack.c.b16 %v4221, %v4216
      %v5397 = vpack.c.b16 %v4222, %v4217
      %v5398 = vpack.c.b16 %v4223, %v4218
      %v5399 = vpack.c.b16 %v4224, %v4219
      %v5400 = vpack.c.b16 %v4230, %v4225
      %v5401 = vpack.c.b16 %v4231, %v4226
      %v5402 = vpack.c.b16 %v4232, %v4227
      %v5403 = vpack.c.b16 %v4233, %v4228
      %v5404 = vpack.c.b16 %v4234, %v4229
      %v5405 = vpack.c.b16 %v4240, %v4235
      %v5406 = vpack.c.b16 %v4241, %v4236
      %v5407 = vpack.c.b16 %v4242, %v4237
      %v5408 = vpack.c.b16 %v4243, %v4238
      %v5409 = vpack.c.b16 %v4244, %v4239
      %v5410 = vpack.c.b16 %v4250, %v4245
      %v5411 = vpack.c.b16 %v4251, %v4246
      %v5412 = vpack.c.b16 %v4252, %v4247
      %v5413 = vpack.c.b16 %v4253, %v4248
      %v5414 = vpack.c.b16 %v4254, %v4249
      %v5415 = vpack.c.b16 %v4260, %v4255
      %v5416 = vpack.c.b16 %v4261, %v4256
      %v5417 = vpack.c.b16 %v4262, %v4257
      %v5418 = vpack.c.b16 %v4263, %v4258
      %v5419 = vpack.c.b16 %v4264, %v4259
      %v5420 = vpack.c.b16 %v4270, %v4265
      %v5421 = vpack.c.b16 %v4271, %v4266
      %v5422 = vpack.c.b16 %v4272, %v4267
      %v5423 = vpack.c.b16 %v4273, %v4268
      %v5424 = vpack.c.b16 %v4274, %v4269
      %v5425 = vpack.c.b16 %v4280, %v4275
      %v5426 = vpack.c.b16 %v4281, %v4276
      %v5427 = vpack.c.b16 %v4282, %v4277
      %v5428 = vpack.c.b16 %v4283, %v4278
      %v5429 = vpack.c.b16 %v4284, %v4279
      %v5430 = vpack.c.b16 %v4290, %v4285
      %v5431 = vpack.c.b16 %v4291, %v4286
      %v5432 = vpack.c.b16 %v4292, %v4287
      %v5433 = vpack.c.b16 %v4293, %v4288
      %v5434 = vpack.c.b16 %v4294, %v4289
      %v5435 = vpack.c.b16 %v4300, %v4295
      %v5436 = vpack.c.b16 %v4301, %v4296
      %v5437 = vpack.c.b16 %v4302, %v4297
      %v5438 = vpack.c.b16 %v4303, %v4298
      %v5439 = vpack.c.b16 %v4304, %v4299
      %v5440 = vpack.c.b16 %v4310, %v4305
      %v5441 = vpack.c.b16 %v4311, %v4306
      %v5442 = vpack.c.b16 %v4312, %v4307
      %v5443 = vpack.c.b16 %v4313, %v4308
      %v5444 = vpack.c.b16 %v4314, %v4309
      %v5445 = vpack.c.b16 %v4320, %v4315
      %v5446 = vpack.c.b16 %v4321, %v4316
      %v5447 = vpack.c.b16 %v4322, %v4317
      %v5448 = vpack.c.b16 %v4323, %v4318
      %v5449 = vpack.c.b16 %v4324, %v4319
      %v5450 = vpack.c.b16 %v4330, %v4325
      %v5451 = vpack.c.b16 %v4331, %v4326
      %v5452 = vpack.c.b16 %v4332, %v4327
      %v5453 = vpack.c.b16 %v4333, %v4328
      %v5454 = vpack.c.b16 %v4334, %v4329
      %v5455 = vpack.c.b16 %v4340, %v4335
      %v5456 = vpack.c.b16 %v4341, %v4336
      %v5457 = vpack.c.b16 %v4342, %v4337
      %v5458 = vpack.c.b16 %v4343, %v4338
      %v5459 = vpack.c.b16 %v4344, %v4339
      %v5460 = vpack.c.b16 %v4350, %v4345
      %v5461 = vpack.c.b16 %v4351, %v4346
      %v5462 = vpack.c.b16 %v4352, %v4347
      %v5463 = vpack.c.b16 %v4353, %v4348
      %v5464 = vpack.c.b16 %v4354, %v4349
      %v5465 = vpack.c.b16 %v4360, %v4355
      %v5466 = vpack.c.b16 %v4361, %v4356
      %v5467 = vpack.c.b16 %v4362, %v4357
      %v5468 = vpack.c.b16 %v4363, %v4358
      %v5469 = vpack.c.b16 %v4364, %v4359
      %v5470 = vpack.c.b16 %v4370, %v4365
      %v5471 = vpack.c.b16 %v4371, %v4366
      %v5472 = vpack.c.b16 %v4372, %v4367
      %v5473 = vpack.c.b16 %v4373, %v4368
      %v5474 = vpack.c.b16 %v4374, %v4369
      %v5475 = vpack.c.b16 %v4380, %v4375
      %v5476 = vpack.c.b16 %v4381, %v4376
      %v5477 = vpack.c.b16 %v4382, %v4377
      %v5478 = vpack.c.b16 %v4383, %v4378
      %v5479 = vpack.c.b16 %v4384, %v4379
      %v5480 = vpack.c.b16 %v4390, %v4385
      %v5481 = vpack.c.b16 %v4391, %v4386
      %v5482 = vpack.c.b16 %v4392, %v4387
      %v5483 = vpack.c.b16 %v4393, %v4388
      %v5484 = vpack.c.b16 %v4394, %v4389
      %v5485 = vpack.c.b16 %v4400, %v4395
      %v5486 = vpack.c.b16 %v4401, %v4396
      %v5487 = vpack.c.b16 %v4402, %v4397
      %v5488 = vpack.c.b16 %v4403, %v4398
      %v5489 = vpack.c.b16 %v4404, %v4399
      %v5490 = vpack.c.b16 %v4410, %v4405
      %v5491 = vpack.c.b16 %v4411, %v4406
      %v5492 = vpack.c.b16 %v4412, %v4407
      %v5493 = vpack.c.b16 %v4413, %v4408
      %v5494 = vpack.c.b16 %v4414, %v4409
      %v5495 = vpack.c.b16 %v4420, %v4415
      %v5496 = vpack.c.b16 %v4421, %v4416
      %v5497 = vpack.c.b16 %v4422, %v4417
      %v5498 = vpack.c.b16 %v4423, %v4418
      %v5499 = vpack.c.b16 %v4424, %v4419
      %v5500 = vpack.c.b16 %v4430, %v4425
      %v5501 = vpack.c.b16 %v4431, %v4426
      %v5502 = vpack.c.b16 %v4432, %v4427
      %v5503 = vpack.c.b16 %v4433, %v4428
      %v5504 = vpack.c.b16 %v4434, %v4429
      %v5505 = vpack.c.b16 %v4440, %v4435
      %v5506 = vpack.c.b16 %v4441, %v4436
      %v5507 = vpack.c.b16 %v4442, %v4437
      %v5508 = vpack.c.b16 %v4443, %v4438
      %v5509 = vpack.c.b16 %v4444, %v4439
      %v5510 = vpack.c.b16 %v4450, %v4445
      %v5511 = vpack.c.b16 %v4451, %v4446
      %v5512 = vpack.c.b16 %v4452, %v4447
      %v5513 = vpack.c.b16 %v4453, %v4448
      %v5514 = vpack.c.b16 %v4454, %v4449
      %v5515 = vpack.c.b16 %v4460, %v4455
      %v5516 = vpack.c.b16 %v4461, %v4456
      %v5517 = vpack.c.b16 %v4462, %v4457
      %v5518 = vpack.c.b16 %v4463, %v4458
      %v5519 = vpack.c.b16 %v4464, %v4459
      %v5520 = vpack.c.b16 %v4470, %v4465
      %v5521 = vpack.c.b16 %v4471, %v4466
      %v5522 = vpack.c.b16 %v4472, %v4467
      %v5523 = vpack.c.b16 %v4473, %v4468
      %v5524 = vpack.c.b16 %v4474, %v4469
      %v5525 = vpack.c.b16 %v4480, %v4475
      %v5526 = vpack.c.b16 %v4481, %v4476
      %v5527 = vpack.c.b16 %v4482, %v4477
      %v5528 = vpack.c.b16 %v4483, %v4478
      %v5529 = vpack.c.b16 %v4484, %v4479
      %v5530 = vpack.c.b16 %v4490, %v4485
      %v5531 = vpack.c.b16 %v4491, %v4486
      %v5532 = vpack.c.b16 %v4492, %v4487
      %v5533 = vpack.c.b16 %v4493, %v4488
      %v5534 = vpack.c.b16 %v4494, %v4489
      %v5535 = vpack.c.b16 %v4500, %v4495
      %v5536 = vpack.c.b16 %v4501, %v4496
      %v5537 = vpack.c.b16 %v4502, %v4497
      %v5538 = vpack.c.b16 %v4503, %v4498
      %v5539 = vpack.c.b16 %v4504, %v4499
      %v5540 = vpack.c.b16 %v4510, %v4505
      %v5541 = vpack.c.b16 %v4511, %v4506
      %v5542 = vpack.c.b16 %v4512, %v4507
      %v5543 = vpack.c.b16 %v4513, %v4508
      %v5544 = vpack.c.b16 %v4514, %v4509
      %v5545 = vpack.c.b16 %v4520, %v4515
      %v5546 = vpack.c.b16 %v4521, %v4516
      %v5547 = vpack.c.b16 %v4522, %v4517
      %v5548 = vpack.c.b16 %v4523, %v4518
      %v5549 = vpack.c.b16 %v4524, %v4519
      %v5550 = vpack.c.b16 %v4530, %v4525
      %v5551 = vpack.c.b16 %v4531, %v4526
      %v5552 = vpack.c.b16 %v4532, %v4527
      %v5553 = vpack.c.b16 %v4533, %v4528
      %v5554 = vpack.c.b16 %v4534, %v4529
      %v5555 = vpack.c.b16 %v4540, %v4535
      %v5556 = vpack.c.b16 %v4541, %v4536
      %v5557 = vpack.c.b16 %v4542, %v4537
      %v5558 = vpack.c.b16 %v4543, %v4538
      %v5559 = vpack.c.b16 %v4544, %v4539
      %v5560 = vpack.c.b16 %v4550, %v4545
      %v5561 = vpack.c.b16 %v4551, %v4546
      %v5562 = vpack.c.b16 %v4552, %v4547
      %v5563 = vpack.c.b16 %v4553, %v4548
      %v5564 = vpack.c.b16 %v4554, %v4549
      %v5565 = vpack.c.b16 %v4560, %v4555
      %v5566 = vpack.c.b16 %v4561, %v4556
      %v5567 = vpack.c.b16 %v4562, %v4557
      %v5568 = vpack.c.b16 %v4563, %v4558
      %v5569 = vpack.c.b16 %v4564, %v4559
      %v5570 = vpack.c.b16 %v4570, %v4565
      %v5571 = vpack.c.b16 %v4571, %v4566
      %v5572 = vpack.c.b16 %v4572, %v4567
      %v5573 = vpack.c.b16 %v4573, %v4568
      %v5574 = vpack.c.b16 %v4574, %v4569
      %v5575 = vpack.c.b16 %v4580, %v4575
      %v5576 = vpack.c.b16 %v4581, %v4576
      %v5577 = vpack.c.b16 %v4582, %v4577
      %v5578 = vpack.c.b16 %v4583, %v4578
      %v5579 = vpack.c.b16 %v4584, %v4579
      %v5580 = vpack.c.b16 %v4590, %v4585
      %v5581 = vpack.c.b16 %v4591, %v4586
      %v5582 = vpack.c.b16 %v4592, %v4587
      %v5583 = vpack.c.b16 %v4593, %v4588
      %v5584 = vpack.c.b16 %v4594, %v4589
      %v5585 = vpack.c.b16 %v4600, %v4595
      %v5586 = vpack.c.b16 %v4601, %v4596
      %v5587 = vpack.c.b16 %v4602, %v4597
      %v5588 = vpack.c.b16 %v4603, %v4598
      %v5589 = vpack.c.b16 %v4604, %v4599
      %v5590 = vpack.c.b16 %v4610, %v4605
      %v5591 = vpack.c.b16 %v4611, %v4606
      %v5592 = vpack.c.b16 %v4612, %v4607
      %v5593 = vpack.c.b16 %v4613, %v4608
      %v5594 = vpack.c.b16 %v4614, %v4609
      %v5595 = vpack.c.b16 %v4620, %v4615
      %v5596 = vpack.c.b16 %v4621, %v4616
      %v5597 = vpack.c.b16 %v4622, %v4617
      %v5598 = vpack.c.b16 %v4623, %v4618
      %v5599 = vpack.c.b16 %v4624, %v4619
      %v5600 = vpack.c.b16 %v4630, %v4625
      %v5601 = vpack.c.b16 %v4631, %v4626
      %v5602 = vpack.c.b16 %v4632, %v4627
      %v5603 = vpack.c.b16 %v4633, %v4628
      %v5604 = vpack.c.b16 %v4634, %v4629
      %v5605 = vpack.c.b16 %v4640, %v4635
      %v5606 = vpack.c.b16 %v4641, %v4636
      %v5607 = vpack.c.b16 %v4642, %v4637
      %v5608 = vpack.c.b16 %v4643, %v4638
      %v5609 = vpack.c.b16 %v4644, %v4639
      %v5610 = vpack.c.b16 %v4650, %v4645
      %v5611 = vpack.c.b16 %v4651, %v4646
      %v5612 = vpack.c.b16 %v4652, %v4647
      %v5613 = vpack.c.b16 %v4653, %v4648
      %v5614 = vpack.c.b16 %v4654, %v4649
      %v5615 = vpack.c.b16 %v4660, %v4655
      %v5616 = vpack.c.b16 %v4661, %v4656
      %v5617 = vpack.c.b16 %v4662, %v4657
      %v5618 = vpack.c.b16 %v4663, %v4658
      %v5619 = vpack.c.b16 %v4664, %v4659
      %v5620 = vpack.c.b16 %v4670, %v4665
      %v5621 = vpack.c.b16 %v4671, %v4666
      %v5622 = vpack.c.b16 %v4672, %v4667
      %v5623 = vpack.c.b16 %v4673, %v4668
      %v5624 = vpack.c.b16 %v4674, %v4669
      %v5625 = vpack.c.b16 %v4680, %v4675
      %v5626 = vpack.c.b16 %v4681, %v4676
      %v5627 = vpack.c.b16 %v4682, %v4677
      %v5628 = vpack.c.b16 %v4683, %v4678
      %v5629 = vpack.c.b16 %v4684, %v4679
      %v5630 = vpack.c.b16 %v4690, %v4685
      %v5631 = vpack.c.b16 %v4691, %v4686
      %v5632 = vpack.c.b16 %v4692, %v4687
      %v5633 = vpack.c.b16 %v4693, %v4688
      %v5634 = vpack.c.b16 %v4694, %v4689
      %v5635 = vpack.c.b16 %v4700, %v4695
      %v5636 = vpack.c.b16 %v4701, %v4696
      %v5637 = vpack.c.b16 %v4702, %v4697
      %v5638 = vpack.c.b16 %v4703, %v4698
      %v5639 = vpack.c.b16 %v4704, %v4699
      %v5640 = vpack.c.b16 %v4710, %v4705
      %v5641 = vpack.c.b16 %v4711, %v4706
      %v5642 = vpack.c.b16 %v4712, %v4707
      %v5643 = vpack.c.b16 %v4713, %v4708
      %v5644 = vpack.c.b16 %v4714, %v4709
      %v5645 = vpack.c.b16 %v4720, %v4715
      %v5646 = vpack.c.b16 %v4721, %v4716
      %v5647 = vpack.c.b16 %v4722, %v4717
      %v5648 = vpack.c.b16 %v4723, %v4718
      %v5649 = vpack.c.b16 %v4724, %v4719
      %v5650 = vpack.c.b16 %v4730, %v4725
      %v5651 = vpack.c.b16 %v4731, %v4726
      %v5652 = vpack.c.b16 %v4732, %v4727
      %v5653 = vpack.c.b16 %v4733, %v4728
      %v5654 = vpack.c.b16 %v4734, %v4729
      %v5655 = vpack.c.b16 %v4740, %v4735
      %v5656 = vpack.c.b16 %v4741, %v4736
      %v5657 = vpack.c.b16 %v4742, %v4737
      %v5658 = vpack.c.b16 %v4743, %v4738
      %v5659 = vpack.c.b16 %v4744, %v4739
      %v5660 = vpack.c.b16 %v4750, %v4745
      %v5661 = vpack.c.b16 %v4751, %v4746
      %v5662 = vpack.c.b16 %v4752, %v4747
      %v5663 = vpack.c.b16 %v4753, %v4748
      %v5664 = vpack.c.b16 %v4754, %v4749
      %v5665 = vpack.c.b16 %v4760, %v4755
      %v5666 = vpack.c.b16 %v4761, %v4756
      %v5667 = vpack.c.b16 %v4762, %v4757
      %v5668 = vpack.c.b16 %v4763, %v4758
      %v5669 = vpack.c.b16 %v4764, %v4759
      %v5670 = vpack.c.b16 %v4770, %v4765
      %v5671 = vpack.c.b16 %v4771, %v4766
      %v5672 = vpack.c.b16 %v4772, %v4767
      %v5673 = vpack.c.b16 %v4773, %v4768
      %v5674 = vpack.c.b16 %v4774, %v4769
      %v5675 = vpack.c.b16 %v4780, %v4775
      %v5676 = vpack.c.b16 %v4781, %v4776
      %v5677 = vpack.c.b16 %v4782, %v4777
      %v5678 = vpack.c.b16 %v4783, %v4778
      %v5679 = vpack.c.b16 %v4784, %v4779
      %v5680 = vpack.c.b16 %v4790, %v4785
      %v5681 = vpack.c.b16 %v4791, %v4786
      %v5682 = vpack.c.b16 %v4792, %v4787
      %v5683 = vpack.c.b16 %v4793, %v4788
      %v5684 = vpack.c.b16 %v4794, %v4789
      %v5685 = vpack.c.b16 %v4800, %v4795
      %v5686 = vpack.c.b16 %v4801, %v4796
      %v5687 = vpack.c.b16 %v4802, %v4797
      %v5688 = vpack.c.b16 %v4803, %v4798
      %v5689 = vpack.c.b16 %v4804, %v4799
      %v5690 = vpack.c.b16 %v4810, %v4805
      %v5691 = vpack.c.b16 %v4811, %v4806
      %v5692 = vpack.c.b16 %v4812, %v4807
      %v5693 = vpack.c.b16 %v4813, %v4808
      %v5694 = vpack.c.b16 %v4814, %v4809
      %v5695 = vpack.c.b16 %v4820, %v4815
      %v5696 = vpack.c.b16 %v4821, %v4816
      %v5697 = vpack.c.b16 %v4822, %v4817
      %v5698 = vpack.c.b16 %v4823, %v4818
      %v5699 = vpack.c.b16 %v4824, %v4819
      %v5700 = vpack.c.b16 %v4830, %v4825
      %v5701 = vpack.c.b16 %v4831, %v4826
      %v5702 = vpack.c.b16 %v4832, %v4827
      %v5703 = vpack.c.b16 %v4833, %v4828
      %v5704 = vpack.c.b16 %v4834, %v4829
      %v5705 = vpack.c.b16 %v4840, %v4835
      %v5706 = vpack.c.b16 %v4841, %v4836
      %v5707 = vpack.c.b16 %v4842, %v4837
      %v5708 = vpack.c.b16 %v4843, %v4838
      %v5709 = vpack.c.b16 %v4844, %v4839
      %v5710 = vpack.c.b16 %v4850, %v4845
      %v5711 = vpack.c.b16 %v4851, %v4846
      %v5712 = vpack.c.b16 %v4852, %v4847
      %v5713 = vpack.c.b16 %v4853, %v4848
      %v5714 = vpack.c.b16 %v4854, %v4849
      %v5715 = vpack.c.b16 %v4860, %v4855
      %v5716 = vpack.c.b16 %v4861, %v4856
      %v5717 = vpack.c.b16 %v4862, %v4857
      %v5718 = vpack.c.b16 %v4863, %v4858
      %v5719 = vpack.c.b16 %v4864, %v4859
      %v5720 = vpack.c.b16 %v4870, %v4865
      %v5721 = vpack.c.b16 %v4871, %v4866
      %v5722 = vpack.c.b16 %v4872, %v4867
      %v5723 = vpack.c.b16 %v4873, %v4868
      %v5724 = vpack.c.b16 %v4874, %v4869
      %v5725 = vpack.c.b16 %v4880, %v4875
      %v5726 = vpack.c.b16 %v4881, %v4876
      %v5727 = vpack.c.b16 %v4882, %v4877
      %v5728 = vpack.c.b16 %v4883, %v4878
      %v5729 = vpack.c.b16 %v4884, %v4879
      %v5730 = vpack.c.b16 %v4890, %v4885
      %v5731 = vpack.c.b16 %v4891, %v4886
      %v5732 = vpack.c.b16 %v4892, %v4887
      %v5733 = vpack.c.b16 %v4893, %v4888
      %v5734 = vpack.c.b16 %v4894, %v4889
      %v5735 = vpack.c.b16 %v4900, %v4895
      %v5736 = vpack.c.b16 %v4901, %v4896
      %v5737 = vpack.c.b16 %v4902, %v4897
      %v5738 = vpack.c.b16 %v4903, %v4898
      %v5739 = vpack.c.b16 %v4904, %v4899
      %v5740 = vpack.c.b16 %v4910, %v4905
      %v5741 = vpack.c.b16 %v4911, %v4906
      %v5742 = vpack.c.b16 %v4912, %v4907
      %v5743 = vpack.c.b16 %v4913, %v4908
      %v5744 = vpack.c.b16 %v4914, %v4909
      %v5745 = vpack.c.b16 %v4920, %v4915
      %v5746 = vpack.c.b16 %v4921, %v4916
      %v5747 = vpack.c.b16 %v4922, %v4917
      %v5748 = vpack.c.b16 %v4923, %v4918
      %v5749 = vpack.c.b16 %v4924, %v4919
      %v5750 = vpack.c.b16 %v4930, %v4925
      %v5751 = vpack.c.b16 %v4931, %v4926
      %v5752 = vpack.c.b16 %v4932, %v4927
      %v5753 = vpack.c.b16 %v4933, %v4928
      %v5754 = vpack.c.b16 %v4934, %v4929
      %v5755 = vpack.c.b16 %v4940, %v4935
      %v5756 = vpack.c.b16 %v4941, %v4936
      %v5757 = vpack.c.b16 %v4942, %v4937
      %v5758 = vpack.c.b16 %v4943, %v4938
      %v5759 = vpack.c.b16 %v4944, %v4939
      %v5760 = vpack.c.b16 %v4950, %v4945
      %v5761 = vpack.c.b16 %v4951, %v4946
      %v5762 = vpack.c.b16 %v4952, %v4947
      %v5763 = vpack.c.b16 %v4953, %v4948
      %v5764 = vpack.c.b16 %v4954, %v4949
      %v5765 = vpack.c.b16 %v4960, %v4955
      %v5766 = vpack.c.b16 %v4961, %v4956
      %v5767 = vpack.c.b16 %v4962, %v4957
      %v5768 = vpack.c.b16 %v4963, %v4958
      %v5769 = vpack.c.b16 %v4964, %v4959
      %v5770 = vpack.c.b16 %v4970, %v4965
      %v5771 = vpack.c.b16 %v4971, %v4966
      %v5772 = vpack.c.b16 %v4972, %v4967
      %v5773 = vpack.c.b16 %v4973, %v4968
      %v5774 = vpack.c.b16 %v4974, %v4969
      %v5775 = vpack.c.b16 %v4980, %v4975
      %v5776 = vpack.c.b16 %v4981, %v4976
      %v5777 = vpack.c.b16 %v4982, %v4977
      %v5778 = vpack.c.b16 %v4983, %v4978
      %v5779 = vpack.c.b16 %v4984, %v4979
      %v5780 = vpack.c.b16 %v4990, %v4985
      %v5781 = vpack.c.b16 %v4991, %v4986
      %v5782 = vpack.c.b16 %v4992, %v4987
      %v5783 = vpack.c.b16 %v4993, %v4988
      %v5784 = vpack.c.b16 %v4994, %v4989
      %v5785 = vpack.c.b16 %v5000, %v4995
      %v5786 = vpack.c.b16 %v5001, %v4996
      %v5787 = vpack.c.b16 %v5002, %v4997
      %v5788 = vpack.c.b16 %v5003, %v4998
      %v5789 = vpack.c.b16 %v5004, %v4999
      %v5790 = vpack.c.b16 %v5010, %v5005
      %v5791 = vpack.c.b16 %v5011, %v5006
      %v5792 = vpack.c.b16 %v5012, %v5007
      %v5793 = vpack.c.b16 %v5013, %v5008
      %v5794 = vpack.c.b16 %v5014, %v5009
      %v5795 = vpack.c.b16 %v5020, %v5015
      %v5796 = vpack.c.b16 %v5021, %v5016
      %v5797 = vpack.c.b16 %v5022, %v5017
      %v5798 = vpack.c.b16 %v5023, %v5018
      %v5799 = vpack.c.b16 %v5024, %v5019
      %v5800 = vpack.c.b16 %v5030, %v5025
      %v5801 = vpack.c.b16 %v5031, %v5026
      %v5802 = vpack.c.b16 %v5032, %v5027
      %v5803 = vpack.c.b16 %v5033, %v5028
      %v5804 = vpack.c.b16 %v5034, %v5029
      %v5805 = vpack.c.b16 %v5040, %v5035
      %v5806 = vpack.c.b16 %v5041, %v5036
      %v5807 = vpack.c.b16 %v5042, %v5037
      %v5808 = vpack.c.b16 %v5043, %v5038
      %v5809 = vpack.c.b16 %v5044, %v5039
      %v5810 = vpack.c.b16 %v5050, %v5045
      %v5811 = vpack.c.b16 %v5051, %v5046
      %v5812 = vpack.c.b16 %v5052, %v5047
      %v5813 = vpack.c.b16 %v5053, %v5048
      %v5814 = vpack.c.b16 %v5054, %v5049
      %v5815 = vpack.c.b16 %v5060, %v5055
      %v5816 = vpack.c.b16 %v5061, %v5056
      %v5817 = vpack.c.b16 %v5062, %v5057
      %v5818 = vpack.c.b16 %v5063, %v5058
      %v5819 = vpack.c.b16 %v5064, %v5059
      %v5820 = vpack.c.b16 %v5070, %v5065
      %v5821 = vpack.c.b16 %v5071, %v5066
      %v5822 = vpack.c.b16 %v5072, %v5067
      %v5823 = vpack.c.b16 %v5073, %v5068
      %v5824 = vpack.c.b16 %v5074, %v5069
      %v5825 = vpack.c.b16 %v5080, %v5075
      %v5826 = vpack.c.b16 %v5081, %v5076
      %v5827 = vpack.c.b16 %v5082, %v5077
      %v5828 = vpack.c.b16 %v5083, %v5078
      %v5829 = vpack.c.b16 %v5084, %v5079
      %v5830 = vpack.c.b16 %v5090, %v5085
      %v5831 = vpack.c.b16 %v5091, %v5086
      %v5832 = vpack.c.b16 %v5092, %v5087
      %v5833 = vpack.c.b16 %v5093, %v5088
      %v5834 = vpack.c.b16 %v5094, %v5089
      %v5835 = vpack.c.b16 %v5100, %v5095
      %v5836 = vpack.c.b16 %v5101, %v5096
      %v5837 = vpack.c.b16 %v5102, %v5097
      %v5838 = vpack.c.b16 %v5103, %v5098
      %v5839 = vpack.c.b16 %v5104, %v5099
      %v5840 = vpack.c.b16 %v5110, %v5105
      %v5841 = vpack.c.b16 %v5111, %v5106
      %v5842 = vpack.c.b16 %v5112, %v5107
      %v5843 = vpack.c.b16 %v5113, %v5108
      %v5844 = vpack.c.b16 %v5114, %v5109
      %v5845 = vpack.c.b16 %v5120, %v5115
      %v5846 = vpack.c.b16 %v5121, %v5116
      %v5847 = vpack.c.b16 %v5122, %v5117
      %v5848 = vpack.c.b16 %v5123, %v5118
      %v5849 = vpack.c.b16 %v5124, %v5119
      %v5850 = vpack.c.b16 %v5130, %v5125
      %v5851 = vpack.c.b16 %v5131, %v5126
      %v5852 = vpack.c.b16 %v5132, %v5127
      %v5853 = vpack.c.b16 %v5133, %v5128
      %v5854 = vpack.c.b16 %v5134, %v5129
      %v5855 = vpack.c.b16 %v5140, %v5135
      %v5856 = vpack.c.b16 %v5141, %v5136
      %v5857 = vpack.c.b16 %v5142, %v5137
      %v5858 = vpack.c.b16 %v5143, %v5138
      %v5859 = vpack.c.b16 %v5144, %v5139
      %v5860 = vpack.c.b16 %v5150, %v5145
      %v5861 = vpack.c.b16 %v5151, %v5146
      %v5862 = vpack.c.b16 %v5152, %v5147
      %v5863 = vpack.c.b16 %v5153, %v5148
      %v5864 = vpack.c.b16 %v5154, %v5149
      %v5865 = vpack.c.b16 %v5160, %v5155
      %v5866 = vpack.c.b16 %v5161, %v5156
      %v5867 = vpack.c.b16 %v5162, %v5157
      %v5868 = vpack.c.b16 %v5163, %v5158
      %v5869 = vpack.c.b16 %v5164, %v5159
      %v5870 = vpack.c.b16 %v5170, %v5165
      %v5871 = vpack.c.b16 %v5171, %v5166
      %v5872 = vpack.c.b16 %v5172, %v5167
      %v5873 = vpack.c.b16 %v5173, %v5168
      %v5874 = vpack.c.b16 %v5174, %v5169
      %v5875 = vpack.c.b16 %v5180, %v5175
      %v5876 = vpack.c.b16 %v5181, %v5176
      %v5877 = vpack.c.b16 %v5182, %v5177
      %v5878 = vpack.c.b16 %v5183, %v5178
      %v5879 = vpack.c.b16 %v5184, %v5179
      %v5880 = vpack.c.b16 %v5190, %v5185
      %v5881 = vpack.c.b16 %v5191, %v5186
      %v5882 = vpack.c.b16 %v5192, %v5187
      %v5883 = vpack.c.b16 %v5193, %v5188
      %v5884 = vpack.c.b16 %v5194, %v5189
      %v5885 = vpack.c.b16 %v5200, %v5195
      %v5886 = vpack.c.b16 %v5201, %v5196
      %v5887 = vpack.c.b16 %v5202, %v5197
      %v5888 = vpack.c.b16 %v5203, %v5198
      %v5889 = vpack.c.b16 %v5204, %v5199
      %v5890 = vpack.c.b16 %v5210, %v5205
      %v5891 = vpack.c.b16 %v5211, %v5206
      %v5892 = vpack.c.b16 %v5212, %v5207
      %v5893 = vpack.c.b16 %v5213, %v5208
      %v5894 = vpack.c.b16 %v5214, %v5209
      %v5895 = vpack.c.b16 %v5220, %v5215
      %v5896 = vpack.c.b16 %v5221, %v5216
      %v5897 = vpack.c.b16 %v5222, %v5217
      %v5898 = vpack.c.b16 %v5223, %v5218
      %v5899 = vpack.c.b16 %v5224, %v5219
      %v5900 = vpack.c.b16 %v5230, %v5225
      %v5901 = vpack.c.b16 %v5231, %v5226
      %v5902 = vpack.c.b16 %v5232, %v5227
      %v5903 = vpack.c.b16 %v5233, %v5228
      %v5904 = vpack.c.b16 %v5234, %v5229
      %v5905 = vpack.c.b16 %v5240, %v5235
      %v5906 = vpack.c.b16 %v5241, %v5236
      %v5907 = vpack.c.b16 %v5242, %v5237
      %v5908 = vpack.c.b16 %v5243, %v5238
      %v5909 = vpack.c.b16 %v5244, %v5239
      %v5910 = vpack.c.b16 %v5250, %v5245
      %v5911 = vpack.c.b16 %v5251, %v5246
      %v5912 = vpack.c.b16 %v5252, %v5247
      %v5913 = vpack.c.b16 %v5253, %v5248
      %v5914 = vpack.c.b16 %v5254, %v5249
      %v5915 = vpack.c.b16 %v5260, %v5255
      %v5916 = vpack.c.b16 %v5261, %v5256
      %v5917 = vpack.c.b16 %v5262, %v5257
      %v5918 = vpack.c.b16 %v5263, %v5258
      %v5919 = vpack.c.b16 %v5264, %v5259
      %v5920 = vpack.c.b16 %v5270, %v5265
      %v5921 = vpack.c.b16 %v5271, %v5266
      %v5922 = vpack.c.b16 %v5272, %v5267
      %v5923 = vpack.c.b16 %v5273, %v5268
      %v5924 = vpack.c.b16 %v5274, %v5269
      %v5925 = vpack.c.b16 %v5280, %v5275
      %v5926 = vpack.c.b16 %v5281, %v5276
      %v5927 = vpack.c.b16 %v5282, %v5277
      %v5928 = vpack.c.b16 %v5283, %v5278
      %v5929 = vpack.c.b16 %v5284, %v5279
      %v5930 = vpack.c.b16 %v5290, %v5285
      %v5931 = vpack.c.b16 %v5291, %v5286
      %v5932 = vpack.c.b16 %v5292, %v5287
      %v5933 = vpack.c.b16 %v5293, %v5288
      %v5934 = vpack.c.b16 %v5294, %v5289
      %v5935 = vpack.c.b16 %v5300, %v5295
      %v5936 = vpack.c.b16 %v5301, %v5296
      %v5937 = vpack.c.b16 %v5302, %v5297
      %v5938 = vpack.c.b16 %v5303, %v5298
      %v5939 = vpack.c.b16 %v5304, %v5299
      %v5940 = vpack.c.b16 %v5310, %v5305
      %v5941 = vpack.c.b16 %v5311, %v5306
      %v5942 = vpack.c.b16 %v5312, %v5307
      %v5943 = vpack.c.b16 %v5313, %v5308
      %v5944 = vpack.c.b16 %v5314, %v5309
      %v5945 = vpack.c.b16 %v5320, %v5315
      %v5946 = vpack.c.b16 %v5321, %v5316
      %v5947 = vpack.c.b16 %v5322, %v5317
      %v5948 = vpack.c.b16 %v5323, %v5318
      %v5949 = vpack.c.b16 %v5324, %v5319
      %v5950 = vpack.c.b16 %v5330, %v5325
      %v5951 = vpack.c.b16 %v5331, %v5326
      %v5952 = vpack.c.b16 %v5332, %v5327
      %v5953 = vpack.c.b16 %v5333, %v5328
      %v5954 = vpack.c.b16 %v5334, %v5329
      %v5955 = vpack.c.b16 %v5340, %v5335
      %v5956 = vpack.c.b16 %v5341, %v5336
      %v5957 = vpack.c.b16 %v5342, %v5337
      %v5958 = vpack.c.b16 %v5343, %v5338
      %v5959 = vpack.c.b16 %v5344, %v5339
      %v5960 = vpack.c.b16 %v5350, %v5345
      %v5961 = vpack.c.b16 %v5351, %v5346
      %v5962 = vpack.c.b16 %v5352, %v5347
      %v5963 = vpack.c.b16 %v5353, %v5348
      %v5964 = vpack.c.b16 %v5354, %v5349
      %v5965 = vpack.c.b16 %v5360, %v5355
      %v5966 = vpack.c.b16 %v5361, %v5356
      %v5967 = vpack.c.b16 %v5362, %v5357
      %v5968 = vpack.c.b16 %v5363, %v5358
      %v5969 = vpack.c.b16 %v5364, %v5359
      %v5970 = vpack.c.b16 %v5370, %v5365
      %v5971 = vpack.c.b16 %v5371, %v5366
      %v5972 = vpack.c.b16 %v5372, %v5367
      %v5973 = vpack.c.b16 %v5373, %v5368
      %v5974 = vpack.c.b16 %v5374, %v5369
      %6575 = vmatprep.subr.bf16.mxu0 %v5376
      %6576 = vmatpush1.bf16.msra.mxu0 %v5375
      %6577 = vmatprep.subr.bf16.mxu0 %v5381
      %6578 = vmatpush1.bf16.msra.mxu0 %v5380
      %6579 = vmatprep.subr.bf16.mxu0 %v5386
      %6580 = vmatpush1.bf16.msra.mxu0 %v5385
      %6581 = vmatprep.subr.bf16.mxu0 %v5391
      %6582 = vmatpush1.bf16.msra.mxu0 %v5390
      %6583 = vmatprep.subr.bf16.mxu0 %v5396
      %6584 = vmatpush1.bf16.msra.mxu0 %v5395
      %6585 = vmatprep.subr.bf16.mxu0 %v5401
      %6586 = vmatpush1.bf16.msra.mxu0 %v5400
      %6587 = vmatprep.subr.bf16.mxu0 %v5406
      %6588 = vmatpush1.bf16.msra.mxu0 %v5405
      %6589 = vmatprep.subr.bf16.mxu0 %v5411
      %6590 = vmatpush1.bf16.msra.mxu0 %v5410
      %6591 = vmatprep.subr.bf16.mxu0 %v5416
      %6592 = vmatpush1.bf16.msra.mxu0 %v5415
      %6593 = vmatprep.subr.bf16.mxu0 %v5421
      %6594 = vmatpush1.bf16.msra.mxu0 %v5420
      %6595 = vmatprep.subr.bf16.mxu0 %v5426
      %6596 = vmatpush1.bf16.msra.mxu0 %v5425
      %6597 = vmatprep.subr.bf16.mxu0 %v5431
      %6598 = vmatpush1.bf16.msra.mxu0 %v5430
      %6599 = vmatprep.subr.bf16.mxu0 %v5436
      %6600 = vmatpush1.bf16.msra.mxu0 %v5435
      %6601 = vmatprep.subr.bf16.mxu0 %v5441
      %6602 = vmatpush1.bf16.msra.mxu0 %v5440
      %6603 = vmatprep.subr.bf16.mxu0 %v5446
      %6604 = vmatpush1.bf16.msra.mxu0 %v5445
      %6605 = vmatprep.subr.bf16.mxu0 %v5451
      %6606 = vmatpush1.bf16.msra.mxu0 %v5450
      %6607 = vmatprep.mubr.bf16.mxu0 %v2676
      %6608 = vmatmul.mubr.bf16.gmra.mrb[0].mxu0 %v2675
      %v6609 = vpop.f32.mrb[0].mxu0
      %v6610 = vadd.f32 0.0, %v6609
      %v6611 = vpop.f32.mrb[0].mxu0
      %v6612 = vadd.f32 0.0, %v6611
      %v6613 = vpop.f32.mrb[0].mxu0
      %v6614 = vadd.f32 0.0, %v6613
      %v6615 = vpop.f32.mrb[0].mxu0
      %v6616 = vadd.f32 0.0, %v6615
      %6617 = vmatprep.mubr.bf16.mxu0 %v2691
      %6618 = vmatmul.mubr.bf16.gmra.mrb[0].mxu0 %v2690
      %v6619 = vpop.f32.mrb[0].mxu0
      %v6620 = vadd.f32 0.0, %v6619
      %v6621 = vpop.f32.mrb[0].mxu0
      %v6622 = vadd.f32 0.0, %v6621
      %v6623 = vpop.f32.mrb[0].mxu0
      %v6624 = vadd.f32 0.0, %v6623
      %v6625 = vpop.f32.mrb[0].mxu0
      %v6626 = vadd.f32 0.0, %v6625
      %6627 = vmatprep.mubr.bf16.mxu0 %v2706
      %6628 = vmatmul.mubr.bf16.gmra.mrb[0].mxu0 %v2705
      %v6629 = vpop.f32.mrb[0].mxu0
      %v6630 = vadd.f32 0.0, %v6629
      %v6631 = vpop.f32.mrb[0].mxu0
      %v6632 = vadd.f32 0.0, %v6631
      %v6633 = vpop.f32.mrb[0].mxu0
      %v6634 = vadd.f32 0.0, %v6633
      %v6635 = vpop.f32.mrb[0].mxu0
      %v6636 = vadd.f32 0.0, %v6635
      %6637 = vmatprep.mubr.bf16.mxu0 %v2721
      %6638 = vmatmul.mubr.bf16.gmra.mrb[0].mxu0 %v2720
      %v6639 = vpop.f32.mrb[0].mxu0
      %v6640 = vadd.f32 0.0, %v6639
      %v6641 = vpop.f32.mrb[0].mxu0
      %v6642 = vadd.f32 0.0, %v6641
      %v6643 = vpop.f32.mrb[0].mxu0
      %v6644 = vpop.f32.mrb[0].mxu0
      %6645 = vdwg.mxu0
      %6646 = vmatprep.subr.bf16.mxu0 %v5456
      %6647 = vmatpush1.bf16.msra.mxu0 %v5455
      %6648 = vmatprep.subr.bf16.mxu0 %v5461
      %6649 = vmatpush1.bf16.msra.mxu0 %v5460
      %6650 = vmatprep.subr.bf16.mxu0 %v5466
      %6651 = vmatpush1.bf16.msra.mxu0 %v5465
      %6652 = vmatprep.subr.bf16.mxu0 %v5471
      %6653 = vmatpush1.bf16.msra.mxu0 %v5470
      %6654 = vmatprep.subr.bf16.mxu0 %v5476
      %6655 = vmatpush1.bf16.msra.mxu0 %v5475
      %6656 = vmatprep.subr.bf16.mxu0 %v5481
      %6657 = vmatpush1.bf16.msra.mxu0 %v5480
      %6658 = vmatprep.subr.bf16.mxu0 %v5486
      %6659 = vmatpush1.bf16.msra.mxu0 %v5485
      %6660 = vmatprep.subr.bf16.mxu0 %v5491
      %6661 = vmatpush1.bf16.msra.mxu0 %v5490
      %6662 = vmatprep.subr.bf16.mxu0 %v5496
      %6663 = vmatpush1.bf16.msra.mxu0 %v5495
      %6664 = vmatprep.subr.bf16.mxu0 %v5501
      %6665 = vmatpush1.bf16.msra.mxu0 %v5500
      %6666 = vmatprep.subr.bf16.mxu0 %v5506
      %6667 = vmatpush1.bf16.msra.mxu0 %v5505
      %6668 = vmatprep.subr.bf16.mxu0 %v5511
      %6669 = vmatpush1.bf16.msra.mxu0 %v5510
      %6670 = vmatprep.subr.bf16.mxu0 %v5516
      %6671 = vmatpush1.bf16.msra.mxu0 %v5515
      %6672 = vmatprep.subr.bf16.mxu0 %v5521
      %6673 = vmatpush1.bf16.msra.mxu0 %v5520
      %6674 = vmatprep.subr.bf16.mxu0 %v5526
      %6675 = vmatpush1.bf16.msra.mxu0 %v5525
      %6676 = vmatprep.subr.bf16.mxu0 %v5531
      %6677 = vmatpush1.bf16.msra.mxu0 %v5530
      %6678 = vmatprep.mubr.bf16.mxu0 %v2678
      %6679 = vmatmul.mubr.bf16.gmra.mrb[0].mxu0 %v2677
      %v6680 = vpop.f32.mrb[0].mxu0
      %v6681 = vadd.f32 %v6610, %v6680
      %v6682 = vpop.f32.mrb[0].mxu0
      %v6683 = vadd.f32 %v6612, %v6682
      %v6684 = vpop.f32.mrb[0].mxu0
      %v6685 = vadd.f32 %v6614, %v6684
      %v6686 = vpop.f32.mrb[0].mxu0
      %v6687 = vadd.f32 %v6616, %v6686
      %6688 = vmatprep.mubr.bf16.mxu0 %v2693
      %6689 = vmatmul.mubr.bf16.gmra.mrb[0].mxu0 %v2692
      %v6690 = vpop.f32.mrb[0].mxu0
      %v6691 = vadd.f32 %v6620, %v6690
      %v6692 = vpop.f32.mrb[0].mxu0
      %v6693 = vadd.f32 %v6622, %v6692
      %v6694 = vpop.f32.mrb[0].mxu0
      %v6695 = vadd.f32 %v6624, %v6694
      %v6696 = vpop.f32.mrb[0].mxu0
      %v6697 = vadd.f32 %v6626, %v6696
      %6698 = vmatprep.mubr.bf16.mxu0 %v2708
      %6699 = vmatmul.mubr.bf16.gmra.mrb[0].mxu0 %v2707
      %v6700 = vpop.f32.mrb[0].mxu0
      %v6701 = vadd.f32 %v6630, %v6700
      %v6702 = vpop.f32.mrb[0].mxu0
      %v6703 = vadd.f32 %v6632, %v6702
      %v6704 = vpop.f32.mrb[0].mxu0
      %v6705 = vadd.f32 %v6634, %v6704
      %v6706 = vpop.f32.mrb[0].mxu0
      %v6707 = vadd.f32 %v6636, %v6706
      %6708 = vmatprep.mubr.bf16.mxu0 %v2723
      %6709 = vmatmul.mubr.bf16.gmra.mrb[0].mxu0 %v2722
      %v6710 = vpop.f32.mrb[0].mxu0
      %v6711 = vadd.f32 %v6640, %v6710
      %v6712 = vpop.f32.mrb[0].mxu0
      %v6713 = vadd.f32 %v6642, %v6712
      %v6714 = vpop.f32.mrb[0].mxu0
      %v6715 = vpop.f32.mrb[0].mxu0
      %6716 = vdwg.mxu0
      %6717 = vmatprep.subr.bf16.mxu0 %v5536
      %6718 = vmatpush1.bf16.msra.mxu0 %v5535
      %6719 = vmatprep.subr.bf16.mxu0 %v5541
      %6720 = vmatpush1.bf16.msra.mxu0 %v5540
      %6721 = vmatprep.subr.bf16.mxu0 %v5546
      %6722 = vmatpush1.bf16.msra.mxu0 %v5545
      %6723 = vmatprep.subr.bf16.mxu0 %v5551
      %6724 = vmatpush1.bf16.msra.mxu0 %v5550
      %6725 = vmatprep.subr.bf16.mxu0 %v5556
      %6726 = vmatpush1.bf16.msra.mxu0 %v5555
      %6727 = vmatprep.subr.bf16.mxu0 %v5561
      %6728 = vmatpush1.bf16.msra.mxu0 %v5560
      %6729 = vmatprep.subr.bf16.mxu0 %v5566
      %6730 = vmatpush1.bf16.msra.mxu0 %v5565
      %6731 = vmatprep.subr.bf16.mxu0 %v5571
      %6732 = vmatpush1.bf16.msra.mxu0 %v5570
      %6733 = vmatprep.subr.bf16.mxu0 %v5576
      %6734 = vmatpush1.bf16.msra.mxu0 %v5575
      %6735 = vmatprep.subr.bf16.mxu0 %v5581
      %6736 = vmatpush1.bf16.msra.mxu0 %v5580
      %6737 = vmatprep.subr.bf16.mxu0 %v5586
      %6738 = vmatpush1.bf16.msra.mxu0 %v5585
      %6739 = vmatprep.subr.bf16.mxu0 %v5591
      %6740 = vmatpush1.bf16.msra.mxu0 %v5590
      %6741 = vmatprep.subr.bf16.mxu0 %v5596
      %6742 = vmatpush1.bf16.msra.mxu0 %v5595
      %6743 = vmatprep.subr.bf16.mxu0 %v5601
      %6744 = vmatpush1.bf16.msra.mxu0 %v5600
      %6745 = vmatprep.subr.bf16.mxu0 %v5606
      %6746 = vmatpush1.bf16.msra.mxu0 %v5605
      %6747 = vmatprep.subr.bf16.mxu0 %v5611
      %6748 = vmatpush1.bf16.msra.mxu0 %v5610
      %6749 = vmatprep.mubr.bf16.mxu0 %v2680
      %6750 = vmatmul.mubr.bf16.gmra.mrb[0].mxu0 %v2679
      %v6751 = vpop.f32.mrb[0].mxu0
      %v6752 = vadd.f32 %v6681, %v6751
      %v6753 = vpop.f32.mrb[0].mxu0
      %v6754 = vadd.f32 %v6683, %v6753
      %v6755 = vpop.f32.mrb[0].mxu0
      %v6756 = vadd.f32 %v6685, %v6755
      %v6757 = vpop.f32.mrb[0].mxu0
      %v6758 = vadd.f32 %v6687, %v6757
      %6759 = vmatprep.mubr.bf16.mxu0 %v2695
      %6760 = vmatmul.mubr.bf16.gmra.mrb[0].mxu0 %v2694
      %v6761 = vpop.f32.mrb[0].mxu0
      %v6762 = vadd.f32 %v6691, %v6761
      %v6763 = vpop.f32.mrb[0].mxu0
      %v6764 = vadd.f32 %v6693, %v6763
      %v6765 = vpop.f32.mrb[0].mxu0
      %v6766 = vadd.f32 %v6695, %v6765
      %v6767 = vpop.f32.mrb[0].mxu0
      %v6768 = vadd.f32 %v6697, %v6767
      %6769 = vmatprep.mubr.bf16.mxu0 %v2710
      %6770 = vmatmul.mubr.bf16.gmra.mrb[0].mxu0 %v2709
      %v6771 = vpop.f32.mrb[0].mxu0
      %v6772 = vadd.f32 %v6701, %v6771
      %v6773 = vpop.f32.mrb[0].mxu0
      %v6774 = vadd.f32 %v6703, %v6773
      %v6775 = vpop.f32.mrb[0].mxu0
      %v6776 = vadd.f32 %v6705, %v6775
      %v6777 = vpop.f32.mrb[0].mxu0
      %v6778 = vadd.f32 %v6707, %v6777
      %6779 = vmatprep.mubr.bf16.mxu0 %v2725
      %6780 = vmatmul.mubr.bf16.gmra.mrb[0].mxu0 %v2724
      %v6781 = vpop.f32.mrb[0].mxu0
      %v6782 = vadd.f32 %v6711, %v6781
      %v6783 = vpop.f32.mrb[0].mxu0
      %v6784 = vadd.f32 %v6713, %v6783
      %v6785 = vpop.f32.mrb[0].mxu0
      %v6786 = vpop.f32.mrb[0].mxu0
      %6787 = vdwg.mxu0
      %6788 = vmatprep.subr.bf16.mxu0 %v5616
      %6789 = vmatpush1.bf16.msra.mxu0 %v5615
      %6790 = vmatprep.subr.bf16.mxu0 %v5621
      %6791 = vmatpush1.bf16.msra.mxu0 %v5620
      %6792 = vmatprep.subr.bf16.mxu0 %v5626
      %6793 = vmatpush1.bf16.msra.mxu0 %v5625
      %6794 = vmatprep.subr.bf16.mxu0 %v5631
      %6795 = vmatpush1.bf16.msra.mxu0 %v5630
      %6796 = vmatprep.subr.bf16.mxu0 %v5636
      %6797 = vmatpush1.bf16.msra.mxu0 %v5635
      %6798 = vmatprep.subr.bf16.mxu0 %v5641
      %6799 = vmatpush1.bf16.msra.mxu0 %v5640
      %6800 = vmatprep.subr.bf16.mxu0 %v5646
      %6801 = vmatpush1.bf16.msra.mxu0 %v5645
      %6802 = vmatprep.subr.bf16.mxu0 %v5651
      %6803 = vmatpush1.bf16.msra.mxu0 %v5650
      %6804 = vmatprep.subr.bf16.mxu0 %v5656
      %6805 = vmatpush1.bf16.msra.mxu0 %v5655
      %6806 = vmatprep.subr.bf16.mxu0 %v5661
      %6807 = vmatpush1.bf16.msra.mxu0 %v5660
      %6808 = vmatprep.subr.bf16.mxu0 %v5666
      %6809 = vmatpush1.bf16.msra.mxu0 %v5665
      %6810 = vmatprep.subr.bf16.mxu0 %v5671
      %6811 = vmatpush1.bf16.msra.mxu0 %v5670
      %6812 = vmatprep.subr.bf16.mxu0 %v5676
      %6813 = vmatpush1.bf16.msra.mxu0 %v5675
      %6814 = vmatprep.subr.bf16.mxu0 %v5681
      %6815 = vmatpush1.bf16.msra.mxu0 %v5680
      %6816 = vmatprep.subr.bf16.mxu0 %v5686
      %6817 = vmatpush1.bf16.msra.mxu0 %v5685
      %6818 = vmatprep.subr.bf16.mxu0 %v5691
      %6819 = vmatpush1.bf16.msra.mxu0 %v5690
      %6820 = vmatprep.mubr.bf16.mxu0 %v2682
      %6821 = vmatmul.mubr.bf16.gmra.mrb[0].mxu0 %v2681
      %v6822 = vpop.f32.mrb[0].mxu0
      %v6823 = vadd.f32 %v6752, %v6822
      %v6824 = vpop.f32.mrb[0].mxu0
      %v6825 = vadd.f32 %v6754, %v6824
      %v6826 = vpop.f32.mrb[0].mxu0
      %v6827 = vadd.f32 %v6756, %v6826
      %v6828 = vpop.f32.mrb[0].mxu0
      %v6829 = vadd.f32 %v6758, %v6828
      %6830 = vmatprep.mubr.bf16.mxu0 %v2697
      %6831 = vmatmul.mubr.bf16.gmra.mrb[0].mxu0 %v2696
      %v6832 = vpop.f32.mrb[0].mxu0
      %v6833 = vadd.f32 %v6762, %v6832
      %v6834 = vpop.f32.mrb[0].mxu0
      %v6835 = vadd.f32 %v6764, %v6834
      %v6836 = vpop.f32.mrb[0].mxu0
      %v6837 = vadd.f32 %v6766, %v6836
      %v6838 = vpop.f32.mrb[0].mxu0
      %v6839 = vadd.f32 %v6768, %v6838
      %6840 = vmatprep.mubr.bf16.mxu0 %v2712
      %6841 = vmatmul.mubr.bf16.gmra.mrb[0].mxu0 %v2711
      %v6842 = vpop.f32.mrb[0].mxu0
      %v6843 = vadd.f32 %v6772, %v6842
      %v6844 = vpop.f32.mrb[0].mxu0
      %v6845 = vadd.f32 %v6774, %v6844
      %v6846 = vpop.f32.mrb[0].mxu0
      %v6847 = vadd.f32 %v6776, %v6846
      %v6848 = vpop.f32.mrb[0].mxu0
      %v6849 = vadd.f32 %v6778, %v6848
      %6850 = vmatprep.mubr.bf16.mxu0 %v2727
      %6851 = vmatmul.mubr.bf16.gmra.mrb[0].mxu0 %v2726
      %v6852 = vpop.f32.mrb[0].mxu0
      %v6853 = vadd.f32 %v6782, %v6852
      %v6854 = vpop.f32.mrb[0].mxu0
      %v6855 = vadd.f32 %v6784, %v6854
      %v6856 = vpop.f32.mrb[0].mxu0
      %v6857 = vpop.f32.mrb[0].mxu0
      %6858 = vdwg.mxu0
      %6859 = vmatprep.subr.bf16.mxu0 %v5696
      %6860 = vmatpush1.bf16.msra.mxu0 %v5695
      %6861 = vmatprep.subr.bf16.mxu0 %v5701
      %6862 = vmatpush1.bf16.msra.mxu0 %v5700
      %6863 = vmatprep.subr.bf16.mxu0 %v5706
      %6864 = vmatpush1.bf16.msra.mxu0 %v5705
      %6865 = vmatprep.subr.bf16.mxu0 %v5711
      %6866 = vmatpush1.bf16.msra.mxu0 %v5710
      %6867 = vmatprep.subr.bf16.mxu0 %v5716
      %6868 = vmatpush1.bf16.msra.mxu0 %v5715
      %6869 = vmatprep.subr.bf16.mxu0 %v5721
      %6870 = vmatpush1.bf16.msra.mxu0 %v5720
      %6871 = vmatprep.subr.bf16.mxu0 %v5726
      %6872 = vmatpush1.bf16.msra.mxu0 %v5725
      %6873 = vmatprep.subr.bf16.mxu0 %v5731
      %6874 = vmatpush1.bf16.msra.mxu0 %v5730
      %6875 = vmatprep.subr.bf16.mxu0 %v5736
      %6876 = vmatpush1.bf16.msra.mxu0 %v5735
      %6877 = vmatprep.subr.bf16.mxu0 %v5741
      %6878 = vmatpush1.bf16.msra.mxu0 %v5740
      %6879 = vmatprep.subr.bf16.mxu0 %v5746
      %6880 = vmatpush1.bf16.msra.mxu0 %v5745
      %6881 = vmatprep.subr.bf16.mxu0 %v5751
      %6882 = vmatpush1.bf16.msra.mxu0 %v5750
      %6883 = vmatprep.subr.bf16.mxu0 %v5756
      %6884 = vmatpush1.bf16.msra.mxu0 %v5755
      %6885 = vmatprep.subr.bf16.mxu0 %v5761
      %6886 = vmatpush1.bf16.msra.mxu0 %v5760
      %6887 = vmatprep.subr.bf16.mxu0 %v5766
      %6888 = vmatpush1.bf16.msra.mxu0 %v5765
      %6889 = vmatprep.subr.bf16.mxu0 %v5771
      %6890 = vmatpush1.bf16.msra.mxu0 %v5770
      %6891 = vmatprep.mubr.bf16.mxu0 %v2684
      %6892 = vmatmul.mubr.bf16.gmra.mrb[0].mxu0 %v2683
      %v6893 = vpop.f32.mrb[0].mxu0
      %v6894 = vadd.f32 %v6823, %v6893
      %v6895 = vpop.f32.mrb[0].mxu0
      %v6896 = vadd.f32 %v6825, %v6895
      %v6897 = vpop.f32.mrb[0].mxu0
      %v6898 = vadd.f32 %v6827, %v6897
      %v6899 = vpop.f32.mrb[0].mxu0
      %v6900 = vadd.f32 %v6829, %v6899
      %6901 = vmatprep.mubr.bf16.mxu0 %v2699
      %6902 = vmatmul.mubr.bf16.gmra.mrb[0].mxu0 %v2698
      %v6903 = vpop.f32.mrb[0].mxu0
      %v6904 = vadd.f32 %v6833, %v6903
      %v6905 = vpop.f32.mrb[0].mxu0
      %v6906 = vadd.f32 %v6835, %v6905
      %v6907 = vpop.f32.mrb[0].mxu0
      %v6908 = vadd.f32 %v6837, %v6907
      %v6909 = vpop.f32.mrb[0].mxu0
      %v6910 = vadd.f32 %v6839, %v6909
      %6911 = vmatprep.mubr.bf16.mxu0 %v2714
      %6912 = vmatmul.mubr.bf16.gmra.mrb[0].mxu0 %v2713
      %v6913 = vpop.f32.mrb[0].mxu0
      %v6914 = vadd.f32 %v6843, %v6913
      %v6915 = vpop.f32.mrb[0].mxu0
      %v6916 = vadd.f32 %v6845, %v6915
      %v6917 = vpop.f32.mrb[0].mxu0
      %v6918 = vadd.f32 %v6847, %v6917
      %v6919 = vpop.f32.mrb[0].mxu0
      %v6920 = vadd.f32 %v6849, %v6919
      %6921 = vmatprep.mubr.bf16.mxu0 %v2729
      %6922 = vmatmul.mubr.bf16.gmra.mrb[0].mxu0 %v2728
      %v6923 = vpop.f32.mrb[0].mxu0
      %v6924 = vadd.f32 %v6853, %v6923
      %v6925 = vpop.f32.mrb[0].mxu0
      %v6926 = vadd.f32 %v6855, %v6925
      %v6927 = vpop.f32.mrb[0].mxu0
      %v6928 = vpop.f32.mrb[0].mxu0
      %6929 = vdwg.mxu0
      %6930 = vmatprep.subr.bf16.mxu0 %v5776
      %6931 = vmatpush1.bf16.msra.mxu0 %v5775
      %6932 = vmatprep.subr.bf16.mxu0 %v5781
      %6933 = vmatpush1.bf16.msra.mxu0 %v5780
      %6934 = vmatprep.subr.bf16.mxu0 %v5786
      %6935 = vmatpush1.bf16.msra.mxu0 %v5785
      %6936 = vmatprep.subr.bf16.mxu0 %v5791
      %6937 = vmatpush1.bf16.msra.mxu0 %v5790
      %6938 = vmatprep.subr.bf16.mxu0 %v5796
      %6939 = vmatpush1.bf16.msra.mxu0 %v5795
      %6940 = vmatprep.subr.bf16.mxu0 %v5801
      %6941 = vmatpush1.bf16.msra.mxu0 %v5800
      %6942 = vmatprep.subr.bf16.mxu0 %v5806
      %6943 = vmatpush1.bf16.msra.mxu0 %v5805
      %6944 = vmatprep.subr.bf16.mxu0 %v5811
      %6945 = vmatpush1.bf16.msra.mxu0 %v5810
      %6946 = vmatprep.subr.bf16.mxu0 %v5816
      %6947 = vmatpush1.bf16.msra.mxu0 %v5815
      %6948 = vmatprep.subr.bf16.mxu0 %v5821
      %6949 = vmatpush1.bf16.msra.mxu0 %v5820
      %6950 = vmatprep.subr.bf16.mxu0 %v5826
      %6951 = vmatpush1.bf16.msra.mxu0 %v5825
      %6952 = vmatprep.subr.bf16.mxu0 %v5831
      %6953 = vmatpush1.bf16.msra.mxu0 %v5830
      %6954 = vmatprep.subr.bf16.mxu0 %v5836
      %6955 = vmatpush1.bf16.msra.mxu0 %v5835
      %6956 = vmatprep.subr.bf16.mxu0 %v5841
      %6957 = vmatpush1.bf16.msra.mxu0 %v5840
      %6958 = vmatprep.subr.bf16.mxu0 %v5846
      %6959 = vmatpush1.bf16.msra.mxu0 %v5845
      %6960 = vmatprep.subr.bf16.mxu0 %v5851
      %6961 = vmatpush1.bf16.msra.mxu0 %v5850
      %6962 = vmatprep.mubr.bf16.mxu0 %v2686
      %6963 = vmatmul.mubr.bf16.gmra.mrb[0].mxu0 %v2685
      %v6964 = vpop.f32.mrb[0].mxu0
      %v6965 = vadd.f32 %v6894, %v6964
      %v6966 = vpop.f32.mrb[0].mxu0
      %v6967 = vadd.f32 %v6896, %v6966
      %v6968 = vpop.f32.mrb[0].mxu0
      %v6969 = vadd.f32 %v6898, %v6968
      %v6970 = vpop.f32.mrb[0].mxu0
      %v6971 = vadd.f32 %v6900, %v6970
      %6972 = vmatprep.mubr.bf16.mxu0 %v2701
      %6973 = vmatmul.mubr.bf16.gmra.mrb[0].mxu0 %v2700
      %v6974 = vpop.f32.mrb[0].mxu0
      %v6975 = vadd.f32 %v6904, %v6974
      %v6976 = vpop.f32.mrb[0].mxu0
      %v6977 = vadd.f32 %v6906, %v6976
      %v6978 = vpop.f32.mrb[0].mxu0
      %v6979 = vadd.f32 %v6908, %v6978
      %v6980 = vpop.f32.mrb[0].mxu0
      %v6981 = vadd.f32 %v6910, %v6980
      %6982 = vmatprep.mubr.bf16.mxu0 %v2716
      %6983 = vmatmul.mubr.bf16.gmra.mrb[0].mxu0 %v2715
      %v6984 = vpop.f32.mrb[0].mxu0
      %v6985 = vadd.f32 %v6914, %v6984
      %v6986 = vpop.f32.mrb[0].mxu0
      %v6987 = vadd.f32 %v6916, %v6986
      %v6988 = vpop.f32.mrb[0].mxu0
      %v6989 = vadd.f32 %v6918, %v6988
      %v6990 = vpop.f32.mrb[0].mxu0
      %v6991 = vadd.f32 %v6920, %v6990
      %6992 = vmatprep.mubr.bf16.mxu0 %v2731
      %6993 = vmatmul.mubr.bf16.gmra.mrb[0].mxu0 %v2730
      %v6994 = vpop.f32.mrb[0].mxu0
      %v6995 = vadd.f32 %v6924, %v6994
      %v6996 = vpop.f32.mrb[0].mxu0
      %v6997 = vadd.f32 %v6926, %v6996
      %v6998 = vpop.f32.mrb[0].mxu0
      %v6999 = vpop.f32.mrb[0].mxu0
      %7000 = vdwg.mxu0
      %7001 = vmatprep.subr.bf16.mxu0 %v5856
      %7002 = vmatpush1.bf16.msra.mxu0 %v5855
      %7003 = vmatprep.subr.bf16.mxu0 %v5861
      %7004 = vmatpush1.bf16.msra.mxu0 %v5860
      %7005 = vmatprep.subr.bf16.mxu0 %v5866
      %7006 = vmatpush1.bf16.msra.mxu0 %v5865
      %7007 = vmatprep.subr.bf16.mxu0 %v5871
      %7008 = vmatpush1.bf16.msra.mxu0 %v5870
      %7009 = vmatprep.subr.bf16.mxu0 %v5876
      %7010 = vmatpush1.bf16.msra.mxu0 %v5875
      %7011 = vmatprep.subr.bf16.mxu0 %v5881
      %7012 = vmatpush1.bf16.msra.mxu0 %v5880
      %7013 = vmatprep.subr.bf16.mxu0 %v5886
      %7014 = vmatpush1.bf16.msra.mxu0 %v5885
      %7015 = vmatprep.subr.bf16.mxu0 %v5891
      %7016 = vmatpush1.bf16.msra.mxu0 %v5890
      %7017 = vmatprep.subr.bf16.mxu0 %v5896
      %7018 = vmatpush1.bf16.msra.mxu0 %v5895
      %7019 = vmatprep.subr.bf16.mxu0 %v5901
      %7020 = vmatpush1.bf16.msra.mxu0 %v5900
      %7021 = vmatprep.subr.bf16.mxu0 %v5906
      %7022 = vmatpush1.bf16.msra.mxu0 %v5905
      %7023 = vmatprep.subr.bf16.mxu0 %v5911
      %7024 = vmatpush1.bf16.msra.mxu0 %v5910
      %7025 = vmatprep.subr.bf16.mxu0 %v5916
      %7026 = vmatpush1.bf16.msra.mxu0 %v5915
      %7027 = vmatprep.subr.bf16.mxu0 %v5921
      %7028 = vmatpush1.bf16.msra.mxu0 %v5920
      %7029 = vmatprep.subr.bf16.mxu0 %v5926
      %7030 = vmatpush1.bf16.msra.mxu0 %v5925
      %7031 = vmatprep.subr.bf16.mxu0 %v5931
      %7032 = vmatpush1.bf16.msra.mxu0 %v5930
      %7033 = vmatprep.mubr.bf16.mxu0 %v2688
      %7034 = vmatmul.mubr.bf16.gmra.mrb[0].mxu0 %v2687
      %v7035 = vpop.f32.mrb[0].mxu0
      %v7036 = vadd.f32 %v6965, %v7035
      %v7037 = vpop.f32.mrb[0].mxu0
      %v7038 = vadd.f32 %v6967, %v7037
      %v7039 = vpop.f32.mrb[0].mxu0
      %v7040 = vadd.f32 %v6969, %v7039
      %v7041 = vpop.f32.mrb[0].mxu0
      %v7042 = vadd.f32 %v6971, %v7041
      %7043 = vmatprep.mubr.bf16.mxu0 %v2703
      %7044 = vmatmul.mubr.bf16.gmra.mrb[0].mxu0 %v2702
      %v7045 = vpop.f32.mrb[0].mxu0
      %v7046 = vadd.f32 %v6975, %v7045
      %v7047 = vpop.f32.mrb[0].mxu0
      %v7048 = vadd.f32 %v6977, %v7047
      %v7049 = vpop.f32.mrb[0].mxu0
      %v7050 = vadd.f32 %v6979, %v7049
      %v7051 = vpop.f32.mrb[0].mxu0
      %v7052 = vadd.f32 %v6981, %v7051
      %7053 = vmatprep.mubr.bf16.mxu0 %v2718
      %7054 = vmatmul.mubr.bf16.gmra.mrb[0].mxu0 %v2717
      %v7055 = vpop.f32.mrb[0].mxu0
      %v7056 = vadd.f32 %v6985, %v7055
      %v7057 = vpop.f32.mrb[0].mxu0
      %v7058 = vadd.f32 %v6987, %v7057
      %v7059 = vpop.f32.mrb[0].mxu0
      %v7060 = vadd.f32 %v6989, %v7059
      %v7061 = vpop.f32.mrb[0].mxu0
      %v7062 = vadd.f32 %v6991, %v7061
      %7063 = vmatprep.mubr.bf16.mxu0 %v2733
      %7064 = vmatmul.mubr.bf16.gmra.mrb[0].mxu0 %v2732
      %v7065 = vpop.f32.mrb[0].mxu0
      %v7066 = vadd.f32 %v6995, %v7065
      %v7067 = vpop.f32.mrb[0].mxu0
      %v7068 = vadd.f32 %v6997, %v7067
      %v7069 = vpop.f32.mrb[0].mxu0
      %v7070 = vpop.f32.mrb[0].mxu0
      %7071 = vdwg.mxu0
      %7072 = vmatprep.subr.bf16.mxu0 %v5936
      %7073 = vmatpush1.bf16.msra.mxu0 %v5935
      %7074 = vmatprep.subr.bf16.mxu0 %v5941
      %7075 = vmatpush1.bf16.msra.mxu0 %v5940
      %7076 = vmatprep.subr.bf16.mxu0 %v5946
      %7077 = vmatpush1.bf16.msra.mxu0 %v5945
      %7078 = vmatprep.subr.bf16.mxu0 %v5951
      %7079 = vmatpush1.bf16.msra.mxu0 %v5950
      %7080 = vmatprep.subr.bf16.mxu0 %v5956
      %7081 = vmatpush1.bf16.msra.mxu0 %v5955
      %7082 = vmatprep.subr.bf16.mxu0 %v5961
      %7083 = vmatpush1.bf16.msra.mxu0 %v5960
      %7084 = vmatprep.subr.bf16.mxu0 %v5966
      %7085 = vmatpush1.bf16.msra.mxu0 %v5965
      %7086 = vmatprep.subr.bf16.mxu0 %v5971
      %7087 = vmatpush1.bf16.msra.mxu0 %v5970
      %7088 = vmatprep.subr.bf16.mxu0 0
      %7089 = vmatpush1.bf16.msra.mxu0 0
      %7090 = vmatprep.subr.bf16.mxu0 0
      %7091 = vmatpush1.bf16.msra.mxu0 0
      %7092 = vmatprep.subr.bf16.mxu0 0
      %7093 = vmatpush1.bf16.msra.mxu0 0
      %7094 = vmatprep.subr.bf16.mxu0 0
      %7095 = vmatpush1.bf16.msra.mxu0 0
      %7096 = vmatprep.subr.bf16.mxu0 0
      %7097 = vmatpush1.bf16.msra.mxu0 0
      %7098 = vmatprep.subr.bf16.mxu0 0
      %7099 = vmatpush1.bf16.msra.mxu0 0
      %7100 = vmatprep.subr.bf16.mxu0 0
      %7101 = vmatpush1.bf16.msra.mxu0 0
      %7102 = vmatprep.subr.bf16.mxu0 0
      %7103 = vmatpush1.bf16.msra.mxu0 0
      %7104 = vmatprep.mubr.bf16.mxu0 0
      %7105 = vmatmul.mubr.bf16.gmra.mrb[0].mxu0 %v2689
      %v7106 = vpop.f32.mrb[0].mxu0
      %v7107 = vadd.f32 %v7036, %v7106
      %v7108 = vpop.f32.mrb[0].mxu0
      %v7109 = vadd.f32 %v7038, %v7108
      %v7110 = vpop.f32.mrb[0].mxu0
      %v7111 = vadd.f32 %v7040, %v7110
      %v7112 = vpop.f32.mrb[0].mxu0
      %v7113 = vadd.f32 %v7042, %v7112
      %7114 = vmatprep.mubr.bf16.mxu0 0
      %7115 = vmatmul.mubr.bf16.gmra.mrb[0].mxu0 %v2704
      %v7116 = vpop.f32.mrb[0].mxu0
      %v7117 = vadd.f32 %v7046, %v7116
      %v7118 = vpop.f32.mrb[0].mxu0
      %v7119 = vadd.f32 %v7048, %v7118
      %v7120 = vpop.f32.mrb[0].mxu0
      %v7121 = vadd.f32 %v7050, %v7120
      %v7122 = vpop.f32.mrb[0].mxu0
      %v7123 = vadd.f32 %v7052, %v7122
      %7124 = vmatprep.mubr.bf16.mxu0 0
      %7125 = vmatmul.mubr.bf16.gmra.mrb[0].mxu0 %v2719
      %v7126 = vpop.f32.mrb[0].mxu0
      %v7127 = vadd.f32 %v7056, %v7126
      %v7128 = vpop.f32.mrb[0].mxu0
      %v7129 = vadd.f32 %v7058, %v7128
      %v7130 = vpop.f32.mrb[0].mxu0
      %v7131 = vadd.f32 %v7060, %v7130
      %v7132 = vpop.f32.mrb[0].mxu0
      %v7133 = vadd.f32 %v7062, %v7132
      %7134 = vmatprep.mubr.bf16.mxu0 0
      %7135 = vmatmul.mubr.bf16.gmra.mrb[0].mxu0 %v2734
      %v7136 = vpop.f32.mrb[0].mxu0
      %v7137 = vadd.f32 %v7066, %v7136
      %v7138 = vpop.f32.mrb[0].mxu0
      %v7139 = vadd.f32 %v7068, %v7138
      %v7140 = vpop.f32.mrb[0].mxu0
      %v7141 = vpop.f32.mrb[0].mxu0
      %7142 = vdwg.mxu0
      %7143 = vmatprep.subr.bf16.mxu0 %v5378
      %7144 = vmatpush1.bf16.msra.mxu0 %v5377
      %7145 = vmatprep.subr.bf16.mxu0 %v5383
      %7146 = vmatpush1.bf16.msra.mxu0 %v5382
      %7147 = vmatprep.subr.bf16.mxu0 %v5388
      %7148 = vmatpush1.bf16.msra.mxu0 %v5387
      %7149 = vmatprep.subr.bf16.mxu0 %v5393
      %7150 = vmatpush1.bf16.msra.mxu0 %v5392
      %7151 = vmatprep.subr.bf16.mxu0 %v5398
      %7152 = vmatpush1.bf16.msra.mxu0 %v5397
      %7153 = vmatprep.subr.bf16.mxu0 %v5403
      %7154 = vmatpush1.bf16.msra.mxu0 %v5402
      %7155 = vmatprep.subr.bf16.mxu0 %v5408
      %7156 = vmatpush1.bf16.msra.mxu0 %v5407
      %7157 = vmatprep.subr.bf16.mxu0 %v5413
      %7158 = vmatpush1.bf16.msra.mxu0 %v5412
      %7159 = vmatprep.subr.bf16.mxu0 %v5418
      %7160 = vmatpush1.bf16.msra.mxu0 %v5417
      %7161 = vmatprep.subr.bf16.mxu0 %v5423
      %7162 = vmatpush1.bf16.msra.mxu0 %v5422
      %7163 = vmatprep.subr.bf16.mxu0 %v5428
      %7164 = vmatpush1.bf16.msra.mxu0 %v5427
      %7165 = vmatprep.subr.bf16.mxu0 %v5433
      %7166 = vmatpush1.bf16.msra.mxu0 %v5432
      %7167 = vmatprep.subr.bf16.mxu0 %v5438
      %7168 = vmatpush1.bf16.msra.mxu0 %v5437
      %7169 = vmatprep.subr.bf16.mxu0 %v5443
      %7170 = vmatpush1.bf16.msra.mxu0 %v5442
      %7171 = vmatprep.subr.bf16.mxu0 %v5448
      %7172 = vmatpush1.bf16.msra.mxu0 %v5447
      %7173 = vmatprep.subr.bf16.mxu0 %v5453
      %7174 = vmatpush1.bf16.msra.mxu0 %v5452
      %7175 = vmatprep.mubr.bf16.mxu0 %v2676
      %7176 = vmatmul.mubr.bf16.gmra.mrb[0].mxu0 %v2675
      %v7177 = vpop.f32.mrb[0].mxu0
      %v7178 = vadd.f32 0.0, %v7177
      %v7179 = vpop.f32.mrb[0].mxu0
      %v7180 = vadd.f32 0.0, %v7179
      %v7181 = vpop.f32.mrb[0].mxu0
      %v7182 = vadd.f32 0.0, %v7181
      %v7183 = vpop.f32.mrb[0].mxu0
      %v7184 = vadd.f32 0.0, %v7183
      %7185 = vmatprep.mubr.bf16.mxu0 %v2691
      %7186 = vmatmul.mubr.bf16.gmra.mrb[0].mxu0 %v2690
      %v7187 = vpop.f32.mrb[0].mxu0
      %v7188 = vadd.f32 0.0, %v7187
      %v7189 = vpop.f32.mrb[0].mxu0
      %v7190 = vadd.f32 0.0, %v7189
      %v7191 = vpop.f32.mrb[0].mxu0
      %v7192 = vadd.f32 0.0, %v7191
      %v7193 = vpop.f32.mrb[0].mxu0
      %v7194 = vadd.f32 0.0, %v7193
      %7195 = vmatprep.mubr.bf16.mxu0 %v2706
      %7196 = vmatmul.mubr.bf16.gmra.mrb[0].mxu0 %v2705
      %v7197 = vpop.f32.mrb[0].mxu0
      %v7198 = vadd.f32 0.0, %v7197
      %v7199 = vpop.f32.mrb[0].mxu0
      %v7200 = vadd.f32 0.0, %v7199
      %v7201 = vpop.f32.mrb[0].mxu0
      %v7202 = vadd.f32 0.0, %v7201
      %v7203 = vpop.f32.mrb[0].mxu0
      %v7204 = vadd.f32 0.0, %v7203
      %7205 = vmatprep.mubr.bf16.mxu0 %v2721
      %7206 = vmatmul.mubr.bf16.gmra.mrb[0].mxu0 %v2720
      %v7207 = vpop.f32.mrb[0].mxu0
      %v7208 = vadd.f32 0.0, %v7207
      %v7209 = vpop.f32.mrb[0].mxu0
      %v7210 = vadd.f32 0.0, %v7209
      %v7211 = vpop.f32.mrb[0].mxu0
      %v7212 = vpop.f32.mrb[0].mxu0
      %7213 = vdwg.mxu0
      %7214 = vmatprep.subr.bf16.mxu0 %v5458
      %7215 = vmatpush1.bf16.msra.mxu0 %v5457
      %7216 = vmatprep.subr.bf16.mxu0 %v5463
      %7217 = vmatpush1.bf16.msra.mxu0 %v5462
      %7218 = vmatprep.subr.bf16.mxu0 %v5468
      %7219 = vmatpush1.bf16.msra.mxu0 %v5467
      %7220 = vmatprep.subr.bf16.mxu0 %v5473
      %7221 = vmatpush1.bf16.msra.mxu0 %v5472
      %7222 = vmatprep.subr.bf16.mxu0 %v5478
      %7223 = vmatpush1.bf16.msra.mxu0 %v5477
      %7224 = vmatprep.subr.bf16.mxu0 %v5483
      %7225 = vmatpush1.bf16.msra.mxu0 %v5482
      %7226 = vmatprep.subr.bf16.mxu0 %v5488
      %7227 = vmatpush1.bf16.msra.mxu0 %v5487
      %7228 = vmatprep.subr.bf16.mxu0 %v5493
      %7229 = vmatpush1.bf16.msra.mxu0 %v5492
      %7230 = vmatprep.subr.bf16.mxu0 %v5498
      %7231 = vmatpush1.bf16.msra.mxu0 %v5497
      %7232 = vmatprep.subr.bf16.mxu0 %v5503
      %7233 = vmatpush1.bf16.msra.mxu0 %v5502
      %7234 = vmatprep.subr.bf16.mxu0 %v5508
      %7235 = vmatpush1.bf16.msra.mxu0 %v5507
      %7236 = vmatprep.subr.bf16.mxu0 %v5513
      %7237 = vmatpush1.bf16.msra.mxu0 %v5512
      %7238 = vmatprep.subr.bf16.mxu0 %v5518
      %7239 = vmatpush1.bf16.msra.mxu0 %v5517
      %7240 = vmatprep.subr.bf16.mxu0 %v5523
      %7241 = vmatpush1.bf16.msra.mxu0 %v5522
      %7242 = vmatprep.subr.bf16.mxu0 %v5528
      %7243 = vmatpush1.bf16.msra.mxu0 %v5527
      %7244 = vmatprep.subr.bf16.mxu0 %v5533
      %7245 = vmatpush1.bf16.msra.mxu0 %v5532
      %7246 = vmatprep.mubr.bf16.mxu0 %v2678
      %7247 = vmatmul.mubr.bf16.gmra.mrb[0].mxu0 %v2677
      %v7248 = vpop.f32.mrb[0].mxu0
      %v7249 = vadd.f32 %v7178, %v7248
      %v7250 = vpop.f32.mrb[0].mxu0
      %v7251 = vadd.f32 %v7180, %v7250
      %v7252 = vpop.f32.mrb[0].mxu0
      %v7253 = vadd.f32 %v7182, %v7252
      %v7254 = vpop.f32.mrb[0].mxu0
      %v7255 = vadd.f32 %v7184, %v7254
      %7256 = vmatprep.mubr.bf16.mxu0 %v2693
      %7257 = vmatmul.mubr.bf16.gmra.mrb[0].mxu0 %v2692
      %v7258 = vpop.f32.mrb[0].mxu0
      %v7259 = vadd.f32 %v7188, %v7258
      %v7260 = vpop.f32.mrb[0].mxu0
      %v7261 = vadd.f32 %v7190, %v7260
      %v7262 = vpop.f32.mrb[0].mxu0
      %v7263 = vadd.f32 %v7192, %v7262
      %v7264 = vpop.f32.mrb[0].mxu0
      %v7265 = vadd.f32 %v7194, %v7264
      %7266 = vmatprep.mubr.bf16.mxu0 %v2708
      %7267 = vmatmul.mubr.bf16.gmra.mrb[0].mxu0 %v2707
      %v7268 = vpop.f32.mrb[0].mxu0
      %v7269 = vadd.f32 %v7198, %v7268
      %v7270 = vpop.f32.mrb[0].mxu0
      %v7271 = vadd.f32 %v7200, %v7270
      %v7272 = vpop.f32.mrb[0].mxu0
      %v7273 = vadd.f32 %v7202, %v7272
      %v7274 = vpop.f32.mrb[0].mxu0
      %v7275 = vadd.f32 %v7204, %v7274
      %7276 = vmatprep.mubr.bf16.mxu0 %v2723
      %7277 = vmatmul.mubr.bf16.gmra.mrb[0].mxu0 %v2722
      %v7278 = vpop.f32.mrb[0].mxu0
      %v7279 = vadd.f32 %v7208, %v7278
      %v7280 = vpop.f32.mrb[0].mxu0
      %v7281 = vadd.f32 %v7210, %v7280
      %v7282 = vpop.f32.mrb[0].mxu0
      %v7283 = vpop.f32.mrb[0].mxu0
      %7284 = vdwg.mxu0
      %7285 = vmatprep.subr.bf16.mxu0 %v5538
      %7286 = vmatpush1.bf16.msra.mxu0 %v5537
      %7287 = vmatprep.subr.bf16.mxu0 %v5543
      %7288 = vmatpush1.bf16.msra.mxu0 %v5542
      %7289 = vmatprep.subr.bf16.mxu0 %v5548
      %7290 = vmatpush1.bf16.msra.mxu0 %v5547
      %7291 = vmatprep.subr.bf16.mxu0 %v5553
      %7292 = vmatpush1.bf16.msra.mxu0 %v5552
      %7293 = vmatprep.subr.bf16.mxu0 %v5558
      %7294 = vmatpush1.bf16.msra.mxu0 %v5557
      %7295 = vmatprep.subr.bf16.mxu0 %v5563
      %7296 = vmatpush1.bf16.msra.mxu0 %v5562
      %7297 = vmatprep.subr.bf16.mxu0 %v5568
      %7298 = vmatpush1.bf16.msra.mxu0 %v5567
      %7299 = vmatprep.subr.bf16.mxu0 %v5573
      %7300 = vmatpush1.bf16.msra.mxu0 %v5572
      %7301 = vmatprep.subr.bf16.mxu0 %v5578
      %7302 = vmatpush1.bf16.msra.mxu0 %v5577
      %7303 = vmatprep.subr.bf16.mxu0 %v5583
      %7304 = vmatpush1.bf16.msra.mxu0 %v5582
      %7305 = vmatprep.subr.bf16.mxu0 %v5588
      %7306 = vmatpush1.bf16.msra.mxu0 %v5587
      %7307 = vmatprep.subr.bf16.mxu0 %v5593
      %7308 = vmatpush1.bf16.msra.mxu0 %v5592
      %7309 = vmatprep.subr.bf16.mxu0 %v5598
      %7310 = vmatpush1.bf16.msra.mxu0 %v5597
      %7311 = vmatprep.subr.bf16.mxu0 %v5603
      %7312 = vmatpush1.bf16.msra.mxu0 %v5602
      %7313 = vmatprep.subr.bf16.mxu0 %v5608
      %7314 = vmatpush1.bf16.msra.mxu0 %v5607
      %7315 = vmatprep.subr.bf16.mxu0 %v5613
      %7316 = vmatpush1.bf16.msra.mxu0 %v5612
      %7317 = vmatprep.mubr.bf16.mxu0 %v2680
      %7318 = vmatmul.mubr.bf16.gmra.mrb[0].mxu0 %v2679
      %v7319 = vpop.f32.mrb[0].mxu0
      %v7320 = vadd.f32 %v7249, %v7319
      %v7321 = vpop.f32.mrb[0].mxu0
      %v7322 = vadd.f32 %v7251, %v7321
      %v7323 = vpop.f32.mrb[0].mxu0
      %v7324 = vadd.f32 %v7253, %v7323
      %v7325 = vpop.f32.mrb[0].mxu0
      %v7326 = vadd.f32 %v7255, %v7325
      %7327 = vmatprep.mubr.bf16.mxu0 %v2695
      %7328 = vmatmul.mubr.bf16.gmra.mrb[0].mxu0 %v2694
      %v7329 = vpop.f32.mrb[0].mxu0
      %v7330 = vadd.f32 %v7259, %v7329
      %v7331 = vpop.f32.mrb[0].mxu0
      %v7332 = vadd.f32 %v7261, %v7331
      %v7333 = vpop.f32.mrb[0].mxu0
      %v7334 = vadd.f32 %v7263, %v7333
      %v7335 = vpop.f32.mrb[0].mxu0
      %v7336 = vadd.f32 %v7265, %v7335
      %7337 = vmatprep.mubr.bf16.mxu0 %v2710
      %7338 = vmatmul.mubr.bf16.gmra.mrb[0].mxu0 %v2709
      %v7339 = vpop.f32.mrb[0].mxu0
      %v7340 = vadd.f32 %v7269, %v7339
      %v7341 = vpop.f32.mrb[0].mxu0
      %v7342 = vadd.f32 %v7271, %v7341
      %v7343 = vpop.f32.mrb[0].mxu0
      %v7344 = vadd.f32 %v7273, %v7343
      %v7345 = vpop.f32.mrb[0].mxu0
      %v7346 = vadd.f32 %v7275, %v7345
      %7347 = vmatprep.mubr.bf16.mxu0 %v2725
      %7348 = vmatmul.mubr.bf16.gmra.mrb[0].mxu0 %v2724
      %v7349 = vpop.f32.mrb[0].mxu0
      %v7350 = vadd.f32 %v7279, %v7349
      %v7351 = vpop.f32.mrb[0].mxu0
      %v7352 = vadd.f32 %v7281, %v7351
      %v7353 = vpop.f32.mrb[0].mxu0
      %v7354 = vpop.f32.mrb[0].mxu0
      %7355 = vdwg.mxu0
      %7356 = vmatprep.subr.bf16.mxu0 %v5618
      %7357 = vmatpush1.bf16.msra.mxu0 %v5617
      %7358 = vmatprep.subr.bf16.mxu0 %v5623
      %7359 = vmatpush1.bf16.msra.mxu0 %v5622
      %7360 = vmatprep.subr.bf16.mxu0 %v5628
      %7361 = vmatpush1.bf16.msra.mxu0 %v5627
      %7362 = vmatprep.subr.bf16.mxu0 %v5633
      %7363 = vmatpush1.bf16.msra.mxu0 %v5632
      %7364 = vmatprep.subr.bf16.mxu0 %v5638
      %7365 = vmatpush1.bf16.msra.mxu0 %v5637
      %7366 = vmatprep.subr.bf16.mxu0 %v5643
      %7367 = vmatpush1.bf16.msra.mxu0 %v5642
      %7368 = vmatprep.subr.bf16.mxu0 %v5648
      %7369 = vmatpush1.bf16.msra.mxu0 %v5647
      %7370 = vmatprep.subr.bf16.mxu0 %v5653
      %7371 = vmatpush1.bf16.msra.mxu0 %v5652
      %7372 = vmatprep.subr.bf16.mxu0 %v5658
      %7373 = vmatpush1.bf16.msra.mxu0 %v5657
      %7374 = vmatprep.subr.bf16.mxu0 %v5663
      %7375 = vmatpush1.bf16.msra.mxu0 %v5662
      %7376 = vmatprep.subr.bf16.mxu0 %v5668
      %7377 = vmatpush1.bf16.msra.mxu0 %v5667
      %7378 = vmatprep.subr.bf16.mxu0 %v5673
      %7379 = vmatpush1.bf16.msra.mxu0 %v5672
      %7380 = vmatprep.subr.bf16.mxu0 %v5678
      %7381 = vmatpush1.bf16.msra.mxu0 %v5677
      %7382 = vmatprep.subr.bf16.mxu0 %v5683
      %7383 = vmatpush1.bf16.msra.mxu0 %v5682
      %7384 = vmatprep.subr.bf16.mxu0 %v5688
      %7385 = vmatpush1.bf16.msra.mxu0 %v5687
      %7386 = vmatprep.subr.bf16.mxu0 %v5693
      %7387 = vmatpush1.bf16.msra.mxu0 %v5692
      %7388 = vmatprep.mubr.bf16.mxu0 %v2682
      %7389 = vmatmul.mubr.bf16.gmra.mrb[0].mxu0 %v2681
      %v7390 = vpop.f32.mrb[0].mxu0
      %v7391 = vadd.f32 %v7320, %v7390
      %v7392 = vpop.f32.mrb[0].mxu0
      %v7393 = vadd.f32 %v7322, %v7392
      %v7394 = vpop.f32.mrb[0].mxu0
      %v7395 = vadd.f32 %v7324, %v7394
      %v7396 = vpop.f32.mrb[0].mxu0
      %v7397 = vadd.f32 %v7326, %v7396
      %7398 = vmatprep.mubr.bf16.mxu0 %v2697
      %7399 = vmatmul.mubr.bf16.gmra.mrb[0].mxu0 %v2696
      %v7400 = vpop.f32.mrb[0].mxu0
      %v7401 = vadd.f32 %v7330, %v7400
      %v7402 = vpop.f32.mrb[0].mxu0
      %v7403 = vadd.f32 %v7332, %v7402
      %v7404 = vpop.f32.mrb[0].mxu0
      %v7405 = vadd.f32 %v7334, %v7404
      %v7406 = vpop.f32.mrb[0].mxu0
      %v7407 = vadd.f32 %v7336, %v7406
      %7408 = vmatprep.mubr.bf16.mxu0 %v2712
      %7409 = vmatmul.mubr.bf16.gmra.mrb[0].mxu0 %v2711
      %v7410 = vpop.f32.mrb[0].mxu0
      %v7411 = vadd.f32 %v7340, %v7410
      %v7412 = vpop.f32.mrb[0].mxu0
      %v7413 = vadd.f32 %v7342, %v7412
      %v7414 = vpop.f32.mrb[0].mxu0
      %v7415 = vadd.f32 %v7344, %v7414
      %v7416 = vpop.f32.mrb[0].mxu0
      %v7417 = vadd.f32 %v7346, %v7416
      %7418 = vmatprep.mubr.bf16.mxu0 %v2727
      %7419 = vmatmul.mubr.bf16.gmra.mrb[0].mxu0 %v2726
      %v7420 = vpop.f32.mrb[0].mxu0
      %v7421 = vadd.f32 %v7350, %v7420
      %v7422 = vpop.f32.mrb[0].mxu0
      %v7423 = vadd.f32 %v7352, %v7422
      %v7424 = vpop.f32.mrb[0].mxu0
      %v7425 = vpop.f32.mrb[0].mxu0
      %7426 = vdwg.mxu0
      %7427 = vmatprep.subr.bf16.mxu0 %v5698
      %7428 = vmatpush1.bf16.msra.mxu0 %v5697
      %7429 = vmatprep.subr.bf16.mxu0 %v5703
      %7430 = vmatpush1.bf16.msra.mxu0 %v5702
      %7431 = vmatprep.subr.bf16.mxu0 %v5708
      %7432 = vmatpush1.bf16.msra.mxu0 %v5707
      %7433 = vmatprep.subr.bf16.mxu0 %v5713
      %7434 = vmatpush1.bf16.msra.mxu0 %v5712
      %7435 = vmatprep.subr.bf16.mxu0 %v5718
      %7436 = vmatpush1.bf16.msra.mxu0 %v5717
      %7437 = vmatprep.subr.bf16.mxu0 %v5723
      %7438 = vmatpush1.bf16.msra.mxu0 %v5722
      %7439 = vmatprep.subr.bf16.mxu0 %v5728
      %7440 = vmatpush1.bf16.msra.mxu0 %v5727
      %7441 = vmatprep.subr.bf16.mxu0 %v5733
      %7442 = vmatpush1.bf16.msra.mxu0 %v5732
      %7443 = vmatprep.subr.bf16.mxu0 %v5738
      %7444 = vmatpush1.bf16.msra.mxu0 %v5737
      %7445 = vmatprep.subr.bf16.mxu0 %v5743
      %7446 = vmatpush1.bf16.msra.mxu0 %v5742
      %7447 = vmatprep.subr.bf16.mxu0 %v5748
      %7448 = vmatpush1.bf16.msra.mxu0 %v5747
      %7449 = vmatprep.subr.bf16.mxu0 %v5753
      %7450 = vmatpush1.bf16.msra.mxu0 %v5752
      %7451 = vmatprep.subr.bf16.mxu0 %v5758
      %7452 = vmatpush1.bf16.msra.mxu0 %v5757
      %7453 = vmatprep.subr.bf16.mxu0 %v5763
      %7454 = vmatpush1.bf16.msra.mxu0 %v5762
      %7455 = vmatprep.subr.bf16.mxu0 %v5768
      %7456 = vmatpush1.bf16.msra.mxu0 %v5767
      %7457 = vmatprep.subr.bf16.mxu0 %v5773
      %7458 = vmatpush1.bf16.msra.mxu0 %v5772
      %7459 = vmatprep.mubr.bf16.mxu0 %v2684
      %7460 = vmatmul.mubr.bf16.gmra.mrb[0].mxu0 %v2683
      %v7461 = vpop.f32.mrb[0].mxu0
      %v7462 = vadd.f32 %v7391, %v7461
      %v7463 = vpop.f32.mrb[0].mxu0
      %v7464 = vadd.f32 %v7393, %v7463
      %v7465 = vpop.f32.mrb[0].mxu0
      %v7466 = vadd.f32 %v7395, %v7465
      %v7467 = vpop.f32.mrb[0].mxu0
      %v7468 = vadd.f32 %v7397, %v7467
      %7469 = vmatprep.mubr.bf16.mxu0 %v2699
      %7470 = vmatmul.mubr.bf16.gmra.mrb[0].mxu0 %v2698
      %v7471 = vpop.f32.mrb[0].mxu0
      %v7472 = vadd.f32 %v7401, %v7471
      %v7473 = vpop.f32.mrb[0].mxu0
      %v7474 = vadd.f32 %v7403, %v7473
      %v7475 = vpop.f32.mrb[0].mxu0
      %v7476 = vadd.f32 %v7405, %v7475
      %v7477 = vpop.f32.mrb[0].mxu0
      %v7478 = vadd.f32 %v7407, %v7477
      %7479 = vmatprep.mubr.bf16.mxu0 %v2714
      %7480 = vmatmul.mubr.bf16.gmra.mrb[0].mxu0 %v2713
      %v7481 = vpop.f32.mrb[0].mxu0
      %v7482 = vadd.f32 %v7411, %v7481
      %v7483 = vpop.f32.mrb[0].mxu0
      %v7484 = vadd.f32 %v7413, %v7483
      %v7485 = vpop.f32.mrb[0].mxu0
      %v7486 = vadd.f32 %v7415, %v7485
      %v7487 = vpop.f32.mrb[0].mxu0
      %v7488 = vadd.f32 %v7417, %v7487
      %7489 = vmatprep.mubr.bf16.mxu0 %v2729
      %7490 = vmatmul.mubr.bf16.gmra.mrb[0].mxu0 %v2728
      %v7491 = vpop.f32.mrb[0].mxu0
      %v7492 = vadd.f32 %v7421, %v7491
      %v7493 = vpop.f32.mrb[0].mxu0
      %v7494 = vadd.f32 %v7423, %v7493
      %v7495 = vpop.f32.mrb[0].mxu0
      %v7496 = vpop.f32.mrb[0].mxu0
      %7497 = vdwg.mxu0
      %7498 = vmatprep.subr.bf16.mxu0 %v5778
      %7499 = vmatpush1.bf16.msra.mxu0 %v5777
      %7500 = vmatprep.subr.bf16.mxu0 %v5783
      %7501 = vmatpush1.bf16.msra.mxu0 %v5782
      %7502 = vmatprep.subr.bf16.mxu0 %v5788
      %7503 = vmatpush1.bf16.msra.mxu0 %v5787
      %7504 = vmatprep.subr.bf16.mxu0 %v5793
      %7505 = vmatpush1.bf16.msra.mxu0 %v5792
      %7506 = vmatprep.subr.bf16.mxu0 %v5798
      %7507 = vmatpush1.bf16.msra.mxu0 %v5797
      %7508 = vmatprep.subr.bf16.mxu0 %v5803
      %7509 = vmatpush1.bf16.msra.mxu0 %v5802
      %7510 = vmatprep.subr.bf16.mxu0 %v5808
      %7511 = vmatpush1.bf16.msra.mxu0 %v5807
      %7512 = vmatprep.subr.bf16.mxu0 %v5813
      %7513 = vmatpush1.bf16.msra.mxu0 %v5812
      %7514 = vmatprep.subr.bf16.mxu0 %v5818
      %7515 = vmatpush1.bf16.msra.mxu0 %v5817
      %7516 = vmatprep.subr.bf16.mxu0 %v5823
      %7517 = vmatpush1.bf16.msra.mxu0 %v5822
      %7518 = vmatprep.subr.bf16.mxu0 %v5828
      %7519 = vmatpush1.bf16.msra.mxu0 %v5827
      %7520 = vmatprep.subr.bf16.mxu0 %v5833
      %7521 = vmatpush1.bf16.msra.mxu0 %v5832
      %7522 = vmatprep.subr.bf16.mxu0 %v5838
      %7523 = vmatpush1.bf16.msra.mxu0 %v5837
      %7524 = vmatprep.subr.bf16.mxu0 %v5843
      %7525 = vmatpush1.bf16.msra.mxu0 %v5842
      %7526 = vmatprep.subr.bf16.mxu0 %v5848
      %7527 = vmatpush1.bf16.msra.mxu0 %v5847
      %7528 = vmatprep.subr.bf16.mxu0 %v5853
      %7529 = vmatpush1.bf16.msra.mxu0 %v5852
      %7530 = vmatprep.mubr.bf16.mxu0 %v2686
      %7531 = vmatmul.mubr.bf16.gmra.mrb[0].mxu0 %v2685
      %v7532 = vpop.f32.mrb[0].mxu0
      %v7533 = vadd.f32 %v7462, %v7532
      %v7534 = vpop.f32.mrb[0].mxu0
      %v7535 = vadd.f32 %v7464, %v7534
      %v7536 = vpop.f32.mrb[0].mxu0
      %v7537 = vadd.f32 %v7466, %v7536
      %v7538 = vpop.f32.mrb[0].mxu0
      %v7539 = vadd.f32 %v7468, %v7538
      %7540 = vmatprep.mubr.bf16.mxu0 %v2701
      %7541 = vmatmul.mubr.bf16.gmra.mrb[0].mxu0 %v2700
      %v7542 = vpop.f32.mrb[0].mxu0
      %v7543 = vadd.f32 %v7472, %v7542
      %v7544 = vpop.f32.mrb[0].mxu0
      %v7545 = vadd.f32 %v7474, %v7544
      %v7546 = vpop.f32.mrb[0].mxu0
      %v7547 = vadd.f32 %v7476, %v7546
      %v7548 = vpop.f32.mrb[0].mxu0
      %v7549 = vadd.f32 %v7478, %v7548
      %7550 = vmatprep.mubr.bf16.mxu0 %v2716
      %7551 = vmatmul.mubr.bf16.gmra.mrb[0].mxu0 %v2715
      %v7552 = vpop.f32.mrb[0].mxu0
      %v7553 = vadd.f32 %v7482, %v7552
      %v7554 = vpop.f32.mrb[0].mxu0
      %v7555 = vadd.f32 %v7484, %v7554
      %v7556 = vpop.f32.mrb[0].mxu0
      %v7557 = vadd.f32 %v7486, %v7556
      %v7558 = vpop.f32.mrb[0].mxu0
      %v7559 = vadd.f32 %v7488, %v7558
      %7560 = vmatprep.mubr.bf16.mxu0 %v2731
      %7561 = vmatmul.mubr.bf16.gmra.mrb[0].mxu0 %v2730
      %v7562 = vpop.f32.mrb[0].mxu0
      %v7563 = vadd.f32 %v7492, %v7562
      %v7564 = vpop.f32.mrb[0].mxu0
      %v7565 = vadd.f32 %v7494, %v7564
      %v7566 = vpop.f32.mrb[0].mxu0
      %v7567 = vpop.f32.mrb[0].mxu0
      %7568 = vdwg.mxu0
      %7569 = vmatprep.subr.bf16.mxu0 %v5858
      %7570 = vmatpush1.bf16.msra.mxu0 %v5857
      %7571 = vmatprep.subr.bf16.mxu0 %v5863
      %7572 = vmatpush1.bf16.msra.mxu0 %v5862
      %7573 = vmatprep.subr.bf16.mxu0 %v5868
      %7574 = vmatpush1.bf16.msra.mxu0 %v5867
      %7575 = vmatprep.subr.bf16.mxu0 %v5873
      %7576 = vmatpush1.bf16.msra.mxu0 %v5872
      %7577 = vmatprep.subr.bf16.mxu0 %v5878
      %7578 = vmatpush1.bf16.msra.mxu0 %v5877
      %7579 = vmatprep.subr.bf16.mxu0 %v5883
      %7580 = vmatpush1.bf16.msra.mxu0 %v5882
      %7581 = vmatprep.subr.bf16.mxu0 %v5888
      %7582 = vmatpush1.bf16.msra.mxu0 %v5887
      %7583 = vmatprep.subr.bf16.mxu0 %v5893
      %7584 = vmatpush1.bf16.msra.mxu0 %v5892
      %7585 = vmatprep.subr.bf16.mxu0 %v5898
      %7586 = vmatpush1.bf16.msra.mxu0 %v5897
      %7587 = vmatprep.subr.bf16.mxu0 %v5903
      %7588 = vmatpush1.bf16.msra.mxu0 %v5902
      %7589 = vmatprep.subr.bf16.mxu0 %v5908
      %7590 = vmatpush1.bf16.msra.mxu0 %v5907
      %7591 = vmatprep.subr.bf16.mxu0 %v5913
      %7592 = vmatpush1.bf16.msra.mxu0 %v5912
      %7593 = vmatprep.subr.bf16.mxu0 %v5918
      %7594 = vmatpush1.bf16.msra.mxu0 %v5917
      %7595 = vmatprep.subr.bf16.mxu0 %v5923
      %7596 = vmatpush1.bf16.msra.mxu0 %v5922
      %7597 = vmatprep.subr.bf16.mxu0 %v5928
      %7598 = vmatpush1.bf16.msra.mxu0 %v5927
      %7599 = vmatprep.subr.bf16.mxu0 %v5933
      %7600 = vmatpush1.bf16.msra.mxu0 %v5932
      %7601 = vmatprep.mubr.bf16.mxu0 %v2688
      %7602 = vmatmul.mubr.bf16.gmra.mrb[0].mxu0 %v2687
      %v7603 = vpop.f32.mrb[0].mxu0
      %v7604 = vadd.f32 %v7533, %v7603
      %v7605 = vpop.f32.mrb[0].mxu0
      %v7606 = vadd.f32 %v7535, %v7605
      %v7607 = vpop.f32.mrb[0].mxu0
      %v7608 = vadd.f32 %v7537, %v7607
      %v7609 = vpop.f32.mrb[0].mxu0
      %v7610 = vadd.f32 %v7539, %v7609
      %7611 = vmatprep.mubr.bf16.mxu0 %v2703
      %7612 = vmatmul.mubr.bf16.gmra.mrb[0].mxu0 %v2702
      %v7613 = vpop.f32.mrb[0].mxu0
      %v7614 = vadd.f32 %v7543, %v7613
      %v7615 = vpop.f32.mrb[0].mxu0
      %v7616 = vadd.f32 %v7545, %v7615
      %v7617 = vpop.f32.mrb[0].mxu0
      %v7618 = vadd.f32 %v7547, %v7617
      %v7619 = vpop.f32.mrb[0].mxu0
      %v7620 = vadd.f32 %v7549, %v7619
      %7621 = vmatprep.mubr.bf16.mxu0 %v2718
      %7622 = vmatmul.mubr.bf16.gmra.mrb[0].mxu0 %v2717
      %v7623 = vpop.f32.mrb[0].mxu0
      %v7624 = vadd.f32 %v7553, %v7623
      %v7625 = vpop.f32.mrb[0].mxu0
      %v7626 = vadd.f32 %v7555, %v7625
      %v7627 = vpop.f32.mrb[0].mxu0
      %v7628 = vadd.f32 %v7557, %v7627
      %v7629 = vpop.f32.mrb[0].mxu0
      %v7630 = vadd.f32 %v7559, %v7629
      %7631 = vmatprep.mubr.bf16.mxu0 %v2733
      %7632 = vmatmul.mubr.bf16.gmra.mrb[0].mxu0 %v2732
      %v7633 = vpop.f32.mrb[0].mxu0
      %v7634 = vadd.f32 %v7563, %v7633
      %v7635 = vpop.f32.mrb[0].mxu0
      %v7636 = vadd.f32 %v7565, %v7635
      %v7637 = vpop.f32.mrb[0].mxu0
      %v7638 = vpop.f32.mrb[0].mxu0
      %7639 = vdwg.mxu0
      %7640 = vmatprep.subr.bf16.mxu0 %v5938
      %7641 = vmatpush1.bf16.msra.mxu0 %v5937
      %7642 = vmatprep.subr.bf16.mxu0 %v5943
      %7643 = vmatpush1.bf16.msra.mxu0 %v5942
      %7644 = vmatprep.subr.bf16.mxu0 %v5948
      %7645 = vmatpush1.bf16.msra.mxu0 %v5947
      %7646 = vmatprep.subr.bf16.mxu0 %v5953
      %7647 = vmatpush1.bf16.msra.mxu0 %v5952
      %7648 = vmatprep.subr.bf16.mxu0 %v5958
      %7649 = vmatpush1.bf16.msra.mxu0 %v5957
      %7650 = vmatprep.subr.bf16.mxu0 %v5963
      %7651 = vmatpush1.bf16.msra.mxu0 %v5962
      %7652 = vmatprep.subr.bf16.mxu0 %v5968
      %7653 = vmatpush1.bf16.msra.mxu0 %v5967
      %7654 = vmatprep.subr.bf16.mxu0 %v5973
      %7655 = vmatpush1.bf16.msra.mxu0 %v5972
      %7656 = vmatprep.subr.bf16.mxu0 0
      %7657 = vmatpush1.bf16.msra.mxu0 0
      %7658 = vmatprep.subr.bf16.mxu0 0
      %7659 = vmatpush1.bf16.msra.mxu0 0
      %7660 = vmatprep.subr.bf16.mxu0 0
      %7661 = vmatpush1.bf16.msra.mxu0 0
      %7662 = vmatprep.subr.bf16.mxu0 0
      %7663 = vmatpush1.bf16.msra.mxu0 0
      %7664 = vmatprep.subr.bf16.mxu0 0
      %7665 = vmatpush1.bf16.msra.mxu0 0
      %7666 = vmatprep.subr.bf16.mxu0 0
      %7667 = vmatpush1.bf16.msra.mxu0 0
      %7668 = vmatprep.subr.bf16.mxu0 0
      %7669 = vmatpush1.bf16.msra.mxu0 0
      %7670 = vmatprep.subr.bf16.mxu0 0
      %7671 = vmatpush1.bf16.msra.mxu0 0
      %7672 = vmatprep.mubr.bf16.mxu0 0
      %7673 = vmatmul.mubr.bf16.gmra.mrb[0].mxu0 %v2689
      %v7674 = vpop.f32.mrb[0].mxu0
      %v7675 = vadd.f32 %v7604, %v7674
      %v7676 = vpop.f32.mrb[0].mxu0
      %v7677 = vadd.f32 %v7606, %v7676
      %v7678 = vpop.f32.mrb[0].mxu0
      %v7679 = vadd.f32 %v7608, %v7678
      %v7680 = vpop.f32.mrb[0].mxu0
      %v7681 = vadd.f32 %v7610, %v7680
      %7682 = vmatprep.mubr.bf16.mxu0 0
      %7683 = vmatmul.mubr.bf16.gmra.mrb[0].mxu0 %v2704
      %v7684 = vpop.f32.mrb[0].mxu0
      %v7685 = vadd.f32 %v7614, %v7684
      %v7686 = vpop.f32.mrb[0].mxu0
      %v7687 = vadd.f32 %v7616, %v7686
      %v7688 = vpop.f32.mrb[0].mxu0
      %v7689 = vadd.f32 %v7618, %v7688
      %v7690 = vpop.f32.mrb[0].mxu0
      %v7691 = vadd.f32 %v7620, %v7690
      %7692 = vmatprep.mubr.bf16.mxu0 0
      %7693 = vmatmul.mubr.bf16.gmra.mrb[0].mxu0 %v2719
      %v7694 = vpop.f32.mrb[0].mxu0
      %v7695 = vadd.f32 %v7624, %v7694
      %v7696 = vpop.f32.mrb[0].mxu0
      %v7697 = vadd.f32 %v7626, %v7696
      %v7698 = vpop.f32.mrb[0].mxu0
      %v7699 = vadd.f32 %v7628, %v7698
      %v7700 = vpop.f32.mrb[0].mxu0
      %v7701 = vadd.f32 %v7630, %v7700
      %7702 = vmatprep.mubr.bf16.mxu0 0
      %7703 = vmatmul.mubr.bf16.gmra.mrb[0].mxu0 %v2734
      %v7704 = vpop.f32.mrb[0].mxu0
      %v7705 = vadd.f32 %v7634, %v7704
      %v7706 = vpop.f32.mrb[0].mxu0
      %v7707 = vadd.f32 %v7636, %v7706
      %v7708 = vpop.f32.mrb[0].mxu0
      %v7709 = vpop.f32.mrb[0].mxu0
      %7710 = vdwg.mxu0
      %7711 = vmatprep.subr.bf16.mxu0 0
      %7712 = vmatpush1.bf16.msra.mxu0 %v5379
      %7713 = vmatprep.subr.bf16.mxu0 0
      %7714 = vmatpush1.bf16.msra.mxu0 %v5384
      %7715 = vmatprep.subr.bf16.mxu0 0
      %7716 = vmatpush1.bf16.msra.mxu0 %v5389
      %7717 = vmatprep.subr.bf16.mxu0 0
      %7718 = vmatpush1.bf16.msra.mxu0 %v5394
      %7719 = vmatprep.subr.bf16.mxu0 0
      %7720 = vmatpush1.bf16.msra.mxu0 %v5399
      %7721 = vmatprep.subr.bf16.mxu0 0
      %7722 = vmatpush1.bf16.msra.mxu0 %v5404
      %7723 = vmatprep.subr.bf16.mxu0 0
      %7724 = vmatpush1.bf16.msra.mxu0 %v5409
      %7725 = vmatprep.subr.bf16.mxu0 0
      %7726 = vmatpush1.bf16.msra.mxu0 %v5414
      %7727 = vmatprep.subr.bf16.mxu0 0
      %7728 = vmatpush1.bf16.msra.mxu0 %v5419
      %7729 = vmatprep.subr.bf16.mxu0 0
      %7730 = vmatpush1.bf16.msra.mxu0 %v5424
      %7731 = vmatprep.subr.bf16.mxu0 0
      %7732 = vmatpush1.bf16.msra.mxu0 %v5429
      %7733 = vmatprep.subr.bf16.mxu0 0
      %7734 = vmatpush1.bf16.msra.mxu0 %v5434
      %7735 = vmatprep.subr.bf16.mxu0 0
      %7736 = vmatpush1.bf16.msra.mxu0 %v5439
      %7737 = vmatprep.subr.bf16.mxu0 0
      %7738 = vmatpush1.bf16.msra.mxu0 %v5444
      %7739 = vmatprep.subr.bf16.mxu0 0
      %7740 = vmatpush1.bf16.msra.mxu0 %v5449
      %7741 = vmatprep.subr.bf16.mxu0 0
      %7742 = vmatpush1.bf16.msra.mxu0 %v5454
      %7743 = vmatprep.mubr.bf16.mxu0 %v2676
      %7744 = vmatmul.mubr.bf16.gmra.mrb[0].mxu0 %v2675
      %v7745 = vpop.f32.mrb[0].mxu0
      %v7746 = vadd.f32 0.0, %v7745
      %v7747 = vpop.f32.mrb[0].mxu0
      %v7748 = vpop.f32.mrb[0].mxu0
      %v7749 = vadd.f32 0.0, %v7748
      %v7750 = vpop.f32.mrb[0].mxu0
      %7751 = vmatprep.mubr.bf16.mxu0 %v2691
      %7752 = vmatmul.mubr.bf16.gmra.mrb[0].mxu0 %v2690
      %v7753 = vpop.f32.mrb[0].mxu0
      %v7754 = vadd.f32 0.0, %v7753
      %v7755 = vpop.f32.mrb[0].mxu0
      %v7756 = vpop.f32.mrb[0].mxu0
      %v7757 = vadd.f32 0.0, %v7756
      %v7758 = vpop.f32.mrb[0].mxu0
      %7759 = vmatprep.mubr.bf16.mxu0 %v2706
      %7760 = vmatmul.mubr.bf16.gmra.mrb[0].mxu0 %v2705
      %v7761 = vpop.f32.mrb[0].mxu0
      %v7762 = vadd.f32 0.0, %v7761
      %v7763 = vpop.f32.mrb[0].mxu0
      %v7764 = vpop.f32.mrb[0].mxu0
      %v7765 = vadd.f32 0.0, %v7764
      %v7766 = vpop.f32.mrb[0].mxu0
      %7767 = vmatprep.mubr.bf16.mxu0 %v2721
      %7768 = vmatmul.mubr.bf16.gmra.mrb[0].mxu0 %v2720
      %v7769 = vpop.f32.mrb[0].mxu0
      %v7770 = vadd.f32 0.0, %v7769
      %v7771 = vpop.f32.mrb[0].mxu0
      %v7772 = vpop.f32.mrb[0].mxu0
      %v7773 = vpop.f32.mrb[0].mxu0
      %7774 = vdwg.mxu0
      %7775 = vmatprep.subr.bf16.mxu0 0
      %7776 = vmatpush1.bf16.msra.mxu0 %v5459
      %7777 = vmatprep.subr.bf16.mxu0 0
      %7778 = vmatpush1.bf16.msra.mxu0 %v5464
      %7779 = vmatprep.subr.bf16.mxu0 0
      %7780 = vmatpush1.bf16.msra.mxu0 %v5469
      %7781 = vmatprep.subr.bf16.mxu0 0
      %7782 = vmatpush1.bf16.msra.mxu0 %v5474
      %7783 = vmatprep.subr.bf16.mxu0 0
      %7784 = vmatpush1.bf16.msra.mxu0 %v5479
      %7785 = vmatprep.subr.bf16.mxu0 0
      %7786 = vmatpush1.bf16.msra.mxu0 %v5484
      %7787 = vmatprep.subr.bf16.mxu0 0
      %7788 = vmatpush1.bf16.msra.mxu0 %v5489
      %7789 = vmatprep.subr.bf16.mxu0 0
      %7790 = vmatpush1.bf16.msra.mxu0 %v5494
      %7791 = vmatprep.subr.bf16.mxu0 0
      %7792 = vmatpush1.bf16.msra.mxu0 %v5499
      %7793 = vmatprep.subr.bf16.mxu0 0
      %7794 = vmatpush1.bf16.msra.mxu0 %v5504
      %7795 = vmatprep.subr.bf16.mxu0 0
      %7796 = vmatpush1.bf16.msra.mxu0 %v5509
      %7797 = vmatprep.subr.bf16.mxu0 0
      %7798 = vmatpush1.bf16.msra.mxu0 %v5514
      %7799 = vmatprep.subr.bf16.mxu0 0
      %7800 = vmatpush1.bf16.msra.mxu0 %v5519
      %7801 = vmatprep.subr.bf16.mxu0 0
      %7802 = vmatpush1.bf16.msra.mxu0 %v5524
      %7803 = vmatprep.subr.bf16.mxu0 0
      %7804 = vmatpush1.bf16.msra.mxu0 %v5529
      %7805 = vmatprep.subr.bf16.mxu0 0
      %7806 = vmatpush1.bf16.msra.mxu0 %v5534
      %7807 = vmatprep.mubr.bf16.mxu0 %v2678
      %7808 = vmatmul.mubr.bf16.gmra.mrb[0].mxu0 %v2677
      %v7809 = vpop.f32.mrb[0].mxu0
      %v7810 = vadd.f32 %v7746, %v7809
      %v7811 = vpop.f32.mrb[0].mxu0
      %v7812 = vpop.f32.mrb[0].mxu0
      %v7813 = vadd.f32 %v7749, %v7812
      %v7814 = vpop.f32.mrb[0].mxu0
      %7815 = vmatprep.mubr.bf16.mxu0 %v2693
      %7816 = vmatmul.mubr.bf16.gmra.mrb[0].mxu0 %v2692
      %v7817 = vpop.f32.mrb[0].mxu0
      %v7818 = vadd.f32 %v7754, %v7817
      %v7819 = vpop.f32.mrb[0].mxu0
      %v7820 = vpop.f32.mrb[0].mxu0
      %v7821 = vadd.f32 %v7757, %v7820
      %v7822 = vpop.f32.mrb[0].mxu0
      %7823 = vmatprep.mubr.bf16.mxu0 %v2708
      %7824 = vmatmul.mubr.bf16.gmra.mrb[0].mxu0 %v2707
      %v7825 = vpop.f32.mrb[0].mxu0
      %v7826 = vadd.f32 %v7762, %v7825
      %v7827 = vpop.f32.mrb[0].mxu0
      %v7828 = vpop.f32.mrb[0].mxu0
      %v7829 = vadd.f32 %v7765, %v7828
      %v7830 = vpop.f32.mrb[0].mxu0
      %7831 = vmatprep.mubr.bf16.mxu0 %v2723
      %7832 = vmatmul.mubr.bf16.gmra.mrb[0].mxu0 %v2722
      %v7833 = vpop.f32.mrb[0].mxu0
      %v7834 = vadd.f32 %v7770, %v7833
      %v7835 = vpop.f32.mrb[0].mxu0
      %v7836 = vpop.f32.mrb[0].mxu0
      %v7837 = vpop.f32.mrb[0].mxu0
      %7838 = vdwg.mxu0
      %7839 = vmatprep.subr.bf16.mxu0 0
      %7840 = vmatpush1.bf16.msra.mxu0 %v5539
      %7841 = vmatprep.subr.bf16.mxu0 0
      %7842 = vmatpush1.bf16.msra.mxu0 %v5544
      %7843 = vmatprep.subr.bf16.mxu0 0
      %7844 = vmatpush1.bf16.msra.mxu0 %v5549
      %7845 = vmatprep.subr.bf16.mxu0 0
      %7846 = vmatpush1.bf16.msra.mxu0 %v5554
      %7847 = vmatprep.subr.bf16.mxu0 0
      %7848 = vmatpush1.bf16.msra.mxu0 %v5559
      %7849 = vmatprep.subr.bf16.mxu0 0
      %7850 = vmatpush1.bf16.msra.mxu0 %v5564
      %7851 = vmatprep.subr.bf16.mxu0 0
      %7852 = vmatpush1.bf16.msra.mxu0 %v5569
      %7853 = vmatprep.subr.bf16.mxu0 0
      %7854 = vmatpush1.bf16.msra.mxu0 %v5574
      %7855 = vmatprep.subr.bf16.mxu0 0
      %7856 = vmatpush1.bf16.msra.mxu0 %v5579
      %7857 = vmatprep.subr.bf16.mxu0 0
      %7858 = vmatpush1.bf16.msra.mxu0 %v5584
      %7859 = vmatprep.subr.bf16.mxu0 0
      %7860 = vmatpush1.bf16.msra.mxu0 %v5589
      %7861 = vmatprep.subr.bf16.mxu0 0
      %7862 = vmatpush1.bf16.msra.mxu0 %v5594
      %7863 = vmatprep.subr.bf16.mxu0 0
      %7864 = vmatpush1.bf16.msra.mxu0 %v5599
      %7865 = vmatprep.subr.bf16.mxu0 0
      %7866 = vmatpush1.bf16.msra.mxu0 %v5604
      %7867 = vmatprep.subr.bf16.mxu0 0
      %7868 = vmatpush1.bf16.msra.mxu0 %v5609
      %7869 = vmatprep.subr.bf16.mxu0 0
      %7870 = vmatpush1.bf16.msra.mxu0 %v5614
      %7871 = vmatprep.mubr.bf16.mxu0 %v2680
      %7872 = vmatmul.mubr.bf16.gmra.mrb[0].mxu0 %v2679
      %v7873 = vpop.f32.mrb[0].mxu0
      %v7874 = vadd.f32 %v7810, %v7873
      %v7875 = vpop.f32.mrb[0].mxu0
      %v7876 = vpop.f32.mrb[0].mxu0
      %v7877 = vadd.f32 %v7813, %v7876
      %v7878 = vpop.f32.mrb[0].mxu0
      %7879 = vmatprep.mubr.bf16.mxu0 %v2695
      %7880 = vmatmul.mubr.bf16.gmra.mrb[0].mxu0 %v2694
      %v7881 = vpop.f32.mrb[0].mxu0
      %v7882 = vadd.f32 %v7818, %v7881
      %v7883 = vpop.f32.mrb[0].mxu0
      %v7884 = vpop.f32.mrb[0].mxu0
      %v7885 = vadd.f32 %v7821, %v7884
      %v7886 = vpop.f32.mrb[0].mxu0
      %7887 = vmatprep.mubr.bf16.mxu0 %v2710
      %7888 = vmatmul.mubr.bf16.gmra.mrb[0].mxu0 %v2709
      %v7889 = vpop.f32.mrb[0].mxu0
      %v7890 = vadd.f32 %v7826, %v7889
      %v7891 = vpop.f32.mrb[0].mxu0
      %v7892 = vpop.f32.mrb[0].mxu0
      %v7893 = vadd.f32 %v7829, %v7892
      %v7894 = vpop.f32.mrb[0].mxu0
      %7895 = vmatprep.mubr.bf16.mxu0 %v2725
      %7896 = vmatmul.mubr.bf16.gmra.mrb[0].mxu0 %v2724
      %v7897 = vpop.f32.mrb[0].mxu0
      %v7898 = vadd.f32 %v7834, %v7897
      %v7899 = vpop.f32.mrb[0].mxu0
      %v7900 = vpop.f32.mrb[0].mxu0
      %v7901 = vpop.f32.mrb[0].mxu0
      %7902 = vdwg.mxu0
      %7903 = vmatprep.subr.bf16.mxu0 0
      %7904 = vmatpush1.bf16.msra.mxu0 %v5619
      %7905 = vmatprep.subr.bf16.mxu0 0
      %7906 = vmatpush1.bf16.msra.mxu0 %v5624
      %7907 = vmatprep.subr.bf16.mxu0 0
      %7908 = vmatpush1.bf16.msra.mxu0 %v5629
      %7909 = vmatprep.subr.bf16.mxu0 0
      %7910 = vmatpush1.bf16.msra.mxu0 %v5634
      %7911 = vmatprep.subr.bf16.mxu0 0
      %7912 = vmatpush1.bf16.msra.mxu0 %v5639
      %7913 = vmatprep.subr.bf16.mxu0 0
      %7914 = vmatpush1.bf16.msra.mxu0 %v5644
      %7915 = vmatprep.subr.bf16.mxu0 0
      %7916 = vmatpush1.bf16.msra.mxu0 %v5649
      %7917 = vmatprep.subr.bf16.mxu0 0
      %7918 = vmatpush1.bf16.msra.mxu0 %v5654
      %7919 = vmatprep.subr.bf16.mxu0 0
      %7920 = vmatpush1.bf16.msra.mxu0 %v5659
      %7921 = vmatprep.subr.bf16.mxu0 0
      %7922 = vmatpush1.bf16.msra.mxu0 %v5664
      %7923 = vmatprep.subr.bf16.mxu0 0
      %7924 = vmatpush1.bf16.msra.mxu0 %v5669
      %7925 = vmatprep.subr.bf16.mxu0 0
      %7926 = vmatpush1.bf16.msra.mxu0 %v5674
      %7927 = vmatprep.subr.bf16.mxu0 0
      %7928 = vmatpush1.bf16.msra.mxu0 %v5679
      %7929 = vmatprep.subr.bf16.mxu0 0
      %7930 = vmatpush1.bf16.msra.mxu0 %v5684
      %7931 = vmatprep.subr.bf16.mxu0 0
      %7932 = vmatpush1.bf16.msra.mxu0 %v5689
      %7933 = vmatprep.subr.bf16.mxu0 0
      %7934 = vmatpush1.bf16.msra.mxu0 %v5694
      %7935 = vmatprep.mubr.bf16.mxu0 %v2682
      %7936 = vmatmul.mubr.bf16.gmra.mrb[0].mxu0 %v2681
      %v7937 = vpop.f32.mrb[0].mxu0
      %v7938 = vadd.f32 %v7874, %v7937
      %v7939 = vpop.f32.mrb[0].mxu0
      %v7940 = vpop.f32.mrb[0].mxu0
      %v7941 = vadd.f32 %v7877, %v7940
      %v7942 = vpop.f32.mrb[0].mxu0
      %7943 = vmatprep.mubr.bf16.mxu0 %v2697
      %7944 = vmatmul.mubr.bf16.gmra.mrb[0].mxu0 %v2696
      %v7945 = vpop.f32.mrb[0].mxu0
      %v7946 = vadd.f32 %v7882, %v7945
      %v7947 = vpop.f32.mrb[0].mxu0
      %v7948 = vpop.f32.mrb[0].mxu0
      %v7949 = vadd.f32 %v7885, %v7948
      %v7950 = vpop.f32.mrb[0].mxu0
      %7951 = vmatprep.mubr.bf16.mxu0 %v2712
      %7952 = vmatmul.mubr.bf16.gmra.mrb[0].mxu0 %v2711
      %v7953 = vpop.f32.mrb[0].mxu0
      %v7954 = vadd.f32 %v7890, %v7953
      %v7955 = vpop.f32.mrb[0].mxu0
      %v7956 = vpop.f32.mrb[0].mxu0
      %v7957 = vadd.f32 %v7893, %v7956
      %v7958 = vpop.f32.mrb[0].mxu0
      %7959 = vmatprep.mubr.bf16.mxu0 %v2727
      %7960 = vmatmul.mubr.bf16.gmra.mrb[0].mxu0 %v2726
      %v7961 = vpop.f32.mrb[0].mxu0
      %v7962 = vadd.f32 %v7898, %v7961
      %v7963 = vpop.f32.mrb[0].mxu0
      %v7964 = vpop.f32.mrb[0].mxu0
      %v7965 = vpop.f32.mrb[0].mxu0
      %7966 = vdwg.mxu0
      %7967 = vmatprep.subr.bf16.mxu0 0
      %7968 = vmatpush1.bf16.msra.mxu0 %v5699
      %7969 = vmatprep.subr.bf16.mxu0 0
      %7970 = vmatpush1.bf16.msra.mxu0 %v5704
      %7971 = vmatprep.subr.bf16.mxu0 0
      %7972 = vmatpush1.bf16.msra.mxu0 %v5709
      %7973 = vmatprep.subr.bf16.mxu0 0
      %7974 = vmatpush1.bf16.msra.mxu0 %v5714
      %7975 = vmatprep.subr.bf16.mxu0 0
      %7976 = vmatpush1.bf16.msra.mxu0 %v5719
      %7977 = vmatprep.subr.bf16.mxu0 0
      %7978 = vmatpush1.bf16.msra.mxu0 %v5724
      %7979 = vmatprep.subr.bf16.mxu0 0
      %7980 = vmatpush1.bf16.msra.mxu0 %v5729
      %7981 = vmatprep.subr.bf16.mxu0 0
      %7982 = vmatpush1.bf16.msra.mxu0 %v5734
      %7983 = vmatprep.subr.bf16.mxu0 0
      %7984 = vmatpush1.bf16.msra.mxu0 %v5739
      %7985 = vmatprep.subr.bf16.mxu0 0
      %7986 = vmatpush1.bf16.msra.mxu0 %v5744
      %7987 = vmatprep.subr.bf16.mxu0 0
      %7988 = vmatpush1.bf16.msra.mxu0 %v5749
      %7989 = vmatprep.subr.bf16.mxu0 0
      %7990 = vmatpush1.bf16.msra.mxu0 %v5754
      %7991 = vmatprep.subr.bf16.mxu0 0
      %7992 = vmatpush1.bf16.msra.mxu0 %v5759
      %7993 = vmatprep.subr.bf16.mxu0 0
      %7994 = vmatpush1.bf16.msra.mxu0 %v5764
      %7995 = vmatprep.subr.bf16.mxu0 0
      %7996 = vmatpush1.bf16.msra.mxu0 %v5769
      %7997 = vmatprep.subr.bf16.mxu0 0
      %7998 = vmatpush1.bf16.msra.mxu0 %v5774
      %7999 = vmatprep.mubr.bf16.mxu0 %v2684
      %8000 = vmatmul.mubr.bf16.gmra.mrb[0].mxu0 %v2683
      %v8001 = vpop.f32.mrb[0].mxu0
      %v8002 = vadd.f32 %v7938, %v8001
      %v8003 = vpop.f32.mrb[0].mxu0
      %v8004 = vpop.f32.mrb[0].mxu0
      %v8005 = vadd.f32 %v7941, %v8004
      %v8006 = vpop.f32.mrb[0].mxu0
      %8007 = vmatprep.mubr.bf16.mxu0 %v2699
      %8008 = vmatmul.mubr.bf16.gmra.mrb[0].mxu0 %v2698
      %v8009 = vpop.f32.mrb[0].mxu0
      %v8010 = vadd.f32 %v7946, %v8009
      %v8011 = vpop.f32.mrb[0].mxu0
      %v8012 = vpop.f32.mrb[0].mxu0
      %v8013 = vadd.f32 %v7949, %v8012
      %v8014 = vpop.f32.mrb[0].mxu0
      %8015 = vmatprep.mubr.bf16.mxu0 %v2714
      %8016 = vmatmul.mubr.bf16.gmra.mrb[0].mxu0 %v2713
      %v8017 = vpop.f32.mrb[0].mxu0
      %v8018 = vadd.f32 %v7954, %v8017
      %v8019 = vpop.f32.mrb[0].mxu0
      %v8020 = vpop.f32.mrb[0].mxu0
      %v8021 = vadd.f32 %v7957, %v8020
      %v8022 = vpop.f32.mrb[0].mxu0
      %8023 = vmatprep.mubr.bf16.mxu0 %v2729
      %8024 = vmatmul.mubr.bf16.gmra.mrb[0].mxu0 %v2728
      %v8025 = vpop.f32.mrb[0].mxu0
      %v8026 = vadd.f32 %v7962, %v8025
      %v8027 = vpop.f32.mrb[0].mxu0
      %v8028 = vpop.f32.mrb[0].mxu0
      %v8029 = vpop.f32.mrb[0].mxu0
      %8030 = vdwg.mxu0
      %8031 = vmatprep.subr.bf16.mxu0 0
      %8032 = vmatpush1.bf16.msra.mxu0 %v5779
      %8033 = vmatprep.subr.bf16.mxu0 0
      %8034 = vmatpush1.bf16.msra.mxu0 %v5784
      %8035 = vmatprep.subr.bf16.mxu0 0
      %8036 = vmatpush1.bf16.msra.mxu0 %v5789
      %8037 = vmatprep.subr.bf16.mxu0 0
      %8038 = vmatpush1.bf16.msra.mxu0 %v5794
      %8039 = vmatprep.subr.bf16.mxu0 0
      %8040 = vmatpush1.bf16.msra.mxu0 %v5799
      %8041 = vmatprep.subr.bf16.mxu0 0
      %8042 = vmatpush1.bf16.msra.mxu0 %v5804
      %8043 = vmatprep.subr.bf16.mxu0 0
      %8044 = vmatpush1.bf16.msra.mxu0 %v5809
      %8045 = vmatprep.subr.bf16.mxu0 0
      %8046 = vmatpush1.bf16.msra.mxu0 %v5814
      %8047 = vmatprep.subr.bf16.mxu0 0
      %8048 = vmatpush1.bf16.msra.mxu0 %v5819
      %8049 = vmatprep.subr.bf16.mxu0 0
      %8050 = vmatpush1.bf16.msra.mxu0 %v5824
      %8051 = vmatprep.subr.bf16.mxu0 0
      %8052 = vmatpush1.bf16.msra.mxu0 %v5829
      %8053 = vmatprep.subr.bf16.mxu0 0
      %8054 = vmatpush1.bf16.msra.mxu0 %v5834
      %8055 = vmatprep.subr.bf16.mxu0 0
      %8056 = vmatpush1.bf16.msra.mxu0 %v5839
      %8057 = vmatprep.subr.bf16.mxu0 0
      %8058 = vmatpush1.bf16.msra.mxu0 %v5844
      %8059 = vmatprep.subr.bf16.mxu0 0
      %8060 = vmatpush1.bf16.msra.mxu0 %v5849
      %8061 = vmatprep.subr.bf16.mxu0 0
      %8062 = vmatpush1.bf16.msra.mxu0 %v5854
      %8063 = vmatprep.mubr.bf16.mxu0 %v2686
      %8064 = vmatmul.mubr.bf16.gmra.mrb[0].mxu0 %v2685
      %v8065 = vpop.f32.mrb[0].mxu0
      %v8066 = vadd.f32 %v8002, %v8065
      %v8067 = vpop.f32.mrb[0].mxu0
      %v8068 = vpop.f32.mrb[0].mxu0
      %v8069 = vadd.f32 %v8005, %v8068
      %v8070 = vpop.f32.mrb[0].mxu0
      %8071 = vmatprep.mubr.bf16.mxu0 %v2701
      %8072 = vmatmul.mubr.bf16.gmra.mrb[0].mxu0 %v2700
      %v8073 = vpop.f32.mrb[0].mxu0
      %v8074 = vadd.f32 %v8010, %v8073
      %v8075 = vpop.f32.mrb[0].mxu0
      %v8076 = vpop.f32.mrb[0].mxu0
      %v8077 = vadd.f32 %v8013, %v8076
      %v8078 = vpop.f32.mrb[0].mxu0
      %8079 = vmatprep.mubr.bf16.mxu0 %v2716
      %8080 = vmatmul.mubr.bf16.gmra.mrb[0].mxu0 %v2715
      %v8081 = vpop.f32.mrb[0].mxu0
      %v8082 = vadd.f32 %v8018, %v8081
      %v8083 = vpop.f32.mrb[0].mxu0
      %v8084 = vpop.f32.mrb[0].mxu0
      %v8085 = vadd.f32 %v8021, %v8084
      %v8086 = vpop.f32.mrb[0].mxu0
      %8087 = vmatprep.mubr.bf16.mxu0 %v2731
      %8088 = vmatmul.mubr.bf16.gmra.mrb[0].mxu0 %v2730
      %v8089 = vpop.f32.mrb[0].mxu0
      %v8090 = vadd.f32 %v8026, %v8089
      %v8091 = vpop.f32.mrb[0].mxu0
      %v8092 = vpop.f32.mrb[0].mxu0
      %v8093 = vpop.f32.mrb[0].mxu0
      %8094 = vdwg.mxu0
      %8095 = vmatprep.subr.bf16.mxu0 0
      %8096 = vmatpush1.bf16.msra.mxu0 %v5859
      %8097 = vmatprep.subr.bf16.mxu0 0
      %8098 = vmatpush1.bf16.msra.mxu0 %v5864
      %8099 = vmatprep.subr.bf16.mxu0 0
      %8100 = vmatpush1.bf16.msra.mxu0 %v5869
      %8101 = vmatprep.subr.bf16.mxu0 0
      %8102 = vmatpush1.bf16.msra.mxu0 %v5874
      %8103 = vmatprep.subr.bf16.mxu0 0
      %8104 = vmatpush1.bf16.msra.mxu0 %v5879
      %8105 = vmatprep.subr.bf16.mxu0 0
      %8106 = vmatpush1.bf16.msra.mxu0 %v5884
      %8107 = vmatprep.subr.bf16.mxu0 0
      %8108 = vmatpush1.bf16.msra.mxu0 %v5889
      %8109 = vmatprep.subr.bf16.mxu0 0
      %8110 = vmatpush1.bf16.msra.mxu0 %v5894
      %8111 = vmatprep.subr.bf16.mxu0 0
      %8112 = vmatpush1.bf16.msra.mxu0 %v5899
      %8113 = vmatprep.subr.bf16.mxu0 0
      %8114 = vmatpush1.bf16.msra.mxu0 %v5904
      %8115 = vmatprep.subr.bf16.mxu0 0
      %8116 = vmatpush1.bf16.msra.mxu0 %v5909
      %8117 = vmatprep.subr.bf16.mxu0 0
      %8118 = vmatpush1.bf16.msra.mxu0 %v5914
      %8119 = vmatprep.subr.bf16.mxu0 0
      %8120 = vmatpush1.bf16.msra.mxu0 %v5919
      %8121 = vmatprep.subr.bf16.mxu0 0
      %8122 = vmatpush1.bf16.msra.mxu0 %v5924
      %8123 = vmatprep.subr.bf16.mxu0 0
      %8124 = vmatpush1.bf16.msra.mxu0 %v5929
      %8125 = vmatprep.subr.bf16.mxu0 0
      %8126 = vmatpush1.bf16.msra.mxu0 %v5934
      %8127 = vmatprep.mubr.bf16.mxu0 %v2688
      %8128 = vmatmul.mubr.bf16.gmra.mrb[0].mxu0 %v2687
      %v8129 = vpop.f32.mrb[0].mxu0
      %v8130 = vadd.f32 %v8066, %v8129
      %v8131 = vpop.f32.mrb[0].mxu0
      %v8132 = vpop.f32.mrb[0].mxu0
      %v8133 = vadd.f32 %v8069, %v8132
      %v8134 = vpop.f32.mrb[0].mxu0
      %8135 = vmatprep.mubr.bf16.mxu0 %v2703
      %8136 = vmatmul.mubr.bf16.gmra.mrb[0].mxu0 %v2702
      %v8137 = vpop.f32.mrb[0].mxu0
      %v8138 = vadd.f32 %v8074, %v8137
      %v8139 = vpop.f32.mrb[0].mxu0
      %v8140 = vpop.f32.mrb[0].mxu0
      %v8141 = vadd.f32 %v8077, %v8140
      %v8142 = vpop.f32.mrb[0].mxu0
      %8143 = vmatprep.mubr.bf16.mxu0 %v2718
      %8144 = vmatmul.mubr.bf16.gmra.mrb[0].mxu0 %v2717
      %v8145 = vpop.f32.mrb[0].mxu0
      %v8146 = vadd.f32 %v8082, %v8145
      %v8147 = vpop.f32.mrb[0].mxu0
      %v8148 = vpop.f32.mrb[0].mxu0
      %v8149 = vadd.f32 %v8085, %v8148
      %v8150 = vpop.f32.mrb[0].mxu0
      %8151 = vmatprep.mubr.bf16.mxu0 %v2733
      %8152 = vmatmul.mubr.bf16.gmra.mrb[0].mxu0 %v2732
      %v8153 = vpop.f32.mrb[0].mxu0
      %v8154 = vadd.f32 %v8090, %v8153
      %v8155 = vpop.f32.mrb[0].mxu0
      %v8156 = vpop.f32.mrb[0].mxu0
      %v8157 = vpop.f32.mrb[0].mxu0
      %8158 = vdwg.mxu0
      %8159 = vmatprep.subr.bf16.mxu0 0
      %8160 = vmatpush1.bf16.msra.mxu0 %v5939
      %8161 = vmatprep.subr.bf16.mxu0 0
      %8162 = vmatpush1.bf16.msra.mxu0 %v5944
      %8163 = vmatprep.subr.bf16.mxu0 0
      %8164 = vmatpush1.bf16.msra.mxu0 %v5949
      %8165 = vmatprep.subr.bf16.mxu0 0
      %8166 = vmatpush1.bf16.msra.mxu0 %v5954
      %8167 = vmatprep.subr.bf16.mxu0 0
      %8168 = vmatpush1.bf16.msra.mxu0 %v5959
      %8169 = vmatprep.subr.bf16.mxu0 0
      %8170 = vmatpush1.bf16.msra.mxu0 %v5964
      %8171 = vmatprep.subr.bf16.mxu0 0
      %8172 = vmatpush1.bf16.msra.mxu0 %v5969
      %8173 = vmatprep.subr.bf16.mxu0 0
      %8174 = vmatpush1.bf16.msra.mxu0 %v5974
      %8175 = vmatprep.subr.bf16.mxu0 0
      %8176 = vmatpush1.bf16.msra.mxu0 0
      %8177 = vmatprep.subr.bf16.mxu0 0
      %8178 = vmatpush1.bf16.msra.mxu0 0
      %8179 = vmatprep.subr.bf16.mxu0 0
      %8180 = vmatpush1.bf16.msra.mxu0 0
      %8181 = vmatprep.subr.bf16.mxu0 0
      %8182 = vmatpush1.bf16.msra.mxu0 0
      %8183 = vmatprep.subr.bf16.mxu0 0
      %8184 = vmatpush1.bf16.msra.mxu0 0
      %8185 = vmatprep.subr.bf16.mxu0 0
      %8186 = vmatpush1.bf16.msra.mxu0 0
      %8187 = vmatprep.subr.bf16.mxu0 0
      %8188 = vmatpush1.bf16.msra.mxu0 0
      %8189 = vmatprep.subr.bf16.mxu0 0
      %8190 = vmatpush1.bf16.msra.mxu0 0
      %8191 = vmatprep.mubr.bf16.mxu0 0
      %8192 = vmatmul.mubr.bf16.gmra.mrb[0].mxu0 %v2689
      %v8193 = vpop.f32.mrb[0].mxu0
      %v8194 = vadd.f32 %v8130, %v8193
      %v8195 = vpop.f32.mrb[0].mxu0
      %v8196 = vpop.f32.mrb[0].mxu0
      %v8197 = vadd.f32 %v8133, %v8196
      %v8198 = vpop.f32.mrb[0].mxu0
      %8199 = vmatprep.mubr.bf16.mxu0 0
      %8200 = vmatmul.mubr.bf16.gmra.mrb[0].mxu0 %v2704
      %v8201 = vpop.f32.mrb[0].mxu0
      %v8202 = vadd.f32 %v8138, %v8201
      %v8203 = vpop.f32.mrb[0].mxu0
      %v8204 = vpop.f32.mrb[0].mxu0
      %v8205 = vadd.f32 %v8141, %v8204
      %v8206 = vpop.f32.mrb[0].mxu0
      %8207 = vmatprep.mubr.bf16.mxu0 0
      %8208 = vmatmul.mubr.bf16.gmra.mrb[0].mxu0 %v2719
      %v8209 = vpop.f32.mrb[0].mxu0
      %v8210 = vadd.f32 %v8146, %v8209
      %v8211 = vpop.f32.mrb[0].mxu0
      %v8212 = vpop.f32.mrb[0].mxu0
      %v8213 = vadd.f32 %v8149, %v8212
      %v8214 = vpop.f32.mrb[0].mxu0
      %8215 = vmatprep.mubr.bf16.mxu0 0
      %8216 = vmatmul.mubr.bf16.gmra.mrb[0].mxu0 %v2734
      %v8217 = vpop.f32.mrb[0].mxu0
      %v8218 = vadd.f32 %v8154, %v8217
      %v8219 = vpop.f32.mrb[0].mxu0
      %v8220 = vpop.f32.mrb[0].mxu0
      %v8221 = vpop.f32.mrb[0].mxu0
      %8222 = vdwg.mxu0
      %p8223 = scmp.eq.s32.totalorder %s19, 0
      // Predicated region
      $region33: #{_mul_conv1x1_impl.1} parent=31 // pred_check
        %p8224 = pneg %p8223
      $region34: #{_mul_conv1x1_impl.1} parent=31 // pred_check_branch
        %8226 = sbr.rel (%p8224) target = $region36
      $region35: #{_mul_conv1x1_impl.1} parent=31 // pred_region
        %8227 = vst [vmem:[%s273] sm:$0xff] %v7107
        %8228 = vst [vmem:[%s273 + $0x8] sm:$0xff] %v7109
        %8229 = vst [vmem:[%s273 + $0x10] sm:$0xff] %v7675
        %8230 = vst [vmem:[%s273 + $0x18] sm:$0xff] %v7677
        %8231 = vst [vmem:[%s273 + $0x20] sm:$0xff] %v8194
        %8232 = vst [vmem:[%s273 + $0x28] sm:$0xff] %v7111
        %8233 = vst [vmem:[%s273 + $0x30] sm:$0xff] %v7113
        %8234 = vst [vmem:[%s273 + $0x38] sm:$0xff] %v7679
        %8235 = vst [vmem:[%s273 + $0x40] sm:$0xff] %v7681
        %8236 = vst [vmem:[%s273 + $0x48] sm:$0xff] %v8197
        %8237 = vst [vmem:[%s273 + $0x50] sm:$0xff] %v7117
        %8238 = vst [vmem:[%s273 + $0x58] sm:$0xff] %v7119
        %8239 = vst [vmem:[%s273 + $0x60] sm:$0xff] %v7685
        %8240 = vst [vmem:[%s273 + $0x68] sm:$0xff] %v7687
        %8241 = vst [vmem:[%s273 + $0x70] sm:$0xff] %v8202
        %8242 = vst [vmem:[%s273 + $0x78] sm:$0xff] %v7121
        %8243 = vst [vmem:[%s273 + $0x80] sm:$0xff] %v7123
        %8244 = vst [vmem:[%s273 + $0x88] sm:$0xff] %v7689
        %8245 = vst [vmem:[%s273 + $0x90] sm:$0xff] %v7691
        %8246 = vst [vmem:[%s273 + $0x98] sm:$0xff] %v8205
        %8247 = vst [vmem:[%s273 + $0xa0] sm:$0xff] %v7127
        %8248 = vst [vmem:[%s273 + $0xa8] sm:$0xff] %v7129
        %8249 = vst [vmem:[%s273 + $0xb0] sm:$0xff] %v7695
        %8250 = vst [vmem:[%s273 + $0xb8] sm:$0xff] %v7697
        %8251 = vst [vmem:[%s273 + $0xc0] sm:$0xff] %v8210
        %8252 = vst [vmem:[%s273 + $0xc8] sm:$0xff] %v7131
        %8253 = vst [vmem:[%s273 + $0xd0] sm:$0xff] %v7133
        %8254 = vst [vmem:[%s273 + $0xd8] sm:$0xff] %v7699
        %8255 = vst [vmem:[%s273 + $0xe0] sm:$0xff] %v7701
        %8256 = vst [vmem:[%s273 + $0xe8] sm:$0xff] %v8213
        %8257 = vst [vmem:[%s273 + $0xf0] sm:$0x1] %v7137
        %8258 = vst [vmem:[%s273 + $0xf8] sm:$0x1] %v7139
        %8259 = vst [vmem:[%s273 + $0x100] sm:$0x1] %v7705
        %8260 = vst [vmem:[%s273 + $0x108] sm:$0x1] %v7707
        %8261 = vst [vmem:[%s273 + $0x110] sm:$0x1] %v8218
      $region36: #{_mul_conv1x1_impl.1} parent=31 // pred_fallthru
        _
      %p8262 = scmp.gt.s32.totalorder %s19, 0
      // Predicated region
      $region37: #{_mul_conv1x1_impl.1} parent=31 // pred_check
        %p8263 = pneg %p8262
      $region38: #{_mul_conv1x1_impl.1} parent=31 // pred_check_branch
        %8265 = sbr.rel (%p8263) target = $region40
      $region39: #{_mul_conv1x1_impl.1} parent=31 // pred_region
        %v8266 = vld [vmem:[%s273] sm:$0xff]
        %v8267 = vld [vmem:[%s273 + $0x8] sm:$0xff]
        %v8268 = vld [vmem:[%s273 + $0x10] sm:$0xff]
        %v8269 = vld [vmem:[%s273 + $0x18] sm:$0xff]
        %v8270 = vld [vmem:[%s273 + $0x20] sm:$0xff]
        %v8271 = vld [vmem:[%s273 + $0x28] sm:$0xff]
        %v8272 = vld [vmem:[%s273 + $0x30] sm:$0xff]
        %v8273 = vld [vmem:[%s273 + $0x38] sm:$0xff]
        %v8274 = vld [vmem:[%s273 + $0x40] sm:$0xff]
        %v8275 = vld [vmem:[%s273 + $0x48] sm:$0xff]
        %v8276 = vld [vmem:[%s273 + $0x50] sm:$0xff]
        %v8277 = vld [vmem:[%s273 + $0x58] sm:$0xff]
        %v8278 = vld [vmem:[%s273 + $0x60] sm:$0xff]
        %v8279 = vld [vmem:[%s273 + $0x68] sm:$0xff]
        %v8280 = vld [vmem:[%s273 + $0x70] sm:$0xff]
        %v8281 = vld [vmem:[%s273 + $0x78] sm:$0xff]
        %v8282 = vld [vmem:[%s273 + $0x80] sm:$0xff]
        %v8283 = vld [vmem:[%s273 + $0x88] sm:$0xff]
        %v8284 = vld [vmem:[%s273 + $0x90] sm:$0xff]
        %v8285 = vld [vmem:[%s273 + $0x98] sm:$0xff]
        %v8286 = vld [vmem:[%s273 + $0xa0] sm:$0xff]
        %v8287 = vld [vmem:[%s273 + $0xa8] sm:$0xff]
        %v8288 = vld [vmem:[%s273 + $0xb0] sm:$0xff]
        %v8289 = vld [vmem:[%s273 + $0xb8] sm:$0xff]
        %v8290 = vld [vmem:[%s273 + $0xc0] sm:$0xff]
        %v8291 = vld [vmem:[%s273 + $0xc8] sm:$0xff]
        %v8292 = vld [vmem:[%s273 + $0xd0] sm:$0xff]
        %v8293 = vld [vmem:[%s273 + $0xd8] sm:$0xff]
        %v8294 = vld [vmem:[%s273 + $0xe0] sm:$0xff]
        %v8295 = vld [vmem:[%s273 + $0xe8] sm:$0xff]
        %v8296 = vld [vmem:[%s273 + $0xf0] sm:$0x1]
        %v8297 = vld [vmem:[%s273 + $0xf8] sm:$0x1]
        %v8298 = vld [vmem:[%s273 + $0x100] sm:$0x1]
        %v8299 = vld [vmem:[%s273 + $0x108] sm:$0x1]
        %v8300 = vld [vmem:[%s273 + $0x110] sm:$0x1]
        %v8301 = vadd.f32 %v8266, %v7107
        %v8302 = vadd.f32 %v8267, %v7109
        %v8303 = vadd.f32 %v8268, %v7675
        %v8304 = vadd.f32 %v8269, %v7677
        %v8305 = vadd.f32 %v8270, %v8194
        %v8306 = vadd.f32 %v8271, %v7111
        %v8307 = vadd.f32 %v8272, %v7113
        %v8308 = vadd.f32 %v8273, %v7679
        %v8309 = vadd.f32 %v8274, %v7681
        %v8310 = vadd.f32 %v8275, %v8197
        %v8311 = vadd.f32 %v8276, %v7117
        %v8312 = vadd.f32 %v8277, %v7119
        %v8313 = vadd.f32 %v8278, %v7685
        %v8314 = vadd.f32 %v8279, %v7687
        %v8315 = vadd.f32 %v8280, %v8202
        %v8316 = vadd.f32 %v8281, %v7121
        %v8317 = vadd.f32 %v8282, %v7123
        %v8318 = vadd.f32 %v8283, %v7689
        %v8319 = vadd.f32 %v8284, %v7691
        %v8320 = vadd.f32 %v8285, %v8205
        %v8321 = vadd.f32 %v8286, %v7127
        %v8322 = vadd.f32 %v8287, %v7129
        %v8323 = vadd.f32 %v8288, %v7695
        %v8324 = vadd.f32 %v8289, %v7697
        %v8325 = vadd.f32 %v8290, %v8210
        %v8326 = vadd.f32 %v8291, %v7131
        %v8327 = vadd.f32 %v8292, %v7133
        %v8328 = vadd.f32 %v8293, %v7699
        %v8329 = vadd.f32 %v8294, %v7701
        %v8330 = vadd.f32 %v8295, %v8213
        %v8331 = vadd.f32 %v8296, %v7137
        %v8332 = vadd.f32 %v8297, %v7139
        %v8333 = vadd.f32 %v8298, %v7705
        %v8334 = vadd.f32 %v8299, %v7707
        %v8335 = vadd.f32 %v8300, %v8218
        %8336 = vst [vmem:[%s273] sm:$0xff] %v8301
        %8337 = vst [vmem:[%s273 + $0x8] sm:$0xff] %v8302
        %8338 = vst [vmem:[%s273 + $0x10] sm:$0xff] %v8303
        %8339 = vst [vmem:[%s273 + $0x18] sm:$0xff] %v8304
        %8340 = vst [vmem:[%s273 + $0x20] sm:$0xff] %v8305
        %8341 = vst [vmem:[%s273 + $0x28] sm:$0xff] %v8306
        %8342 = vst [vmem:[%s273 + $0x30] sm:$0xff] %v8307
        %8343 = vst [vmem:[%s273 + $0x38] sm:$0xff] %v8308
        %8344 = vst [vmem:[%s273 + $0x40] sm:$0xff] %v8309
        %8345 = vst [vmem:[%s273 + $0x48] sm:$0xff] %v8310
        %8346 = vst [vmem:[%s273 + $0x50] sm:$0xff] %v8311
        %8347 = vst [vmem:[%s273 + $0x58] sm:$0xff] %v8312
        %8348 = vst [vmem:[%s273 + $0x60] sm:$0xff] %v8313
        %8349 = vst [vmem:[%s273 + $0x68] sm:$0xff] %v8314
        %8350 = vst [vmem:[%s273 + $0x70] sm:$0xff] %v8315
        %8351 = vst [vmem:[%s273 + $0x78] sm:$0xff] %v8316
        %8352 = vst [vmem:[%s273 + $0x80] sm:$0xff] %v8317
        %8353 = vst [vmem:[%s273 + $0x88] sm:$0xff] %v8318
        %8354 = vst [vmem:[%s273 + $0x90] sm:$0xff] %v8319
        %8355 = vst [vmem:[%s273 + $0x98] sm:$0xff] %v8320
        %8356 = vst [vmem:[%s273 + $0xa0] sm:$0xff] %v8321
        %8357 = vst [vmem:[%s273 + $0xa8] sm:$0xff] %v8322
        %8358 = vst [vmem:[%s273 + $0xb0] sm:$0xff] %v8323
        %8359 = vst [vmem:[%s273 + $0xb8] sm:$0xff] %v8324
        %8360 = vst [vmem:[%s273 + $0xc0] sm:$0xff] %v8325
        %8361 = vst [vmem:[%s273 + $0xc8] sm:$0xff] %v8326
        %8362 = vst [vmem:[%s273 + $0xd0] sm:$0xff] %v8327
        %8363 = vst [vmem:[%s273 + $0xd8] sm:$0xff] %v8328
        %8364 = vst [vmem:[%s273 + $0xe0] sm:$0xff] %v8329
        %8365 = vst [vmem:[%s273 + $0xe8] sm:$0xff] %v8330
        %8366 = vst [vmem:[%s273 + $0xf0] sm:$0x1] %v8331
        %8367 = vst [vmem:[%s273 + $0xf8] sm:$0x1] %v8332
        %8368 = vst [vmem:[%s273 + $0x100] sm:$0x1] %v8333
        %8369 = vst [vmem:[%s273 + $0x108] sm:$0x1] %v8334
        %8370 = vst [vmem:[%s273 + $0x110] sm:$0x1] %v8335
      $region40: #{_mul_conv1x1_impl.1} parent=31 // pred_fallthru
        _
      %p8371 = scmp.lt.s32.totalorder %s18, 0
      %s8372 = scalar_select %p8371, %s18, 0
      %s8373 = smul.addr %s8372, 35
      %s8374 = smul.addr %s8373, 8
      %s8375 = scalar_lea.vmem %s3, %s8374
      // Predicated region
      $region41: #{_mul_conv1x1_impl.1} parent=31 // pred_check
        %p8376 = pneg %p134
      $region42: #{_mul_conv1x1_impl.1} parent=31 // pred_check_branch
        %8378 = sbr.rel (%p8376) target = $region44
      $region43: #{_mul_conv1x1_impl.1} parent=31 // pred_region
        _
      $region44: #{_mul_conv1x1_impl.1} parent=31 // pred_fallthru
        _
      // Predicated region
      $region45: #{_mul_conv1x1_impl.1} parent=31 // pred_check
        %p8379 = pneg %p134
      $region46: #{_mul_conv1x1_impl.1} parent=31 // pred_check_branch
        %8381 = sbr.rel (%p8379) target = $region48
      $region47: #{_mul_conv1x1_impl.1} parent=31 // pred_region
        %p8382 = scmp.lt.s32.totalorder %s18, 0
        %s8383 = scalar_select %p8382, %s18, 0
        %s8384 = smul.addr %s8383, 35
        %s8385 = smul.addr %s8384, 8
        %s8386 = scalar_lea.vmem %s3, %s8385
      $region48: #{_mul_conv1x1_impl.1} parent=31 // pred_fallthru
        _
    $region32: #{_mul_conv1x1_impl.1} parent=5 // pred_fallthru
      _
    %p8387 = scmp.le.s32.totalorder 2, %s9
    // Predicated region
    $region49: #{_mul_conv1x1_impl.1} parent=5 // pred_check
      %p8388 = pneg %p8387
    $region50: #{_mul_conv1x1_impl.1} parent=5 // pred_check_branch
      %8390 = sbr.rel (%p8388) target = $region52
    $region51: #{_mul_conv1x1_impl.1} parent=5 // pred_region
      %s8391 = ssub.s32 %s9, 2
    $region52: #{_mul_conv1x1_impl.1} parent=5 // pred_fallthru
      _
  $region6: #{_mul_conv1x1_impl.1} parent=0 // loop_footer
    %s13 = sadd.s32 1, %s9
  $region7: #{_mul_conv1x1_impl.1} parent=0 // loop_footer_branch
    %8 = sbr.rel target = $region3
  $region8: #{_mul_conv1x1_impl.1} parent=0 // loop_exit
    _

</llo_original>
